<compile_context>
chip_gen: v6e
topology: v6e:2x2x1
jax: 0.10.0
libtpu: 0.0.40
codegen_flags: <defaults>
</compile_context>

<pallas_src>
from functools import partial

import numpy as np
import jax
import jax.numpy as jnp
from jax.experimental import pallas as pl
from jax.experimental.pallas import tpu as pltpu


def _tree_sum(terms):
    """Balanced pairwise sum of a Python list of arrays (breaks serial chain)."""
    while len(terms) > 1:
        nxt = [terms[i] + terms[i + 1] for i in range(0, len(terms) - 1, 2)]
        if len(terms) % 2:
            nxt.append(terms[-1])
        terms = nxt
    return terms[0]


def _srcnn_kernel(H, W, G, MA_pad, baseA, r0,
                  x9_ref,    # (G, 9, L9)  f32: row kh = flat padded frame shifted by kh*Wp
                  mask_ref,  # (1, G*MA_pad) f32: 1.0 at real image pixels of band A
                  w1T_ref,   # (64, 81) bf16, tap index = kw*9 + kh
                  b1_ref,    # (64, 1)  f32
                  w2_ref,    # (32, 64) bf16
                  b2_ref,    # (32, 1)  f32
                  w3r_ref,   # (25, 32) bf16, tap index = kh*5 + kw
                  b3_ref,    # (1, 1)   f32 in SMEM
                  o_ref,     # (G, 1, MB) f32, lane-dense output band (H*Wp)
                  cols_ref,  # VMEM scratch (81, G*MA_pad) f32: in-kernel im2col
                  taps_ref): # VMEM scratch (25, G*MA_pad) f32: conv3 per-tap terms
    f32 = jnp.float32
    bf16 = jnp.bfloat16
    Wp = W + 8
    MB = H * Wp

    # ---- grouped in-kernel im2col for conv1: 9 stores of 9-sublane slabs per
    # image (instead of 81 single-sublane copies).  cols row kw*9 + kh holds
    # tap (kh, kw); the per-kh shift is already baked into x9.
    for g in range(G):
        for kw in range(9):
            a = baseA + kw
            cols_ref[kw * 9:(kw + 1) * 9, g * MA_pad:(g + 1) * MA_pad] = (
                x9_ref[g, :, a:a + MA_pad])

    # ---- conv1 (9x9, 1->64) + ReLU : one bf16 MXU matmul, K=81 --------------
    out1 = jnp.dot(w1T_ref[...], cols_ref[...].astype(bf16),
                   preferred_element_type=f32)
    out1 = jnp.maximum(out1 + b1_ref[...], 0.0)            # (64, G*MA_pad) f32

    # ---- conv2 (1x1, 64->32) + ReLU -----------------------------------------
    out2 = jnp.dot(w2_ref[...], out1.astype(bf16), preferred_element_type=f32)
    out2 = jnp.maximum(out2 + b2_ref[...], 0.0)             # (32, G*MA_pad)
    # zero every non-image (pad / lane-padding) position so conv3 sees true
    # zero padding; garbage values there are finite, so this is exact.
    out2 = out2 * mask_ref[...]

    # ---- conv3 (5x5, 32->1): channel reduction on the MXU, then per-image
    # tree-sum of the 25 shifted (1, MB) tap rows + residual + bias.
    taps_ref[...] = jnp.dot(w3r_ref[...], out2.astype(bf16),
                            preferred_element_type=f32)     # (25, G*MA_pad)

    b3 = b3_ref[0, 0]
    for g in range(G):
        off = g * MA_pad
        # residual (original x at band B, lane-aligned read) + bias
        terms = [x9_ref[g, 0:1, r0:r0 + MB] + b3]
        for kh in range(5):
            for kw in range(5):
                t = kh * 5 + kw
                s = kh * Wp + kw
                terms.append(taps_ref[t:t + 1, off + s:off + s + MB])
        o_ref[g] = _tree_sum(terms)                          # unmasked stores


def make_params(key):
    """Deterministic synthetic parameters in PyTorch Conv2d layout (OIHW)."""
    k1, k2, k3, k4, k5, k6 = jax.random.split(key, 6)
    s = 0.05
    return {
        "w1": s * jax.random.normal(k1, (64, 1, 9, 9), jnp.float32),
        "b1": s * jax.random.normal(k2, (64,), jnp.float32),
        "w2": s * jax.random.normal(k3, (32, 64, 1, 1), jnp.float32),
        "b2": s * jax.random.normal(k4, (32,), jnp.float32),
        "w3": s * jax.random.normal(k5, (1, 32, 5, 5), jnp.float32),
        "b3": s * jax.random.normal(k6, (1,), jnp.float32),
    }


@jax.jit
def srcnn_forward(x, params):
    """x: (N, 1, H, W) float32 (NCHW, like PyTorch). Returns (N, 1, H, W)."""
    N, C, H, W = x.shape
    assert C == 1
    Hp, Wp = H + 8, W + 8
    Q = Hp * Wp                              # flat padded-frame length
    MA = (H + 4) * Wp + 4                    # band A (conv1/conv2) length
    MA_pad = ((MA + 127) // 128) * 128       # lane-pad band A to 128 multiple
    MB = H * Wp                              # band B (output) length

    # images per grid step: amortize per-step overhead, keep >= 2 grid steps
    # so both v7x TensorCores get work on the "parallel" batch axis.
    G = max(1, min(8, N // 2))
    Np = ((N + G - 1) // G) * G
    n_steps = Np // G

    # front extension chosen so the residual/band-B read offset r0 = E_f + 4*Wp
    # is a multiple of 128 (aligned vld in the epilogue).
    E_f = ((6 * Wp + 6 + 127) // 128) * 128 - 4 * Wp
    r0 = E_f + 4 * Wp
    baseA = E_f - 2 * Wp - 6                 # band-A tap base offset (kw=0)
    L9 = ((max(baseA + 8 + MA_pad, r0 + MB) + 127) // 128) * 128
    L_ext = L9 + 8 * Wp

    # --- glue (plain JAX, tiny): pad + flatten input and build the 9 kh-shifts
    xb = x[:, 0]
    if Np != N:
        xb = jnp.concatenate([xb, jnp.zeros((Np - N, H, W), x.dtype)], axis=0)
    xpad = jnp.pad(xb, ((0, 0), (4, 4), (4, 4)))                     # (Np,Hp,Wp)
    xflat = jnp.pad(xpad.reshape(Np, Q), ((0, 0), (E_f, L_ext - E_f - Q)))
    x9 = jnp.stack([xflat[:, kh * Wp: kh * Wp + L9] for kh in range(9)],
                   axis=1)                                           # (Np,9,L9)

    # band-A real-pixel mask (covers the lane padding too), tiled G times.
    qa = np.arange(MA_pad) + (2 * Wp - 2)                            # frame idx
    ii, jj = qa // Wp, qa % Wp
    m = ((ii >= 4) & (ii < 4 + H) & (jj >= 4) & (jj < 4 + W)).astype(np.float32)
    maskA = jnp.asarray(np.tile(m, G)).reshape(1, G * MA_pad)

    # --- weight repacking (channels on sublanes); bf16 for the MXU -----------
    w1T = (params["w1"][:, 0].transpose(0, 2, 1)          # (Cout, kw, kh)
           .reshape(64, 81).astype(jnp.bfloat16))         # tap index kw*9+kh
    b1r = params["b1"].reshape(64, 1).astype(jnp.float32)
    w2r = params["w2"][:, :, 0, 0].astype(jnp.bfloat16)   # (32, 64)
    b2r = params["b2"].reshape(32, 1).astype(jnp.float32)
    w3r = (params["w3"][0].transpose(1, 2, 0)             # (kh, kw, Cin)
           .reshape(25, 32).astype(jnp.bfloat16))         # tap index kh*5+kw
    b3r = params["b3"].reshape(1, 1).astype(jnp.float32)

    kernel = partial(_srcnn_kernel, H, W, G, MA_pad, baseA, r0)
    out_flat = pl.pallas_call(
        kernel,
        out_shape=jax.ShapeDtypeStruct((Np, 1, MB), jnp.float32),
        grid=(n_steps,),
        in_specs=[
            pl.BlockSpec((G, 9, L9), lambda n: (n, 0, 0)),
            pl.BlockSpec((1, G * MA_pad), lambda n: (0, 0)),
            pl.BlockSpec((64, 81), lambda n: (0, 0)),
            pl.BlockSpec((64, 1), lambda n: (0, 0)),
            pl.BlockSpec((32, 64), lambda n: (0, 0)),
            pl.BlockSpec((32, 1), lambda n: (0, 0)),
            pl.BlockSpec((25, 32), lambda n: (0, 0)),
            pl.BlockSpec(memory_space=pltpu.MemorySpace.SMEM),   # b3 scalar
        ],
        out_specs=pl.BlockSpec((G, 1, MB), lambda n: (n, 0, 0)),
        scratch_shapes=[pltpu.VMEM((81, G * MA_pad), jnp.float32),
                        pltpu.VMEM((25, G * MA_pad), jnp.float32)],
        compiler_params=pltpu.CompilerParams(
            dimension_semantics=("parallel",),        # 2 TensorCores on v7x
            vmem_limit_bytes=32 * 1024 * 1024),       # safe on v5e/v6e/v7x
    )(x9, maskA, w1T, b1r, w2r, b2r, w3r, b3r)

    # strip the batch padding and the 4-wide pad columns, restore NCHW
    out_img = out_flat.reshape(Np, H, Wp)[:N, :, 4:4 + W]
    return out_img[:, None, :, :]


def reference_forward(x, p):
    """Pure-JAX reference replicating the PyTorch forward exactly (NCHW)."""
    dn = ("NCHW", "OIHW", "NCHW")

    def conv(inp, w, b, pad):
        out = jax.lax.conv_general_dilated(
            inp, w, window_strides=(1, 1),
            padding=[(pad, pad), (pad, pad)], dimension_numbers=dn,
            precision=jax.lax.Precision.HIGHEST)
        return out + b.reshape(1, -1, 1, 1)

    o = jax.nn.relu(conv(x, p["w1"], p["b1"], 4))
    o = jax.nn.relu(conv(o, p["w2"], p["b2"], 0))
    o = conv(o, p["w3"], p["b3"], 2)
    return x + o


if __name__ == "__main__":
    key = jax.random.PRNGKey(0)
    kp, kx = jax.random.split(key)
    params = make_params(kp)
    # batch 8 exercises the batched (4 images / grid step, 2 grid steps) path
    x = jax.random.normal(kx, (8, 1, 16, 16), jnp.float32)        # NCHW, C=1

    out = jax.block_until_ready(srcnn_forward(x, params))

    ref = reference_forward(x, params)
    err = float(jnp.max(jnp.abs(out - ref)))
    if out.shape != (8, 1, 16, 16) or not np.isfinite(err) or err > 2e-2:
        raise SystemExit(f"MISMATCH: shape={out.shape} max_abs_err={err}")
    print("KERNEL_OK")
</pallas_src>

<mosaic_0001>
module attributes {stable_mosaic.version = 11 : i64} {
  func.func @_srcnn_kernel(%arg0: i32, %arg1: memref<4x9x640xf32, #tpu.memory_space<vmem>>, %arg2: memref<1x2048xf32, #tpu.memory_space<vmem>>, %arg3: memref<64x81xbf16, #tpu.memory_space<vmem>>, %arg4: memref<64x1xf32, #tpu.memory_space<vmem>>, %arg5: memref<32x64xbf16, #tpu.memory_space<vmem>>, %arg6: memref<32x1xf32, #tpu.memory_space<vmem>>, %arg7: memref<25x32xbf16, #tpu.memory_space<vmem>>, %arg8: memref<1x1xf32, #tpu.memory_space<smem>>, %arg9: memref<4x1x384xf32, #tpu.memory_space<vmem>>, %arg10: memref<81x2048xf32, #tpu.memory_space<vmem>>, %arg11: memref<25x2048xf32, #tpu.memory_space<vmem>>) attributes {dimension_semantics = [#tpu.dimension_semantics<parallel>], iteration_bounds = array<i64: 2>, scalar_prefetch = 0 : i64, scratch_operands = 2 : i64, tpu.core_type = #tpu.core_type<tc>, window_params = [{transform_indices = @transform_0, window_bounds = array<i64: 4, 9, 640>}, {pipeline_mode = #tpu.pipeline_mode<synchronous>, transform_indices = @transform_1, window_bounds = array<i64: 1, 2048>}, {pipeline_mode = #tpu.pipeline_mode<synchronous>, transform_indices = @transform_2, window_bounds = array<i64: 64, 81>}, {pipeline_mode = #tpu.pipeline_mode<synchronous>, transform_indices = @transform_3, window_bounds = array<i64: 64, 1>}, {pipeline_mode = #tpu.pipeline_mode<synchronous>, transform_indices = @transform_4, window_bounds = array<i64: 32, 64>}, {pipeline_mode = #tpu.pipeline_mode<synchronous>, transform_indices = @transform_5, window_bounds = array<i64: 32, 1>}, {pipeline_mode = #tpu.pipeline_mode<synchronous>, transform_indices = @transform_6, window_bounds = array<i64: 25, 32>}, {transform_indices = @transform_7, window_bounds = array<i64: 1, 1>}, {transform_indices = @transform_8, window_bounds = array<i64: 4, 1, 384>}]} {
    %c0 = arith.constant 0 : index
    %c0_0 = arith.constant 0 : index
    %c106 = arith.constant 106 : index
    %0 = vector.load %arg1[%c0, %c0_0, %c106] : memref<4x9x640xf32, #tpu.memory_space<vmem>>, vector<1x9x512xf32>
    %1 = vector.shape_cast %0 : vector<1x9x512xf32> to vector<9x512xf32>
    %c0_1 = arith.constant 0 : index
    %c0_2 = arith.constant 0 : index
    %2 = vector.load %arg10[%c0_1, %c0_2] : memref<81x2048xf32, #tpu.memory_space<vmem>>, vector<9x512xf32>
    tpu.vector_store %arg10[%c0_1, %c0_2], %1 {strides = array<i32>} : memref<81x2048xf32, #tpu.memory_space<vmem>>, vector<9x512xf32>,
    %c0_3 = arith.constant 0 : index
    %c0_4 = arith.constant 0 : index
    %c107 = arith.constant 107 : index
    %3 = vector.load %arg1[%c0_3, %c0_4, %c107] : memref<4x9x640xf32, #tpu.memory_space<vmem>>, vector<1x9x512xf32>
    %4 = vector.shape_cast %3 : vector<1x9x512xf32> to vector<9x512xf32>
    %c9 = arith.constant 9 : index
    %c0_5 = arith.constant 0 : index
    %5 = vector.load %arg10[%c9, %c0_5] : memref<81x2048xf32, #tpu.memory_space<vmem>>, vector<9x512xf32>
    tpu.vector_store %arg10[%c9, %c0_5], %4 {strides = array<i32>} : memref<81x2048xf32, #tpu.memory_space<vmem>>, vector<9x512xf32>,
    %c0_6 = arith.constant 0 : index
    %c0_7 = arith.constant 0 : index
    %c108 = arith.constant 108 : index
    %6 = vector.load %arg1[%c0_6, %c0_7, %c108] : memref<4x9x640xf32, #tpu.memory_space<vmem>>, vector<1x9x512xf32>
    %7 = vector.shape_cast %6 : vector<1x9x512xf32> to vector<9x512xf32>
    %c18 = arith.constant 18 : index
    %c0_8 = arith.constant 0 : index
    %8 = vector.load %arg10[%c18, %c0_8] : memref<81x2048xf32, #tpu.memory_space<vmem>>, vector<9x512xf32>
    tpu.vector_store %arg10[%c18, %c0_8], %7 {strides = array<i32>} : memref<81x2048xf32, #tpu.memory_space<vmem>>, vector<9x512xf32>,
    %c0_9 = arith.constant 0 : index
    %c0_10 = arith.constant 0 : index
    %c109 = arith.constant 109 : index
    %9 = vector.load %arg1[%c0_9, %c0_10, %c109] : memref<4x9x640xf32, #tpu.memory_space<vmem>>, vector<1x9x512xf32>
    %10 = vector.shape_cast %9 : vector<1x9x512xf32> to vector<9x512xf32>
    %c27 = arith.constant 27 : index
    %c0_11 = arith.constant 0 : index
    %11 = vector.load %arg10[%c27, %c0_11] : memref<81x2048xf32, #tpu.memory_space<vmem>>, vector<9x512xf32>
    tpu.vector_store %arg10[%c27, %c0_11], %10 {strides = array<i32>} : memref<81x2048xf32, #tpu.memory_space<vmem>>, vector<9x512xf32>,
    %c0_12 = arith.constant 0 : index
    %c0_13 = arith.constant 0 : index
    %c110 = arith.constant 110 : index
    %12 = vector.load %arg1[%c0_12, %c0_13, %c110] : memref<4x9x640xf32, #tpu.memory_space<vmem>>, vector<1x9x512xf32>
    %13 = vector.shape_cast %12 : vector<1x9x512xf32> to vector<9x512xf32>
    %c36 = arith.constant 36 : index
    %c0_14 = arith.constant 0 : index
    %14 = vector.load %arg10[%c36, %c0_14] : memref<81x2048xf32, #tpu.memory_space<vmem>>, vector<9x512xf32>
    tpu.vector_store %arg10[%c36, %c0_14], %13 {strides = array<i32>} : memref<81x2048xf32, #tpu.memory_space<vmem>>, vector<9x512xf32>,
    %c0_15 = arith.constant 0 : index
    %c0_16 = arith.constant 0 : index
    %c111 = arith.constant 111 : index
    %15 = vector.load %arg1[%c0_15, %c0_16, %c111] : memref<4x9x640xf32, #tpu.memory_space<vmem>>, vector<1x9x512xf32>
    %16 = vector.shape_cast %15 : vector<1x9x512xf32> to vector<9x512xf32>
    %c45 = arith.constant 45 : index
    %c0_17 = arith.constant 0 : index
    %17 = vector.load %arg10[%c45, %c0_17] : memref<81x2048xf32, #tpu.memory_space<vmem>>, vector<9x512xf32>
    tpu.vector_store %arg10[%c45, %c0_17], %16 {strides = array<i32>} : memref<81x2048xf32, #tpu.memory_space<vmem>>, vector<9x512xf32>,
    %c0_18 = arith.constant 0 : index
    %c0_19 = arith.constant 0 : index
    %c112 = arith.constant 112 : index
    %18 = vector.load %arg1[%c0_18, %c0_19, %c112] : memref<4x9x640xf32, #tpu.memory_space<vmem>>, vector<1x9x512xf32>
    %19 = vector.shape_cast %18 : vector<1x9x512xf32> to vector<9x512xf32>
    %c54 = arith.constant 54 : index
    %c0_20 = arith.constant 0 : index
    %20 = vector.load %arg10[%c54, %c0_20] : memref<81x2048xf32, #tpu.memory_space<vmem>>, vector<9x512xf32>
    tpu.vector_store %arg10[%c54, %c0_20], %19 {strides = array<i32>} : memref<81x2048xf32, #tpu.memory_space<vmem>>, vector<9x512xf32>,
    %c0_21 = arith.constant 0 : index
    %c0_22 = arith.constant 0 : index
    %c113 = arith.constant 113 : index
    %21 = vector.load %arg1[%c0_21, %c0_22, %c113] : memref<4x9x640xf32, #tpu.memory_space<vmem>>, vector<1x9x512xf32>
    %22 = vector.shape_cast %21 : vector<1x9x512xf32> to vector<9x512xf32>
    %c63 = arith.constant 63 : index
    %c0_23 = arith.constant 0 : index
    %23 = vector.load %arg10[%c63, %c0_23] : memref<81x2048xf32, #tpu.memory_space<vmem>>, vector<9x512xf32>
    tpu.vector_store %arg10[%c63, %c0_23], %22 {strides = array<i32>} : memref<81x2048xf32, #tpu.memory_space<vmem>>, vector<9x512xf32>,
    %c0_24 = arith.constant 0 : index
    %c0_25 = arith.constant 0 : index
    %c114 = arith.constant 114 : index
    %24 = vector.load %arg1[%c0_24, %c0_25, %c114] : memref<4x9x640xf32, #tpu.memory_space<vmem>>, vector<1x9x512xf32>
    %25 = vector.shape_cast %24 : vector<1x9x512xf32> to vector<9x512xf32>
    %c72 = arith.constant 72 : index
    %c0_26 = arith.constant 0 : index
    %26 = vector.load %arg10[%c72, %c0_26] : memref<81x2048xf32, #tpu.memory_space<vmem>>, vector<9x512xf32>
    tpu.vector_store %arg10[%c72, %c0_26], %25 {strides = array<i32>} : memref<81x2048xf32, #tpu.memory_space<vmem>>, vector<9x512xf32>,
    %c1 = arith.constant 1 : index
    %c0_27 = arith.constant 0 : index
    %c106_28 = arith.constant 106 : index
    %27 = vector.load %arg1[%c1, %c0_27, %c106_28] : memref<4x9x640xf32, #tpu.memory_space<vmem>>, vector<1x9x512xf32>
    %28 = vector.shape_cast %27 : vector<1x9x512xf32> to vector<9x512xf32>
    %c0_29 = arith.constant 0 : index
    %c512 = arith.constant 512 : index
    %29 = vector.load %arg10[%c0_29, %c512] : memref<81x2048xf32, #tpu.memory_space<vmem>>, vector<9x512xf32>
    tpu.vector_store %arg10[%c0_29, %c512], %28 {strides = array<i32>} : memref<81x2048xf32, #tpu.memory_space<vmem>>, vector<9x512xf32>,
    %c1_30 = arith.constant 1 : index
    %c0_31 = arith.constant 0 : index
    %c107_32 = arith.constant 107 : index
    %30 = vector.load %arg1[%c1_30, %c0_31, %c107_32] : memref<4x9x640xf32, #tpu.memory_space<vmem>>, vector<1x9x512xf32>
    %31 = vector.shape_cast %30 : vector<1x9x512xf32> to vector<9x512xf32>
    %c9_33 = arith.constant 9 : index
    %c512_34 = arith.constant 512 : index
    %32 = vector.load %arg10[%c9_33, %c512_34] : memref<81x2048xf32, #tpu.memory_space<vmem>>, vector<9x512xf32>
    tpu.vector_store %arg10[%c9_33, %c512_34], %31 {strides = array<i32>} : memref<81x2048xf32, #tpu.memory_space<vmem>>, vector<9x512xf32>,
    %c1_35 = arith.constant 1 : index
    %c0_36 = arith.constant 0 : index
    %c108_37 = arith.constant 108 : index
    %33 = vector.load %arg1[%c1_35, %c0_36, %c108_37] : memref<4x9x640xf32, #tpu.memory_space<vmem>>, vector<1x9x512xf32>
    %34 = vector.shape_cast %33 : vector<1x9x512xf32> to vector<9x512xf32>
    %c18_38 = arith.constant 18 : index
    %c512_39 = arith.constant 512 : index
    %35 = vector.load %arg10[%c18_38, %c512_39] : memref<81x2048xf32, #tpu.memory_space<vmem>>, vector<9x512xf32>
    tpu.vector_store %arg10[%c18_38, %c512_39], %34 {strides = array<i32>} : memref<81x2048xf32, #tpu.memory_space<vmem>>, vector<9x512xf32>,
    %c1_40 = arith.constant 1 : index
    %c0_41 = arith.constant 0 : index
    %c109_42 = arith.constant 109 : index
    %36 = vector.load %arg1[%c1_40, %c0_41, %c109_42] : memref<4x9x640xf32, #tpu.memory_space<vmem>>, vector<1x9x512xf32>
    %37 = vector.shape_cast %36 : vector<1x9x512xf32> to vector<9x512xf32>
    %c27_43 = arith.constant 27 : index
    %c512_44 = arith.constant 512 : index
    %38 = vector.load %arg10[%c27_43, %c512_44] : memref<81x2048xf32, #tpu.memory_space<vmem>>, vector<9x512xf32>
    tpu.vector_store %arg10[%c27_43, %c512_44], %37 {strides = array<i32>} : memref<81x2048xf32, #tpu.memory_space<vmem>>, vector<9x512xf32>,
    %c1_45 = arith.constant 1 : index
    %c0_46 = arith.constant 0 : index
    %c110_47 = arith.constant 110 : index
    %39 = vector.load %arg1[%c1_45, %c0_46, %c110_47] : memref<4x9x640xf32, #tpu.memory_space<vmem>>, vector<1x9x512xf32>
    %40 = vector.shape_cast %39 : vector<1x9x512xf32> to vector<9x512xf32>
    %c36_48 = arith.constant 36 : index
    %c512_49 = arith.constant 512 : index
    %41 = vector.load %arg10[%c36_48, %c512_49] : memref<81x2048xf32, #tpu.memory_space<vmem>>, vector<9x512xf32>
    tpu.vector_store %arg10[%c36_48, %c512_49], %40 {strides = array<i32>} : memref<81x2048xf32, #tpu.memory_space<vmem>>, vector<9x512xf32>,
    %c1_50 = arith.constant 1 : index
    %c0_51 = arith.constant 0 : index
    %c111_52 = arith.constant 111 : index
    %42 = vector.load %arg1[%c1_50, %c0_51, %c111_52] : memref<4x9x640xf32, #tpu.memory_space<vmem>>, vector<1x9x512xf32>
    %43 = vector.shape_cast %42 : vector<1x9x512xf32> to vector<9x512xf32>
    %c45_53 = arith.constant 45 : index
    %c512_54 = arith.constant 512 : index
    %44 = vector.load %arg10[%c45_53, %c512_54] : memref<81x2048xf32, #tpu.memory_space<vmem>>, vector<9x512xf32>
    tpu.vector_store %arg10[%c45_53, %c512_54], %43 {strides = array<i32>} : memref<81x2048xf32, #tpu.memory_space<vmem>>, vector<9x512xf32>,
    %c1_55 = arith.constant 1 : index
    %c0_56 = arith.constant 0 : index
    %c112_57 = arith.constant 112 : index
    %45 = vector.load %arg1[%c1_55, %c0_56, %c112_57] : memref<4x9x640xf32, #tpu.memory_space<vmem>>, vector<1x9x512xf32>
    %46 = vector.shape_cast %45 : vector<1x9x512xf32> to vector<9x512xf32>
    %c54_58 = arith.constant 54 : index
    %c512_59 = arith.constant 512 : index
    %47 = vector.load %arg10[%c54_58, %c512_59] : memref<81x2048xf32, #tpu.memory_space<vmem>>, vector<9x512xf32>
    tpu.vector_store %arg10[%c54_58, %c512_59], %46 {strides = array<i32>} : memref<81x2048xf32, #tpu.memory_space<vmem>>, vector<9x512xf32>,
    %c1_60 = arith.constant 1 : index
    %c0_61 = arith.constant 0 : index
    %c113_62 = arith.constant 113 : index
    %48 = vector.load %arg1[%c1_60, %c0_61, %c113_62] : memref<4x9x640xf32, #tpu.memory_space<vmem>>, vector<1x9x512xf32>
    %49 = vector.shape_cast %48 : vector<1x9x512xf32> to vector<9x512xf32>
    %c63_63 = arith.constant 63 : index
    %c512_64 = arith.constant 512 : index
    %50 = vector.load %arg10[%c63_63, %c512_64] : memref<81x2048xf32, #tpu.memory_space<vmem>>, vector<9x512xf32>
    tpu.vector_store %arg10[%c63_63, %c512_64], %49 {strides = array<i32>} : memref<81x2048xf32, #tpu.memory_space<vmem>>, vector<9x512xf32>,
    %c1_65 = arith.constant 1 : index
    %c0_66 = arith.constant 0 : index
    %c114_67 = arith.constant 114 : index
    %51 = vector.load %arg1[%c1_65, %c0_66, %c114_67] : memref<4x9x640xf32, #tpu.memory_space<vmem>>, vector<1x9x512xf32>
    %52 = vector.shape_cast %51 : vector<1x9x512xf32> to vector<9x512xf32>
    %c72_68 = arith.constant 72 : index
    %c512_69 = arith.constant 512 : index
    %53 = vector.load %arg10[%c72_68, %c512_69] : memref<81x2048xf32, #tpu.memory_space<vmem>>, vector<9x512xf32>
    tpu.vector_store %arg10[%c72_68, %c512_69], %52 {strides = array<i32>} : memref<81x2048xf32, #tpu.memory_space<vmem>>, vector<9x512xf32>,
    %c2 = arith.constant 2 : index
    %c0_70 = arith.constant 0 : index
    %c106_71 = arith.constant 106 : index
    %54 = vector.load %arg1[%c2, %c0_70, %c106_71] : memref<4x9x640xf32, #tpu.memory_space<vmem>>, vector<1x9x512xf32>
    %55 = vector.shape_cast %54 : vector<1x9x512xf32> to vector<9x512xf32>
    %c0_72 = arith.constant 0 : index
    %c1024 = arith.constant 1024 : index
    %56 = vector.load %arg10[%c0_72, %c1024] : memref<81x2048xf32, #tpu.memory_space<vmem>>, vector<9x512xf32>
    tpu.vector_store %arg10[%c0_72, %c1024], %55 {strides = array<i32>} : memref<81x2048xf32, #tpu.memory_space<vmem>>, vector<9x512xf32>,
    %c2_73 = arith.constant 2 : index
    %c0_74 = arith.constant 0 : index
    %c107_75 = arith.constant 107 : index
    %57 = vector.load %arg1[%c2_73, %c0_74, %c107_75] : memref<4x9x640xf32, #tpu.memory_space<vmem>>, vector<1x9x512xf32>
    %58 = vector.shape_cast %57 : vector<1x9x512xf32> to vector<9x512xf32>
    %c9_76 = arith.constant 9 : index
    %c1024_77 = arith.constant 1024 : index
    %59 = vector.load %arg10[%c9_76, %c1024_77] : memref<81x2048xf32, #tpu.memory_space<vmem>>, vector<9x512xf32>
    tpu.vector_store %arg10[%c9_76, %c1024_77], %58 {strides = array<i32>} : memref<81x2048xf32, #tpu.memory_space<vmem>>, vector<9x512xf32>,
    %c2_78 = arith.constant 2 : index
    %c0_79 = arith.constant 0 : index
    %c108_80 = arith.constant 108 : index
    %60 = vector.load %arg1[%c2_78, %c0_79, %c108_80] : memref<4x9x640xf32, #tpu.memory_space<vmem>>, vector<1x9x512xf32>
    %61 = vector.shape_cast %60 : vector<1x9x512xf32> to vector<9x512xf32>
    %c18_81 = arith.constant 18 : index
    %c1024_82 = arith.constant 1024 : index
    %62 = vector.load %arg10[%c18_81, %c1024_82] : memref<81x2048xf32, #tpu.memory_space<vmem>>, vector<9x512xf32>
    tpu.vector_store %arg10[%c18_81, %c1024_82], %61 {strides = array<i32>} : memref<81x2048xf32, #tpu.memory_space<vmem>>, vector<9x512xf32>,
    %c2_83 = arith.constant 2 : index
    %c0_84 = arith.constant 0 : index
    %c109_85 = arith.constant 109 : index
    %63 = vector.load %arg1[%c2_83, %c0_84, %c109_85] : memref<4x9x640xf32, #tpu.memory_space<vmem>>, vector<1x9x512xf32>
    %64 = vector.shape_cast %63 : vector<1x9x512xf32> to vector<9x512xf32>
    %c27_86 = arith.constant 27 : index
    %c1024_87 = arith.constant 1024 : index
    %65 = vector.load %arg10[%c27_86, %c1024_87] : memref<81x2048xf32, #tpu.memory_space<vmem>>, vector<9x512xf32>
    tpu.vector_store %arg10[%c27_86, %c1024_87], %64 {strides = array<i32>} : memref<81x2048xf32, #tpu.memory_space<vmem>>, vector<9x512xf32>,
    %c2_88 = arith.constant 2 : index
    %c0_89 = arith.constant 0 : index
    %c110_90 = arith.constant 110 : index
    %66 = vector.load %arg1[%c2_88, %c0_89, %c110_90] : memref<4x9x640xf32, #tpu.memory_space<vmem>>, vector<1x9x512xf32>
    %67 = vector.shape_cast %66 : vector<1x9x512xf32> to vector<9x512xf32>
    %c36_91 = arith.constant 36 : index
    %c1024_92 = arith.constant 1024 : index
    %68 = vector.load %arg10[%c36_91, %c1024_92] : memref<81x2048xf32, #tpu.memory_space<vmem>>, vector<9x512xf32>
    tpu.vector_store %arg10[%c36_91, %c1024_92], %67 {strides = array<i32>} : memref<81x2048xf32, #tpu.memory_space<vmem>>, vector<9x512xf32>,
    %c2_93 = arith.constant 2 : index
    %c0_94 = arith.constant 0 : index
    %c111_95 = arith.constant 111 : index
    %69 = vector.load %arg1[%c2_93, %c0_94, %c111_95] : memref<4x9x640xf32, #tpu.memory_space<vmem>>, vector<1x9x512xf32>
    %70 = vector.shape_cast %69 : vector<1x9x512xf32> to vector<9x512xf32>
    %c45_96 = arith.constant 45 : index
    %c1024_97 = arith.constant 1024 : index
    %71 = vector.load %arg10[%c45_96, %c1024_97] : memref<81x2048xf32, #tpu.memory_space<vmem>>, vector<9x512xf32>
    tpu.vector_store %arg10[%c45_96, %c1024_97], %70 {strides = array<i32>} : memref<81x2048xf32, #tpu.memory_space<vmem>>, vector<9x512xf32>,
    %c2_98 = arith.constant 2 : index
    %c0_99 = arith.constant 0 : index
    %c112_100 = arith.constant 112 : index
    %72 = vector.load %arg1[%c2_98, %c0_99, %c112_100] : memref<4x9x640xf32, #tpu.memory_space<vmem>>, vector<1x9x512xf32>
    %73 = vector.shape_cast %72 : vector<1x9x512xf32> to vector<9x512xf32>
    %c54_101 = arith.constant 54 : index
    %c1024_102 = arith.constant 1024 : index
    %74 = vector.load %arg10[%c54_101, %c1024_102] : memref<81x2048xf32, #tpu.memory_space<vmem>>, vector<9x512xf32>
    tpu.vector_store %arg10[%c54_101, %c1024_102], %73 {strides = array<i32>} : memref<81x2048xf32, #tpu.memory_space<vmem>>, vector<9x512xf32>,
    %c2_103 = arith.constant 2 : index
    %c0_104 = arith.constant 0 : index
    %c113_105 = arith.constant 113 : index
    %75 = vector.load %arg1[%c2_103, %c0_104, %c113_105] : memref<4x9x640xf32, #tpu.memory_space<vmem>>, vector<1x9x512xf32>
    %76 = vector.shape_cast %75 : vector<1x9x512xf32> to vector<9x512xf32>
    %c63_106 = arith.constant 63 : index
    %c1024_107 = arith.constant 1024 : index
    %77 = vector.load %arg10[%c63_106, %c1024_107] : memref<81x2048xf32, #tpu.memory_space<vmem>>, vector<9x512xf32>
    tpu.vector_store %arg10[%c63_106, %c1024_107], %76 {strides = array<i32>} : memref<81x2048xf32, #tpu.memory_space<vmem>>, vector<9x512xf32>,
    %c2_108 = arith.constant 2 : index
    %c0_109 = arith.constant 0 : index
    %c114_110 = arith.constant 114 : index
    %78 = vector.load %arg1[%c2_108, %c0_109, %c114_110] : memref<4x9x640xf32, #tpu.memory_space<vmem>>, vector<1x9x512xf32>
    %79 = vector.shape_cast %78 : vector<1x9x512xf32> to vector<9x512xf32>
    %c72_111 = arith.constant 72 : index
    %c1024_112 = arith.constant 1024 : index
    %80 = vector.load %arg10[%c72_111, %c1024_112] : memref<81x2048xf32, #tpu.memory_space<vmem>>, vector<9x512xf32>
    tpu.vector_store %arg10[%c72_111, %c1024_112], %79 {strides = array<i32>} : memref<81x2048xf32, #tpu.memory_space<vmem>>, vector<9x512xf32>,
    %c3 = arith.constant 3 : index
    %c0_113 = arith.constant 0 : index
    %c106_114 = arith.constant 106 : index
    %81 = vector.load %arg1[%c3, %c0_113, %c106_114] : memref<4x9x640xf32, #tpu.memory_space<vmem>>, vector<1x9x512xf32>
    %82 = vector.shape_cast %81 : vector<1x9x512xf32> to vector<9x512xf32>
    %c0_115 = arith.constant 0 : index
    %c1536 = arith.constant 1536 : index
    %83 = vector.load %arg10[%c0_115, %c1536] : memref<81x2048xf32, #tpu.memory_space<vmem>>, vector<9x512xf32>
    tpu.vector_store %arg10[%c0_115, %c1536], %82 {strides = array<i32>} : memref<81x2048xf32, #tpu.memory_space<vmem>>, vector<9x512xf32>,
    %c3_116 = arith.constant 3 : index
    %c0_117 = arith.constant 0 : index
    %c107_118 = arith.constant 107 : index
    %84 = vector.load %arg1[%c3_116, %c0_117, %c107_118] : memref<4x9x640xf32, #tpu.memory_space<vmem>>, vector<1x9x512xf32>
    %85 = vector.shape_cast %84 : vector<1x9x512xf32> to vector<9x512xf32>
    %c9_119 = arith.constant 9 : index
    %c1536_120 = arith.constant 1536 : index
    %86 = vector.load %arg10[%c9_119, %c1536_120] : memref<81x2048xf32, #tpu.memory_space<vmem>>, vector<9x512xf32>
    tpu.vector_store %arg10[%c9_119, %c1536_120], %85 {strides = array<i32>} : memref<81x2048xf32, #tpu.memory_space<vmem>>, vector<9x512xf32>,
    %c3_121 = arith.constant 3 : index
    %c0_122 = arith.constant 0 : index
    %c108_123 = arith.constant 108 : index
    %87 = vector.load %arg1[%c3_121, %c0_122, %c108_123] : memref<4x9x640xf32, #tpu.memory_space<vmem>>, vector<1x9x512xf32>
    %88 = vector.shape_cast %87 : vector<1x9x512xf32> to vector<9x512xf32>
    %c18_124 = arith.constant 18 : index
    %c1536_125 = arith.constant 1536 : index
    %89 = vector.load %arg10[%c18_124, %c1536_125] : memref<81x2048xf32, #tpu.memory_space<vmem>>, vector<9x512xf32>
    tpu.vector_store %arg10[%c18_124, %c1536_125], %88 {strides = array<i32>} : memref<81x2048xf32, #tpu.memory_space<vmem>>, vector<9x512xf32>,
    %c3_126 = arith.constant 3 : index
    %c0_127 = arith.constant 0 : index
    %c109_128 = arith.constant 109 : index
    %90 = vector.load %arg1[%c3_126, %c0_127, %c109_128] : memref<4x9x640xf32, #tpu.memory_space<vmem>>, vector<1x9x512xf32>
    %91 = vector.shape_cast %90 : vector<1x9x512xf32> to vector<9x512xf32>
    %c27_129 = arith.constant 27 : index
    %c1536_130 = arith.constant 1536 : index
    %92 = vector.load %arg10[%c27_129, %c1536_130] : memref<81x2048xf32, #tpu.memory_space<vmem>>, vector<9x512xf32>
    tpu.vector_store %arg10[%c27_129, %c1536_130], %91 {strides = array<i32>} : memref<81x2048xf32, #tpu.memory_space<vmem>>, vector<9x512xf32>,
    %c3_131 = arith.constant 3 : index
    %c0_132 = arith.constant 0 : index
    %c110_133 = arith.constant 110 : index
    %93 = vector.load %arg1[%c3_131, %c0_132, %c110_133] : memref<4x9x640xf32, #tpu.memory_space<vmem>>, vector<1x9x512xf32>
    %94 = vector.shape_cast %93 : vector<1x9x512xf32> to vector<9x512xf32>
    %c36_134 = arith.constant 36 : index
    %c1536_135 = arith.constant 1536 : index
    %95 = vector.load %arg10[%c36_134, %c1536_135] : memref<81x2048xf32, #tpu.memory_space<vmem>>, vector<9x512xf32>
    tpu.vector_store %arg10[%c36_134, %c1536_135], %94 {strides = array<i32>} : memref<81x2048xf32, #tpu.memory_space<vmem>>, vector<9x512xf32>,
    %c3_136 = arith.constant 3 : index
    %c0_137 = arith.constant 0 : index
    %c111_138 = arith.constant 111 : index
    %96 = vector.load %arg1[%c3_136, %c0_137, %c111_138] : memref<4x9x640xf32, #tpu.memory_space<vmem>>, vector<1x9x512xf32>
    %97 = vector.shape_cast %96 : vector<1x9x512xf32> to vector<9x512xf32>
    %c45_139 = arith.constant 45 : index
    %c1536_140 = arith.constant 1536 : index
    %98 = vector.load %arg10[%c45_139, %c1536_140] : memref<81x2048xf32, #tpu.memory_space<vmem>>, vector<9x512xf32>
    tpu.vector_store %arg10[%c45_139, %c1536_140], %97 {strides = array<i32>} : memref<81x2048xf32, #tpu.memory_space<vmem>>, vector<9x512xf32>,
    %c3_141 = arith.constant 3 : index
    %c0_142 = arith.constant 0 : index
    %c112_143 = arith.constant 112 : index
    %99 = vector.load %arg1[%c3_141, %c0_142, %c112_143] : memref<4x9x640xf32, #tpu.memory_space<vmem>>, vector<1x9x512xf32>
    %100 = vector.shape_cast %99 : vector<1x9x512xf32> to vector<9x512xf32>
    %c54_144 = arith.constant 54 : index
    %c1536_145 = arith.constant 1536 : index
    %101 = vector.load %arg10[%c54_144, %c1536_145] : memref<81x2048xf32, #tpu.memory_space<vmem>>, vector<9x512xf32>
    tpu.vector_store %arg10[%c54_144, %c1536_145], %100 {strides = array<i32>} : memref<81x2048xf32, #tpu.memory_space<vmem>>, vector<9x512xf32>,
    %c3_146 = arith.constant 3 : index
    %c0_147 = arith.constant 0 : index
    %c113_148 = arith.constant 113 : index
    %102 = vector.load %arg1[%c3_146, %c0_147, %c113_148] : memref<4x9x640xf32, #tpu.memory_space<vmem>>, vector<1x9x512xf32>
    %103 = vector.shape_cast %102 : vector<1x9x512xf32> to vector<9x512xf32>
    %c63_149 = arith.constant 63 : index
    %c1536_150 = arith.constant 1536 : index
    %104 = vector.load %arg10[%c63_149, %c1536_150] : memref<81x2048xf32, #tpu.memory_space<vmem>>, vector<9x512xf32>
    tpu.vector_store %arg10[%c63_149, %c1536_150], %103 {strides = array<i32>} : memref<81x2048xf32, #tpu.memory_space<vmem>>, vector<9x512xf32>,
    %c3_151 = arith.constant 3 : index
    %c0_152 = arith.constant 0 : index
    %c114_153 = arith.constant 114 : index
    %105 = vector.load %arg1[%c3_151, %c0_152, %c114_153] : memref<4x9x640xf32, #tpu.memory_space<vmem>>, vector<1x9x512xf32>
    %106 = vector.shape_cast %105 : vector<1x9x512xf32> to vector<9x512xf32>
    %c72_154 = arith.constant 72 : index
    %c1536_155 = arith.constant 1536 : index
    %107 = vector.load %arg10[%c72_154, %c1536_155] : memref<81x2048xf32, #tpu.memory_space<vmem>>, vector<9x512xf32>
    tpu.vector_store %arg10[%c72_154, %c1536_155], %106 {strides = array<i32>} : memref<81x2048xf32, #tpu.memory_space<vmem>>, vector<9x512xf32>,
    %c0_156 = arith.constant 0 : index
    %c0_157 = arith.constant 0 : index
    %108 = vector.load %arg3[%c0_156, %c0_157] : memref<64x81xbf16, #tpu.memory_space<vmem>>, vector<64x81xbf16>
    %c0_158 = arith.constant 0 : index
    %c0_159 = arith.constant 0 : index
    %109 = vector.load %arg10[%c0_158, %c0_159] : memref<81x2048xf32, #tpu.memory_space<vmem>>, vector<81x2048xf32>
    %110 = arith.truncf %109 : vector<81x2048xf32> to vector<81x2048xbf16>
    %cst = arith.constant dense<0.000000e+00> : vector<64x2048xf32>
    %111 = tpu.matmul %108, %110, %cst {dimension_numbers = #tpu.dot_dimension_numbers<[1], [0], [0], [1], [0, 0, 1, 1], [], []>} : vector<64x81xbf16>, vector<81x2048xbf16>, vector<64x2048xf32> -> vector<64x2048xf32>
    %c0_160 = arith.constant 0 : index
    %c0_161 = arith.constant 0 : index
    %112 = vector.load %arg4[%c0_160, %c0_161] : memref<64x1xf32, #tpu.memory_space<vmem>>, vector<64x1xf32>
    %113 = vector.broadcast %112 : vector<64x1xf32> to vector<64x2048xf32>
    %114 = arith.addf %111, %113 : vector<64x2048xf32>
    %cst_162 = arith.constant 0.000000e+00 : f32
    %115 = vector.broadcast %cst_162 : f32 to vector<64x2048xf32>
    %116 = arith.maximumf %114, %115 : vector<64x2048xf32>
    %c0_163 = arith.constant 0 : index
    %c0_164 = arith.constant 0 : index
    %117 = vector.load %arg5[%c0_163, %c0_164] : memref<32x64xbf16, #tpu.memory_space<vmem>>, vector<32x64xbf16>
    %118 = arith.truncf %116 : vector<64x2048xf32> to vector<64x2048xbf16>
    %cst_165 = arith.constant dense<0.000000e+00> : vector<32x2048xf32>
    %119 = tpu.matmul %117, %118, %cst_165 {dimension_numbers = #tpu.dot_dimension_numbers<[1], [0], [0], [1], [0, 0, 1, 1], [], []>} : vector<32x64xbf16>, vector<64x2048xbf16>, vector<32x2048xf32> -> vector<32x2048xf32>
    %c0_166 = arith.constant 0 : index
    %c0_167 = arith.constant 0 : index
    %120 = vector.load %arg6[%c0_166, %c0_167] : memref<32x1xf32, #tpu.memory_space<vmem>>, vector<32x1xf32>
    %121 = vector.broadcast %120 : vector<32x1xf32> to vector<32x2048xf32>
    %122 = arith.addf %119, %121 : vector<32x2048xf32>
    %cst_168 = arith.constant 0.000000e+00 : f32
    %123 = vector.broadcast %cst_168 : f32 to vector<32x2048xf32>
    %124 = arith.maximumf %122, %123 : vector<32x2048xf32>
    %c0_169 = arith.constant 0 : index
    %c0_170 = arith.constant 0 : index
    %125 = vector.load %arg2[%c0_169, %c0_170] : memref<1x2048xf32, #tpu.memory_space<vmem>>, vector<1x2048xf32>
    %126 = vector.broadcast %125 : vector<1x2048xf32> to vector<32x2048xf32>
    %127 = arith.mulf %124, %126 : vector<32x2048xf32>
    %c0_171 = arith.constant 0 : index
    %c0_172 = arith.constant 0 : index
    %128 = vector.load %arg7[%c0_171, %c0_172] : memref<25x32xbf16, #tpu.memory_space<vmem>>, vector<25x32xbf16>
    %129 = arith.truncf %127 : vector<32x2048xf32> to vector<32x2048xbf16>
    %cst_173 = arith.constant dense<0.000000e+00> : vector<25x2048xf32>
    %130 = tpu.matmul %128, %129, %cst_173 {dimension_numbers = #tpu.dot_dimension_numbers<[1], [0], [0], [1], [0, 0, 1, 1], [], []>} : vector<25x32xbf16>, vector<32x2048xbf16>, vector<25x2048xf32> -> vector<25x2048xf32>
    %c0_174 = arith.constant 0 : index
    %c0_175 = arith.constant 0 : index
    %131 = vector.load %arg11[%c0_174, %c0_175] : memref<25x2048xf32, #tpu.memory_space<vmem>>, vector<25x2048xf32>
    tpu.vector_store %arg11[%c0_174, %c0_175], %130 {strides = array<i32>} : memref<25x2048xf32, #tpu.memory_space<vmem>>, vector<25x2048xf32>,
    %c0_176 = arith.constant 0 : index
    %c0_177 = arith.constant 0 : index
    %132 = memref.load %arg8[%c0_176, %c0_177] : memref<1x1xf32, #tpu.memory_space<smem>>
    %c0_178 = arith.constant 0 : index
    %c0_179 = arith.constant 0 : index
    %c256 = arith.constant 256 : index
    %133 = vector.load %arg1[%c0_178, %c0_179, %c256] : memref<4x9x640xf32, #tpu.memory_space<vmem>>, vector<1x1x384xf32>
    %134 = vector.shape_cast %133 : vector<1x1x384xf32> to vector<1x384xf32>
    %135 = vector.broadcast %132 : f32 to vector<1x384xf32>
    %136 = arith.addf %134, %135 : vector<1x384xf32>
    %c0_180 = arith.constant 0 : index
    %c0_181 = arith.constant 0 : index
    %137 = vector.load %arg11[%c0_180, %c0_181] : memref<25x2048xf32, #tpu.memory_space<vmem>>, vector<1x384xf32>
    %c1_182 = arith.constant 1 : index
    %c1_183 = arith.constant 1 : index
    %138 = vector.load %arg11[%c1_182, %c1_183] : memref<25x2048xf32, #tpu.memory_space<vmem>>, vector<1x384xf32>
    %c2_184 = arith.constant 2 : index
    %c2_185 = arith.constant 2 : index
    %139 = vector.load %arg11[%c2_184, %c2_185] : memref<25x2048xf32, #tpu.memory_space<vmem>>, vector<1x384xf32>
    %c3_186 = arith.constant 3 : index
    %c3_187 = arith.constant 3 : index
    %140 = vector.load %arg11[%c3_186, %c3_187] : memref<25x2048xf32, #tpu.memory_space<vmem>>, vector<1x384xf32>
    %c4 = arith.constant 4 : index
    %c4_188 = arith.constant 4 : index
    %141 = vector.load %arg11[%c4, %c4_188] : memref<25x2048xf32, #tpu.memory_space<vmem>>, vector<1x384xf32>
    %c5 = arith.constant 5 : index
    %c24 = arith.constant 24 : index
    %142 = vector.load %arg11[%c5, %c24] : memref<25x2048xf32, #tpu.memory_space<vmem>>, vector<1x384xf32>
    %c6 = arith.constant 6 : index
    %c25 = arith.constant 25 : index
    %143 = vector.load %arg11[%c6, %c25] : memref<25x2048xf32, #tpu.memory_space<vmem>>, vector<1x384xf32>
    %c7 = arith.constant 7 : index
    %c26 = arith.constant 26 : index
    %144 = vector.load %arg11[%c7, %c26] : memref<25x2048xf32, #tpu.memory_space<vmem>>, vector<1x384xf32>
    %c8 = arith.constant 8 : index
    %c27_189 = arith.constant 27 : index
    %145 = vector.load %arg11[%c8, %c27_189] : memref<25x2048xf32, #tpu.memory_space<vmem>>, vector<1x384xf32>
    %c9_190 = arith.constant 9 : index
    %c28 = arith.constant 28 : index
    %146 = vector.load %arg11[%c9_190, %c28] : memref<25x2048xf32, #tpu.memory_space<vmem>>, vector<1x384xf32>
    %c10 = arith.constant 10 : index
    %c48 = arith.constant 48 : index
    %147 = vector.load %arg11[%c10, %c48] : memref<25x2048xf32, #tpu.memory_space<vmem>>, vector<1x384xf32>
    %c11 = arith.constant 11 : index
    %c49 = arith.constant 49 : index
    %148 = vector.load %arg11[%c11, %c49] : memref<25x2048xf32, #tpu.memory_space<vmem>>, vector<1x384xf32>
    %c12 = arith.constant 12 : index
    %c50 = arith.constant 50 : index
    %149 = vector.load %arg11[%c12, %c50] : memref<25x2048xf32, #tpu.memory_space<vmem>>, vector<1x384xf32>
    %c13 = arith.constant 13 : index
    %c51 = arith.constant 51 : index
    %150 = vector.load %arg11[%c13, %c51] : memref<25x2048xf32, #tpu.memory_space<vmem>>, vector<1x384xf32>
    %c14 = arith.constant 14 : index
    %c52 = arith.constant 52 : index
    %151 = vector.load %arg11[%c14, %c52] : memref<25x2048xf32, #tpu.memory_space<vmem>>, vector<1x384xf32>
    %c15 = arith.constant 15 : index
    %c72_191 = arith.constant 72 : index
    %152 = vector.load %arg11[%c15, %c72_191] : memref<25x2048xf32, #tpu.memory_space<vmem>>, vector<1x384xf32>
    %c16 = arith.constant 16 : index
    %c73 = arith.constant 73 : index
    %153 = vector.load %arg11[%c16, %c73] : memref<25x2048xf32, #tpu.memory_space<vmem>>, vector<1x384xf32>
    %c17 = arith.constant 17 : index
    %c74 = arith.constant 74 : index
    %154 = vector.load %arg11[%c17, %c74] : memref<25x2048xf32, #tpu.memory_space<vmem>>, vector<1x384xf32>
    %c18_192 = arith.constant 18 : index
    %c75 = arith.constant 75 : index
    %155 = vector.load %arg11[%c18_192, %c75] : memref<25x2048xf32, #tpu.memory_space<vmem>>, vector<1x384xf32>
    %c19 = arith.constant 19 : index
    %c76 = arith.constant 76 : index
    %156 = vector.load %arg11[%c19, %c76] : memref<25x2048xf32, #tpu.memory_space<vmem>>, vector<1x384xf32>
    %c20 = arith.constant 20 : index
    %c96 = arith.constant 96 : index
    %157 = vector.load %arg11[%c20, %c96] : memref<25x2048xf32, #tpu.memory_space<vmem>>, vector<1x384xf32>
    %c21 = arith.constant 21 : index
    %c97 = arith.constant 97 : index
    %158 = vector.load %arg11[%c21, %c97] : memref<25x2048xf32, #tpu.memory_space<vmem>>, vector<1x384xf32>
    %c22 = arith.constant 22 : index
    %c98 = arith.constant 98 : index
    %159 = vector.load %arg11[%c22, %c98] : memref<25x2048xf32, #tpu.memory_space<vmem>>, vector<1x384xf32>
    %c23 = arith.constant 23 : index
    %c99 = arith.constant 99 : index
    %160 = vector.load %arg11[%c23, %c99] : memref<25x2048xf32, #tpu.memory_space<vmem>>, vector<1x384xf32>
    %c24_193 = arith.constant 24 : index
    %c100 = arith.constant 100 : index
    %161 = vector.load %arg11[%c24_193, %c100] : memref<25x2048xf32, #tpu.memory_space<vmem>>, vector<1x384xf32>
    %162 = arith.addf %136, %137 : vector<1x384xf32>
    %163 = arith.addf %138, %139 : vector<1x384xf32>
    %164 = arith.addf %140, %141 : vector<1x384xf32>
    %165 = arith.addf %142, %143 : vector<1x384xf32>
    %166 = arith.addf %144, %145 : vector<1x384xf32>
    %167 = arith.addf %146, %147 : vector<1x384xf32>
    %168 = arith.addf %148, %149 : vector<1x384xf32>
    %169 = arith.addf %150, %151 : vector<1x384xf32>
    %170 = arith.addf %152, %153 : vector<1x384xf32>
    %171 = arith.addf %154, %155 : vector<1x384xf32>
    %172 = arith.addf %156, %157 : vector<1x384xf32>
    %173 = arith.addf %158, %159 : vector<1x384xf32>
    %174 = arith.addf %160, %161 : vector<1x384xf32>
    %175 = arith.addf %162, %163 : vector<1x384xf32>
    %176 = arith.addf %164, %165 : vector<1x384xf32>
    %177 = arith.addf %166, %167 : vector<1x384xf32>
    %178 = arith.addf %168, %169 : vector<1x384xf32>
    %179 = arith.addf %170, %171 : vector<1x384xf32>
    %180 = arith.addf %172, %173 : vector<1x384xf32>
    %181 = arith.addf %175, %176 : vector<1x384xf32>
    %182 = arith.addf %177, %178 : vector<1x384xf32>
    %183 = arith.addf %179, %180 : vector<1x384xf32>
    %184 = arith.addf %181, %182 : vector<1x384xf32>
    %185 = arith.addf %183, %174 : vector<1x384xf32>
    %186 = arith.addf %184, %185 : vector<1x384xf32>
    %c0_194 = arith.constant 0 : index
    %c0_195 = arith.constant 0 : index
    %c0_196 = arith.constant 0 : index
    %187 = vector.load %arg9[%c0_194, %c0_195, %c0_196] : memref<4x1x384xf32, #tpu.memory_space<vmem>>, vector<1x1x384xf32>
    %188 = vector.shape_cast %187 : vector<1x1x384xf32> to vector<1x384xf32>
    %189 = vector.shape_cast %186 : vector<1x384xf32> to vector<1x1x384xf32>
    tpu.vector_store %arg9[%c0_194, %c0_195, %c0_196], %189 {strides = array<i32>} : memref<4x1x384xf32, #tpu.memory_space<vmem>>, vector<1x1x384xf32>,
    %c1_197 = arith.constant 1 : index
    %c0_198 = arith.constant 0 : index
    %c256_199 = arith.constant 256 : index
    %190 = vector.load %arg1[%c1_197, %c0_198, %c256_199] : memref<4x9x640xf32, #tpu.memory_space<vmem>>, vector<1x1x384xf32>
    %191 = vector.shape_cast %190 : vector<1x1x384xf32> to vector<1x384xf32>
    %192 = vector.broadcast %132 : f32 to vector<1x384xf32>
    %193 = arith.addf %191, %192 : vector<1x384xf32>
    %c0_200 = arith.constant 0 : index
    %c512_201 = arith.constant 512 : index
    %194 = vector.load %arg11[%c0_200, %c512_201] : memref<25x2048xf32, #tpu.memory_space<vmem>>, vector<1x384xf32>
    %c1_202 = arith.constant 1 : index
    %c513 = arith.constant 513 : index
    %195 = vector.load %arg11[%c1_202, %c513] : memref<25x2048xf32, #tpu.memory_space<vmem>>, vector<1x384xf32>
    %c2_203 = arith.constant 2 : index
    %c514 = arith.constant 514 : index
    %196 = vector.load %arg11[%c2_203, %c514] : memref<25x2048xf32, #tpu.memory_space<vmem>>, vector<1x384xf32>
    %c3_204 = arith.constant 3 : index
    %c515 = arith.constant 515 : index
    %197 = vector.load %arg11[%c3_204, %c515] : memref<25x2048xf32, #tpu.memory_space<vmem>>, vector<1x384xf32>
    %c4_205 = arith.constant 4 : index
    %c516 = arith.constant 516 : index
    %198 = vector.load %arg11[%c4_205, %c516] : memref<25x2048xf32, #tpu.memory_space<vmem>>, vector<1x384xf32>
    %c5_206 = arith.constant 5 : index
    %c536 = arith.constant 536 : index
    %199 = vector.load %arg11[%c5_206, %c536] : memref<25x2048xf32, #tpu.memory_space<vmem>>, vector<1x384xf32>
    %c6_207 = arith.constant 6 : index
    %c537 = arith.constant 537 : index
    %200 = vector.load %arg11[%c6_207, %c537] : memref<25x2048xf32, #tpu.memory_space<vmem>>, vector<1x384xf32>
    %c7_208 = arith.constant 7 : index
    %c538 = arith.constant 538 : index
    %201 = vector.load %arg11[%c7_208, %c538] : memref<25x2048xf32, #tpu.memory_space<vmem>>, vector<1x384xf32>
    %c8_209 = arith.constant 8 : index
    %c539 = arith.constant 539 : index
    %202 = vector.load %arg11[%c8_209, %c539] : memref<25x2048xf32, #tpu.memory_space<vmem>>, vector<1x384xf32>
    %c9_210 = arith.constant 9 : index
    %c540 = arith.constant 540 : index
    %203 = vector.load %arg11[%c9_210, %c540] : memref<25x2048xf32, #tpu.memory_space<vmem>>, vector<1x384xf32>
    %c10_211 = arith.constant 10 : index
    %c560 = arith.constant 560 : index
    %204 = vector.load %arg11[%c10_211, %c560] : memref<25x2048xf32, #tpu.memory_space<vmem>>, vector<1x384xf32>
    %c11_212 = arith.constant 11 : index
    %c561 = arith.constant 561 : index
    %205 = vector.load %arg11[%c11_212, %c561] : memref<25x2048xf32, #tpu.memory_space<vmem>>, vector<1x384xf32>
    %c12_213 = arith.constant 12 : index
    %c562 = arith.constant 562 : index
    %206 = vector.load %arg11[%c12_213, %c562] : memref<25x2048xf32, #tpu.memory_space<vmem>>, vector<1x384xf32>
    %c13_214 = arith.constant 13 : index
    %c563 = arith.constant 563 : index
    %207 = vector.load %arg11[%c13_214, %c563] : memref<25x2048xf32, #tpu.memory_space<vmem>>, vector<1x384xf32>
    %c14_215 = arith.constant 14 : index
    %c564 = arith.constant 564 : index
    %208 = vector.load %arg11[%c14_215, %c564] : memref<25x2048xf32, #tpu.memory_space<vmem>>, vector<1x384xf32>
    %c15_216 = arith.constant 15 : index
    %c584 = arith.constant 584 : index
    %209 = vector.load %arg11[%c15_216, %c584] : memref<25x2048xf32, #tpu.memory_space<vmem>>, vector<1x384xf32>
    %c16_217 = arith.constant 16 : index
    %c585 = arith.constant 585 : index
    %210 = vector.load %arg11[%c16_217, %c585] : memref<25x2048xf32, #tpu.memory_space<vmem>>, vector<1x384xf32>
    %c17_218 = arith.constant 17 : index
    %c586 = arith.constant 586 : index
    %211 = vector.load %arg11[%c17_218, %c586] : memref<25x2048xf32, #tpu.memory_space<vmem>>, vector<1x384xf32>
    %c18_219 = arith.constant 18 : index
    %c587 = arith.constant 587 : index
    %212 = vector.load %arg11[%c18_219, %c587] : memref<25x2048xf32, #tpu.memory_space<vmem>>, vector<1x384xf32>
    %c19_220 = arith.constant 19 : index
    %c588 = arith.constant 588 : index
    %213 = vector.load %arg11[%c19_220, %c588] : memref<25x2048xf32, #tpu.memory_space<vmem>>, vector<1x384xf32>
    %c20_221 = arith.constant 20 : index
    %c608 = arith.constant 608 : index
    %214 = vector.load %arg11[%c20_221, %c608] : memref<25x2048xf32, #tpu.memory_space<vmem>>, vector<1x384xf32>
    %c21_222 = arith.constant 21 : index
    %c609 = arith.constant 609 : index
    %215 = vector.load %arg11[%c21_222, %c609] : memref<25x2048xf32, #tpu.memory_space<vmem>>, vector<1x384xf32>
    %c22_223 = arith.constant 22 : index
    %c610 = arith.constant 610 : index
    %216 = vector.load %arg11[%c22_223, %c610] : memref<25x2048xf32, #tpu.memory_space<vmem>>, vector<1x384xf32>
    %c23_224 = arith.constant 23 : index
    %c611 = arith.constant 611 : index
    %217 = vector.load %arg11[%c23_224, %c611] : memref<25x2048xf32, #tpu.memory_space<vmem>>, vector<1x384xf32>
    %c24_225 = arith.constant 24 : index
    %c612 = arith.constant 612 : index
    %218 = vector.load %arg11[%c24_225, %c612] : memref<25x2048xf32, #tpu.memory_space<vmem>>, vector<1x384xf32>
    %219 = arith.addf %193, %194 : vector<1x384xf32>
    %220 = arith.addf %195, %196 : vector<1x384xf32>
    %221 = arith.addf %197, %198 : vector<1x384xf32>
    %222 = arith.addf %199, %200 : vector<1x384xf32>
    %223 = arith.addf %201, %202 : vector<1x384xf32>
    %224 = arith.addf %203, %204 : vector<1x384xf32>
    %225 = arith.addf %205, %206 : vector<1x384xf32>
    %226 = arith.addf %207, %208 : vector<1x384xf32>
    %227 = arith.addf %209, %210 : vector<1x384xf32>
    %228 = arith.addf %211, %212 : vector<1x384xf32>
    %229 = arith.addf %213, %214 : vector<1x384xf32>
    %230 = arith.addf %215, %216 : vector<1x384xf32>
    %231 = arith.addf %217, %218 : vector<1x384xf32>
    %232 = arith.addf %219, %220 : vector<1x384xf32>
    %233 = arith.addf %221, %222 : vector<1x384xf32>
    %234 = arith.addf %223, %224 : vector<1x384xf32>
    %235 = arith.addf %225, %226 : vector<1x384xf32>
    %236 = arith.addf %227, %228 : vector<1x384xf32>
    %237 = arith.addf %229, %230 : vector<1x384xf32>
    %238 = arith.addf %232, %233 : vector<1x384xf32>
    %239 = arith.addf %234, %235 : vector<1x384xf32>
    %240 = arith.addf %236, %237 : vector<1x384xf32>
    %241 = arith.addf %238, %239 : vector<1x384xf32>
    %242 = arith.addf %240, %231 : vector<1x384xf32>
    %243 = arith.addf %241, %242 : vector<1x384xf32>
    %c1_226 = arith.constant 1 : index
    %c0_227 = arith.constant 0 : index
    %c0_228 = arith.constant 0 : index
    %244 = vector.load %arg9[%c1_226, %c0_227, %c0_228] : memref<4x1x384xf32, #tpu.memory_space<vmem>>, vector<1x1x384xf32>
    %245 = vector.shape_cast %244 : vector<1x1x384xf32> to vector<1x384xf32>
    %246 = vector.shape_cast %243 : vector<1x384xf32> to vector<1x1x384xf32>
    tpu.vector_store %arg9[%c1_226, %c0_227, %c0_228], %246 {strides = array<i32>} : memref<4x1x384xf32, #tpu.memory_space<vmem>>, vector<1x1x384xf32>,
    %c2_229 = arith.constant 2 : index
    %c0_230 = arith.constant 0 : index
    %c256_231 = arith.constant 256 : index
    %247 = vector.load %arg1[%c2_229, %c0_230, %c256_231] : memref<4x9x640xf32, #tpu.memory_space<vmem>>, vector<1x1x384xf32>
    %248 = vector.shape_cast %247 : vector<1x1x384xf32> to vector<1x384xf32>
    %249 = vector.broadcast %132 : f32 to vector<1x384xf32>
    %250 = arith.addf %248, %249 : vector<1x384xf32>
    %c0_232 = arith.constant 0 : index
    %c1024_233 = arith.constant 1024 : index
    %251 = vector.load %arg11[%c0_232, %c1024_233] : memref<25x2048xf32, #tpu.memory_space<vmem>>, vector<1x384xf32>
    %c1_234 = arith.constant 1 : index
    %c1025 = arith.constant 1025 : index
    %252 = vector.load %arg11[%c1_234, %c1025] : memref<25x2048xf32, #tpu.memory_space<vmem>>, vector<1x384xf32>
    %c2_235 = arith.constant 2 : index
    %c1026 = arith.constant 1026 : index
    %253 = vector.load %arg11[%c2_235, %c1026] : memref<25x2048xf32, #tpu.memory_space<vmem>>, vector<1x384xf32>
    %c3_236 = arith.constant 3 : index
    %c1027 = arith.constant 1027 : index
    %254 = vector.load %arg11[%c3_236, %c1027] : memref<25x2048xf32, #tpu.memory_space<vmem>>, vector<1x384xf32>
    %c4_237 = arith.constant 4 : index
    %c1028 = arith.constant 1028 : index
    %255 = vector.load %arg11[%c4_237, %c1028] : memref<25x2048xf32, #tpu.memory_space<vmem>>, vector<1x384xf32>
    %c5_238 = arith.constant 5 : index
    %c1048 = arith.constant 1048 : index
    %256 = vector.load %arg11[%c5_238, %c1048] : memref<25x2048xf32, #tpu.memory_space<vmem>>, vector<1x384xf32>
    %c6_239 = arith.constant 6 : index
    %c1049 = arith.constant 1049 : index
    %257 = vector.load %arg11[%c6_239, %c1049] : memref<25x2048xf32, #tpu.memory_space<vmem>>, vector<1x384xf32>
    %c7_240 = arith.constant 7 : index
    %c1050 = arith.constant 1050 : index
    %258 = vector.load %arg11[%c7_240, %c1050] : memref<25x2048xf32, #tpu.memory_space<vmem>>, vector<1x384xf32>
    %c8_241 = arith.constant 8 : index
    %c1051 = arith.constant 1051 : index
    %259 = vector.load %arg11[%c8_241, %c1051] : memref<25x2048xf32, #tpu.memory_space<vmem>>, vector<1x384xf32>
    %c9_242 = arith.constant 9 : index
    %c1052 = arith.constant 1052 : index
    %260 = vector.load %arg11[%c9_242, %c1052] : memref<25x2048xf32, #tpu.memory_space<vmem>>, vector<1x384xf32>
    %c10_243 = arith.constant 10 : index
    %c1072 = arith.constant 1072 : index
    %261 = vector.load %arg11[%c10_243, %c1072] : memref<25x2048xf32, #tpu.memory_space<vmem>>, vector<1x384xf32>
    %c11_244 = arith.constant 11 : index
    %c1073 = arith.constant 1073 : index
    %262 = vector.load %arg11[%c11_244, %c1073] : memref<25x2048xf32, #tpu.memory_space<vmem>>, vector<1x384xf32>
    %c12_245 = arith.constant 12 : index
    %c1074 = arith.constant 1074 : index
    %263 = vector.load %arg11[%c12_245, %c1074] : memref<25x2048xf32, #tpu.memory_space<vmem>>, vector<1x384xf32>
    %c13_246 = arith.constant 13 : index
    %c1075 = arith.constant 1075 : index
    %264 = vector.load %arg11[%c13_246, %c1075] : memref<25x2048xf32, #tpu.memory_space<vmem>>, vector<1x384xf32>
    %c14_247 = arith.constant 14 : index
    %c1076 = arith.constant 1076 : index
    %265 = vector.load %arg11[%c14_247, %c1076] : memref<25x2048xf32, #tpu.memory_space<vmem>>, vector<1x384xf32>
    %c15_248 = arith.constant 15 : index
    %c1096 = arith.constant 1096 : index
    %266 = vector.load %arg11[%c15_248, %c1096] : memref<25x2048xf32, #tpu.memory_space<vmem>>, vector<1x384xf32>
    %c16_249 = arith.constant 16 : index
    %c1097 = arith.constant 1097 : index
    %267 = vector.load %arg11[%c16_249, %c1097] : memref<25x2048xf32, #tpu.memory_space<vmem>>, vector<1x384xf32>
    %c17_250 = arith.constant 17 : index
    %c1098 = arith.constant 1098 : index
    %268 = vector.load %arg11[%c17_250, %c1098] : memref<25x2048xf32, #tpu.memory_space<vmem>>, vector<1x384xf32>
    %c18_251 = arith.constant 18 : index
    %c1099 = arith.constant 1099 : index
    %269 = vector.load %arg11[%c18_251, %c1099] : memref<25x2048xf32, #tpu.memory_space<vmem>>, vector<1x384xf32>
    %c19_252 = arith.constant 19 : index
    %c1100 = arith.constant 1100 : index
    %270 = vector.load %arg11[%c19_252, %c1100] : memref<25x2048xf32, #tpu.memory_space<vmem>>, vector<1x384xf32>
    %c20_253 = arith.constant 20 : index
    %c1120 = arith.constant 1120 : index
    %271 = vector.load %arg11[%c20_253, %c1120] : memref<25x2048xf32, #tpu.memory_space<vmem>>, vector<1x384xf32>
    %c21_254 = arith.constant 21 : index
    %c1121 = arith.constant 1121 : index
    %272 = vector.load %arg11[%c21_254, %c1121] : memref<25x2048xf32, #tpu.memory_space<vmem>>, vector<1x384xf32>
    %c22_255 = arith.constant 22 : index
    %c1122 = arith.constant 1122 : index
    %273 = vector.load %arg11[%c22_255, %c1122] : memref<25x2048xf32, #tpu.memory_space<vmem>>, vector<1x384xf32>
    %c23_256 = arith.constant 23 : index
    %c1123 = arith.constant 1123 : index
    %274 = vector.load %arg11[%c23_256, %c1123] : memref<25x2048xf32, #tpu.memory_space<vmem>>, vector<1x384xf32>
    %c24_257 = arith.constant 24 : index
    %c1124 = arith.constant 1124 : index
    %275 = vector.load %arg11[%c24_257, %c1124] : memref<25x2048xf32, #tpu.memory_space<vmem>>, vector<1x384xf32>
    %276 = arith.addf %250, %251 : vector<1x384xf32>
    %277 = arith.addf %252, %253 : vector<1x384xf32>
    %278 = arith.addf %254, %255 : vector<1x384xf32>
    %279 = arith.addf %256, %257 : vector<1x384xf32>
    %280 = arith.addf %258, %259 : vector<1x384xf32>
    %281 = arith.addf %260, %261 : vector<1x384xf32>
    %282 = arith.addf %262, %263 : vector<1x384xf32>
    %283 = arith.addf %264, %265 : vector<1x384xf32>
    %284 = arith.addf %266, %267 : vector<1x384xf32>
    %285 = arith.addf %268, %269 : vector<1x384xf32>
    %286 = arith.addf %270, %271 : vector<1x384xf32>
    %287 = arith.addf %272, %273 : vector<1x384xf32>
    %288 = arith.addf %274, %275 : vector<1x384xf32>
    %289 = arith.addf %276, %277 : vector<1x384xf32>
    %290 = arith.addf %278, %279 : vector<1x384xf32>
    %291 = arith.addf %280, %281 : vector<1x384xf32>
    %292 = arith.addf %282, %283 : vector<1x384xf32>
    %293 = arith.addf %284, %285 : vector<1x384xf32>
    %294 = arith.addf %286, %287 : vector<1x384xf32>
    %295 = arith.addf %289, %290 : vector<1x384xf32>
    %296 = arith.addf %291, %292 : vector<1x384xf32>
    %297 = arith.addf %293, %294 : vector<1x384xf32>
    %298 = arith.addf %295, %296 : vector<1x384xf32>
    %299 = arith.addf %297, %288 : vector<1x384xf32>
    %300 = arith.addf %298, %299 : vector<1x384xf32>
    %c2_258 = arith.constant 2 : index
    %c0_259 = arith.constant 0 : index
    %c0_260 = arith.constant 0 : index
    %301 = vector.load %arg9[%c2_258, %c0_259, %c0_260] : memref<4x1x384xf32, #tpu.memory_space<vmem>>, vector<1x1x384xf32>
    %302 = vector.shape_cast %301 : vector<1x1x384xf32> to vector<1x384xf32>
    %303 = vector.shape_cast %300 : vector<1x384xf32> to vector<1x1x384xf32>
    tpu.vector_store %arg9[%c2_258, %c0_259, %c0_260], %303 {strides = array<i32>} : memref<4x1x384xf32, #tpu.memory_space<vmem>>, vector<1x1x384xf32>,
    %c3_261 = arith.constant 3 : index
    %c0_262 = arith.constant 0 : index
    %c256_263 = arith.constant 256 : index
    %304 = vector.load %arg1[%c3_261, %c0_262, %c256_263] : memref<4x9x640xf32, #tpu.memory_space<vmem>>, vector<1x1x384xf32>
    %305 = vector.shape_cast %304 : vector<1x1x384xf32> to vector<1x384xf32>
    %306 = vector.broadcast %132 : f32 to vector<1x384xf32>
    %307 = arith.addf %305, %306 : vector<1x384xf32>
    %c0_264 = arith.constant 0 : index
    %c1536_265 = arith.constant 1536 : index
    %308 = vector.load %arg11[%c0_264, %c1536_265] : memref<25x2048xf32, #tpu.memory_space<vmem>>, vector<1x384xf32>
    %c1_266 = arith.constant 1 : index
    %c1537 = arith.constant 1537 : index
    %309 = vector.load %arg11[%c1_266, %c1537] : memref<25x2048xf32, #tpu.memory_space<vmem>>, vector<1x384xf32>
    %c2_267 = arith.constant 2 : index
    %c1538 = arith.constant 1538 : index
    %310 = vector.load %arg11[%c2_267, %c1538] : memref<25x2048xf32, #tpu.memory_space<vmem>>, vector<1x384xf32>
    %c3_268 = arith.constant 3 : index
    %c1539 = arith.constant 1539 : index
    %311 = vector.load %arg11[%c3_268, %c1539] : memref<25x2048xf32, #tpu.memory_space<vmem>>, vector<1x384xf32>
    %c4_269 = arith.constant 4 : index
    %c1540 = arith.constant 1540 : index
    %312 = vector.load %arg11[%c4_269, %c1540] : memref<25x2048xf32, #tpu.memory_space<vmem>>, vector<1x384xf32>
    %c5_270 = arith.constant 5 : index
    %c1560 = arith.constant 1560 : index
    %313 = vector.load %arg11[%c5_270, %c1560] : memref<25x2048xf32, #tpu.memory_space<vmem>>, vector<1x384xf32>
    %c6_271 = arith.constant 6 : index
    %c1561 = arith.constant 1561 : index
    %314 = vector.load %arg11[%c6_271, %c1561] : memref<25x2048xf32, #tpu.memory_space<vmem>>, vector<1x384xf32>
    %c7_272 = arith.constant 7 : index
    %c1562 = arith.constant 1562 : index
    %315 = vector.load %arg11[%c7_272, %c1562] : memref<25x2048xf32, #tpu.memory_space<vmem>>, vector<1x384xf32>
    %c8_273 = arith.constant 8 : index
    %c1563 = arith.constant 1563 : index
    %316 = vector.load %arg11[%c8_273, %c1563] : memref<25x2048xf32, #tpu.memory_space<vmem>>, vector<1x384xf32>
    %c9_274 = arith.constant 9 : index
    %c1564 = arith.constant 1564 : index
    %317 = vector.load %arg11[%c9_274, %c1564] : memref<25x2048xf32, #tpu.memory_space<vmem>>, vector<1x384xf32>
    %c10_275 = arith.constant 10 : index
    %c1584 = arith.constant 1584 : index
    %318 = vector.load %arg11[%c10_275, %c1584] : memref<25x2048xf32, #tpu.memory_space<vmem>>, vector<1x384xf32>
    %c11_276 = arith.constant 11 : index
    %c1585 = arith.constant 1585 : index
    %319 = vector.load %arg11[%c11_276, %c1585] : memref<25x2048xf32, #tpu.memory_space<vmem>>, vector<1x384xf32>
    %c12_277 = arith.constant 12 : index
    %c1586 = arith.constant 1586 : index
    %320 = vector.load %arg11[%c12_277, %c1586] : memref<25x2048xf32, #tpu.memory_space<vmem>>, vector<1x384xf32>
    %c13_278 = arith.constant 13 : index
    %c1587 = arith.constant 1587 : index
    %321 = vector.load %arg11[%c13_278, %c1587] : memref<25x2048xf32, #tpu.memory_space<vmem>>, vector<1x384xf32>
    %c14_279 = arith.constant 14 : index
    %c1588 = arith.constant 1588 : index
    %322 = vector.load %arg11[%c14_279, %c1588] : memref<25x2048xf32, #tpu.memory_space<vmem>>, vector<1x384xf32>
    %c15_280 = arith.constant 15 : index
    %c1608 = arith.constant 1608 : index
    %323 = vector.load %arg11[%c15_280, %c1608] : memref<25x2048xf32, #tpu.memory_space<vmem>>, vector<1x384xf32>
    %c16_281 = arith.constant 16 : index
    %c1609 = arith.constant 1609 : index
    %324 = vector.load %arg11[%c16_281, %c1609] : memref<25x2048xf32, #tpu.memory_space<vmem>>, vector<1x384xf32>
    %c17_282 = arith.constant 17 : index
    %c1610 = arith.constant 1610 : index
    %325 = vector.load %arg11[%c17_282, %c1610] : memref<25x2048xf32, #tpu.memory_space<vmem>>, vector<1x384xf32>
    %c18_283 = arith.constant 18 : index
    %c1611 = arith.constant 1611 : index
    %326 = vector.load %arg11[%c18_283, %c1611] : memref<25x2048xf32, #tpu.memory_space<vmem>>, vector<1x384xf32>
    %c19_284 = arith.constant 19 : index
    %c1612 = arith.constant 1612 : index
    %327 = vector.load %arg11[%c19_284, %c1612] : memref<25x2048xf32, #tpu.memory_space<vmem>>, vector<1x384xf32>
    %c20_285 = arith.constant 20 : index
    %c1632 = arith.constant 1632 : index
    %328 = vector.load %arg11[%c20_285, %c1632] : memref<25x2048xf32, #tpu.memory_space<vmem>>, vector<1x384xf32>
    %c21_286 = arith.constant 21 : index
    %c1633 = arith.constant 1633 : index
    %329 = vector.load %arg11[%c21_286, %c1633] : memref<25x2048xf32, #tpu.memory_space<vmem>>, vector<1x384xf32>
    %c22_287 = arith.constant 22 : index
    %c1634 = arith.constant 1634 : index
    %330 = vector.load %arg11[%c22_287, %c1634] : memref<25x2048xf32, #tpu.memory_space<vmem>>, vector<1x384xf32>
    %c23_288 = arith.constant 23 : index
    %c1635 = arith.constant 1635 : index
    %331 = vector.load %arg11[%c23_288, %c1635] : memref<25x2048xf32, #tpu.memory_space<vmem>>, vector<1x384xf32>
    %c24_289 = arith.constant 24 : index
    %c1636 = arith.constant 1636 : index
    %332 = vector.load %arg11[%c24_289, %c1636] : memref<25x2048xf32, #tpu.memory_space<vmem>>, vector<1x384xf32>
    %333 = arith.addf %307, %308 : vector<1x384xf32>
    %334 = arith.addf %309, %310 : vector<1x384xf32>
    %335 = arith.addf %311, %312 : vector<1x384xf32>
    %336 = arith.addf %313, %314 : vector<1x384xf32>
    %337 = arith.addf %315, %316 : vector<1x384xf32>
    %338 = arith.addf %317, %318 : vector<1x384xf32>
    %339 = arith.addf %319, %320 : vector<1x384xf32>
    %340 = arith.addf %321, %322 : vector<1x384xf32>
    %341 = arith.addf %323, %324 : vector<1x384xf32>
    %342 = arith.addf %325, %326 : vector<1x384xf32>
    %343 = arith.addf %327, %328 : vector<1x384xf32>
    %344 = arith.addf %329, %330 : vector<1x384xf32>
    %345 = arith.addf %331, %332 : vector<1x384xf32>
    %346 = arith.addf %333, %334 : vector<1x384xf32>
    %347 = arith.addf %335, %336 : vector<1x384xf32>
    %348 = arith.addf %337, %338 : vector<1x384xf32>
    %349 = arith.addf %339, %340 : vector<1x384xf32>
    %350 = arith.addf %341, %342 : vector<1x384xf32>
    %351 = arith.addf %343, %344 : vector<1x384xf32>
    %352 = arith.addf %346, %347 : vector<1x384xf32>
    %353 = arith.addf %348, %349 : vector<1x384xf32>
    %354 = arith.addf %350, %351 : vector<1x384xf32>
    %355 = arith.addf %352, %353 : vector<1x384xf32>
    %356 = arith.addf %354, %345 : vector<1x384xf32>
    %357 = arith.addf %355, %356 : vector<1x384xf32>
    %c3_290 = arith.constant 3 : index
    %c0_291 = arith.constant 0 : index
    %c0_292 = arith.constant 0 : index
    %358 = vector.load %arg9[%c3_290, %c0_291, %c0_292] : memref<4x1x384xf32, #tpu.memory_space<vmem>>, vector<1x1x384xf32>
    %359 = vector.shape_cast %358 : vector<1x1x384xf32> to vector<1x384xf32>
    %360 = vector.shape_cast %357 : vector<1x384xf32> to vector<1x1x384xf32>
    tpu.vector_store %arg9[%c3_290, %c0_291, %c0_292], %360 {strides = array<i32>} : memref<4x1x384xf32, #tpu.memory_space<vmem>>, vector<1x1x384xf32>,
    return
  }
  func.func @transform_0(%arg0: i32) -> (i32, i32, i32) {
    %c0_i32 = arith.constant 0 : i32
    %c0_i32_0 = arith.constant 0 : i32
    %c0_i32_1 = arith.constant 0 : i32
    return %arg0, %c0_i32, %c0_i32_0 : i32, i32, i32
  }
  func.func @transform_1(%arg0: i32) -> (i32, i32) {
    %c0_i32 = arith.constant 0 : i32
    %c0_i32_0 = arith.constant 0 : i32
    %c0_i32_1 = arith.constant 0 : i32
    return %c0_i32, %c0_i32_0 : i32, i32
  }
  func.func @transform_2(%arg0: i32) -> (i32, i32) {
    %c0_i32 = arith.constant 0 : i32
    %c0_i32_0 = arith.constant 0 : i32
    %c0_i32_1 = arith.constant 0 : i32
    return %c0_i32, %c0_i32_0 : i32, i32
  }
  func.func @transform_3(%arg0: i32) -> (i32, i32) {
    %c0_i32 = arith.constant 0 : i32
    %c0_i32_0 = arith.constant 0 : i32
    %c0_i32_1 = arith.constant 0 : i32
    return %c0_i32, %c0_i32_0 : i32, i32
  }
  func.func @transform_4(%arg0: i32) -> (i32, i32) {
    %c0_i32 = arith.constant 0 : i32
    %c0_i32_0 = arith.constant 0 : i32
    %c0_i32_1 = arith.constant 0 : i32
    return %c0_i32, %c0_i32_0 : i32, i32
  }
  func.func @transform_5(%arg0: i32) -> (i32, i32) {
    %c0_i32 = arith.constant 0 : i32
    %c0_i32_0 = arith.constant 0 : i32
    %c0_i32_1 = arith.constant 0 : i32
    return %c0_i32, %c0_i32_0 : i32, i32
  }
  func.func @transform_6(%arg0: i32) -> (i32, i32) {
    %c0_i32 = arith.constant 0 : i32
    %c0_i32_0 = arith.constant 0 : i32
    %c0_i32_1 = arith.constant 0 : i32
    return %c0_i32, %c0_i32_0 : i32, i32
  }
  func.func @transform_7(%arg0: i32) -> (i32, i32) {
    %c0_i32 = arith.constant 0 : i32
    %c0_i32_0 = arith.constant 0 : i32
    %c0_i32_1 = arith.constant 0 : i32
    return %c0_i32, %c0_i32_0 : i32, i32
  }
  func.func @transform_8(%arg0: i32) -> (i32, i32, i32) {
    %c0_i32 = arith.constant 0 : i32
    %c0_i32_0 = arith.constant 0 : i32
    %c0_i32_1 = arith.constant 0 : i32
    return %arg0, %c0_i32, %c0_i32_0 : i32, i32, i32
  }
}

</mosaic_0001>

<llo_original>
// kernel: srcnn_forward.1
$region0: #{srcnn_forward.1}
  #allocation0 [shape = 'u32[]', space=smem, size = 0x4, offset = 0x4, fixed_abs, tag = 'smem constant byte address 0x4 - core index']
  #allocation1 [shape = 'u32[144,128]{1,0:T(1,128)}', space=vmem, size = 0x12000, scoped, tag = 'internal scratch']
  #allocation2 [shape = 'f32[81,2048]{1,0:T(8,128)}', space=vmem, size = 0xb0000, scoped, tag = 'scratch operand']
  #allocation3 [shape = 'f32[25,2048]{1,0:T(8,128)}', space=vmem, size = 0x40000, scoped, tag = 'scratch operand']
  #allocation4 [shape = 'f32[1,1]{1,0:T(1,128)S(6)}', space=smem, size = 0x200, scoped, tag = 'scoped memory for srcnn_forward.1']
  %s0 = inlined_call_operand.vmem [shape: f32[8,9,640], index: 0, kind: input, shape index: {}]
  %s1 = inlined_call_operand.vmem [shape: f32[1,2048], index: 1, kind: input, shape index: {}]
  %s2 = inlined_call_operand.vmem [shape: bf16[64,81], index: 2, kind: input, shape index: {}]
  %s3 = inlined_call_operand.vmem [shape: f32[64,1], index: 3, kind: input, shape index: {}]
  %s4 = inlined_call_operand.vmem [shape: bf16[32,64], index: 4, kind: input, shape index: {}]
  %s5 = inlined_call_operand.vmem [shape: f32[32,1], index: 5, kind: input, shape index: {}]
  %s6 = inlined_call_operand.vmem [shape: bf16[25,32], index: 6, kind: input, shape index: {}]
  %s7 = inlined_call_operand.<no memory space> [shape: f32[1,1], index: 7, kind: input, shape index: {}]
  %s8 = inlined_call_operand.vmem [shape: f32[8,1,384], index: 8, kind: output, shape index: {}]
  %s9 = sld [smem:[#allocation0]]
  $region65: #{srcnn_forward.1} parent=0
    _
  %s11 = ssub.s32 1, %s9
  %s12 = scalar_select 0, %s11, %s9
  %13 = sst [smem:[#allocation4]] %s7
  loop: start=0, step=1, limit=4
  $region2: #{srcnn_forward.1} parent=0 // loop_pre_header
    _
  $region3: #{srcnn_forward.1} parent=0 // loop_header
    %s15 = sphi 0, %s19
    %p16 = scmp.ge.s32.totalorder %s15, 4
    %s25 = sphi 0, %s27
    %s28 = sphi 0, %s25
    %s29 = sphi 0, %s28
    %s45 = sphi 0, %s29
    %s49 = sphi 0, %s49
    %s51 = sphi 0, %s49
    %s52 = sphi 0, %s51
    %s66 = sphi 0, %s52
    %s70 = sphi 0, %s70
    %s72 = sphi 0, %s70
    %s73 = sphi 0, %s72
    %s87 = sphi 0, %s73
    %s91 = sphi 0, %s91
    %s93 = sphi 0, %s91
    %s94 = sphi 0, %s93
    %s108 = sphi 0, %s94
    %s112 = sphi 0, %s112
    %s114 = sphi 0, %s112
    %s115 = sphi 0, %s114
    %s129 = sphi 0, %s115
    %s133 = sphi 0, %s133
    %s135 = sphi 0, %s133
    %s136 = sphi 0, %s135
    %s150 = sphi 0, %s136
    %s154 = sphi 0, %s154
    %s156 = sphi 0, %s154
    %s157 = sphi 0, %s156
    %s171 = sphi 0, %s157
    %s175 = sphi 0, %s175
    %s177 = sphi 0, %s175
    %s178 = sphi 0, %s177
    %s192 = sphi 0, %s178
    %s198 = sphi 0, %s200
    %s201 = sphi 0, %s198
    %s202 = sphi 0, %s201
    %s218 = sphi 0, %s202
  $region4: #{srcnn_forward.1} parent=0 // loop_header_branch
    %18 = sbr.rel (%p16) target = $region8
  $region5: #{srcnn_forward.1} parent=0 // loop_body
    %s20 = ssub.s32 %s15, 1
    %s21 = ssub.s32 %s15, 2
    %s22 = sadd.s32 %s15, 1
    %s23 = ssub.s32 %s15, %s22
    %p24 = scmp.eq.s32.totalorder %s23, 0
    %s26 = sadd.s32 %s25, 1
    %s27 = scalar_select %p24, %s25, %s26
    %p30 = pneg %p24
    %p31 = scmp.eq.s32.totalorder %s15, 1
    %p32 = por %p30, %p31
    %p33 = scmp.ne.s32.totalorder %s25, %s28
    %p34 = scmp.eq.s32.totalorder %s15, 0
    %p35 = por %p33, %p34
    %p36 = scmp.ne.s32.totalorder %s25, %s28
    %p37 = scmp.eq.s32.totalorder %s20, 1
    %p38 = por %p36, %p37
    %p39 = scmp.ne.s32.totalorder %s28, %s29
    %p40 = scmp.eq.s32.totalorder %s20, 0
    %p41 = por %p39, %p40
    %p42 = scmp.ne.s32.totalorder %s28, %s29
    %p43 = scmp.eq.s32.totalorder %s21, 1
    %p44 = por %p42, %p43
    %p46 = scmp.ne.s32.totalorder %s29, %s45
    %p47 = scmp.eq.s32.totalorder %s21, 0
    %p48 = por %p46, %p47
    %s50 = sadd.s32 %s49, 1
    %p53 = scmp.eq.s32.totalorder %s15, 1
    %p54 = scmp.ne.s32.totalorder %s49, %s51
    %p55 = scmp.eq.s32.totalorder %s15, 0
    %p56 = por %p54, %p55
    %p57 = scmp.ne.s32.totalorder %s49, %s51
    %p58 = scmp.eq.s32.totalorder %s20, 1
    %p59 = por %p57, %p58
    %p60 = scmp.ne.s32.totalorder %s51, %s52
    %p61 = scmp.eq.s32.totalorder %s20, 0
    %p62 = por %p60, %p61
    %p63 = scmp.ne.s32.totalorder %s51, %s52
    %p64 = scmp.eq.s32.totalorder %s21, 1
    %p65 = por %p63, %p64
    %p67 = scmp.ne.s32.totalorder %s52, %s66
    %p68 = scmp.eq.s32.totalorder %s21, 0
    %p69 = por %p67, %p68
    %s71 = sadd.s32 %s70, 1
    %p74 = scmp.eq.s32.totalorder %s15, 1
    %p75 = scmp.ne.s32.totalorder %s70, %s72
    %p76 = scmp.eq.s32.totalorder %s15, 0
    %p77 = por %p75, %p76
    %p78 = scmp.ne.s32.totalorder %s70, %s72
    %p79 = scmp.eq.s32.totalorder %s20, 1
    %p80 = por %p78, %p79
    %p81 = scmp.ne.s32.totalorder %s72, %s73
    %p82 = scmp.eq.s32.totalorder %s20, 0
    %p83 = por %p81, %p82
    %p84 = scmp.ne.s32.totalorder %s72, %s73
    %p85 = scmp.eq.s32.totalorder %s21, 1
    %p86 = por %p84, %p85
    %p88 = scmp.ne.s32.totalorder %s73, %s87
    %p89 = scmp.eq.s32.totalorder %s21, 0
    %p90 = por %p88, %p89
    %s92 = sadd.s32 %s91, 1
    %p95 = scmp.eq.s32.totalorder %s15, 1
    %p96 = scmp.ne.s32.totalorder %s91, %s93
    %p97 = scmp.eq.s32.totalorder %s15, 0
    %p98 = por %p96, %p97
    %p99 = scmp.ne.s32.totalorder %s91, %s93
    %p100 = scmp.eq.s32.totalorder %s20, 1
    %p101 = por %p99, %p100
    %p102 = scmp.ne.s32.totalorder %s93, %s94
    %p103 = scmp.eq.s32.totalorder %s20, 0
    %p104 = por %p102, %p103
    %p105 = scmp.ne.s32.totalorder %s93, %s94
    %p106 = scmp.eq.s32.totalorder %s21, 1
    %p107 = por %p105, %p106
    %p109 = scmp.ne.s32.totalorder %s94, %s108
    %p110 = scmp.eq.s32.totalorder %s21, 0
    %p111 = por %p109, %p110
    %s113 = sadd.s32 %s112, 1
    %p116 = scmp.eq.s32.totalorder %s15, 1
    %p117 = scmp.ne.s32.totalorder %s112, %s114
    %p118 = scmp.eq.s32.totalorder %s15, 0
    %p119 = por %p117, %p118
    %p120 = scmp.ne.s32.totalorder %s112, %s114
    %p121 = scmp.eq.s32.totalorder %s20, 1
    %p122 = por %p120, %p121
    %p123 = scmp.ne.s32.totalorder %s114, %s115
    %p124 = scmp.eq.s32.totalorder %s20, 0
    %p125 = por %p123, %p124
    %p126 = scmp.ne.s32.totalorder %s114, %s115
    %p127 = scmp.eq.s32.totalorder %s21, 1
    %p128 = por %p126, %p127
    %p130 = scmp.ne.s32.totalorder %s115, %s129
    %p131 = scmp.eq.s32.totalorder %s21, 0
    %p132 = por %p130, %p131
    %s134 = sadd.s32 %s133, 1
    %p137 = scmp.eq.s32.totalorder %s15, 1
    %p138 = scmp.ne.s32.totalorder %s133, %s135
    %p139 = scmp.eq.s32.totalorder %s15, 0
    %p140 = por %p138, %p139
    %p141 = scmp.ne.s32.totalorder %s133, %s135
    %p142 = scmp.eq.s32.totalorder %s20, 1
    %p143 = por %p141, %p142
    %p144 = scmp.ne.s32.totalorder %s135, %s136
    %p145 = scmp.eq.s32.totalorder %s20, 0
    %p146 = por %p144, %p145
    %p147 = scmp.ne.s32.totalorder %s135, %s136
    %p148 = scmp.eq.s32.totalorder %s21, 1
    %p149 = por %p147, %p148
    %p151 = scmp.ne.s32.totalorder %s136, %s150
    %p152 = scmp.eq.s32.totalorder %s21, 0
    %p153 = por %p151, %p152
    %s155 = sadd.s32 %s154, 1
    %p158 = scmp.eq.s32.totalorder %s15, 1
    %p159 = scmp.ne.s32.totalorder %s154, %s156
    %p160 = scmp.eq.s32.totalorder %s15, 0
    %p161 = por %p159, %p160
    %p162 = scmp.ne.s32.totalorder %s154, %s156
    %p163 = scmp.eq.s32.totalorder %s20, 1
    %p164 = por %p162, %p163
    %p165 = scmp.ne.s32.totalorder %s156, %s157
    %p166 = scmp.eq.s32.totalorder %s20, 0
    %p167 = por %p165, %p166
    %p168 = scmp.ne.s32.totalorder %s156, %s157
    %p169 = scmp.eq.s32.totalorder %s21, 1
    %p170 = por %p168, %p169
    %p172 = scmp.ne.s32.totalorder %s157, %s171
    %p173 = scmp.eq.s32.totalorder %s21, 0
    %p174 = por %p172, %p173
    %s176 = sadd.s32 %s175, 1
    %p179 = scmp.eq.s32.totalorder %s15, 1
    %p180 = scmp.ne.s32.totalorder %s175, %s177
    %p181 = scmp.eq.s32.totalorder %s15, 0
    %p182 = por %p180, %p181
    %p183 = scmp.ne.s32.totalorder %s175, %s177
    %p184 = scmp.eq.s32.totalorder %s20, 1
    %p185 = por %p183, %p184
    %p186 = scmp.ne.s32.totalorder %s177, %s178
    %p187 = scmp.eq.s32.totalorder %s20, 0
    %p188 = por %p186, %p187
    %p189 = scmp.ne.s32.totalorder %s177, %s178
    %p190 = scmp.eq.s32.totalorder %s21, 1
    %p191 = por %p189, %p190
    %p193 = scmp.ne.s32.totalorder %s178, %s192
    %p194 = scmp.eq.s32.totalorder %s21, 0
    %p195 = por %p193, %p194
    %s196 = ssub.s32 %s15, %s22
    %p197 = scmp.eq.s32.totalorder %s196, 0
    %s199 = sadd.s32 %s198, 1
    %s200 = scalar_select %p197, %s198, %s199
    %p203 = pneg %p197
    %p204 = scmp.eq.s32.totalorder %s15, 1
    %p205 = por %p203, %p204
    %p206 = scmp.ne.s32.totalorder %s198, %s201
    %p207 = scmp.eq.s32.totalorder %s15, 0
    %p208 = por %p206, %p207
    %p209 = scmp.ne.s32.totalorder %s198, %s201
    %p210 = scmp.eq.s32.totalorder %s20, 1
    %p211 = por %p209, %p210
    %p212 = scmp.ne.s32.totalorder %s201, %s202
    %p213 = scmp.eq.s32.totalorder %s20, 0
    %p214 = por %p212, %p213
    %p215 = scmp.ne.s32.totalorder %s201, %s202
    %p216 = scmp.eq.s32.totalorder %s21, 1
    %p217 = por %p215, %p216
    %p219 = scmp.ne.s32.totalorder %s202, %s218
    %p220 = scmp.eq.s32.totalorder %s21, 0
    %p221 = por %p219, %p220
    %p222 = scmp.le.s32.totalorder 1, %s15
    %p223 = scmp.lt.s32.totalorder %s15, 3
    %p224 = pnand %p222, %p223
    %p225 = pneg %p224
    // Predicated region
    $region9: #{srcnn_forward.1} parent=5 // pred_check
      _
    $region10: #{srcnn_forward.1} parent=5 // pred_check_branch
      %227 = sbr.rel (%p224) target = $region12
    $region11: #{srcnn_forward.1} parent=5 // pred_region
      %s228 = ssub.s32 %s15, 1
      // Predicated region
      $region13: #{srcnn_forward.1} parent=11 // pred_check
        %p229 = pneg %p62
      $region14: #{srcnn_forward.1} parent=11 // pred_check_branch
        %231 = sbr.rel (%p229) target = $region16
      $region15: #{srcnn_forward.1} parent=11 // pred_region
        _
      $region16: #{srcnn_forward.1} parent=11 // pred_fallthru
        _
      // Predicated region
      $region17: #{srcnn_forward.1} parent=11 // pred_check
        %p232 = pneg %p83
      $region18: #{srcnn_forward.1} parent=11 // pred_check_branch
        %234 = sbr.rel (%p232) target = $region20
      $region19: #{srcnn_forward.1} parent=11 // pred_region
        _
      $region20: #{srcnn_forward.1} parent=11 // pred_fallthru
        _
      // Predicated region
      $region21: #{srcnn_forward.1} parent=11 // pred_check
        %p235 = pneg %p104
      $region22: #{srcnn_forward.1} parent=11 // pred_check_branch
        %237 = sbr.rel (%p235) target = $region24
      $region23: #{srcnn_forward.1} parent=11 // pred_region
        _
      $region24: #{srcnn_forward.1} parent=11 // pred_fallthru
        _
      // Predicated region
      $region25: #{srcnn_forward.1} parent=11 // pred_check
        %p238 = pneg %p125
      $region26: #{srcnn_forward.1} parent=11 // pred_check_branch
        %240 = sbr.rel (%p238) target = $region28
      $region27: #{srcnn_forward.1} parent=11 // pred_region
        _
      $region28: #{srcnn_forward.1} parent=11 // pred_fallthru
        _
      // Predicated region
      $region29: #{srcnn_forward.1} parent=11 // pred_check
        %p241 = pneg %p146
      $region30: #{srcnn_forward.1} parent=11 // pred_check_branch
        %243 = sbr.rel (%p241) target = $region32
      $region31: #{srcnn_forward.1} parent=11 // pred_region
        _
      $region32: #{srcnn_forward.1} parent=11 // pred_fallthru
        _
      // Predicated region
      $region33: #{srcnn_forward.1} parent=11 // pred_check
        %p244 = pneg %p167
      $region34: #{srcnn_forward.1} parent=11 // pred_check_branch
        %246 = sbr.rel (%p244) target = $region36
      $region35: #{srcnn_forward.1} parent=11 // pred_region
        _
      $region36: #{srcnn_forward.1} parent=11 // pred_fallthru
        _
      // Predicated region
      $region37: #{srcnn_forward.1} parent=11 // pred_check
        %p247 = pneg %p188
      $region38: #{srcnn_forward.1} parent=11 // pred_check_branch
        %249 = sbr.rel (%p247) target = $region40
      $region39: #{srcnn_forward.1} parent=11 // pred_region
        _
      $region40: #{srcnn_forward.1} parent=11 // pred_fallthru
        _
    $region12: #{srcnn_forward.1} parent=5 // pred_fallthru
      _
    %p250 = scmp.lt.s32.totalorder %s15, 2
    // Predicated region
    $region41: #{srcnn_forward.1} parent=5 // pred_check
      %p251 = pneg %p250
    $region42: #{srcnn_forward.1} parent=5 // pred_check_branch
      %253 = sbr.rel (%p251) target = $region44
    $region43: #{srcnn_forward.1} parent=5 // pred_region
      // Predicated region
      $region45: #{srcnn_forward.1} parent=43 // pred_check
        %p254 = pneg %p35
      $region46: #{srcnn_forward.1} parent=43 // pred_check_branch
        %256 = sbr.rel (%p254) target = $region48
      $region47: #{srcnn_forward.1} parent=43 // pred_region
        %s257 = smul.u32 4, %s15
        %p258 = scmp.lt.s32.totalorder %s257, 7
        %s259 = scalar_select %p258, %s257, 7
        %s260 = smul.addr %s259, 10
        %s261 = smul.addr %s260, 8
        %s262 = scalar_lea.vmem %s0, %s261
        %s263 = smul.u32 4, %s15
      $region48: #{srcnn_forward.1} parent=43 // pred_fallthru
        _
    $region44: #{srcnn_forward.1} parent=5 // pred_fallthru
      _
    %p264 = scmp.le.s32.totalorder 1, %s15
    %p265 = scmp.lt.s32.totalorder %s15, 3
    %p266 = pnand %p264, %p265
    %p267 = pneg %p266
    // Predicated region
    $region49: #{srcnn_forward.1} parent=5 // pred_check
      _
    $region50: #{srcnn_forward.1} parent=5 // pred_check_branch
      %269 = sbr.rel (%p266) target = $region52
    $region51: #{srcnn_forward.1} parent=5 // pred_region
      %s270 = ssub.s32 %s15, 1
      %s271 = smul.u32 4, %s20
      %p272 = scmp.lt.s32.totalorder %s271, 7
      %s273 = scalar_select %p272, %s271, 7
      %s274 = smul.addr %s273, 10
      %s275 = smul.addr %s274, 8
      %s276 = scalar_lea.vmem %s0, %s275
      %p277 = pneg %p41
      %p278 = pneg %p38
      %p279 = pneg %p62
      %p280 = pneg %p59
      %p281 = pneg %p83
      %p282 = pneg %p80
      %p283 = pneg %p104
      %p284 = pneg %p101
      %p285 = pneg %p125
      %p286 = pneg %p122
      %p287 = pneg %p146
      %p288 = pneg %p143
      %p289 = pneg %p167
      %p290 = pneg %p164
      %p291 = pneg %p188
      %p292 = pneg %p185
      %p293 = pneg %p214
      %p294 = pneg %p211
      %s295 = smul.u32 4, %s20
      %p296 = scmp.lt.s32.totalorder %s295, 7
      %s297 = scalar_select %p296, %s295, 7
      %s298 = smul.addr %s297, 3
      %s299 = scalar_lea.vmem %s8, %s298
      %s300 = smul.u32 4, %s20
      %p301 = scmp.lt.s32.totalorder %s300, 7
      %s302 = scalar_select %p301, %s300, 7
      %s303 = smul.addr %s302, 10
      %s304 = smul.addr %s303, 8
      %s305 = scalar_lea.vmem %s0, %s304
      %s306 = smul.u32 4, %s20
      %s307 = smul.u32 4, %s20
      %p308 = scmp.lt.s32.totalorder %s307, 7
      %s309 = scalar_select %p308, %s307, 7
      %s310 = smul.addr %s309, 3
      %s311 = scalar_lea.vmem %s8, %s310
      %s312 = smul.u32 4, %s20
      %v314 = vld [vmem:[%s305] sm:$0xff]
      %v315 = vld [vmem:[%s305 + $0x8] sm:$0xff]
      %v316 = vld [vmem:[%s305 + $0x10] sm:$0xff]
      %v317 = vld [vmem:[%s305 + $0x18] sm:$0xff]
      %v318 = vld [vmem:[%s305 + $0x20] sm:$0xff]
      %v319 = vld [vmem:[%s305 + $0x28] sm:$0x1]
      %v320 = vld [vmem:[%s305 + $0x30] sm:$0x1]
      %v321 = vld [vmem:[%s305 + $0x38] sm:$0x1]
      %v322 = vld [vmem:[%s305 + $0x40] sm:$0x1]
      %v323 = vld [vmem:[%s305 + $0x48] sm:$0x1]
      %334 = vrot.lane.b32.xlu0 %v314, 22
      %v335 = vpop.permute.xlu0 %334
      %336 = vrot.lane.b32.xlu0 %v315, 22
      %v337 = vpop.permute.xlu0 %336
      %338 = vrot.lane.b32.xlu0 %v316, 22
      %v339 = vpop.permute.xlu0 %338
      %340 = vrot.lane.b32.xlu0 %v317, 22
      %v341 = vpop.permute.xlu0 %340
      %342 = vrot.lane.b32.xlu0 %v318, 22
      %v343 = vpop.permute.xlu0 %342
      %344 = vrot.lane.b32.xlu0 %v319, 22
      %v345 = vpop.permute.xlu0 %344
      %346 = vrot.lane.b32.xlu0 %v320, 22
      %v347 = vpop.permute.xlu0 %346
      %348 = vrot.lane.b32.xlu0 %v321, 22
      %v349 = vpop.permute.xlu0 %348
      %350 = vrot.lane.b32.xlu0 %v322, 22
      %v351 = vpop.permute.xlu0 %350
      %352 = vrot.lane.b32.xlu0 %v323, 22
      %v353 = vpop.permute.xlu0 %352
      %vm354 = vcmask 179200
      %v355 = vsel %vm354, %v335, %v337
      %v356 = vsel %vm354, %v337, %v339
      %v357 = vsel %vm354, %v339, %v341
      %v358 = vsel %vm354, %v341, %v343
      %v359 = vsel %vm354, %v345, %v347
      %v360 = vsel %vm354, %v347, %v349
      %v361 = vsel %vm354, %v349, %v351
      %v362 = vsel %vm354, %v351, %v353
      %371 = vst [vmem:[#allocation2] sm:$0xff] %v355
      %372 = vst [vmem:[#allocation2 + $0x8] sm:$0xff] %v356
      %373 = vst [vmem:[#allocation2 + $0x10] sm:$0xff] %v357
      %374 = vst [vmem:[#allocation2 + $0x18] sm:$0xff] %v358
      %375 = vst [vmem:[#allocation2 + $0x80] sm:$0x1] %v359
      %376 = vst [vmem:[#allocation2 + $0x88] sm:$0x1] %v360
      %377 = vst [vmem:[#allocation2 + $0x90] sm:$0x1] %v361
      %378 = vst [vmem:[#allocation2 + $0x98] sm:$0x1] %v362
      %v379 = vld [vmem:[%s305] sm:$0xff]
      %v380 = vld [vmem:[%s305 + $0x8] sm:$0xff]
      %v381 = vld [vmem:[%s305 + $0x10] sm:$0xff]
      %v382 = vld [vmem:[%s305 + $0x18] sm:$0xff]
      %v383 = vld [vmem:[%s305 + $0x20] sm:$0xff]
      %v384 = vld [vmem:[%s305 + $0x28] sm:$0x1]
      %v385 = vld [vmem:[%s305 + $0x30] sm:$0x1]
      %v386 = vld [vmem:[%s305 + $0x38] sm:$0x1]
      %v387 = vld [vmem:[%s305 + $0x40] sm:$0x1]
      %v388 = vld [vmem:[%s305 + $0x48] sm:$0x1]
      %vm399 = vcmask 1040384
      %v400 = vrot.slane %v379, 7
      %v401 = vrot.slane %v380, 7
      %v402 = vrot.slane %v381, 7
      %v403 = vrot.slane %v382, 7
      %v404 = vrot.slane %v383, 7
      %v405 = vrot.slane %v384, 7
      %v406 = vsel %vm399, %v400, %v405
      %v407 = vrot.slane %v385, 7
      %v408 = vsel %vm399, %v401, %v407
      %v409 = vrot.slane %v386, 7
      %v410 = vsel %vm399, %v402, %v409
      %v411 = vrot.slane %v387, 7
      %v412 = vsel %vm399, %v403, %v411
      %v413 = vrot.slane %v388, 7
      %v414 = vsel %vm399, %v404, %v413
      %415 = vrot.lane.b32.xlu0 %v400, 21
      %v416 = vpop.permute.xlu0 %415
      %417 = vrot.lane.b32.xlu0 %v401, 21
      %v418 = vpop.permute.xlu0 %417
      %419 = vrot.lane.b32.xlu0 %v402, 21
      %v420 = vpop.permute.xlu0 %419
      %421 = vrot.lane.b32.xlu0 %v403, 21
      %v422 = vpop.permute.xlu0 %421
      %423 = vrot.lane.b32.xlu0 %v404, 21
      %v424 = vpop.permute.xlu0 %423
      %425 = vrot.lane.b32.xlu0 %v406, 21
      %v426 = vpop.permute.xlu0 %425
      %427 = vrot.lane.b32.xlu0 %v408, 21
      %v428 = vpop.permute.xlu0 %427
      %429 = vrot.lane.b32.xlu0 %v410, 21
      %v430 = vpop.permute.xlu0 %429
      %431 = vrot.lane.b32.xlu0 %v412, 21
      %v432 = vpop.permute.xlu0 %431
      %433 = vrot.lane.b32.xlu0 %v414, 21
      %v434 = vpop.permute.xlu0 %433
      %vm435 = vcmask 171008
      %v436 = vsel %vm435, %v416, %v418
      %v437 = vsel %vm435, %v418, %v420
      %v438 = vsel %vm435, %v420, %v422
      %v439 = vsel %vm435, %v422, %v424
      %v440 = vsel %vm435, %v426, %v428
      %v441 = vsel %vm435, %v428, %v430
      %v442 = vsel %vm435, %v430, %v432
      %v443 = vsel %vm435, %v432, %v434
      %452 = vst [vmem:[#allocation2 + $0x80] sm:$0xfe] %v436
      %453 = vst [vmem:[#allocation2 + $0x88] sm:$0xfe] %v437
      %454 = vst [vmem:[#allocation2 + $0x90] sm:$0xfe] %v438
      %455 = vst [vmem:[#allocation2 + $0x98] sm:$0xfe] %v439
      %456 = vst [vmem:[#allocation2 + $0x100] sm:$0x3] %v440
      %457 = vst [vmem:[#allocation2 + $0x108] sm:$0x3] %v441
      %458 = vst [vmem:[#allocation2 + $0x110] sm:$0x3] %v442
      %459 = vst [vmem:[#allocation2 + $0x118] sm:$0x3] %v443
      %v460 = vld [vmem:[%s305] sm:$0xff]
      %v461 = vld [vmem:[%s305 + $0x8] sm:$0xff]
      %v462 = vld [vmem:[%s305 + $0x10] sm:$0xff]
      %v463 = vld [vmem:[%s305 + $0x18] sm:$0xff]
      %v464 = vld [vmem:[%s305 + $0x20] sm:$0xff]
      %v465 = vld [vmem:[%s305 + $0x28] sm:$0x1]
      %v466 = vld [vmem:[%s305 + $0x30] sm:$0x1]
      %v467 = vld [vmem:[%s305 + $0x38] sm:$0x1]
      %v468 = vld [vmem:[%s305 + $0x40] sm:$0x1]
      %v469 = vld [vmem:[%s305 + $0x48] sm:$0x1]
      %vm480 = vcmask 1041408
      %v481 = vrot.slane %v460, 6
      %v482 = vrot.slane %v461, 6
      %v483 = vrot.slane %v462, 6
      %v484 = vrot.slane %v463, 6
      %v485 = vrot.slane %v464, 6
      %v486 = vrot.slane %v465, 6
      %v487 = vsel %vm480, %v481, %v486
      %v488 = vrot.slane %v466, 6
      %v489 = vsel %vm480, %v482, %v488
      %v490 = vrot.slane %v467, 6
      %v491 = vsel %vm480, %v483, %v490
      %v492 = vrot.slane %v468, 6
      %v493 = vsel %vm480, %v484, %v492
      %v494 = vrot.slane %v469, 6
      %v495 = vsel %vm480, %v485, %v494
      %496 = vrot.lane.b32.xlu0 %v481, 20
      %v497 = vpop.permute.xlu0 %496
      %498 = vrot.lane.b32.xlu0 %v482, 20
      %v499 = vpop.permute.xlu0 %498
      %500 = vrot.lane.b32.xlu0 %v483, 20
      %v501 = vpop.permute.xlu0 %500
      %502 = vrot.lane.b32.xlu0 %v484, 20
      %v503 = vpop.permute.xlu0 %502
      %504 = vrot.lane.b32.xlu0 %v485, 20
      %v505 = vpop.permute.xlu0 %504
      %506 = vrot.lane.b32.xlu0 %v487, 20
      %v507 = vpop.permute.xlu0 %506
      %508 = vrot.lane.b32.xlu0 %v489, 20
      %v509 = vpop.permute.xlu0 %508
      %510 = vrot.lane.b32.xlu0 %v491, 20
      %v511 = vpop.permute.xlu0 %510
      %512 = vrot.lane.b32.xlu0 %v493, 20
      %v513 = vpop.permute.xlu0 %512
      %514 = vrot.lane.b32.xlu0 %v495, 20
      %v515 = vpop.permute.xlu0 %514
      %vm516 = vcmask 162816
      %v517 = vsel %vm516, %v497, %v499
      %v518 = vsel %vm516, %v499, %v501
      %v519 = vsel %vm516, %v501, %v503
      %v520 = vsel %vm516, %v503, %v505
      %v521 = vsel %vm516, %v507, %v509
      %v522 = vsel %vm516, %v509, %v511
      %v523 = vsel %vm516, %v511, %v513
      %v524 = vsel %vm516, %v513, %v515
      %533 = vst [vmem:[#allocation2 + $0x100] sm:$0xfc] %v517
      %534 = vst [vmem:[#allocation2 + $0x108] sm:$0xfc] %v518
      %535 = vst [vmem:[#allocation2 + $0x110] sm:$0xfc] %v519
      %536 = vst [vmem:[#allocation2 + $0x118] sm:$0xfc] %v520
      %537 = vst [vmem:[#allocation2 + $0x180] sm:$0x7] %v521
      %538 = vst [vmem:[#allocation2 + $0x188] sm:$0x7] %v522
      %539 = vst [vmem:[#allocation2 + $0x190] sm:$0x7] %v523
      %540 = vst [vmem:[#allocation2 + $0x198] sm:$0x7] %v524
      %v541 = vld [vmem:[%s305] sm:$0xff]
      %v542 = vld [vmem:[%s305 + $0x8] sm:$0xff]
      %v543 = vld [vmem:[%s305 + $0x10] sm:$0xff]
      %v544 = vld [vmem:[%s305 + $0x18] sm:$0xff]
      %v545 = vld [vmem:[%s305 + $0x20] sm:$0xff]
      %v546 = vld [vmem:[%s305 + $0x28] sm:$0x1]
      %v547 = vld [vmem:[%s305 + $0x30] sm:$0x1]
      %v548 = vld [vmem:[%s305 + $0x38] sm:$0x1]
      %v549 = vld [vmem:[%s305 + $0x40] sm:$0x1]
      %v550 = vld [vmem:[%s305 + $0x48] sm:$0x1]
      %vm561 = vcmask 1042432
      %v562 = vrot.slane %v541, 5
      %v563 = vrot.slane %v542, 5
      %v564 = vrot.slane %v543, 5
      %v565 = vrot.slane %v544, 5
      %v566 = vrot.slane %v545, 5
      %v567 = vrot.slane %v546, 5
      %v568 = vsel %vm561, %v562, %v567
      %v569 = vrot.slane %v547, 5
      %v570 = vsel %vm561, %v563, %v569
      %v571 = vrot.slane %v548, 5
      %v572 = vsel %vm561, %v564, %v571
      %v573 = vrot.slane %v549, 5
      %v574 = vsel %vm561, %v565, %v573
      %v575 = vrot.slane %v550, 5
      %v576 = vsel %vm561, %v566, %v575
      %577 = vrot.lane.b32.xlu0 %v562, 19
      %v578 = vpop.permute.xlu0 %577
      %579 = vrot.lane.b32.xlu0 %v563, 19
      %v580 = vpop.permute.xlu0 %579
      %581 = vrot.lane.b32.xlu0 %v564, 19
      %v582 = vpop.permute.xlu0 %581
      %583 = vrot.lane.b32.xlu0 %v565, 19
      %v584 = vpop.permute.xlu0 %583
      %585 = vrot.lane.b32.xlu0 %v566, 19
      %v586 = vpop.permute.xlu0 %585
      %587 = vrot.lane.b32.xlu0 %v568, 19
      %v588 = vpop.permute.xlu0 %587
      %589 = vrot.lane.b32.xlu0 %v570, 19
      %v590 = vpop.permute.xlu0 %589
      %591 = vrot.lane.b32.xlu0 %v572, 19
      %v592 = vpop.permute.xlu0 %591
      %593 = vrot.lane.b32.xlu0 %v574, 19
      %v594 = vpop.permute.xlu0 %593
      %595 = vrot.lane.b32.xlu0 %v576, 19
      %v596 = vpop.permute.xlu0 %595
      %vm597 = vcmask 154624
      %v598 = vsel %vm597, %v578, %v580
      %v599 = vsel %vm597, %v580, %v582
      %v600 = vsel %vm597, %v582, %v584
      %v601 = vsel %vm597, %v584, %v586
      %v602 = vsel %vm597, %v588, %v590
      %v603 = vsel %vm597, %v590, %v592
      %v604 = vsel %vm597, %v592, %v594
      %v605 = vsel %vm597, %v594, %v596
      %614 = vst [vmem:[#allocation2 + $0x180] sm:$0xf8] %v598
      %615 = vst [vmem:[#allocation2 + $0x188] sm:$0xf8] %v599
      %616 = vst [vmem:[#allocation2 + $0x190] sm:$0xf8] %v600
      %617 = vst [vmem:[#allocation2 + $0x198] sm:$0xf8] %v601
      %618 = vst [vmem:[#allocation2 + $0x200] sm:$0xf] %v602
      %619 = vst [vmem:[#allocation2 + $0x208] sm:$0xf] %v603
      %620 = vst [vmem:[#allocation2 + $0x210] sm:$0xf] %v604
      %621 = vst [vmem:[#allocation2 + $0x218] sm:$0xf] %v605
      %v622 = vld [vmem:[%s305] sm:$0xff]
      %v623 = vld [vmem:[%s305 + $0x8] sm:$0xff]
      %v624 = vld [vmem:[%s305 + $0x10] sm:$0xff]
      %v625 = vld [vmem:[%s305 + $0x18] sm:$0xff]
      %v626 = vld [vmem:[%s305 + $0x20] sm:$0xff]
      %v627 = vld [vmem:[%s305 + $0x28] sm:$0x1]
      %v628 = vld [vmem:[%s305 + $0x30] sm:$0x1]
      %v629 = vld [vmem:[%s305 + $0x38] sm:$0x1]
      %v630 = vld [vmem:[%s305 + $0x40] sm:$0x1]
      %v631 = vld [vmem:[%s305 + $0x48] sm:$0x1]
      %vm642 = vcmask 1043456
      %v643 = vrot.slane %v622, 4
      %v644 = vrot.slane %v623, 4
      %v645 = vrot.slane %v624, 4
      %v646 = vrot.slane %v625, 4
      %v647 = vrot.slane %v626, 4
      %v648 = vrot.slane %v627, 4
      %v649 = vsel %vm642, %v643, %v648
      %v650 = vrot.slane %v628, 4
      %v651 = vsel %vm642, %v644, %v650
      %v652 = vrot.slane %v629, 4
      %v653 = vsel %vm642, %v645, %v652
      %v654 = vrot.slane %v630, 4
      %v655 = vsel %vm642, %v646, %v654
      %v656 = vrot.slane %v631, 4
      %v657 = vsel %vm642, %v647, %v656
      %658 = vrot.lane.b32.xlu0 %v643, 18
      %v659 = vpop.permute.xlu0 %658
      %660 = vrot.lane.b32.xlu0 %v644, 18
      %v661 = vpop.permute.xlu0 %660
      %662 = vrot.lane.b32.xlu0 %v645, 18
      %v663 = vpop.permute.xlu0 %662
      %664 = vrot.lane.b32.xlu0 %v646, 18
      %v665 = vpop.permute.xlu0 %664
      %666 = vrot.lane.b32.xlu0 %v647, 18
      %v667 = vpop.permute.xlu0 %666
      %668 = vrot.lane.b32.xlu0 %v649, 18
      %v669 = vpop.permute.xlu0 %668
      %670 = vrot.lane.b32.xlu0 %v651, 18
      %v671 = vpop.permute.xlu0 %670
      %672 = vrot.lane.b32.xlu0 %v653, 18
      %v673 = vpop.permute.xlu0 %672
      %674 = vrot.lane.b32.xlu0 %v655, 18
      %v675 = vpop.permute.xlu0 %674
      %676 = vrot.lane.b32.xlu0 %v657, 18
      %v677 = vpop.permute.xlu0 %676
      %vm678 = vcmask 146432
      %v679 = vsel %vm678, %v659, %v661
      %v680 = vsel %vm678, %v661, %v663
      %v681 = vsel %vm678, %v663, %v665
      %v682 = vsel %vm678, %v665, %v667
      %v683 = vsel %vm678, %v669, %v671
      %v684 = vsel %vm678, %v671, %v673
      %v685 = vsel %vm678, %v673, %v675
      %v686 = vsel %vm678, %v675, %v677
      %695 = vst [vmem:[#allocation2 + $0x200] sm:$0xf0] %v679
      %696 = vst [vmem:[#allocation2 + $0x208] sm:$0xf0] %v680
      %697 = vst [vmem:[#allocation2 + $0x210] sm:$0xf0] %v681
      %698 = vst [vmem:[#allocation2 + $0x218] sm:$0xf0] %v682
      %699 = vst [vmem:[#allocation2 + $0x280] sm:$0x1f] %v683
      %700 = vst [vmem:[#allocation2 + $0x288] sm:$0x1f] %v684
      %701 = vst [vmem:[#allocation2 + $0x290] sm:$0x1f] %v685
      %702 = vst [vmem:[#allocation2 + $0x298] sm:$0x1f] %v686
      %v703 = vld [vmem:[%s305] sm:$0xff]
      %v704 = vld [vmem:[%s305 + $0x8] sm:$0xff]
      %v705 = vld [vmem:[%s305 + $0x10] sm:$0xff]
      %v706 = vld [vmem:[%s305 + $0x18] sm:$0xff]
      %v707 = vld [vmem:[%s305 + $0x20] sm:$0xff]
      %v708 = vld [vmem:[%s305 + $0x28] sm:$0x1]
      %v709 = vld [vmem:[%s305 + $0x30] sm:$0x1]
      %v710 = vld [vmem:[%s305 + $0x38] sm:$0x1]
      %v711 = vld [vmem:[%s305 + $0x40] sm:$0x1]
      %v712 = vld [vmem:[%s305 + $0x48] sm:$0x1]
      %vm723 = vcmask 1044480
      %v724 = vrot.slane %v703, 3
      %v725 = vrot.slane %v704, 3
      %v726 = vrot.slane %v705, 3
      %v727 = vrot.slane %v706, 3
      %v728 = vrot.slane %v707, 3
      %v729 = vrot.slane %v708, 3
      %v730 = vsel %vm723, %v724, %v729
      %v731 = vrot.slane %v709, 3
      %v732 = vsel %vm723, %v725, %v731
      %v733 = vrot.slane %v710, 3
      %v734 = vsel %vm723, %v726, %v733
      %v735 = vrot.slane %v711, 3
      %v736 = vsel %vm723, %v727, %v735
      %v737 = vrot.slane %v712, 3
      %v738 = vsel %vm723, %v728, %v737
      %739 = vrot.lane.b32.xlu0 %v724, 17
      %v740 = vpop.permute.xlu0 %739
      %741 = vrot.lane.b32.xlu0 %v725, 17
      %v742 = vpop.permute.xlu0 %741
      %743 = vrot.lane.b32.xlu0 %v726, 17
      %v744 = vpop.permute.xlu0 %743
      %745 = vrot.lane.b32.xlu0 %v727, 17
      %v746 = vpop.permute.xlu0 %745
      %747 = vrot.lane.b32.xlu0 %v728, 17
      %v748 = vpop.permute.xlu0 %747
      %749 = vrot.lane.b32.xlu0 %v730, 17
      %v750 = vpop.permute.xlu0 %749
      %751 = vrot.lane.b32.xlu0 %v732, 17
      %v752 = vpop.permute.xlu0 %751
      %753 = vrot.lane.b32.xlu0 %v734, 17
      %v754 = vpop.permute.xlu0 %753
      %755 = vrot.lane.b32.xlu0 %v736, 17
      %v756 = vpop.permute.xlu0 %755
      %757 = vrot.lane.b32.xlu0 %v738, 17
      %v758 = vpop.permute.xlu0 %757
      %vm759 = vcmask 138240
      %v760 = vsel %vm759, %v740, %v742
      %v761 = vsel %vm759, %v742, %v744
      %v762 = vsel %vm759, %v744, %v746
      %v763 = vsel %vm759, %v746, %v748
      %v764 = vsel %vm759, %v750, %v752
      %v765 = vsel %vm759, %v752, %v754
      %v766 = vsel %vm759, %v754, %v756
      %v767 = vsel %vm759, %v756, %v758
      %776 = vst [vmem:[#allocation2 + $0x280] sm:$0xe0] %v760
      %777 = vst [vmem:[#allocation2 + $0x288] sm:$0xe0] %v761
      %778 = vst [vmem:[#allocation2 + $0x290] sm:$0xe0] %v762
      %779 = vst [vmem:[#allocation2 + $0x298] sm:$0xe0] %v763
      %780 = vst [vmem:[#allocation2 + $0x300] sm:$0x3f] %v764
      %781 = vst [vmem:[#allocation2 + $0x308] sm:$0x3f] %v765
      %782 = vst [vmem:[#allocation2 + $0x310] sm:$0x3f] %v766
      %783 = vst [vmem:[#allocation2 + $0x318] sm:$0x3f] %v767
      %v784 = vld [vmem:[%s305] sm:$0xff]
      %v785 = vld [vmem:[%s305 + $0x8] sm:$0xff]
      %v786 = vld [vmem:[%s305 + $0x10] sm:$0xff]
      %v787 = vld [vmem:[%s305 + $0x18] sm:$0xff]
      %v788 = vld [vmem:[%s305 + $0x20] sm:$0xff]
      %v789 = vld [vmem:[%s305 + $0x28] sm:$0x1]
      %v790 = vld [vmem:[%s305 + $0x30] sm:$0x1]
      %v791 = vld [vmem:[%s305 + $0x38] sm:$0x1]
      %v792 = vld [vmem:[%s305 + $0x40] sm:$0x1]
      %v793 = vld [vmem:[%s305 + $0x48] sm:$0x1]
      %vm804 = vcmask 1045504
      %v805 = vrot.slane %v784, 2
      %v806 = vrot.slane %v785, 2
      %v807 = vrot.slane %v786, 2
      %v808 = vrot.slane %v787, 2
      %v809 = vrot.slane %v788, 2
      %v810 = vrot.slane %v789, 2
      %v811 = vsel %vm804, %v805, %v810
      %v812 = vrot.slane %v790, 2
      %v813 = vsel %vm804, %v806, %v812
      %v814 = vrot.slane %v791, 2
      %v815 = vsel %vm804, %v807, %v814
      %v816 = vrot.slane %v792, 2
      %v817 = vsel %vm804, %v808, %v816
      %v818 = vrot.slane %v793, 2
      %v819 = vsel %vm804, %v809, %v818
      %820 = vrot.lane.b32.xlu0 %v805, 16
      %v821 = vpop.permute.xlu0 %820
      %822 = vrot.lane.b32.xlu0 %v806, 16
      %v823 = vpop.permute.xlu0 %822
      %824 = vrot.lane.b32.xlu0 %v807, 16
      %v825 = vpop.permute.xlu0 %824
      %826 = vrot.lane.b32.xlu0 %v808, 16
      %v827 = vpop.permute.xlu0 %826
      %828 = vrot.lane.b32.xlu0 %v809, 16
      %v829 = vpop.permute.xlu0 %828
      %830 = vrot.lane.b32.xlu0 %v811, 16
      %v831 = vpop.permute.xlu0 %830
      %832 = vrot.lane.b32.xlu0 %v813, 16
      %v833 = vpop.permute.xlu0 %832
      %834 = vrot.lane.b32.xlu0 %v815, 16
      %v835 = vpop.permute.xlu0 %834
      %836 = vrot.lane.b32.xlu0 %v817, 16
      %v837 = vpop.permute.xlu0 %836
      %838 = vrot.lane.b32.xlu0 %v819, 16
      %v839 = vpop.permute.xlu0 %838
      %vm840 = vcmask 130048
      %v841 = vsel %vm840, %v821, %v823
      %v842 = vsel %vm840, %v823, %v825
      %v843 = vsel %vm840, %v825, %v827
      %v844 = vsel %vm840, %v827, %v829
      %v845 = vsel %vm840, %v831, %v833
      %v846 = vsel %vm840, %v833, %v835
      %v847 = vsel %vm840, %v835, %v837
      %v848 = vsel %vm840, %v837, %v839
      %857 = vst [vmem:[#allocation2 + $0x300] sm:$0xc0] %v841
      %858 = vst [vmem:[#allocation2 + $0x308] sm:$0xc0] %v842
      %859 = vst [vmem:[#allocation2 + $0x310] sm:$0xc0] %v843
      %860 = vst [vmem:[#allocation2 + $0x318] sm:$0xc0] %v844
      %861 = vst [vmem:[#allocation2 + $0x380] sm:$0x7f] %v845
      %862 = vst [vmem:[#allocation2 + $0x388] sm:$0x7f] %v846
      %863 = vst [vmem:[#allocation2 + $0x390] sm:$0x7f] %v847
      %864 = vst [vmem:[#allocation2 + $0x398] sm:$0x7f] %v848
      %v865 = vld [vmem:[%s305] sm:$0xff]
      %v866 = vld [vmem:[%s305 + $0x8] sm:$0xff]
      %v867 = vld [vmem:[%s305 + $0x10] sm:$0xff]
      %v868 = vld [vmem:[%s305 + $0x18] sm:$0xff]
      %v869 = vld [vmem:[%s305 + $0x20] sm:$0xff]
      %v870 = vld [vmem:[%s305 + $0x28] sm:$0x1]
      %v871 = vld [vmem:[%s305 + $0x30] sm:$0x1]
      %v872 = vld [vmem:[%s305 + $0x38] sm:$0x1]
      %v873 = vld [vmem:[%s305 + $0x40] sm:$0x1]
      %v874 = vld [vmem:[%s305 + $0x48] sm:$0x1]
      %vm885 = vcmask 1046528
      %v886 = vrot.slane %v865, 1
      %v887 = vrot.slane %v866, 1
      %v888 = vrot.slane %v867, 1
      %v889 = vrot.slane %v868, 1
      %v890 = vrot.slane %v869, 1
      %v891 = vrot.slane %v870, 1
      %v892 = vsel %vm885, %v886, %v891
      %v893 = vrot.slane %v871, 1
      %v894 = vsel %vm885, %v887, %v893
      %v895 = vrot.slane %v872, 1
      %v896 = vsel %vm885, %v888, %v895
      %v897 = vrot.slane %v873, 1
      %v898 = vsel %vm885, %v889, %v897
      %v899 = vrot.slane %v874, 1
      %v900 = vsel %vm885, %v890, %v899
      %901 = vrot.lane.b32.xlu0 %v886, 15
      %v902 = vpop.permute.xlu0 %901
      %903 = vrot.lane.b32.xlu0 %v887, 15
      %v904 = vpop.permute.xlu0 %903
      %905 = vrot.lane.b32.xlu0 %v888, 15
      %v906 = vpop.permute.xlu0 %905
      %907 = vrot.lane.b32.xlu0 %v889, 15
      %v908 = vpop.permute.xlu0 %907
      %909 = vrot.lane.b32.xlu0 %v890, 15
      %v910 = vpop.permute.xlu0 %909
      %911 = vrot.lane.b32.xlu0 %v892, 15
      %v912 = vpop.permute.xlu0 %911
      %913 = vrot.lane.b32.xlu0 %v894, 15
      %v914 = vpop.permute.xlu0 %913
      %915 = vrot.lane.b32.xlu0 %v896, 15
      %v916 = vpop.permute.xlu0 %915
      %917 = vrot.lane.b32.xlu0 %v898, 15
      %v918 = vpop.permute.xlu0 %917
      %919 = vrot.lane.b32.xlu0 %v900, 15
      %v920 = vpop.permute.xlu0 %919
      %vm921 = vcmask 121856
      %v922 = vsel %vm921, %v902, %v904
      %v923 = vsel %vm921, %v904, %v906
      %v924 = vsel %vm921, %v906, %v908
      %v925 = vsel %vm921, %v908, %v910
      %v926 = vsel %vm921, %v912, %v914
      %v927 = vsel %vm921, %v914, %v916
      %v928 = vsel %vm921, %v916, %v918
      %v929 = vsel %vm921, %v918, %v920
      %938 = vst [vmem:[#allocation2 + $0x380] sm:$0x80] %v922
      %939 = vst [vmem:[#allocation2 + $0x388] sm:$0x80] %v923
      %940 = vst [vmem:[#allocation2 + $0x390] sm:$0x80] %v924
      %941 = vst [vmem:[#allocation2 + $0x398] sm:$0x80] %v925
      %942 = vst [vmem:[#allocation2 + $0x400] sm:$0xff] %v926
      %943 = vst [vmem:[#allocation2 + $0x408] sm:$0xff] %v927
      %944 = vst [vmem:[#allocation2 + $0x410] sm:$0xff] %v928
      %945 = vst [vmem:[#allocation2 + $0x418] sm:$0xff] %v929
      %v946 = vld [vmem:[%s305] sm:$0xff]
      %v947 = vld [vmem:[%s305 + $0x8] sm:$0xff]
      %v948 = vld [vmem:[%s305 + $0x10] sm:$0xff]
      %v949 = vld [vmem:[%s305 + $0x18] sm:$0xff]
      %v950 = vld [vmem:[%s305 + $0x20] sm:$0xff]
      %v951 = vld [vmem:[%s305 + $0x28] sm:$0x1]
      %v952 = vld [vmem:[%s305 + $0x30] sm:$0x1]
      %v953 = vld [vmem:[%s305 + $0x38] sm:$0x1]
      %v954 = vld [vmem:[%s305 + $0x40] sm:$0x1]
      %v955 = vld [vmem:[%s305 + $0x48] sm:$0x1]
      %966 = vrot.lane.b32.xlu0 %v946, 14
      %v967 = vpop.permute.xlu0 %966
      %968 = vrot.lane.b32.xlu0 %v947, 14
      %v969 = vpop.permute.xlu0 %968
      %970 = vrot.lane.b32.xlu0 %v948, 14
      %v971 = vpop.permute.xlu0 %970
      %972 = vrot.lane.b32.xlu0 %v949, 14
      %v973 = vpop.permute.xlu0 %972
      %974 = vrot.lane.b32.xlu0 %v950, 14
      %v975 = vpop.permute.xlu0 %974
      %976 = vrot.lane.b32.xlu0 %v951, 14
      %v977 = vpop.permute.xlu0 %976
      %978 = vrot.lane.b32.xlu0 %v952, 14
      %v979 = vpop.permute.xlu0 %978
      %980 = vrot.lane.b32.xlu0 %v953, 14
      %v981 = vpop.permute.xlu0 %980
      %982 = vrot.lane.b32.xlu0 %v954, 14
      %v983 = vpop.permute.xlu0 %982
      %984 = vrot.lane.b32.xlu0 %v955, 14
      %v985 = vpop.permute.xlu0 %984
      %vm986 = vcmask 113664
      %v987 = vsel %vm986, %v967, %v969
      %v988 = vsel %vm986, %v969, %v971
      %v989 = vsel %vm986, %v971, %v973
      %v990 = vsel %vm986, %v973, %v975
      %v991 = vsel %vm986, %v977, %v979
      %v992 = vsel %vm986, %v979, %v981
      %v993 = vsel %vm986, %v981, %v983
      %v994 = vsel %vm986, %v983, %v985
      %1003 = vst [vmem:[#allocation2 + $0x480] sm:$0xff] %v987
      %1004 = vst [vmem:[#allocation2 + $0x488] sm:$0xff] %v988
      %1005 = vst [vmem:[#allocation2 + $0x490] sm:$0xff] %v989
      %1006 = vst [vmem:[#allocation2 + $0x498] sm:$0xff] %v990
      %1007 = vst [vmem:[#allocation2 + $0x500] sm:$0x1] %v991
      %1008 = vst [vmem:[#allocation2 + $0x508] sm:$0x1] %v992
      %1009 = vst [vmem:[#allocation2 + $0x510] sm:$0x1] %v993
      %1010 = vst [vmem:[#allocation2 + $0x518] sm:$0x1] %v994
      %s1011 = scalar_lea.vmem %s305, 80
      %v1012 = vld [vmem:[%s1011] sm:$0xff]
      %v1013 = vld [vmem:[%s1011 + $0x8] sm:$0xff]
      %v1014 = vld [vmem:[%s1011 + $0x10] sm:$0xff]
      %v1015 = vld [vmem:[%s1011 + $0x18] sm:$0xff]
      %v1016 = vld [vmem:[%s1011 + $0x20] sm:$0xff]
      %v1017 = vld [vmem:[%s1011 + $0x28] sm:$0x1]
      %v1018 = vld [vmem:[%s1011 + $0x30] sm:$0x1]
      %v1019 = vld [vmem:[%s1011 + $0x38] sm:$0x1]
      %v1020 = vld [vmem:[%s1011 + $0x40] sm:$0x1]
      %v1021 = vld [vmem:[%s1011 + $0x48] sm:$0x1]
      %1032 = vrot.lane.b32.xlu0 %v1012, 22
      %v1033 = vpop.permute.xlu0 %1032
      %1034 = vrot.lane.b32.xlu0 %v1013, 22
      %v1035 = vpop.permute.xlu0 %1034
      %1036 = vrot.lane.b32.xlu0 %v1014, 22
      %v1037 = vpop.permute.xlu0 %1036
      %1038 = vrot.lane.b32.xlu0 %v1015, 22
      %v1039 = vpop.permute.xlu0 %1038
      %1040 = vrot.lane.b32.xlu0 %v1016, 22
      %v1041 = vpop.permute.xlu0 %1040
      %1042 = vrot.lane.b32.xlu0 %v1017, 22
      %v1043 = vpop.permute.xlu0 %1042
      %1044 = vrot.lane.b32.xlu0 %v1018, 22
      %v1045 = vpop.permute.xlu0 %1044
      %1046 = vrot.lane.b32.xlu0 %v1019, 22
      %v1047 = vpop.permute.xlu0 %1046
      %1048 = vrot.lane.b32.xlu0 %v1020, 22
      %v1049 = vpop.permute.xlu0 %1048
      %1050 = vrot.lane.b32.xlu0 %v1021, 22
      %v1051 = vpop.permute.xlu0 %1050
      %v1052 = vsel %vm354, %v1033, %v1035
      %v1053 = vsel %vm354, %v1035, %v1037
      %v1054 = vsel %vm354, %v1037, %v1039
      %v1055 = vsel %vm354, %v1039, %v1041
      %v1056 = vsel %vm354, %v1043, %v1045
      %v1057 = vsel %vm354, %v1045, %v1047
      %v1058 = vsel %vm354, %v1047, %v1049
      %v1059 = vsel %vm354, %v1049, %v1051
      %1068 = vst [vmem:[#allocation2 + $0x20] sm:$0xff] %v1052
      %1069 = vst [vmem:[#allocation2 + $0x28] sm:$0xff] %v1053
      %1070 = vst [vmem:[#allocation2 + $0x30] sm:$0xff] %v1054
      %1071 = vst [vmem:[#allocation2 + $0x38] sm:$0xff] %v1055
      %1072 = vst [vmem:[#allocation2 + $0xa0] sm:$0x1] %v1056
      %1073 = vst [vmem:[#allocation2 + $0xa8] sm:$0x1] %v1057
      %1074 = vst [vmem:[#allocation2 + $0xb0] sm:$0x1] %v1058
      %1075 = vst [vmem:[#allocation2 + $0xb8] sm:$0x1] %v1059
      %v1076 = vld [vmem:[%s1011] sm:$0xff]
      %v1077 = vld [vmem:[%s1011 + $0x8] sm:$0xff]
      %v1078 = vld [vmem:[%s1011 + $0x10] sm:$0xff]
      %v1079 = vld [vmem:[%s1011 + $0x18] sm:$0xff]
      %v1080 = vld [vmem:[%s1011 + $0x20] sm:$0xff]
      %v1081 = vld [vmem:[%s1011 + $0x28] sm:$0x1]
      %v1082 = vld [vmem:[%s1011 + $0x30] sm:$0x1]
      %v1083 = vld [vmem:[%s1011 + $0x38] sm:$0x1]
      %v1084 = vld [vmem:[%s1011 + $0x40] sm:$0x1]
      %v1085 = vld [vmem:[%s1011 + $0x48] sm:$0x1]
      %v1096 = vrot.slane %v1076, 7
      %v1097 = vrot.slane %v1077, 7
      %v1098 = vrot.slane %v1078, 7
      %v1099 = vrot.slane %v1079, 7
      %v1100 = vrot.slane %v1080, 7
      %v1101 = vrot.slane %v1081, 7
      %v1102 = vsel %vm399, %v1096, %v1101
      %v1103 = vrot.slane %v1082, 7
      %v1104 = vsel %vm399, %v1097, %v1103
      %v1105 = vrot.slane %v1083, 7
      %v1106 = vsel %vm399, %v1098, %v1105
      %v1107 = vrot.slane %v1084, 7
      %v1108 = vsel %vm399, %v1099, %v1107
      %v1109 = vrot.slane %v1085, 7
      %v1110 = vsel %vm399, %v1100, %v1109
      %1111 = vrot.lane.b32.xlu0 %v1096, 21
      %v1112 = vpop.permute.xlu0 %1111
      %1113 = vrot.lane.b32.xlu0 %v1097, 21
      %v1114 = vpop.permute.xlu0 %1113
      %1115 = vrot.lane.b32.xlu0 %v1098, 21
      %v1116 = vpop.permute.xlu0 %1115
      %1117 = vrot.lane.b32.xlu0 %v1099, 21
      %v1118 = vpop.permute.xlu0 %1117
      %1119 = vrot.lane.b32.xlu0 %v1100, 21
      %v1120 = vpop.permute.xlu0 %1119
      %1121 = vrot.lane.b32.xlu0 %v1102, 21
      %v1122 = vpop.permute.xlu0 %1121
      %1123 = vrot.lane.b32.xlu0 %v1104, 21
      %v1124 = vpop.permute.xlu0 %1123
      %1125 = vrot.lane.b32.xlu0 %v1106, 21
      %v1126 = vpop.permute.xlu0 %1125
      %1127 = vrot.lane.b32.xlu0 %v1108, 21
      %v1128 = vpop.permute.xlu0 %1127
      %1129 = vrot.lane.b32.xlu0 %v1110, 21
      %v1130 = vpop.permute.xlu0 %1129
      %v1131 = vsel %vm435, %v1112, %v1114
      %v1132 = vsel %vm435, %v1114, %v1116
      %v1133 = vsel %vm435, %v1116, %v1118
      %v1134 = vsel %vm435, %v1118, %v1120
      %v1135 = vsel %vm435, %v1122, %v1124
      %v1136 = vsel %vm435, %v1124, %v1126
      %v1137 = vsel %vm435, %v1126, %v1128
      %v1138 = vsel %vm435, %v1128, %v1130
      %1147 = vst [vmem:[#allocation2 + $0xa0] sm:$0xfe] %v1131
      %1148 = vst [vmem:[#allocation2 + $0xa8] sm:$0xfe] %v1132
      %1149 = vst [vmem:[#allocation2 + $0xb0] sm:$0xfe] %v1133
      %1150 = vst [vmem:[#allocation2 + $0xb8] sm:$0xfe] %v1134
      %1151 = vst [vmem:[#allocation2 + $0x120] sm:$0x3] %v1135
      %1152 = vst [vmem:[#allocation2 + $0x128] sm:$0x3] %v1136
      %1153 = vst [vmem:[#allocation2 + $0x130] sm:$0x3] %v1137
      %1154 = vst [vmem:[#allocation2 + $0x138] sm:$0x3] %v1138
      %v1155 = vld [vmem:[%s1011] sm:$0xff]
      %v1156 = vld [vmem:[%s1011 + $0x8] sm:$0xff]
      %v1157 = vld [vmem:[%s1011 + $0x10] sm:$0xff]
      %v1158 = vld [vmem:[%s1011 + $0x18] sm:$0xff]
      %v1159 = vld [vmem:[%s1011 + $0x20] sm:$0xff]
      %v1160 = vld [vmem:[%s1011 + $0x28] sm:$0x1]
      %v1161 = vld [vmem:[%s1011 + $0x30] sm:$0x1]
      %v1162 = vld [vmem:[%s1011 + $0x38] sm:$0x1]
      %v1163 = vld [vmem:[%s1011 + $0x40] sm:$0x1]
      %v1164 = vld [vmem:[%s1011 + $0x48] sm:$0x1]
      %v1175 = vrot.slane %v1155, 6
      %v1176 = vrot.slane %v1156, 6
      %v1177 = vrot.slane %v1157, 6
      %v1178 = vrot.slane %v1158, 6
      %v1179 = vrot.slane %v1159, 6
      %v1180 = vrot.slane %v1160, 6
      %v1181 = vsel %vm480, %v1175, %v1180
      %v1182 = vrot.slane %v1161, 6
      %v1183 = vsel %vm480, %v1176, %v1182
      %v1184 = vrot.slane %v1162, 6
      %v1185 = vsel %vm480, %v1177, %v1184
      %v1186 = vrot.slane %v1163, 6
      %v1187 = vsel %vm480, %v1178, %v1186
      %v1188 = vrot.slane %v1164, 6
      %v1189 = vsel %vm480, %v1179, %v1188
      %1190 = vrot.lane.b32.xlu0 %v1175, 20
      %v1191 = vpop.permute.xlu0 %1190
      %1192 = vrot.lane.b32.xlu0 %v1176, 20
      %v1193 = vpop.permute.xlu0 %1192
      %1194 = vrot.lane.b32.xlu0 %v1177, 20
      %v1195 = vpop.permute.xlu0 %1194
      %1196 = vrot.lane.b32.xlu0 %v1178, 20
      %v1197 = vpop.permute.xlu0 %1196
      %1198 = vrot.lane.b32.xlu0 %v1179, 20
      %v1199 = vpop.permute.xlu0 %1198
      %1200 = vrot.lane.b32.xlu0 %v1181, 20
      %v1201 = vpop.permute.xlu0 %1200
      %1202 = vrot.lane.b32.xlu0 %v1183, 20
      %v1203 = vpop.permute.xlu0 %1202
      %1204 = vrot.lane.b32.xlu0 %v1185, 20
      %v1205 = vpop.permute.xlu0 %1204
      %1206 = vrot.lane.b32.xlu0 %v1187, 20
      %v1207 = vpop.permute.xlu0 %1206
      %1208 = vrot.lane.b32.xlu0 %v1189, 20
      %v1209 = vpop.permute.xlu0 %1208
      %v1210 = vsel %vm516, %v1191, %v1193
      %v1211 = vsel %vm516, %v1193, %v1195
      %v1212 = vsel %vm516, %v1195, %v1197
      %v1213 = vsel %vm516, %v1197, %v1199
      %v1214 = vsel %vm516, %v1201, %v1203
      %v1215 = vsel %vm516, %v1203, %v1205
      %v1216 = vsel %vm516, %v1205, %v1207
      %v1217 = vsel %vm516, %v1207, %v1209
      %1226 = vst [vmem:[#allocation2 + $0x120] sm:$0xfc] %v1210
      %1227 = vst [vmem:[#allocation2 + $0x128] sm:$0xfc] %v1211
      %1228 = vst [vmem:[#allocation2 + $0x130] sm:$0xfc] %v1212
      %1229 = vst [vmem:[#allocation2 + $0x138] sm:$0xfc] %v1213
      %1230 = vst [vmem:[#allocation2 + $0x1a0] sm:$0x7] %v1214
      %1231 = vst [vmem:[#allocation2 + $0x1a8] sm:$0x7] %v1215
      %1232 = vst [vmem:[#allocation2 + $0x1b0] sm:$0x7] %v1216
      %1233 = vst [vmem:[#allocation2 + $0x1b8] sm:$0x7] %v1217
      %v1234 = vld [vmem:[%s1011] sm:$0xff]
      %v1235 = vld [vmem:[%s1011 + $0x8] sm:$0xff]
      %v1236 = vld [vmem:[%s1011 + $0x10] sm:$0xff]
      %v1237 = vld [vmem:[%s1011 + $0x18] sm:$0xff]
      %v1238 = vld [vmem:[%s1011 + $0x20] sm:$0xff]
      %v1239 = vld [vmem:[%s1011 + $0x28] sm:$0x1]
      %v1240 = vld [vmem:[%s1011 + $0x30] sm:$0x1]
      %v1241 = vld [vmem:[%s1011 + $0x38] sm:$0x1]
      %v1242 = vld [vmem:[%s1011 + $0x40] sm:$0x1]
      %v1243 = vld [vmem:[%s1011 + $0x48] sm:$0x1]
      %v1254 = vrot.slane %v1234, 5
      %v1255 = vrot.slane %v1235, 5
      %v1256 = vrot.slane %v1236, 5
      %v1257 = vrot.slane %v1237, 5
      %v1258 = vrot.slane %v1238, 5
      %v1259 = vrot.slane %v1239, 5
      %v1260 = vsel %vm561, %v1254, %v1259
      %v1261 = vrot.slane %v1240, 5
      %v1262 = vsel %vm561, %v1255, %v1261
      %v1263 = vrot.slane %v1241, 5
      %v1264 = vsel %vm561, %v1256, %v1263
      %v1265 = vrot.slane %v1242, 5
      %v1266 = vsel %vm561, %v1257, %v1265
      %v1267 = vrot.slane %v1243, 5
      %v1268 = vsel %vm561, %v1258, %v1267
      %1269 = vrot.lane.b32.xlu0 %v1254, 19
      %v1270 = vpop.permute.xlu0 %1269
      %1271 = vrot.lane.b32.xlu0 %v1255, 19
      %v1272 = vpop.permute.xlu0 %1271
      %1273 = vrot.lane.b32.xlu0 %v1256, 19
      %v1274 = vpop.permute.xlu0 %1273
      %1275 = vrot.lane.b32.xlu0 %v1257, 19
      %v1276 = vpop.permute.xlu0 %1275
      %1277 = vrot.lane.b32.xlu0 %v1258, 19
      %v1278 = vpop.permute.xlu0 %1277
      %1279 = vrot.lane.b32.xlu0 %v1260, 19
      %v1280 = vpop.permute.xlu0 %1279
      %1281 = vrot.lane.b32.xlu0 %v1262, 19
      %v1282 = vpop.permute.xlu0 %1281
      %1283 = vrot.lane.b32.xlu0 %v1264, 19
      %v1284 = vpop.permute.xlu0 %1283
      %1285 = vrot.lane.b32.xlu0 %v1266, 19
      %v1286 = vpop.permute.xlu0 %1285
      %1287 = vrot.lane.b32.xlu0 %v1268, 19
      %v1288 = vpop.permute.xlu0 %1287
      %v1289 = vsel %vm597, %v1270, %v1272
      %v1290 = vsel %vm597, %v1272, %v1274
      %v1291 = vsel %vm597, %v1274, %v1276
      %v1292 = vsel %vm597, %v1276, %v1278
      %v1293 = vsel %vm597, %v1280, %v1282
      %v1294 = vsel %vm597, %v1282, %v1284
      %v1295 = vsel %vm597, %v1284, %v1286
      %v1296 = vsel %vm597, %v1286, %v1288
      %1305 = vst [vmem:[#allocation2 + $0x1a0] sm:$0xf8] %v1289
      %1306 = vst [vmem:[#allocation2 + $0x1a8] sm:$0xf8] %v1290
      %1307 = vst [vmem:[#allocation2 + $0x1b0] sm:$0xf8] %v1291
      %1308 = vst [vmem:[#allocation2 + $0x1b8] sm:$0xf8] %v1292
      %1309 = vst [vmem:[#allocation2 + $0x220] sm:$0xf] %v1293
      %1310 = vst [vmem:[#allocation2 + $0x228] sm:$0xf] %v1294
      %1311 = vst [vmem:[#allocation2 + $0x230] sm:$0xf] %v1295
      %1312 = vst [vmem:[#allocation2 + $0x238] sm:$0xf] %v1296
      %v1313 = vld [vmem:[%s1011] sm:$0xff]
      %v1314 = vld [vmem:[%s1011 + $0x8] sm:$0xff]
      %v1315 = vld [vmem:[%s1011 + $0x10] sm:$0xff]
      %v1316 = vld [vmem:[%s1011 + $0x18] sm:$0xff]
      %v1317 = vld [vmem:[%s1011 + $0x20] sm:$0xff]
      %v1318 = vld [vmem:[%s1011 + $0x28] sm:$0x1]
      %v1319 = vld [vmem:[%s1011 + $0x30] sm:$0x1]
      %v1320 = vld [vmem:[%s1011 + $0x38] sm:$0x1]
      %v1321 = vld [vmem:[%s1011 + $0x40] sm:$0x1]
      %v1322 = vld [vmem:[%s1011 + $0x48] sm:$0x1]
      %v1333 = vrot.slane %v1313, 4
      %v1334 = vrot.slane %v1314, 4
      %v1335 = vrot.slane %v1315, 4
      %v1336 = vrot.slane %v1316, 4
      %v1337 = vrot.slane %v1317, 4
      %v1338 = vrot.slane %v1318, 4
      %v1339 = vsel %vm642, %v1333, %v1338
      %v1340 = vrot.slane %v1319, 4
      %v1341 = vsel %vm642, %v1334, %v1340
      %v1342 = vrot.slane %v1320, 4
      %v1343 = vsel %vm642, %v1335, %v1342
      %v1344 = vrot.slane %v1321, 4
      %v1345 = vsel %vm642, %v1336, %v1344
      %v1346 = vrot.slane %v1322, 4
      %v1347 = vsel %vm642, %v1337, %v1346
      %1348 = vrot.lane.b32.xlu0 %v1333, 18
      %v1349 = vpop.permute.xlu0 %1348
      %1350 = vrot.lane.b32.xlu0 %v1334, 18
      %v1351 = vpop.permute.xlu0 %1350
      %1352 = vrot.lane.b32.xlu0 %v1335, 18
      %v1353 = vpop.permute.xlu0 %1352
      %1354 = vrot.lane.b32.xlu0 %v1336, 18
      %v1355 = vpop.permute.xlu0 %1354
      %1356 = vrot.lane.b32.xlu0 %v1337, 18
      %v1357 = vpop.permute.xlu0 %1356
      %1358 = vrot.lane.b32.xlu0 %v1339, 18
      %v1359 = vpop.permute.xlu0 %1358
      %1360 = vrot.lane.b32.xlu0 %v1341, 18
      %v1361 = vpop.permute.xlu0 %1360
      %1362 = vrot.lane.b32.xlu0 %v1343, 18
      %v1363 = vpop.permute.xlu0 %1362
      %1364 = vrot.lane.b32.xlu0 %v1345, 18
      %v1365 = vpop.permute.xlu0 %1364
      %1366 = vrot.lane.b32.xlu0 %v1347, 18
      %v1367 = vpop.permute.xlu0 %1366
      %v1368 = vsel %vm678, %v1349, %v1351
      %v1369 = vsel %vm678, %v1351, %v1353
      %v1370 = vsel %vm678, %v1353, %v1355
      %v1371 = vsel %vm678, %v1355, %v1357
      %v1372 = vsel %vm678, %v1359, %v1361
      %v1373 = vsel %vm678, %v1361, %v1363
      %v1374 = vsel %vm678, %v1363, %v1365
      %v1375 = vsel %vm678, %v1365, %v1367
      %1384 = vst [vmem:[#allocation2 + $0x220] sm:$0xf0] %v1368
      %1385 = vst [vmem:[#allocation2 + $0x228] sm:$0xf0] %v1369
      %1386 = vst [vmem:[#allocation2 + $0x230] sm:$0xf0] %v1370
      %1387 = vst [vmem:[#allocation2 + $0x238] sm:$0xf0] %v1371
      %1388 = vst [vmem:[#allocation2 + $0x2a0] sm:$0x1f] %v1372
      %1389 = vst [vmem:[#allocation2 + $0x2a8] sm:$0x1f] %v1373
      %1390 = vst [vmem:[#allocation2 + $0x2b0] sm:$0x1f] %v1374
      %1391 = vst [vmem:[#allocation2 + $0x2b8] sm:$0x1f] %v1375
      %v1392 = vld [vmem:[%s1011] sm:$0xff]
      %v1393 = vld [vmem:[%s1011 + $0x8] sm:$0xff]
      %v1394 = vld [vmem:[%s1011 + $0x10] sm:$0xff]
      %v1395 = vld [vmem:[%s1011 + $0x18] sm:$0xff]
      %v1396 = vld [vmem:[%s1011 + $0x20] sm:$0xff]
      %v1397 = vld [vmem:[%s1011 + $0x28] sm:$0x1]
      %v1398 = vld [vmem:[%s1011 + $0x30] sm:$0x1]
      %v1399 = vld [vmem:[%s1011 + $0x38] sm:$0x1]
      %v1400 = vld [vmem:[%s1011 + $0x40] sm:$0x1]
      %v1401 = vld [vmem:[%s1011 + $0x48] sm:$0x1]
      %v1412 = vrot.slane %v1392, 3
      %v1413 = vrot.slane %v1393, 3
      %v1414 = vrot.slane %v1394, 3
      %v1415 = vrot.slane %v1395, 3
      %v1416 = vrot.slane %v1396, 3
      %v1417 = vrot.slane %v1397, 3
      %v1418 = vsel %vm723, %v1412, %v1417
      %v1419 = vrot.slane %v1398, 3
      %v1420 = vsel %vm723, %v1413, %v1419
      %v1421 = vrot.slane %v1399, 3
      %v1422 = vsel %vm723, %v1414, %v1421
      %v1423 = vrot.slane %v1400, 3
      %v1424 = vsel %vm723, %v1415, %v1423
      %v1425 = vrot.slane %v1401, 3
      %v1426 = vsel %vm723, %v1416, %v1425
      %1427 = vrot.lane.b32.xlu0 %v1412, 17
      %v1428 = vpop.permute.xlu0 %1427
      %1429 = vrot.lane.b32.xlu0 %v1413, 17
      %v1430 = vpop.permute.xlu0 %1429
      %1431 = vrot.lane.b32.xlu0 %v1414, 17
      %v1432 = vpop.permute.xlu0 %1431
      %1433 = vrot.lane.b32.xlu0 %v1415, 17
      %v1434 = vpop.permute.xlu0 %1433
      %1435 = vrot.lane.b32.xlu0 %v1416, 17
      %v1436 = vpop.permute.xlu0 %1435
      %1437 = vrot.lane.b32.xlu0 %v1418, 17
      %v1438 = vpop.permute.xlu0 %1437
      %1439 = vrot.lane.b32.xlu0 %v1420, 17
      %v1440 = vpop.permute.xlu0 %1439
      %1441 = vrot.lane.b32.xlu0 %v1422, 17
      %v1442 = vpop.permute.xlu0 %1441
      %1443 = vrot.lane.b32.xlu0 %v1424, 17
      %v1444 = vpop.permute.xlu0 %1443
      %1445 = vrot.lane.b32.xlu0 %v1426, 17
      %v1446 = vpop.permute.xlu0 %1445
      %v1447 = vsel %vm759, %v1428, %v1430
      %v1448 = vsel %vm759, %v1430, %v1432
      %v1449 = vsel %vm759, %v1432, %v1434
      %v1450 = vsel %vm759, %v1434, %v1436
      %v1451 = vsel %vm759, %v1438, %v1440
      %v1452 = vsel %vm759, %v1440, %v1442
      %v1453 = vsel %vm759, %v1442, %v1444
      %v1454 = vsel %vm759, %v1444, %v1446
      %1463 = vst [vmem:[#allocation2 + $0x2a0] sm:$0xe0] %v1447
      %1464 = vst [vmem:[#allocation2 + $0x2a8] sm:$0xe0] %v1448
      %1465 = vst [vmem:[#allocation2 + $0x2b0] sm:$0xe0] %v1449
      %1466 = vst [vmem:[#allocation2 + $0x2b8] sm:$0xe0] %v1450
      %1467 = vst [vmem:[#allocation2 + $0x320] sm:$0x3f] %v1451
      %1468 = vst [vmem:[#allocation2 + $0x328] sm:$0x3f] %v1452
      %1469 = vst [vmem:[#allocation2 + $0x330] sm:$0x3f] %v1453
      %1470 = vst [vmem:[#allocation2 + $0x338] sm:$0x3f] %v1454
      %v1471 = vld [vmem:[%s1011] sm:$0xff]
      %v1472 = vld [vmem:[%s1011 + $0x8] sm:$0xff]
      %v1473 = vld [vmem:[%s1011 + $0x10] sm:$0xff]
      %v1474 = vld [vmem:[%s1011 + $0x18] sm:$0xff]
      %v1475 = vld [vmem:[%s1011 + $0x20] sm:$0xff]
      %v1476 = vld [vmem:[%s1011 + $0x28] sm:$0x1]
      %v1477 = vld [vmem:[%s1011 + $0x30] sm:$0x1]
      %v1478 = vld [vmem:[%s1011 + $0x38] sm:$0x1]
      %v1479 = vld [vmem:[%s1011 + $0x40] sm:$0x1]
      %v1480 = vld [vmem:[%s1011 + $0x48] sm:$0x1]
      %v1491 = vrot.slane %v1471, 2
      %v1492 = vrot.slane %v1472, 2
      %v1493 = vrot.slane %v1473, 2
      %v1494 = vrot.slane %v1474, 2
      %v1495 = vrot.slane %v1475, 2
      %v1496 = vrot.slane %v1476, 2
      %v1497 = vsel %vm804, %v1491, %v1496
      %v1498 = vrot.slane %v1477, 2
      %v1499 = vsel %vm804, %v1492, %v1498
      %v1500 = vrot.slane %v1478, 2
      %v1501 = vsel %vm804, %v1493, %v1500
      %v1502 = vrot.slane %v1479, 2
      %v1503 = vsel %vm804, %v1494, %v1502
      %v1504 = vrot.slane %v1480, 2
      %v1505 = vsel %vm804, %v1495, %v1504
      %1506 = vrot.lane.b32.xlu0 %v1491, 16
      %v1507 = vpop.permute.xlu0 %1506
      %1508 = vrot.lane.b32.xlu0 %v1492, 16
      %v1509 = vpop.permute.xlu0 %1508
      %1510 = vrot.lane.b32.xlu0 %v1493, 16
      %v1511 = vpop.permute.xlu0 %1510
      %1512 = vrot.lane.b32.xlu0 %v1494, 16
      %v1513 = vpop.permute.xlu0 %1512
      %1514 = vrot.lane.b32.xlu0 %v1495, 16
      %v1515 = vpop.permute.xlu0 %1514
      %1516 = vrot.lane.b32.xlu0 %v1497, 16
      %v1517 = vpop.permute.xlu0 %1516
      %1518 = vrot.lane.b32.xlu0 %v1499, 16
      %v1519 = vpop.permute.xlu0 %1518
      %1520 = vrot.lane.b32.xlu0 %v1501, 16
      %v1521 = vpop.permute.xlu0 %1520
      %1522 = vrot.lane.b32.xlu0 %v1503, 16
      %v1523 = vpop.permute.xlu0 %1522
      %1524 = vrot.lane.b32.xlu0 %v1505, 16
      %v1525 = vpop.permute.xlu0 %1524
      %v1526 = vsel %vm840, %v1507, %v1509
      %v1527 = vsel %vm840, %v1509, %v1511
      %v1528 = vsel %vm840, %v1511, %v1513
      %v1529 = vsel %vm840, %v1513, %v1515
      %v1530 = vsel %vm840, %v1517, %v1519
      %v1531 = vsel %vm840, %v1519, %v1521
      %v1532 = vsel %vm840, %v1521, %v1523
      %v1533 = vsel %vm840, %v1523, %v1525
      %1542 = vst [vmem:[#allocation2 + $0x320] sm:$0xc0] %v1526
      %1543 = vst [vmem:[#allocation2 + $0x328] sm:$0xc0] %v1527
      %1544 = vst [vmem:[#allocation2 + $0x330] sm:$0xc0] %v1528
      %1545 = vst [vmem:[#allocation2 + $0x338] sm:$0xc0] %v1529
      %1546 = vst [vmem:[#allocation2 + $0x3a0] sm:$0x7f] %v1530
      %1547 = vst [vmem:[#allocation2 + $0x3a8] sm:$0x7f] %v1531
      %1548 = vst [vmem:[#allocation2 + $0x3b0] sm:$0x7f] %v1532
      %1549 = vst [vmem:[#allocation2 + $0x3b8] sm:$0x7f] %v1533
      %v1550 = vld [vmem:[%s1011] sm:$0xff]
      %v1551 = vld [vmem:[%s1011 + $0x8] sm:$0xff]
      %v1552 = vld [vmem:[%s1011 + $0x10] sm:$0xff]
      %v1553 = vld [vmem:[%s1011 + $0x18] sm:$0xff]
      %v1554 = vld [vmem:[%s1011 + $0x20] sm:$0xff]
      %v1555 = vld [vmem:[%s1011 + $0x28] sm:$0x1]
      %v1556 = vld [vmem:[%s1011 + $0x30] sm:$0x1]
      %v1557 = vld [vmem:[%s1011 + $0x38] sm:$0x1]
      %v1558 = vld [vmem:[%s1011 + $0x40] sm:$0x1]
      %v1559 = vld [vmem:[%s1011 + $0x48] sm:$0x1]
      %v1570 = vrot.slane %v1550, 1
      %v1571 = vrot.slane %v1551, 1
      %v1572 = vrot.slane %v1552, 1
      %v1573 = vrot.slane %v1553, 1
      %v1574 = vrot.slane %v1554, 1
      %v1575 = vrot.slane %v1555, 1
      %v1576 = vsel %vm885, %v1570, %v1575
      %v1577 = vrot.slane %v1556, 1
      %v1578 = vsel %vm885, %v1571, %v1577
      %v1579 = vrot.slane %v1557, 1
      %v1580 = vsel %vm885, %v1572, %v1579
      %v1581 = vrot.slane %v1558, 1
      %v1582 = vsel %vm885, %v1573, %v1581
      %v1583 = vrot.slane %v1559, 1
      %v1584 = vsel %vm885, %v1574, %v1583
      %1585 = vrot.lane.b32.xlu0 %v1570, 15
      %v1586 = vpop.permute.xlu0 %1585
      %1587 = vrot.lane.b32.xlu0 %v1571, 15
      %v1588 = vpop.permute.xlu0 %1587
      %1589 = vrot.lane.b32.xlu0 %v1572, 15
      %v1590 = vpop.permute.xlu0 %1589
      %1591 = vrot.lane.b32.xlu0 %v1573, 15
      %v1592 = vpop.permute.xlu0 %1591
      %1593 = vrot.lane.b32.xlu0 %v1574, 15
      %v1594 = vpop.permute.xlu0 %1593
      %1595 = vrot.lane.b32.xlu0 %v1576, 15
      %v1596 = vpop.permute.xlu0 %1595
      %1597 = vrot.lane.b32.xlu0 %v1578, 15
      %v1598 = vpop.permute.xlu0 %1597
      %1599 = vrot.lane.b32.xlu0 %v1580, 15
      %v1600 = vpop.permute.xlu0 %1599
      %1601 = vrot.lane.b32.xlu0 %v1582, 15
      %v1602 = vpop.permute.xlu0 %1601
      %1603 = vrot.lane.b32.xlu0 %v1584, 15
      %v1604 = vpop.permute.xlu0 %1603
      %v1605 = vsel %vm921, %v1586, %v1588
      %v1606 = vsel %vm921, %v1588, %v1590
      %v1607 = vsel %vm921, %v1590, %v1592
      %v1608 = vsel %vm921, %v1592, %v1594
      %v1609 = vsel %vm921, %v1596, %v1598
      %v1610 = vsel %vm921, %v1598, %v1600
      %v1611 = vsel %vm921, %v1600, %v1602
      %v1612 = vsel %vm921, %v1602, %v1604
      %1621 = vst [vmem:[#allocation2 + $0x3a0] sm:$0x80] %v1605
      %1622 = vst [vmem:[#allocation2 + $0x3a8] sm:$0x80] %v1606
      %1623 = vst [vmem:[#allocation2 + $0x3b0] sm:$0x80] %v1607
      %1624 = vst [vmem:[#allocation2 + $0x3b8] sm:$0x80] %v1608
      %1625 = vst [vmem:[#allocation2 + $0x420] sm:$0xff] %v1609
      %1626 = vst [vmem:[#allocation2 + $0x428] sm:$0xff] %v1610
      %1627 = vst [vmem:[#allocation2 + $0x430] sm:$0xff] %v1611
      %1628 = vst [vmem:[#allocation2 + $0x438] sm:$0xff] %v1612
      %v1629 = vld [vmem:[%s1011] sm:$0xff]
      %v1630 = vld [vmem:[%s1011 + $0x8] sm:$0xff]
      %v1631 = vld [vmem:[%s1011 + $0x10] sm:$0xff]
      %v1632 = vld [vmem:[%s1011 + $0x18] sm:$0xff]
      %v1633 = vld [vmem:[%s1011 + $0x20] sm:$0xff]
      %v1634 = vld [vmem:[%s1011 + $0x28] sm:$0x1]
      %v1635 = vld [vmem:[%s1011 + $0x30] sm:$0x1]
      %v1636 = vld [vmem:[%s1011 + $0x38] sm:$0x1]
      %v1637 = vld [vmem:[%s1011 + $0x40] sm:$0x1]
      %v1638 = vld [vmem:[%s1011 + $0x48] sm:$0x1]
      %1649 = vrot.lane.b32.xlu0 %v1629, 14
      %v1650 = vpop.permute.xlu0 %1649
      %1651 = vrot.lane.b32.xlu0 %v1630, 14
      %v1652 = vpop.permute.xlu0 %1651
      %1653 = vrot.lane.b32.xlu0 %v1631, 14
      %v1654 = vpop.permute.xlu0 %1653
      %1655 = vrot.lane.b32.xlu0 %v1632, 14
      %v1656 = vpop.permute.xlu0 %1655
      %1657 = vrot.lane.b32.xlu0 %v1633, 14
      %v1658 = vpop.permute.xlu0 %1657
      %1659 = vrot.lane.b32.xlu0 %v1634, 14
      %v1660 = vpop.permute.xlu0 %1659
      %1661 = vrot.lane.b32.xlu0 %v1635, 14
      %v1662 = vpop.permute.xlu0 %1661
      %1663 = vrot.lane.b32.xlu0 %v1636, 14
      %v1664 = vpop.permute.xlu0 %1663
      %1665 = vrot.lane.b32.xlu0 %v1637, 14
      %v1666 = vpop.permute.xlu0 %1665
      %1667 = vrot.lane.b32.xlu0 %v1638, 14
      %v1668 = vpop.permute.xlu0 %1667
      %v1669 = vsel %vm986, %v1650, %v1652
      %v1670 = vsel %vm986, %v1652, %v1654
      %v1671 = vsel %vm986, %v1654, %v1656
      %v1672 = vsel %vm986, %v1656, %v1658
      %v1673 = vsel %vm986, %v1660, %v1662
      %v1674 = vsel %vm986, %v1662, %v1664
      %v1675 = vsel %vm986, %v1664, %v1666
      %v1676 = vsel %vm986, %v1666, %v1668
      %1685 = vst [vmem:[#allocation2 + $0x4a0] sm:$0xff] %v1669
      %1686 = vst [vmem:[#allocation2 + $0x4a8] sm:$0xff] %v1670
      %1687 = vst [vmem:[#allocation2 + $0x4b0] sm:$0xff] %v1671
      %1688 = vst [vmem:[#allocation2 + $0x4b8] sm:$0xff] %v1672
      %1689 = vst [vmem:[#allocation2 + $0x520] sm:$0x1] %v1673
      %1690 = vst [vmem:[#allocation2 + $0x528] sm:$0x1] %v1674
      %1691 = vst [vmem:[#allocation2 + $0x530] sm:$0x1] %v1675
      %1692 = vst [vmem:[#allocation2 + $0x538] sm:$0x1] %v1676
      %s1693 = scalar_lea.vmem %s305, 160
      %v1694 = vld [vmem:[%s1693] sm:$0xff]
      %v1695 = vld [vmem:[%s1693 + $0x8] sm:$0xff]
      %v1696 = vld [vmem:[%s1693 + $0x10] sm:$0xff]
      %v1697 = vld [vmem:[%s1693 + $0x18] sm:$0xff]
      %v1698 = vld [vmem:[%s1693 + $0x20] sm:$0xff]
      %v1699 = vld [vmem:[%s1693 + $0x28] sm:$0x1]
      %v1700 = vld [vmem:[%s1693 + $0x30] sm:$0x1]
      %v1701 = vld [vmem:[%s1693 + $0x38] sm:$0x1]
      %v1702 = vld [vmem:[%s1693 + $0x40] sm:$0x1]
      %v1703 = vld [vmem:[%s1693 + $0x48] sm:$0x1]
      %1714 = vrot.lane.b32.xlu0 %v1694, 22
      %v1715 = vpop.permute.xlu0 %1714
      %1716 = vrot.lane.b32.xlu0 %v1695, 22
      %v1717 = vpop.permute.xlu0 %1716
      %1718 = vrot.lane.b32.xlu0 %v1696, 22
      %v1719 = vpop.permute.xlu0 %1718
      %1720 = vrot.lane.b32.xlu0 %v1697, 22
      %v1721 = vpop.permute.xlu0 %1720
      %1722 = vrot.lane.b32.xlu0 %v1698, 22
      %v1723 = vpop.permute.xlu0 %1722
      %1724 = vrot.lane.b32.xlu0 %v1699, 22
      %v1725 = vpop.permute.xlu0 %1724
      %1726 = vrot.lane.b32.xlu0 %v1700, 22
      %v1727 = vpop.permute.xlu0 %1726
      %1728 = vrot.lane.b32.xlu0 %v1701, 22
      %v1729 = vpop.permute.xlu0 %1728
      %1730 = vrot.lane.b32.xlu0 %v1702, 22
      %v1731 = vpop.permute.xlu0 %1730
      %1732 = vrot.lane.b32.xlu0 %v1703, 22
      %v1733 = vpop.permute.xlu0 %1732
      %v1734 = vsel %vm354, %v1715, %v1717
      %v1735 = vsel %vm354, %v1717, %v1719
      %v1736 = vsel %vm354, %v1719, %v1721
      %v1737 = vsel %vm354, %v1721, %v1723
      %v1738 = vsel %vm354, %v1725, %v1727
      %v1739 = vsel %vm354, %v1727, %v1729
      %v1740 = vsel %vm354, %v1729, %v1731
      %v1741 = vsel %vm354, %v1731, %v1733
      %1750 = vst [vmem:[#allocation2 + $0x40] sm:$0xff] %v1734
      %1751 = vst [vmem:[#allocation2 + $0x48] sm:$0xff] %v1735
      %1752 = vst [vmem:[#allocation2 + $0x50] sm:$0xff] %v1736
      %1753 = vst [vmem:[#allocation2 + $0x58] sm:$0xff] %v1737
      %1754 = vst [vmem:[#allocation2 + $0xc0] sm:$0x1] %v1738
      %1755 = vst [vmem:[#allocation2 + $0xc8] sm:$0x1] %v1739
      %1756 = vst [vmem:[#allocation2 + $0xd0] sm:$0x1] %v1740
      %1757 = vst [vmem:[#allocation2 + $0xd8] sm:$0x1] %v1741
      %v1758 = vld [vmem:[%s1693] sm:$0xff]
      %v1759 = vld [vmem:[%s1693 + $0x8] sm:$0xff]
      %v1760 = vld [vmem:[%s1693 + $0x10] sm:$0xff]
      %v1761 = vld [vmem:[%s1693 + $0x18] sm:$0xff]
      %v1762 = vld [vmem:[%s1693 + $0x20] sm:$0xff]
      %v1763 = vld [vmem:[%s1693 + $0x28] sm:$0x1]
      %v1764 = vld [vmem:[%s1693 + $0x30] sm:$0x1]
      %v1765 = vld [vmem:[%s1693 + $0x38] sm:$0x1]
      %v1766 = vld [vmem:[%s1693 + $0x40] sm:$0x1]
      %v1767 = vld [vmem:[%s1693 + $0x48] sm:$0x1]
      %v1778 = vrot.slane %v1758, 7
      %v1779 = vrot.slane %v1759, 7
      %v1780 = vrot.slane %v1760, 7
      %v1781 = vrot.slane %v1761, 7
      %v1782 = vrot.slane %v1762, 7
      %v1783 = vrot.slane %v1763, 7
      %v1784 = vsel %vm399, %v1778, %v1783
      %v1785 = vrot.slane %v1764, 7
      %v1786 = vsel %vm399, %v1779, %v1785
      %v1787 = vrot.slane %v1765, 7
      %v1788 = vsel %vm399, %v1780, %v1787
      %v1789 = vrot.slane %v1766, 7
      %v1790 = vsel %vm399, %v1781, %v1789
      %v1791 = vrot.slane %v1767, 7
      %v1792 = vsel %vm399, %v1782, %v1791
      %1793 = vrot.lane.b32.xlu0 %v1778, 21
      %v1794 = vpop.permute.xlu0 %1793
      %1795 = vrot.lane.b32.xlu0 %v1779, 21
      %v1796 = vpop.permute.xlu0 %1795
      %1797 = vrot.lane.b32.xlu0 %v1780, 21
      %v1798 = vpop.permute.xlu0 %1797
      %1799 = vrot.lane.b32.xlu0 %v1781, 21
      %v1800 = vpop.permute.xlu0 %1799
      %1801 = vrot.lane.b32.xlu0 %v1782, 21
      %v1802 = vpop.permute.xlu0 %1801
      %1803 = vrot.lane.b32.xlu0 %v1784, 21
      %v1804 = vpop.permute.xlu0 %1803
      %1805 = vrot.lane.b32.xlu0 %v1786, 21
      %v1806 = vpop.permute.xlu0 %1805
      %1807 = vrot.lane.b32.xlu0 %v1788, 21
      %v1808 = vpop.permute.xlu0 %1807
      %1809 = vrot.lane.b32.xlu0 %v1790, 21
      %v1810 = vpop.permute.xlu0 %1809
      %1811 = vrot.lane.b32.xlu0 %v1792, 21
      %v1812 = vpop.permute.xlu0 %1811
      %v1813 = vsel %vm435, %v1794, %v1796
      %v1814 = vsel %vm435, %v1796, %v1798
      %v1815 = vsel %vm435, %v1798, %v1800
      %v1816 = vsel %vm435, %v1800, %v1802
      %v1817 = vsel %vm435, %v1804, %v1806
      %v1818 = vsel %vm435, %v1806, %v1808
      %v1819 = vsel %vm435, %v1808, %v1810
      %v1820 = vsel %vm435, %v1810, %v1812
      %1829 = vst [vmem:[#allocation2 + $0xc0] sm:$0xfe] %v1813
      %1830 = vst [vmem:[#allocation2 + $0xc8] sm:$0xfe] %v1814
      %1831 = vst [vmem:[#allocation2 + $0xd0] sm:$0xfe] %v1815
      %1832 = vst [vmem:[#allocation2 + $0xd8] sm:$0xfe] %v1816
      %1833 = vst [vmem:[#allocation2 + $0x140] sm:$0x3] %v1817
      %1834 = vst [vmem:[#allocation2 + $0x148] sm:$0x3] %v1818
      %1835 = vst [vmem:[#allocation2 + $0x150] sm:$0x3] %v1819
      %1836 = vst [vmem:[#allocation2 + $0x158] sm:$0x3] %v1820
      %v1837 = vld [vmem:[%s1693] sm:$0xff]
      %v1838 = vld [vmem:[%s1693 + $0x8] sm:$0xff]
      %v1839 = vld [vmem:[%s1693 + $0x10] sm:$0xff]
      %v1840 = vld [vmem:[%s1693 + $0x18] sm:$0xff]
      %v1841 = vld [vmem:[%s1693 + $0x20] sm:$0xff]
      %v1842 = vld [vmem:[%s1693 + $0x28] sm:$0x1]
      %v1843 = vld [vmem:[%s1693 + $0x30] sm:$0x1]
      %v1844 = vld [vmem:[%s1693 + $0x38] sm:$0x1]
      %v1845 = vld [vmem:[%s1693 + $0x40] sm:$0x1]
      %v1846 = vld [vmem:[%s1693 + $0x48] sm:$0x1]
      %v1857 = vrot.slane %v1837, 6
      %v1858 = vrot.slane %v1838, 6
      %v1859 = vrot.slane %v1839, 6
      %v1860 = vrot.slane %v1840, 6
      %v1861 = vrot.slane %v1841, 6
      %v1862 = vrot.slane %v1842, 6
      %v1863 = vsel %vm480, %v1857, %v1862
      %v1864 = vrot.slane %v1843, 6
      %v1865 = vsel %vm480, %v1858, %v1864
      %v1866 = vrot.slane %v1844, 6
      %v1867 = vsel %vm480, %v1859, %v1866
      %v1868 = vrot.slane %v1845, 6
      %v1869 = vsel %vm480, %v1860, %v1868
      %v1870 = vrot.slane %v1846, 6
      %v1871 = vsel %vm480, %v1861, %v1870
      %1872 = vrot.lane.b32.xlu0 %v1857, 20
      %v1873 = vpop.permute.xlu0 %1872
      %1874 = vrot.lane.b32.xlu0 %v1858, 20
      %v1875 = vpop.permute.xlu0 %1874
      %1876 = vrot.lane.b32.xlu0 %v1859, 20
      %v1877 = vpop.permute.xlu0 %1876
      %1878 = vrot.lane.b32.xlu0 %v1860, 20
      %v1879 = vpop.permute.xlu0 %1878
      %1880 = vrot.lane.b32.xlu0 %v1861, 20
      %v1881 = vpop.permute.xlu0 %1880
      %1882 = vrot.lane.b32.xlu0 %v1863, 20
      %v1883 = vpop.permute.xlu0 %1882
      %1884 = vrot.lane.b32.xlu0 %v1865, 20
      %v1885 = vpop.permute.xlu0 %1884
      %1886 = vrot.lane.b32.xlu0 %v1867, 20
      %v1887 = vpop.permute.xlu0 %1886
      %1888 = vrot.lane.b32.xlu0 %v1869, 20
      %v1889 = vpop.permute.xlu0 %1888
      %1890 = vrot.lane.b32.xlu0 %v1871, 20
      %v1891 = vpop.permute.xlu0 %1890
      %v1892 = vsel %vm516, %v1873, %v1875
      %v1893 = vsel %vm516, %v1875, %v1877
      %v1894 = vsel %vm516, %v1877, %v1879
      %v1895 = vsel %vm516, %v1879, %v1881
      %v1896 = vsel %vm516, %v1883, %v1885
      %v1897 = vsel %vm516, %v1885, %v1887
      %v1898 = vsel %vm516, %v1887, %v1889
      %v1899 = vsel %vm516, %v1889, %v1891
      %1908 = vst [vmem:[#allocation2 + $0x140] sm:$0xfc] %v1892
      %1909 = vst [vmem:[#allocation2 + $0x148] sm:$0xfc] %v1893
      %1910 = vst [vmem:[#allocation2 + $0x150] sm:$0xfc] %v1894
      %1911 = vst [vmem:[#allocation2 + $0x158] sm:$0xfc] %v1895
      %1912 = vst [vmem:[#allocation2 + $0x1c0] sm:$0x7] %v1896
      %1913 = vst [vmem:[#allocation2 + $0x1c8] sm:$0x7] %v1897
      %1914 = vst [vmem:[#allocation2 + $0x1d0] sm:$0x7] %v1898
      %1915 = vst [vmem:[#allocation2 + $0x1d8] sm:$0x7] %v1899
      %v1916 = vld [vmem:[%s1693] sm:$0xff]
      %v1917 = vld [vmem:[%s1693 + $0x8] sm:$0xff]
      %v1918 = vld [vmem:[%s1693 + $0x10] sm:$0xff]
      %v1919 = vld [vmem:[%s1693 + $0x18] sm:$0xff]
      %v1920 = vld [vmem:[%s1693 + $0x20] sm:$0xff]
      %v1921 = vld [vmem:[%s1693 + $0x28] sm:$0x1]
      %v1922 = vld [vmem:[%s1693 + $0x30] sm:$0x1]
      %v1923 = vld [vmem:[%s1693 + $0x38] sm:$0x1]
      %v1924 = vld [vmem:[%s1693 + $0x40] sm:$0x1]
      %v1925 = vld [vmem:[%s1693 + $0x48] sm:$0x1]
      %v1936 = vrot.slane %v1916, 5
      %v1937 = vrot.slane %v1917, 5
      %v1938 = vrot.slane %v1918, 5
      %v1939 = vrot.slane %v1919, 5
      %v1940 = vrot.slane %v1920, 5
      %v1941 = vrot.slane %v1921, 5
      %v1942 = vsel %vm561, %v1936, %v1941
      %v1943 = vrot.slane %v1922, 5
      %v1944 = vsel %vm561, %v1937, %v1943
      %v1945 = vrot.slane %v1923, 5
      %v1946 = vsel %vm561, %v1938, %v1945
      %v1947 = vrot.slane %v1924, 5
      %v1948 = vsel %vm561, %v1939, %v1947
      %v1949 = vrot.slane %v1925, 5
      %v1950 = vsel %vm561, %v1940, %v1949
      %1951 = vrot.lane.b32.xlu0 %v1936, 19
      %v1952 = vpop.permute.xlu0 %1951
      %1953 = vrot.lane.b32.xlu0 %v1937, 19
      %v1954 = vpop.permute.xlu0 %1953
      %1955 = vrot.lane.b32.xlu0 %v1938, 19
      %v1956 = vpop.permute.xlu0 %1955
      %1957 = vrot.lane.b32.xlu0 %v1939, 19
      %v1958 = vpop.permute.xlu0 %1957
      %1959 = vrot.lane.b32.xlu0 %v1940, 19
      %v1960 = vpop.permute.xlu0 %1959
      %1961 = vrot.lane.b32.xlu0 %v1942, 19
      %v1962 = vpop.permute.xlu0 %1961
      %1963 = vrot.lane.b32.xlu0 %v1944, 19
      %v1964 = vpop.permute.xlu0 %1963
      %1965 = vrot.lane.b32.xlu0 %v1946, 19
      %v1966 = vpop.permute.xlu0 %1965
      %1967 = vrot.lane.b32.xlu0 %v1948, 19
      %v1968 = vpop.permute.xlu0 %1967
      %1969 = vrot.lane.b32.xlu0 %v1950, 19
      %v1970 = vpop.permute.xlu0 %1969
      %v1971 = vsel %vm597, %v1952, %v1954
      %v1972 = vsel %vm597, %v1954, %v1956
      %v1973 = vsel %vm597, %v1956, %v1958
      %v1974 = vsel %vm597, %v1958, %v1960
      %v1975 = vsel %vm597, %v1962, %v1964
      %v1976 = vsel %vm597, %v1964, %v1966
      %v1977 = vsel %vm597, %v1966, %v1968
      %v1978 = vsel %vm597, %v1968, %v1970
      %1987 = vst [vmem:[#allocation2 + $0x1c0] sm:$0xf8] %v1971
      %1988 = vst [vmem:[#allocation2 + $0x1c8] sm:$0xf8] %v1972
      %1989 = vst [vmem:[#allocation2 + $0x1d0] sm:$0xf8] %v1973
      %1990 = vst [vmem:[#allocation2 + $0x1d8] sm:$0xf8] %v1974
      %1991 = vst [vmem:[#allocation2 + $0x240] sm:$0xf] %v1975
      %1992 = vst [vmem:[#allocation2 + $0x248] sm:$0xf] %v1976
      %1993 = vst [vmem:[#allocation2 + $0x250] sm:$0xf] %v1977
      %1994 = vst [vmem:[#allocation2 + $0x258] sm:$0xf] %v1978
      %v1995 = vld [vmem:[%s1693] sm:$0xff]
      %v1996 = vld [vmem:[%s1693 + $0x8] sm:$0xff]
      %v1997 = vld [vmem:[%s1693 + $0x10] sm:$0xff]
      %v1998 = vld [vmem:[%s1693 + $0x18] sm:$0xff]
      %v1999 = vld [vmem:[%s1693 + $0x20] sm:$0xff]
      %v2000 = vld [vmem:[%s1693 + $0x28] sm:$0x1]
      %v2001 = vld [vmem:[%s1693 + $0x30] sm:$0x1]
      %v2002 = vld [vmem:[%s1693 + $0x38] sm:$0x1]
      %v2003 = vld [vmem:[%s1693 + $0x40] sm:$0x1]
      %v2004 = vld [vmem:[%s1693 + $0x48] sm:$0x1]
      %v2015 = vrot.slane %v1995, 4
      %v2016 = vrot.slane %v1996, 4
      %v2017 = vrot.slane %v1997, 4
      %v2018 = vrot.slane %v1998, 4
      %v2019 = vrot.slane %v1999, 4
      %v2020 = vrot.slane %v2000, 4
      %v2021 = vsel %vm642, %v2015, %v2020
      %v2022 = vrot.slane %v2001, 4
      %v2023 = vsel %vm642, %v2016, %v2022
      %v2024 = vrot.slane %v2002, 4
      %v2025 = vsel %vm642, %v2017, %v2024
      %v2026 = vrot.slane %v2003, 4
      %v2027 = vsel %vm642, %v2018, %v2026
      %v2028 = vrot.slane %v2004, 4
      %v2029 = vsel %vm642, %v2019, %v2028
      %2030 = vrot.lane.b32.xlu0 %v2015, 18
      %v2031 = vpop.permute.xlu0 %2030
      %2032 = vrot.lane.b32.xlu0 %v2016, 18
      %v2033 = vpop.permute.xlu0 %2032
      %2034 = vrot.lane.b32.xlu0 %v2017, 18
      %v2035 = vpop.permute.xlu0 %2034
      %2036 = vrot.lane.b32.xlu0 %v2018, 18
      %v2037 = vpop.permute.xlu0 %2036
      %2038 = vrot.lane.b32.xlu0 %v2019, 18
      %v2039 = vpop.permute.xlu0 %2038
      %2040 = vrot.lane.b32.xlu0 %v2021, 18
      %v2041 = vpop.permute.xlu0 %2040
      %2042 = vrot.lane.b32.xlu0 %v2023, 18
      %v2043 = vpop.permute.xlu0 %2042
      %2044 = vrot.lane.b32.xlu0 %v2025, 18
      %v2045 = vpop.permute.xlu0 %2044
      %2046 = vrot.lane.b32.xlu0 %v2027, 18
      %v2047 = vpop.permute.xlu0 %2046
      %2048 = vrot.lane.b32.xlu0 %v2029, 18
      %v2049 = vpop.permute.xlu0 %2048
      %v2050 = vsel %vm678, %v2031, %v2033
      %v2051 = vsel %vm678, %v2033, %v2035
      %v2052 = vsel %vm678, %v2035, %v2037
      %v2053 = vsel %vm678, %v2037, %v2039
      %v2054 = vsel %vm678, %v2041, %v2043
      %v2055 = vsel %vm678, %v2043, %v2045
      %v2056 = vsel %vm678, %v2045, %v2047
      %v2057 = vsel %vm678, %v2047, %v2049
      %2066 = vst [vmem:[#allocation2 + $0x240] sm:$0xf0] %v2050
      %2067 = vst [vmem:[#allocation2 + $0x248] sm:$0xf0] %v2051
      %2068 = vst [vmem:[#allocation2 + $0x250] sm:$0xf0] %v2052
      %2069 = vst [vmem:[#allocation2 + $0x258] sm:$0xf0] %v2053
      %2070 = vst [vmem:[#allocation2 + $0x2c0] sm:$0x1f] %v2054
      %2071 = vst [vmem:[#allocation2 + $0x2c8] sm:$0x1f] %v2055
      %2072 = vst [vmem:[#allocation2 + $0x2d0] sm:$0x1f] %v2056
      %2073 = vst [vmem:[#allocation2 + $0x2d8] sm:$0x1f] %v2057
      %v2074 = vld [vmem:[%s1693] sm:$0xff]
      %v2075 = vld [vmem:[%s1693 + $0x8] sm:$0xff]
      %v2076 = vld [vmem:[%s1693 + $0x10] sm:$0xff]
      %v2077 = vld [vmem:[%s1693 + $0x18] sm:$0xff]
      %v2078 = vld [vmem:[%s1693 + $0x20] sm:$0xff]
      %v2079 = vld [vmem:[%s1693 + $0x28] sm:$0x1]
      %v2080 = vld [vmem:[%s1693 + $0x30] sm:$0x1]
      %v2081 = vld [vmem:[%s1693 + $0x38] sm:$0x1]
      %v2082 = vld [vmem:[%s1693 + $0x40] sm:$0x1]
      %v2083 = vld [vmem:[%s1693 + $0x48] sm:$0x1]
      %v2094 = vrot.slane %v2074, 3
      %v2095 = vrot.slane %v2075, 3
      %v2096 = vrot.slane %v2076, 3
      %v2097 = vrot.slane %v2077, 3
      %v2098 = vrot.slane %v2078, 3
      %v2099 = vrot.slane %v2079, 3
      %v2100 = vsel %vm723, %v2094, %v2099
      %v2101 = vrot.slane %v2080, 3
      %v2102 = vsel %vm723, %v2095, %v2101
      %v2103 = vrot.slane %v2081, 3
      %v2104 = vsel %vm723, %v2096, %v2103
      %v2105 = vrot.slane %v2082, 3
      %v2106 = vsel %vm723, %v2097, %v2105
      %v2107 = vrot.slane %v2083, 3
      %v2108 = vsel %vm723, %v2098, %v2107
      %2109 = vrot.lane.b32.xlu0 %v2094, 17
      %v2110 = vpop.permute.xlu0 %2109
      %2111 = vrot.lane.b32.xlu0 %v2095, 17
      %v2112 = vpop.permute.xlu0 %2111
      %2113 = vrot.lane.b32.xlu0 %v2096, 17
      %v2114 = vpop.permute.xlu0 %2113
      %2115 = vrot.lane.b32.xlu0 %v2097, 17
      %v2116 = vpop.permute.xlu0 %2115
      %2117 = vrot.lane.b32.xlu0 %v2098, 17
      %v2118 = vpop.permute.xlu0 %2117
      %2119 = vrot.lane.b32.xlu0 %v2100, 17
      %v2120 = vpop.permute.xlu0 %2119
      %2121 = vrot.lane.b32.xlu0 %v2102, 17
      %v2122 = vpop.permute.xlu0 %2121
      %2123 = vrot.lane.b32.xlu0 %v2104, 17
      %v2124 = vpop.permute.xlu0 %2123
      %2125 = vrot.lane.b32.xlu0 %v2106, 17
      %v2126 = vpop.permute.xlu0 %2125
      %2127 = vrot.lane.b32.xlu0 %v2108, 17
      %v2128 = vpop.permute.xlu0 %2127
      %v2129 = vsel %vm759, %v2110, %v2112
      %v2130 = vsel %vm759, %v2112, %v2114
      %v2131 = vsel %vm759, %v2114, %v2116
      %v2132 = vsel %vm759, %v2116, %v2118
      %v2133 = vsel %vm759, %v2120, %v2122
      %v2134 = vsel %vm759, %v2122, %v2124
      %v2135 = vsel %vm759, %v2124, %v2126
      %v2136 = vsel %vm759, %v2126, %v2128
      %2145 = vst [vmem:[#allocation2 + $0x2c0] sm:$0xe0] %v2129
      %2146 = vst [vmem:[#allocation2 + $0x2c8] sm:$0xe0] %v2130
      %2147 = vst [vmem:[#allocation2 + $0x2d0] sm:$0xe0] %v2131
      %2148 = vst [vmem:[#allocation2 + $0x2d8] sm:$0xe0] %v2132
      %2149 = vst [vmem:[#allocation2 + $0x340] sm:$0x3f] %v2133
      %2150 = vst [vmem:[#allocation2 + $0x348] sm:$0x3f] %v2134
      %2151 = vst [vmem:[#allocation2 + $0x350] sm:$0x3f] %v2135
      %2152 = vst [vmem:[#allocation2 + $0x358] sm:$0x3f] %v2136
      %v2153 = vld [vmem:[%s1693] sm:$0xff]
      %v2154 = vld [vmem:[%s1693 + $0x8] sm:$0xff]
      %v2155 = vld [vmem:[%s1693 + $0x10] sm:$0xff]
      %v2156 = vld [vmem:[%s1693 + $0x18] sm:$0xff]
      %v2157 = vld [vmem:[%s1693 + $0x20] sm:$0xff]
      %v2158 = vld [vmem:[%s1693 + $0x28] sm:$0x1]
      %v2159 = vld [vmem:[%s1693 + $0x30] sm:$0x1]
      %v2160 = vld [vmem:[%s1693 + $0x38] sm:$0x1]
      %v2161 = vld [vmem:[%s1693 + $0x40] sm:$0x1]
      %v2162 = vld [vmem:[%s1693 + $0x48] sm:$0x1]
      %v2173 = vrot.slane %v2153, 2
      %v2174 = vrot.slane %v2154, 2
      %v2175 = vrot.slane %v2155, 2
      %v2176 = vrot.slane %v2156, 2
      %v2177 = vrot.slane %v2157, 2
      %v2178 = vrot.slane %v2158, 2
      %v2179 = vsel %vm804, %v2173, %v2178
      %v2180 = vrot.slane %v2159, 2
      %v2181 = vsel %vm804, %v2174, %v2180
      %v2182 = vrot.slane %v2160, 2
      %v2183 = vsel %vm804, %v2175, %v2182
      %v2184 = vrot.slane %v2161, 2
      %v2185 = vsel %vm804, %v2176, %v2184
      %v2186 = vrot.slane %v2162, 2
      %v2187 = vsel %vm804, %v2177, %v2186
      %2188 = vrot.lane.b32.xlu0 %v2173, 16
      %v2189 = vpop.permute.xlu0 %2188
      %2190 = vrot.lane.b32.xlu0 %v2174, 16
      %v2191 = vpop.permute.xlu0 %2190
      %2192 = vrot.lane.b32.xlu0 %v2175, 16
      %v2193 = vpop.permute.xlu0 %2192
      %2194 = vrot.lane.b32.xlu0 %v2176, 16
      %v2195 = vpop.permute.xlu0 %2194
      %2196 = vrot.lane.b32.xlu0 %v2177, 16
      %v2197 = vpop.permute.xlu0 %2196
      %2198 = vrot.lane.b32.xlu0 %v2179, 16
      %v2199 = vpop.permute.xlu0 %2198
      %2200 = vrot.lane.b32.xlu0 %v2181, 16
      %v2201 = vpop.permute.xlu0 %2200
      %2202 = vrot.lane.b32.xlu0 %v2183, 16
      %v2203 = vpop.permute.xlu0 %2202
      %2204 = vrot.lane.b32.xlu0 %v2185, 16
      %v2205 = vpop.permute.xlu0 %2204
      %2206 = vrot.lane.b32.xlu0 %v2187, 16
      %v2207 = vpop.permute.xlu0 %2206
      %v2208 = vsel %vm840, %v2189, %v2191
      %v2209 = vsel %vm840, %v2191, %v2193
      %v2210 = vsel %vm840, %v2193, %v2195
      %v2211 = vsel %vm840, %v2195, %v2197
      %v2212 = vsel %vm840, %v2199, %v2201
      %v2213 = vsel %vm840, %v2201, %v2203
      %v2214 = vsel %vm840, %v2203, %v2205
      %v2215 = vsel %vm840, %v2205, %v2207
      %2224 = vst [vmem:[#allocation2 + $0x340] sm:$0xc0] %v2208
      %2225 = vst [vmem:[#allocation2 + $0x348] sm:$0xc0] %v2209
      %2226 = vst [vmem:[#allocation2 + $0x350] sm:$0xc0] %v2210
      %2227 = vst [vmem:[#allocation2 + $0x358] sm:$0xc0] %v2211
      %2228 = vst [vmem:[#allocation2 + $0x3c0] sm:$0x7f] %v2212
      %2229 = vst [vmem:[#allocation2 + $0x3c8] sm:$0x7f] %v2213
      %2230 = vst [vmem:[#allocation2 + $0x3d0] sm:$0x7f] %v2214
      %2231 = vst [vmem:[#allocation2 + $0x3d8] sm:$0x7f] %v2215
      %v2232 = vld [vmem:[%s1693] sm:$0xff]
      %v2233 = vld [vmem:[%s1693 + $0x8] sm:$0xff]
      %v2234 = vld [vmem:[%s1693 + $0x10] sm:$0xff]
      %v2235 = vld [vmem:[%s1693 + $0x18] sm:$0xff]
      %v2236 = vld [vmem:[%s1693 + $0x20] sm:$0xff]
      %v2237 = vld [vmem:[%s1693 + $0x28] sm:$0x1]
      %v2238 = vld [vmem:[%s1693 + $0x30] sm:$0x1]
      %v2239 = vld [vmem:[%s1693 + $0x38] sm:$0x1]
      %v2240 = vld [vmem:[%s1693 + $0x40] sm:$0x1]
      %v2241 = vld [vmem:[%s1693 + $0x48] sm:$0x1]
      %v2252 = vrot.slane %v2232, 1
      %v2253 = vrot.slane %v2233, 1
      %v2254 = vrot.slane %v2234, 1
      %v2255 = vrot.slane %v2235, 1
      %v2256 = vrot.slane %v2236, 1
      %v2257 = vrot.slane %v2237, 1
      %v2258 = vsel %vm885, %v2252, %v2257
      %v2259 = vrot.slane %v2238, 1
      %v2260 = vsel %vm885, %v2253, %v2259
      %v2261 = vrot.slane %v2239, 1
      %v2262 = vsel %vm885, %v2254, %v2261
      %v2263 = vrot.slane %v2240, 1
      %v2264 = vsel %vm885, %v2255, %v2263
      %v2265 = vrot.slane %v2241, 1
      %v2266 = vsel %vm885, %v2256, %v2265
      %2267 = vrot.lane.b32.xlu0 %v2252, 15
      %v2268 = vpop.permute.xlu0 %2267
      %2269 = vrot.lane.b32.xlu0 %v2253, 15
      %v2270 = vpop.permute.xlu0 %2269
      %2271 = vrot.lane.b32.xlu0 %v2254, 15
      %v2272 = vpop.permute.xlu0 %2271
      %2273 = vrot.lane.b32.xlu0 %v2255, 15
      %v2274 = vpop.permute.xlu0 %2273
      %2275 = vrot.lane.b32.xlu0 %v2256, 15
      %v2276 = vpop.permute.xlu0 %2275
      %2277 = vrot.lane.b32.xlu0 %v2258, 15
      %v2278 = vpop.permute.xlu0 %2277
      %2279 = vrot.lane.b32.xlu0 %v2260, 15
      %v2280 = vpop.permute.xlu0 %2279
      %2281 = vrot.lane.b32.xlu0 %v2262, 15
      %v2282 = vpop.permute.xlu0 %2281
      %2283 = vrot.lane.b32.xlu0 %v2264, 15
      %v2284 = vpop.permute.xlu0 %2283
      %2285 = vrot.lane.b32.xlu0 %v2266, 15
      %v2286 = vpop.permute.xlu0 %2285
      %v2287 = vsel %vm921, %v2268, %v2270
      %v2288 = vsel %vm921, %v2270, %v2272
      %v2289 = vsel %vm921, %v2272, %v2274
      %v2290 = vsel %vm921, %v2274, %v2276
      %v2291 = vsel %vm921, %v2278, %v2280
      %v2292 = vsel %vm921, %v2280, %v2282
      %v2293 = vsel %vm921, %v2282, %v2284
      %v2294 = vsel %vm921, %v2284, %v2286
      %2303 = vst [vmem:[#allocation2 + $0x3c0] sm:$0x80] %v2287
      %2304 = vst [vmem:[#allocation2 + $0x3c8] sm:$0x80] %v2288
      %2305 = vst [vmem:[#allocation2 + $0x3d0] sm:$0x80] %v2289
      %2306 = vst [vmem:[#allocation2 + $0x3d8] sm:$0x80] %v2290
      %2307 = vst [vmem:[#allocation2 + $0x440] sm:$0xff] %v2291
      %2308 = vst [vmem:[#allocation2 + $0x448] sm:$0xff] %v2292
      %2309 = vst [vmem:[#allocation2 + $0x450] sm:$0xff] %v2293
      %2310 = vst [vmem:[#allocation2 + $0x458] sm:$0xff] %v2294
      %v2311 = vld [vmem:[%s1693] sm:$0xff]
      %v2312 = vld [vmem:[%s1693 + $0x8] sm:$0xff]
      %v2313 = vld [vmem:[%s1693 + $0x10] sm:$0xff]
      %v2314 = vld [vmem:[%s1693 + $0x18] sm:$0xff]
      %v2315 = vld [vmem:[%s1693 + $0x20] sm:$0xff]
      %v2316 = vld [vmem:[%s1693 + $0x28] sm:$0x1]
      %v2317 = vld [vmem:[%s1693 + $0x30] sm:$0x1]
      %v2318 = vld [vmem:[%s1693 + $0x38] sm:$0x1]
      %v2319 = vld [vmem:[%s1693 + $0x40] sm:$0x1]
      %v2320 = vld [vmem:[%s1693 + $0x48] sm:$0x1]
      %2331 = vrot.lane.b32.xlu0 %v2311, 14
      %v2332 = vpop.permute.xlu0 %2331
      %2333 = vrot.lane.b32.xlu0 %v2312, 14
      %v2334 = vpop.permute.xlu0 %2333
      %2335 = vrot.lane.b32.xlu0 %v2313, 14
      %v2336 = vpop.permute.xlu0 %2335
      %2337 = vrot.lane.b32.xlu0 %v2314, 14
      %v2338 = vpop.permute.xlu0 %2337
      %2339 = vrot.lane.b32.xlu0 %v2315, 14
      %v2340 = vpop.permute.xlu0 %2339
      %2341 = vrot.lane.b32.xlu0 %v2316, 14
      %v2342 = vpop.permute.xlu0 %2341
      %2343 = vrot.lane.b32.xlu0 %v2317, 14
      %v2344 = vpop.permute.xlu0 %2343
      %2345 = vrot.lane.b32.xlu0 %v2318, 14
      %v2346 = vpop.permute.xlu0 %2345
      %2347 = vrot.lane.b32.xlu0 %v2319, 14
      %v2348 = vpop.permute.xlu0 %2347
      %2349 = vrot.lane.b32.xlu0 %v2320, 14
      %v2350 = vpop.permute.xlu0 %2349
      %v2351 = vsel %vm986, %v2332, %v2334
      %v2352 = vsel %vm986, %v2334, %v2336
      %v2353 = vsel %vm986, %v2336, %v2338
      %v2354 = vsel %vm986, %v2338, %v2340
      %v2355 = vsel %vm986, %v2342, %v2344
      %v2356 = vsel %vm986, %v2344, %v2346
      %v2357 = vsel %vm986, %v2346, %v2348
      %v2358 = vsel %vm986, %v2348, %v2350
      %2367 = vst [vmem:[#allocation2 + $0x4c0] sm:$0xff] %v2351
      %2368 = vst [vmem:[#allocation2 + $0x4c8] sm:$0xff] %v2352
      %2369 = vst [vmem:[#allocation2 + $0x4d0] sm:$0xff] %v2353
      %2370 = vst [vmem:[#allocation2 + $0x4d8] sm:$0xff] %v2354
      %2371 = vst [vmem:[#allocation2 + $0x540] sm:$0x1] %v2355
      %2372 = vst [vmem:[#allocation2 + $0x548] sm:$0x1] %v2356
      %2373 = vst [vmem:[#allocation2 + $0x550] sm:$0x1] %v2357
      %2374 = vst [vmem:[#allocation2 + $0x558] sm:$0x1] %v2358
      %s2375 = scalar_lea.vmem %s305, 240
      %v2376 = vld [vmem:[%s2375] sm:$0xff]
      %v2377 = vld [vmem:[%s2375 + $0x8] sm:$0xff]
      %v2378 = vld [vmem:[%s2375 + $0x10] sm:$0xff]
      %v2379 = vld [vmem:[%s2375 + $0x18] sm:$0xff]
      %v2380 = vld [vmem:[%s2375 + $0x20] sm:$0xff]
      %v2381 = vld [vmem:[%s2375 + $0x28] sm:$0x1]
      %v2382 = vld [vmem:[%s2375 + $0x30] sm:$0x1]
      %v2383 = vld [vmem:[%s2375 + $0x38] sm:$0x1]
      %v2384 = vld [vmem:[%s2375 + $0x40] sm:$0x1]
      %v2385 = vld [vmem:[%s2375 + $0x48] sm:$0x1]
      %2396 = vrot.lane.b32.xlu0 %v2376, 22
      %v2397 = vpop.permute.xlu0 %2396
      %2398 = vrot.lane.b32.xlu0 %v2377, 22
      %v2399 = vpop.permute.xlu0 %2398
      %2400 = vrot.lane.b32.xlu0 %v2378, 22
      %v2401 = vpop.permute.xlu0 %2400
      %2402 = vrot.lane.b32.xlu0 %v2379, 22
      %v2403 = vpop.permute.xlu0 %2402
      %2404 = vrot.lane.b32.xlu0 %v2380, 22
      %v2405 = vpop.permute.xlu0 %2404
      %2406 = vrot.lane.b32.xlu0 %v2381, 22
      %v2407 = vpop.permute.xlu0 %2406
      %2408 = vrot.lane.b32.xlu0 %v2382, 22
      %v2409 = vpop.permute.xlu0 %2408
      %2410 = vrot.lane.b32.xlu0 %v2383, 22
      %v2411 = vpop.permute.xlu0 %2410
      %2412 = vrot.lane.b32.xlu0 %v2384, 22
      %v2413 = vpop.permute.xlu0 %2412
      %2414 = vrot.lane.b32.xlu0 %v2385, 22
      %v2415 = vpop.permute.xlu0 %2414
      %v2416 = vsel %vm354, %v2397, %v2399
      %v2417 = vsel %vm354, %v2399, %v2401
      %v2418 = vsel %vm354, %v2401, %v2403
      %v2419 = vsel %vm354, %v2403, %v2405
      %v2420 = vsel %vm354, %v2407, %v2409
      %v2421 = vsel %vm354, %v2409, %v2411
      %v2422 = vsel %vm354, %v2411, %v2413
      %v2423 = vsel %vm354, %v2413, %v2415
      %2432 = vst [vmem:[#allocation2 + $0x60] sm:$0xff] %v2416
      %2433 = vst [vmem:[#allocation2 + $0x68] sm:$0xff] %v2417
      %2434 = vst [vmem:[#allocation2 + $0x70] sm:$0xff] %v2418
      %2435 = vst [vmem:[#allocation2 + $0x78] sm:$0xff] %v2419
      %2436 = vst [vmem:[#allocation2 + $0xe0] sm:$0x1] %v2420
      %2437 = vst [vmem:[#allocation2 + $0xe8] sm:$0x1] %v2421
      %2438 = vst [vmem:[#allocation2 + $0xf0] sm:$0x1] %v2422
      %2439 = vst [vmem:[#allocation2 + $0xf8] sm:$0x1] %v2423
      %v2440 = vld [vmem:[%s2375] sm:$0xff]
      %v2441 = vld [vmem:[%s2375 + $0x8] sm:$0xff]
      %v2442 = vld [vmem:[%s2375 + $0x10] sm:$0xff]
      %v2443 = vld [vmem:[%s2375 + $0x18] sm:$0xff]
      %v2444 = vld [vmem:[%s2375 + $0x20] sm:$0xff]
      %v2445 = vld [vmem:[%s2375 + $0x28] sm:$0x1]
      %v2446 = vld [vmem:[%s2375 + $0x30] sm:$0x1]
      %v2447 = vld [vmem:[%s2375 + $0x38] sm:$0x1]
      %v2448 = vld [vmem:[%s2375 + $0x40] sm:$0x1]
      %v2449 = vld [vmem:[%s2375 + $0x48] sm:$0x1]
      %v2460 = vrot.slane %v2440, 7
      %v2461 = vrot.slane %v2441, 7
      %v2462 = vrot.slane %v2442, 7
      %v2463 = vrot.slane %v2443, 7
      %v2464 = vrot.slane %v2444, 7
      %v2465 = vrot.slane %v2445, 7
      %v2466 = vsel %vm399, %v2460, %v2465
      %v2467 = vrot.slane %v2446, 7
      %v2468 = vsel %vm399, %v2461, %v2467
      %v2469 = vrot.slane %v2447, 7
      %v2470 = vsel %vm399, %v2462, %v2469
      %v2471 = vrot.slane %v2448, 7
      %v2472 = vsel %vm399, %v2463, %v2471
      %v2473 = vrot.slane %v2449, 7
      %v2474 = vsel %vm399, %v2464, %v2473
      %2475 = vrot.lane.b32.xlu0 %v2460, 21
      %v2476 = vpop.permute.xlu0 %2475
      %2477 = vrot.lane.b32.xlu0 %v2461, 21
      %v2478 = vpop.permute.xlu0 %2477
      %2479 = vrot.lane.b32.xlu0 %v2462, 21
      %v2480 = vpop.permute.xlu0 %2479
      %2481 = vrot.lane.b32.xlu0 %v2463, 21
      %v2482 = vpop.permute.xlu0 %2481
      %2483 = vrot.lane.b32.xlu0 %v2464, 21
      %v2484 = vpop.permute.xlu0 %2483
      %2485 = vrot.lane.b32.xlu0 %v2466, 21
      %v2486 = vpop.permute.xlu0 %2485
      %2487 = vrot.lane.b32.xlu0 %v2468, 21
      %v2488 = vpop.permute.xlu0 %2487
      %2489 = vrot.lane.b32.xlu0 %v2470, 21
      %v2490 = vpop.permute.xlu0 %2489
      %2491 = vrot.lane.b32.xlu0 %v2472, 21
      %v2492 = vpop.permute.xlu0 %2491
      %2493 = vrot.lane.b32.xlu0 %v2474, 21
      %v2494 = vpop.permute.xlu0 %2493
      %v2495 = vsel %vm435, %v2476, %v2478
      %v2496 = vsel %vm435, %v2478, %v2480
      %v2497 = vsel %vm435, %v2480, %v2482
      %v2498 = vsel %vm435, %v2482, %v2484
      %v2499 = vsel %vm435, %v2486, %v2488
      %v2500 = vsel %vm435, %v2488, %v2490
      %v2501 = vsel %vm435, %v2490, %v2492
      %v2502 = vsel %vm435, %v2492, %v2494
      %2511 = vst [vmem:[#allocation2 + $0xe0] sm:$0xfe] %v2495
      %2512 = vst [vmem:[#allocation2 + $0xe8] sm:$0xfe] %v2496
      %2513 = vst [vmem:[#allocation2 + $0xf0] sm:$0xfe] %v2497
      %2514 = vst [vmem:[#allocation2 + $0xf8] sm:$0xfe] %v2498
      %2515 = vst [vmem:[#allocation2 + $0x160] sm:$0x3] %v2499
      %2516 = vst [vmem:[#allocation2 + $0x168] sm:$0x3] %v2500
      %2517 = vst [vmem:[#allocation2 + $0x170] sm:$0x3] %v2501
      %2518 = vst [vmem:[#allocation2 + $0x178] sm:$0x3] %v2502
      %v2519 = vld [vmem:[%s2375] sm:$0xff]
      %v2520 = vld [vmem:[%s2375 + $0x8] sm:$0xff]
      %v2521 = vld [vmem:[%s2375 + $0x10] sm:$0xff]
      %v2522 = vld [vmem:[%s2375 + $0x18] sm:$0xff]
      %v2523 = vld [vmem:[%s2375 + $0x20] sm:$0xff]
      %v2524 = vld [vmem:[%s2375 + $0x28] sm:$0x1]
      %v2525 = vld [vmem:[%s2375 + $0x30] sm:$0x1]
      %v2526 = vld [vmem:[%s2375 + $0x38] sm:$0x1]
      %v2527 = vld [vmem:[%s2375 + $0x40] sm:$0x1]
      %v2528 = vld [vmem:[%s2375 + $0x48] sm:$0x1]
      %v2539 = vrot.slane %v2519, 6
      %v2540 = vrot.slane %v2520, 6
      %v2541 = vrot.slane %v2521, 6
      %v2542 = vrot.slane %v2522, 6
      %v2543 = vrot.slane %v2523, 6
      %v2544 = vrot.slane %v2524, 6
      %v2545 = vsel %vm480, %v2539, %v2544
      %v2546 = vrot.slane %v2525, 6
      %v2547 = vsel %vm480, %v2540, %v2546
      %v2548 = vrot.slane %v2526, 6
      %v2549 = vsel %vm480, %v2541, %v2548
      %v2550 = vrot.slane %v2527, 6
      %v2551 = vsel %vm480, %v2542, %v2550
      %v2552 = vrot.slane %v2528, 6
      %v2553 = vsel %vm480, %v2543, %v2552
      %2554 = vrot.lane.b32.xlu0 %v2539, 20
      %v2555 = vpop.permute.xlu0 %2554
      %2556 = vrot.lane.b32.xlu0 %v2540, 20
      %v2557 = vpop.permute.xlu0 %2556
      %2558 = vrot.lane.b32.xlu0 %v2541, 20
      %v2559 = vpop.permute.xlu0 %2558
      %2560 = vrot.lane.b32.xlu0 %v2542, 20
      %v2561 = vpop.permute.xlu0 %2560
      %2562 = vrot.lane.b32.xlu0 %v2543, 20
      %v2563 = vpop.permute.xlu0 %2562
      %2564 = vrot.lane.b32.xlu0 %v2545, 20
      %v2565 = vpop.permute.xlu0 %2564
      %2566 = vrot.lane.b32.xlu0 %v2547, 20
      %v2567 = vpop.permute.xlu0 %2566
      %2568 = vrot.lane.b32.xlu0 %v2549, 20
      %v2569 = vpop.permute.xlu0 %2568
      %2570 = vrot.lane.b32.xlu0 %v2551, 20
      %v2571 = vpop.permute.xlu0 %2570
      %2572 = vrot.lane.b32.xlu0 %v2553, 20
      %v2573 = vpop.permute.xlu0 %2572
      %v2574 = vsel %vm516, %v2555, %v2557
      %v2575 = vsel %vm516, %v2557, %v2559
      %v2576 = vsel %vm516, %v2559, %v2561
      %v2577 = vsel %vm516, %v2561, %v2563
      %v2578 = vsel %vm516, %v2565, %v2567
      %v2579 = vsel %vm516, %v2567, %v2569
      %v2580 = vsel %vm516, %v2569, %v2571
      %v2581 = vsel %vm516, %v2571, %v2573
      %2590 = vst [vmem:[#allocation2 + $0x160] sm:$0xfc] %v2574
      %2591 = vst [vmem:[#allocation2 + $0x168] sm:$0xfc] %v2575
      %2592 = vst [vmem:[#allocation2 + $0x170] sm:$0xfc] %v2576
      %2593 = vst [vmem:[#allocation2 + $0x178] sm:$0xfc] %v2577
      %2594 = vst [vmem:[#allocation2 + $0x1e0] sm:$0x7] %v2578
      %2595 = vst [vmem:[#allocation2 + $0x1e8] sm:$0x7] %v2579
      %2596 = vst [vmem:[#allocation2 + $0x1f0] sm:$0x7] %v2580
      %2597 = vst [vmem:[#allocation2 + $0x1f8] sm:$0x7] %v2581
      %v2598 = vld [vmem:[%s2375] sm:$0xff]
      %v2599 = vld [vmem:[%s2375 + $0x8] sm:$0xff]
      %v2600 = vld [vmem:[%s2375 + $0x10] sm:$0xff]
      %v2601 = vld [vmem:[%s2375 + $0x18] sm:$0xff]
      %v2602 = vld [vmem:[%s2375 + $0x20] sm:$0xff]
      %v2603 = vld [vmem:[%s2375 + $0x28] sm:$0x1]
      %v2604 = vld [vmem:[%s2375 + $0x30] sm:$0x1]
      %v2605 = vld [vmem:[%s2375 + $0x38] sm:$0x1]
      %v2606 = vld [vmem:[%s2375 + $0x40] sm:$0x1]
      %v2607 = vld [vmem:[%s2375 + $0x48] sm:$0x1]
      %v2618 = vrot.slane %v2598, 5
      %v2619 = vrot.slane %v2599, 5
      %v2620 = vrot.slane %v2600, 5
      %v2621 = vrot.slane %v2601, 5
      %v2622 = vrot.slane %v2602, 5
      %v2623 = vrot.slane %v2603, 5
      %v2624 = vsel %vm561, %v2618, %v2623
      %v2625 = vrot.slane %v2604, 5
      %v2626 = vsel %vm561, %v2619, %v2625
      %v2627 = vrot.slane %v2605, 5
      %v2628 = vsel %vm561, %v2620, %v2627
      %v2629 = vrot.slane %v2606, 5
      %v2630 = vsel %vm561, %v2621, %v2629
      %v2631 = vrot.slane %v2607, 5
      %v2632 = vsel %vm561, %v2622, %v2631
      %2633 = vrot.lane.b32.xlu0 %v2618, 19
      %v2634 = vpop.permute.xlu0 %2633
      %2635 = vrot.lane.b32.xlu0 %v2619, 19
      %v2636 = vpop.permute.xlu0 %2635
      %2637 = vrot.lane.b32.xlu0 %v2620, 19
      %v2638 = vpop.permute.xlu0 %2637
      %2639 = vrot.lane.b32.xlu0 %v2621, 19
      %v2640 = vpop.permute.xlu0 %2639
      %2641 = vrot.lane.b32.xlu0 %v2622, 19
      %v2642 = vpop.permute.xlu0 %2641
      %2643 = vrot.lane.b32.xlu0 %v2624, 19
      %v2644 = vpop.permute.xlu0 %2643
      %2645 = vrot.lane.b32.xlu0 %v2626, 19
      %v2646 = vpop.permute.xlu0 %2645
      %2647 = vrot.lane.b32.xlu0 %v2628, 19
      %v2648 = vpop.permute.xlu0 %2647
      %2649 = vrot.lane.b32.xlu0 %v2630, 19
      %v2650 = vpop.permute.xlu0 %2649
      %2651 = vrot.lane.b32.xlu0 %v2632, 19
      %v2652 = vpop.permute.xlu0 %2651
      %v2653 = vsel %vm597, %v2634, %v2636
      %v2654 = vsel %vm597, %v2636, %v2638
      %v2655 = vsel %vm597, %v2638, %v2640
      %v2656 = vsel %vm597, %v2640, %v2642
      %v2657 = vsel %vm597, %v2644, %v2646
      %v2658 = vsel %vm597, %v2646, %v2648
      %v2659 = vsel %vm597, %v2648, %v2650
      %v2660 = vsel %vm597, %v2650, %v2652
      %2669 = vst [vmem:[#allocation2 + $0x1e0] sm:$0xf8] %v2653
      %2670 = vst [vmem:[#allocation2 + $0x1e8] sm:$0xf8] %v2654
      %2671 = vst [vmem:[#allocation2 + $0x1f0] sm:$0xf8] %v2655
      %2672 = vst [vmem:[#allocation2 + $0x1f8] sm:$0xf8] %v2656
      %2673 = vst [vmem:[#allocation2 + $0x260] sm:$0xf] %v2657
      %2674 = vst [vmem:[#allocation2 + $0x268] sm:$0xf] %v2658
      %2675 = vst [vmem:[#allocation2 + $0x270] sm:$0xf] %v2659
      %2676 = vst [vmem:[#allocation2 + $0x278] sm:$0xf] %v2660
      %v2677 = vld [vmem:[%s2375] sm:$0xff]
      %v2678 = vld [vmem:[%s2375 + $0x8] sm:$0xff]
      %v2679 = vld [vmem:[%s2375 + $0x10] sm:$0xff]
      %v2680 = vld [vmem:[%s2375 + $0x18] sm:$0xff]
      %v2681 = vld [vmem:[%s2375 + $0x20] sm:$0xff]
      %v2682 = vld [vmem:[%s2375 + $0x28] sm:$0x1]
      %v2683 = vld [vmem:[%s2375 + $0x30] sm:$0x1]
      %v2684 = vld [vmem:[%s2375 + $0x38] sm:$0x1]
      %v2685 = vld [vmem:[%s2375 + $0x40] sm:$0x1]
      %v2686 = vld [vmem:[%s2375 + $0x48] sm:$0x1]
      %v2697 = vrot.slane %v2677, 4
      %v2698 = vrot.slane %v2678, 4
      %v2699 = vrot.slane %v2679, 4
      %v2700 = vrot.slane %v2680, 4
      %v2701 = vrot.slane %v2681, 4
      %v2702 = vrot.slane %v2682, 4
      %v2703 = vsel %vm642, %v2697, %v2702
      %v2704 = vrot.slane %v2683, 4
      %v2705 = vsel %vm642, %v2698, %v2704
      %v2706 = vrot.slane %v2684, 4
      %v2707 = vsel %vm642, %v2699, %v2706
      %v2708 = vrot.slane %v2685, 4
      %v2709 = vsel %vm642, %v2700, %v2708
      %v2710 = vrot.slane %v2686, 4
      %v2711 = vsel %vm642, %v2701, %v2710
      %2712 = vrot.lane.b32.xlu0 %v2697, 18
      %v2713 = vpop.permute.xlu0 %2712
      %2714 = vrot.lane.b32.xlu0 %v2698, 18
      %v2715 = vpop.permute.xlu0 %2714
      %2716 = vrot.lane.b32.xlu0 %v2699, 18
      %v2717 = vpop.permute.xlu0 %2716
      %2718 = vrot.lane.b32.xlu0 %v2700, 18
      %v2719 = vpop.permute.xlu0 %2718
      %2720 = vrot.lane.b32.xlu0 %v2701, 18
      %v2721 = vpop.permute.xlu0 %2720
      %2722 = vrot.lane.b32.xlu0 %v2703, 18
      %v2723 = vpop.permute.xlu0 %2722
      %2724 = vrot.lane.b32.xlu0 %v2705, 18
      %v2725 = vpop.permute.xlu0 %2724
      %2726 = vrot.lane.b32.xlu0 %v2707, 18
      %v2727 = vpop.permute.xlu0 %2726
      %2728 = vrot.lane.b32.xlu0 %v2709, 18
      %v2729 = vpop.permute.xlu0 %2728
      %2730 = vrot.lane.b32.xlu0 %v2711, 18
      %v2731 = vpop.permute.xlu0 %2730
      %v2732 = vsel %vm678, %v2713, %v2715
      %v2733 = vsel %vm678, %v2715, %v2717
      %v2734 = vsel %vm678, %v2717, %v2719
      %v2735 = vsel %vm678, %v2719, %v2721
      %v2736 = vsel %vm678, %v2723, %v2725
      %v2737 = vsel %vm678, %v2725, %v2727
      %v2738 = vsel %vm678, %v2727, %v2729
      %v2739 = vsel %vm678, %v2729, %v2731
      %2748 = vst [vmem:[#allocation2 + $0x260] sm:$0xf0] %v2732
      %2749 = vst [vmem:[#allocation2 + $0x268] sm:$0xf0] %v2733
      %2750 = vst [vmem:[#allocation2 + $0x270] sm:$0xf0] %v2734
      %2751 = vst [vmem:[#allocation2 + $0x278] sm:$0xf0] %v2735
      %2752 = vst [vmem:[#allocation2 + $0x2e0] sm:$0x1f] %v2736
      %2753 = vst [vmem:[#allocation2 + $0x2e8] sm:$0x1f] %v2737
      %2754 = vst [vmem:[#allocation2 + $0x2f0] sm:$0x1f] %v2738
      %2755 = vst [vmem:[#allocation2 + $0x2f8] sm:$0x1f] %v2739
      %v2756 = vld [vmem:[%s2375] sm:$0xff]
      %v2757 = vld [vmem:[%s2375 + $0x8] sm:$0xff]
      %v2758 = vld [vmem:[%s2375 + $0x10] sm:$0xff]
      %v2759 = vld [vmem:[%s2375 + $0x18] sm:$0xff]
      %v2760 = vld [vmem:[%s2375 + $0x20] sm:$0xff]
      %v2761 = vld [vmem:[%s2375 + $0x28] sm:$0x1]
      %v2762 = vld [vmem:[%s2375 + $0x30] sm:$0x1]
      %v2763 = vld [vmem:[%s2375 + $0x38] sm:$0x1]
      %v2764 = vld [vmem:[%s2375 + $0x40] sm:$0x1]
      %v2765 = vld [vmem:[%s2375 + $0x48] sm:$0x1]
      %v2776 = vrot.slane %v2756, 3
      %v2777 = vrot.slane %v2757, 3
      %v2778 = vrot.slane %v2758, 3
      %v2779 = vrot.slane %v2759, 3
      %v2780 = vrot.slane %v2760, 3
      %v2781 = vrot.slane %v2761, 3
      %v2782 = vsel %vm723, %v2776, %v2781
      %v2783 = vrot.slane %v2762, 3
      %v2784 = vsel %vm723, %v2777, %v2783
      %v2785 = vrot.slane %v2763, 3
      %v2786 = vsel %vm723, %v2778, %v2785
      %v2787 = vrot.slane %v2764, 3
      %v2788 = vsel %vm723, %v2779, %v2787
      %v2789 = vrot.slane %v2765, 3
      %v2790 = vsel %vm723, %v2780, %v2789
      %2791 = vrot.lane.b32.xlu0 %v2776, 17
      %v2792 = vpop.permute.xlu0 %2791
      %2793 = vrot.lane.b32.xlu0 %v2777, 17
      %v2794 = vpop.permute.xlu0 %2793
      %2795 = vrot.lane.b32.xlu0 %v2778, 17
      %v2796 = vpop.permute.xlu0 %2795
      %2797 = vrot.lane.b32.xlu0 %v2779, 17
      %v2798 = vpop.permute.xlu0 %2797
      %2799 = vrot.lane.b32.xlu0 %v2780, 17
      %v2800 = vpop.permute.xlu0 %2799
      %2801 = vrot.lane.b32.xlu0 %v2782, 17
      %v2802 = vpop.permute.xlu0 %2801
      %2803 = vrot.lane.b32.xlu0 %v2784, 17
      %v2804 = vpop.permute.xlu0 %2803
      %2805 = vrot.lane.b32.xlu0 %v2786, 17
      %v2806 = vpop.permute.xlu0 %2805
      %2807 = vrot.lane.b32.xlu0 %v2788, 17
      %v2808 = vpop.permute.xlu0 %2807
      %2809 = vrot.lane.b32.xlu0 %v2790, 17
      %v2810 = vpop.permute.xlu0 %2809
      %v2811 = vsel %vm759, %v2792, %v2794
      %v2812 = vsel %vm759, %v2794, %v2796
      %v2813 = vsel %vm759, %v2796, %v2798
      %v2814 = vsel %vm759, %v2798, %v2800
      %v2815 = vsel %vm759, %v2802, %v2804
      %v2816 = vsel %vm759, %v2804, %v2806
      %v2817 = vsel %vm759, %v2806, %v2808
      %v2818 = vsel %vm759, %v2808, %v2810
      %2827 = vst [vmem:[#allocation2 + $0x2e0] sm:$0xe0] %v2811
      %2828 = vst [vmem:[#allocation2 + $0x2e8] sm:$0xe0] %v2812
      %2829 = vst [vmem:[#allocation2 + $0x2f0] sm:$0xe0] %v2813
      %2830 = vst [vmem:[#allocation2 + $0x2f8] sm:$0xe0] %v2814
      %2831 = vst [vmem:[#allocation2 + $0x360] sm:$0x3f] %v2815
      %2832 = vst [vmem:[#allocation2 + $0x368] sm:$0x3f] %v2816
      %2833 = vst [vmem:[#allocation2 + $0x370] sm:$0x3f] %v2817
      %2834 = vst [vmem:[#allocation2 + $0x378] sm:$0x3f] %v2818
      %v2835 = vld [vmem:[%s2375] sm:$0xff]
      %v2836 = vld [vmem:[%s2375 + $0x8] sm:$0xff]
      %v2837 = vld [vmem:[%s2375 + $0x10] sm:$0xff]
      %v2838 = vld [vmem:[%s2375 + $0x18] sm:$0xff]
      %v2839 = vld [vmem:[%s2375 + $0x20] sm:$0xff]
      %v2840 = vld [vmem:[%s2375 + $0x28] sm:$0x1]
      %v2841 = vld [vmem:[%s2375 + $0x30] sm:$0x1]
      %v2842 = vld [vmem:[%s2375 + $0x38] sm:$0x1]
      %v2843 = vld [vmem:[%s2375 + $0x40] sm:$0x1]
      %v2844 = vld [vmem:[%s2375 + $0x48] sm:$0x1]
      %v2855 = vrot.slane %v2835, 2
      %v2856 = vrot.slane %v2836, 2
      %v2857 = vrot.slane %v2837, 2
      %v2858 = vrot.slane %v2838, 2
      %v2859 = vrot.slane %v2839, 2
      %v2860 = vrot.slane %v2840, 2
      %v2861 = vsel %vm804, %v2855, %v2860
      %v2862 = vrot.slane %v2841, 2
      %v2863 = vsel %vm804, %v2856, %v2862
      %v2864 = vrot.slane %v2842, 2
      %v2865 = vsel %vm804, %v2857, %v2864
      %v2866 = vrot.slane %v2843, 2
      %v2867 = vsel %vm804, %v2858, %v2866
      %v2868 = vrot.slane %v2844, 2
      %v2869 = vsel %vm804, %v2859, %v2868
      %2870 = vrot.lane.b32.xlu0 %v2855, 16
      %v2871 = vpop.permute.xlu0 %2870
      %2872 = vrot.lane.b32.xlu0 %v2856, 16
      %v2873 = vpop.permute.xlu0 %2872
      %2874 = vrot.lane.b32.xlu0 %v2857, 16
      %v2875 = vpop.permute.xlu0 %2874
      %2876 = vrot.lane.b32.xlu0 %v2858, 16
      %v2877 = vpop.permute.xlu0 %2876
      %2878 = vrot.lane.b32.xlu0 %v2859, 16
      %v2879 = vpop.permute.xlu0 %2878
      %2880 = vrot.lane.b32.xlu0 %v2861, 16
      %v2881 = vpop.permute.xlu0 %2880
      %2882 = vrot.lane.b32.xlu0 %v2863, 16
      %v2883 = vpop.permute.xlu0 %2882
      %2884 = vrot.lane.b32.xlu0 %v2865, 16
      %v2885 = vpop.permute.xlu0 %2884
      %2886 = vrot.lane.b32.xlu0 %v2867, 16
      %v2887 = vpop.permute.xlu0 %2886
      %2888 = vrot.lane.b32.xlu0 %v2869, 16
      %v2889 = vpop.permute.xlu0 %2888
      %v2890 = vsel %vm840, %v2871, %v2873
      %v2891 = vsel %vm840, %v2873, %v2875
      %v2892 = vsel %vm840, %v2875, %v2877
      %v2893 = vsel %vm840, %v2877, %v2879
      %v2894 = vsel %vm840, %v2881, %v2883
      %v2895 = vsel %vm840, %v2883, %v2885
      %v2896 = vsel %vm840, %v2885, %v2887
      %v2897 = vsel %vm840, %v2887, %v2889
      %2906 = vst [vmem:[#allocation2 + $0x360] sm:$0xc0] %v2890
      %2907 = vst [vmem:[#allocation2 + $0x368] sm:$0xc0] %v2891
      %2908 = vst [vmem:[#allocation2 + $0x370] sm:$0xc0] %v2892
      %2909 = vst [vmem:[#allocation2 + $0x378] sm:$0xc0] %v2893
      %2910 = vst [vmem:[#allocation2 + $0x3e0] sm:$0x7f] %v2894
      %2911 = vst [vmem:[#allocation2 + $0x3e8] sm:$0x7f] %v2895
      %2912 = vst [vmem:[#allocation2 + $0x3f0] sm:$0x7f] %v2896
      %2913 = vst [vmem:[#allocation2 + $0x3f8] sm:$0x7f] %v2897
      %v2914 = vld [vmem:[%s2375] sm:$0xff]
      %v2915 = vld [vmem:[%s2375 + $0x8] sm:$0xff]
      %v2916 = vld [vmem:[%s2375 + $0x10] sm:$0xff]
      %v2917 = vld [vmem:[%s2375 + $0x18] sm:$0xff]
      %v2918 = vld [vmem:[%s2375 + $0x20] sm:$0xff]
      %v2919 = vld [vmem:[%s2375 + $0x28] sm:$0x1]
      %v2920 = vld [vmem:[%s2375 + $0x30] sm:$0x1]
      %v2921 = vld [vmem:[%s2375 + $0x38] sm:$0x1]
      %v2922 = vld [vmem:[%s2375 + $0x40] sm:$0x1]
      %v2923 = vld [vmem:[%s2375 + $0x48] sm:$0x1]
      %v2934 = vrot.slane %v2914, 1
      %v2935 = vrot.slane %v2915, 1
      %v2936 = vrot.slane %v2916, 1
      %v2937 = vrot.slane %v2917, 1
      %v2938 = vrot.slane %v2918, 1
      %v2939 = vrot.slane %v2919, 1
      %v2940 = vsel %vm885, %v2934, %v2939
      %v2941 = vrot.slane %v2920, 1
      %v2942 = vsel %vm885, %v2935, %v2941
      %v2943 = vrot.slane %v2921, 1
      %v2944 = vsel %vm885, %v2936, %v2943
      %v2945 = vrot.slane %v2922, 1
      %v2946 = vsel %vm885, %v2937, %v2945
      %v2947 = vrot.slane %v2923, 1
      %v2948 = vsel %vm885, %v2938, %v2947
      %2949 = vrot.lane.b32.xlu0 %v2934, 15
      %v2950 = vpop.permute.xlu0 %2949
      %2951 = vrot.lane.b32.xlu0 %v2935, 15
      %v2952 = vpop.permute.xlu0 %2951
      %2953 = vrot.lane.b32.xlu0 %v2936, 15
      %v2954 = vpop.permute.xlu0 %2953
      %2955 = vrot.lane.b32.xlu0 %v2937, 15
      %v2956 = vpop.permute.xlu0 %2955
      %2957 = vrot.lane.b32.xlu0 %v2938, 15
      %v2958 = vpop.permute.xlu0 %2957
      %2959 = vrot.lane.b32.xlu0 %v2940, 15
      %v2960 = vpop.permute.xlu0 %2959
      %2961 = vrot.lane.b32.xlu0 %v2942, 15
      %v2962 = vpop.permute.xlu0 %2961
      %2963 = vrot.lane.b32.xlu0 %v2944, 15
      %v2964 = vpop.permute.xlu0 %2963
      %2965 = vrot.lane.b32.xlu0 %v2946, 15
      %v2966 = vpop.permute.xlu0 %2965
      %2967 = vrot.lane.b32.xlu0 %v2948, 15
      %v2968 = vpop.permute.xlu0 %2967
      %v2969 = vsel %vm921, %v2950, %v2952
      %v2970 = vsel %vm921, %v2952, %v2954
      %v2971 = vsel %vm921, %v2954, %v2956
      %v2972 = vsel %vm921, %v2956, %v2958
      %v2973 = vsel %vm921, %v2960, %v2962
      %v2974 = vsel %vm921, %v2962, %v2964
      %v2975 = vsel %vm921, %v2964, %v2966
      %v2976 = vsel %vm921, %v2966, %v2968
      %2985 = vst [vmem:[#allocation2 + $0x3e0] sm:$0x80] %v2969
      %2986 = vst [vmem:[#allocation2 + $0x3e8] sm:$0x80] %v2970
      %2987 = vst [vmem:[#allocation2 + $0x3f0] sm:$0x80] %v2971
      %2988 = vst [vmem:[#allocation2 + $0x3f8] sm:$0x80] %v2972
      %2989 = vst [vmem:[#allocation2 + $0x460] sm:$0xff] %v2973
      %2990 = vst [vmem:[#allocation2 + $0x468] sm:$0xff] %v2974
      %2991 = vst [vmem:[#allocation2 + $0x470] sm:$0xff] %v2975
      %2992 = vst [vmem:[#allocation2 + $0x478] sm:$0xff] %v2976
      %v2993 = vld [vmem:[%s2375] sm:$0xff]
      %v2994 = vld [vmem:[%s2375 + $0x8] sm:$0xff]
      %v2995 = vld [vmem:[%s2375 + $0x10] sm:$0xff]
      %v2996 = vld [vmem:[%s2375 + $0x18] sm:$0xff]
      %v2997 = vld [vmem:[%s2375 + $0x20] sm:$0xff]
      %v2998 = vld [vmem:[%s2375 + $0x28] sm:$0x1]
      %v2999 = vld [vmem:[%s2375 + $0x30] sm:$0x1]
      %v3000 = vld [vmem:[%s2375 + $0x38] sm:$0x1]
      %v3001 = vld [vmem:[%s2375 + $0x40] sm:$0x1]
      %v3002 = vld [vmem:[%s2375 + $0x48] sm:$0x1]
      %3013 = vrot.lane.b32.xlu0 %v2993, 14
      %v3014 = vpop.permute.xlu0 %3013
      %3015 = vrot.lane.b32.xlu0 %v2994, 14
      %v3016 = vpop.permute.xlu0 %3015
      %3017 = vrot.lane.b32.xlu0 %v2995, 14
      %v3018 = vpop.permute.xlu0 %3017
      %3019 = vrot.lane.b32.xlu0 %v2996, 14
      %v3020 = vpop.permute.xlu0 %3019
      %3021 = vrot.lane.b32.xlu0 %v2997, 14
      %v3022 = vpop.permute.xlu0 %3021
      %3023 = vrot.lane.b32.xlu0 %v2998, 14
      %v3024 = vpop.permute.xlu0 %3023
      %3025 = vrot.lane.b32.xlu0 %v2999, 14
      %v3026 = vpop.permute.xlu0 %3025
      %3027 = vrot.lane.b32.xlu0 %v3000, 14
      %v3028 = vpop.permute.xlu0 %3027
      %3029 = vrot.lane.b32.xlu0 %v3001, 14
      %v3030 = vpop.permute.xlu0 %3029
      %3031 = vrot.lane.b32.xlu0 %v3002, 14
      %v3032 = vpop.permute.xlu0 %3031
      %v3033 = vsel %vm986, %v3014, %v3016
      %v3034 = vsel %vm986, %v3016, %v3018
      %v3035 = vsel %vm986, %v3018, %v3020
      %v3036 = vsel %vm986, %v3020, %v3022
      %v3037 = vsel %vm986, %v3024, %v3026
      %v3038 = vsel %vm986, %v3026, %v3028
      %v3039 = vsel %vm986, %v3028, %v3030
      %v3040 = vsel %vm986, %v3030, %v3032
      %3049 = vst [vmem:[#allocation2 + $0x4e0] sm:$0xff] %v3033
      %3050 = vst [vmem:[#allocation2 + $0x4e8] sm:$0xff] %v3034
      %3051 = vst [vmem:[#allocation2 + $0x4f0] sm:$0xff] %v3035
      %3052 = vst [vmem:[#allocation2 + $0x4f8] sm:$0xff] %v3036
      %3053 = vst [vmem:[#allocation2 + $0x560] sm:$0x1] %v3037
      %3054 = vst [vmem:[#allocation2 + $0x568] sm:$0x1] %v3038
      %3055 = vst [vmem:[#allocation2 + $0x570] sm:$0x1] %v3039
      %3056 = vst [vmem:[#allocation2 + $0x578] sm:$0x1] %v3040
      %v3057 = vld [vmem:[%s2] sm:$0xf]
      %v3058 = vld [vmem:[%s2 + $0x4] sm:$0xf]
      %v3059 = vld [vmem:[%s2 + $0x8] sm:$0xf]
      %v3060 = vld [vmem:[%s2 + $0xc] sm:$0xf]
      %v3061 = vld [vmem:[%s2 + $0x10] sm:$0xf]
      %v3062 = vld [vmem:[%s2 + $0x14] sm:$0xf]
      %v3063 = vld [vmem:[%s2 + $0x18] sm:$0xf]
      %v3064 = vld [vmem:[%s2 + $0x1c] sm:$0xf]
      %v3065 = vld [vmem:[#allocation2] sm:$0xff]
      %v3066 = vld [vmem:[#allocation2 + $0x8] sm:$0xff]
      %v3067 = vld [vmem:[#allocation2 + $0x10] sm:$0xff]
      %v3068 = vld [vmem:[#allocation2 + $0x18] sm:$0xff]
      %v3069 = vld [vmem:[#allocation2 + $0x20] sm:$0xff]
      %v3070 = vld [vmem:[#allocation2 + $0x28] sm:$0xff]
      %v3071 = vld [vmem:[#allocation2 + $0x30] sm:$0xff]
      %v3072 = vld [vmem:[#allocation2 + $0x38] sm:$0xff]
      %v3073 = vld [vmem:[#allocation2 + $0x40] sm:$0xff]
      %v3074 = vld [vmem:[#allocation2 + $0x48] sm:$0xff]
      %v3075 = vld [vmem:[#allocation2 + $0x50] sm:$0xff]
      %v3076 = vld [vmem:[#allocation2 + $0x58] sm:$0xff]
      %v3077 = vld [vmem:[#allocation2 + $0x60] sm:$0xff]
      %v3078 = vld [vmem:[#allocation2 + $0x68] sm:$0xff]
      %v3079 = vld [vmem:[#allocation2 + $0x70] sm:$0xff]
      %v3080 = vld [vmem:[#allocation2 + $0x78] sm:$0xff]
      %v3081 = vld [vmem:[#allocation2 + $0x80] sm:$0xff]
      %v3082 = vld [vmem:[#allocation2 + $0x88] sm:$0xff]
      %v3083 = vld [vmem:[#allocation2 + $0x90] sm:$0xff]
      %v3084 = vld [vmem:[#allocation2 + $0x98] sm:$0xff]
      %v3085 = vld [vmem:[#allocation2 + $0xa0] sm:$0xff]
      %v3086 = vld [vmem:[#allocation2 + $0xa8] sm:$0xff]
      %v3087 = vld [vmem:[#allocation2 + $0xb0] sm:$0xff]
      %v3088 = vld [vmem:[#allocation2 + $0xb8] sm:$0xff]
      %v3089 = vld [vmem:[#allocation2 + $0xc0] sm:$0xff]
      %v3090 = vld [vmem:[#allocation2 + $0xc8] sm:$0xff]
      %v3091 = vld [vmem:[#allocation2 + $0xd0] sm:$0xff]
      %v3092 = vld [vmem:[#allocation2 + $0xd8] sm:$0xff]
      %v3093 = vld [vmem:[#allocation2 + $0xe0] sm:$0xff]
      %v3094 = vld [vmem:[#allocation2 + $0xe8] sm:$0xff]
      %v3095 = vld [vmem:[#allocation2 + $0xf0] sm:$0xff]
      %v3096 = vld [vmem:[#allocation2 + $0xf8] sm:$0xff]
      %v3097 = vld [vmem:[#allocation2 + $0x100] sm:$0xff]
      %v3098 = vld [vmem:[#allocation2 + $0x108] sm:$0xff]
      %v3099 = vld [vmem:[#allocation2 + $0x110] sm:$0xff]
      %v3100 = vld [vmem:[#allocation2 + $0x118] sm:$0xff]
      %v3101 = vld [vmem:[#allocation2 + $0x120] sm:$0xff]
      %v3102 = vld [vmem:[#allocation2 + $0x128] sm:$0xff]
      %v3103 = vld [vmem:[#allocation2 + $0x130] sm:$0xff]
      %v3104 = vld [vmem:[#allocation2 + $0x138] sm:$0xff]
      %v3105 = vld [vmem:[#allocation2 + $0x140] sm:$0xff]
      %v3106 = vld [vmem:[#allocation2 + $0x148] sm:$0xff]
      %v3107 = vld [vmem:[#allocation2 + $0x150] sm:$0xff]
      %v3108 = vld [vmem:[#allocation2 + $0x158] sm:$0xff]
      %v3109 = vld [vmem:[#allocation2 + $0x160] sm:$0xff]
      %v3110 = vld [vmem:[#allocation2 + $0x168] sm:$0xff]
      %v3111 = vld [vmem:[#allocation2 + $0x170] sm:$0xff]
      %v3112 = vld [vmem:[#allocation2 + $0x178] sm:$0xff]
      %v3113 = vld [vmem:[#allocation2 + $0x180] sm:$0xff]
      %v3114 = vld [vmem:[#allocation2 + $0x188] sm:$0xff]
      %v3115 = vld [vmem:[#allocation2 + $0x190] sm:$0xff]
      %v3116 = vld [vmem:[#allocation2 + $0x198] sm:$0xff]
      %v3117 = vld [vmem:[#allocation2 + $0x1a0] sm:$0xff]
      %v3118 = vld [vmem:[#allocation2 + $0x1a8] sm:$0xff]
      %v3119 = vld [vmem:[#allocation2 + $0x1b0] sm:$0xff]
      %v3120 = vld [vmem:[#allocation2 + $0x1b8] sm:$0xff]
      %v3121 = vld [vmem:[#allocation2 + $0x1c0] sm:$0xff]
      %v3122 = vld [vmem:[#allocation2 + $0x1c8] sm:$0xff]
      %v3123 = vld [vmem:[#allocation2 + $0x1d0] sm:$0xff]
      %v3124 = vld [vmem:[#allocation2 + $0x1d8] sm:$0xff]
      %v3125 = vld [vmem:[#allocation2 + $0x1e0] sm:$0xff]
      %v3126 = vld [vmem:[#allocation2 + $0x1e8] sm:$0xff]
      %v3127 = vld [vmem:[#allocation2 + $0x1f0] sm:$0xff]
      %v3128 = vld [vmem:[#allocation2 + $0x1f8] sm:$0xff]
      %v3129 = vld [vmem:[#allocation2 + $0x200] sm:$0xff]
      %v3130 = vld [vmem:[#allocation2 + $0x208] sm:$0xff]
      %v3131 = vld [vmem:[#allocation2 + $0x210] sm:$0xff]
      %v3132 = vld [vmem:[#allocation2 + $0x218] sm:$0xff]
      %v3133 = vld [vmem:[#allocation2 + $0x220] sm:$0xff]
      %v3134 = vld [vmem:[#allocation2 + $0x228] sm:$0xff]
      %v3135 = vld [vmem:[#allocation2 + $0x230] sm:$0xff]
      %v3136 = vld [vmem:[#allocation2 + $0x238] sm:$0xff]
      %v3137 = vld [vmem:[#allocation2 + $0x240] sm:$0xff]
      %v3138 = vld [vmem:[#allocation2 + $0x248] sm:$0xff]
      %v3139 = vld [vmem:[#allocation2 + $0x250] sm:$0xff]
      %v3140 = vld [vmem:[#allocation2 + $0x258] sm:$0xff]
      %v3141 = vld [vmem:[#allocation2 + $0x260] sm:$0xff]
      %v3142 = vld [vmem:[#allocation2 + $0x268] sm:$0xff]
      %v3143 = vld [vmem:[#allocation2 + $0x270] sm:$0xff]
      %v3144 = vld [vmem:[#allocation2 + $0x278] sm:$0xff]
      %v3145 = vld [vmem:[#allocation2 + $0x280] sm:$0xff]
      %v3146 = vld [vmem:[#allocation2 + $0x288] sm:$0xff]
      %v3147 = vld [vmem:[#allocation2 + $0x290] sm:$0xff]
      %v3148 = vld [vmem:[#allocation2 + $0x298] sm:$0xff]
      %v3149 = vld [vmem:[#allocation2 + $0x2a0] sm:$0xff]
      %v3150 = vld [vmem:[#allocation2 + $0x2a8] sm:$0xff]
      %v3151 = vld [vmem:[#allocation2 + $0x2b0] sm:$0xff]
      %v3152 = vld [vmem:[#allocation2 + $0x2b8] sm:$0xff]
      %v3153 = vld [vmem:[#allocation2 + $0x2c0] sm:$0xff]
      %v3154 = vld [vmem:[#allocation2 + $0x2c8] sm:$0xff]
      %v3155 = vld [vmem:[#allocation2 + $0x2d0] sm:$0xff]
      %v3156 = vld [vmem:[#allocation2 + $0x2d8] sm:$0xff]
      %v3157 = vld [vmem:[#allocation2 + $0x2e0] sm:$0xff]
      %v3158 = vld [vmem:[#allocation2 + $0x2e8] sm:$0xff]
      %v3159 = vld [vmem:[#allocation2 + $0x2f0] sm:$0xff]
      %v3160 = vld [vmem:[#allocation2 + $0x2f8] sm:$0xff]
      %v3161 = vld [vmem:[#allocation2 + $0x300] sm:$0xff]
      %v3162 = vld [vmem:[#allocation2 + $0x308] sm:$0xff]
      %v3163 = vld [vmem:[#allocation2 + $0x310] sm:$0xff]
      %v3164 = vld [vmem:[#allocation2 + $0x318] sm:$0xff]
      %v3165 = vld [vmem:[#allocation2 + $0x320] sm:$0xff]
      %v3166 = vld [vmem:[#allocation2 + $0x328] sm:$0xff]
      %v3167 = vld [vmem:[#allocation2 + $0x330] sm:$0xff]
      %v3168 = vld [vmem:[#allocation2 + $0x338] sm:$0xff]
      %v3169 = vld [vmem:[#allocation2 + $0x340] sm:$0xff]
      %v3170 = vld [vmem:[#allocation2 + $0x348] sm:$0xff]
      %v3171 = vld [vmem:[#allocation2 + $0x350] sm:$0xff]
      %v3172 = vld [vmem:[#allocation2 + $0x358] sm:$0xff]
      %v3173 = vld [vmem:[#allocation2 + $0x360] sm:$0xff]
      %v3174 = vld [vmem:[#allocation2 + $0x368] sm:$0xff]
      %v3175 = vld [vmem:[#allocation2 + $0x370] sm:$0xff]
      %v3176 = vld [vmem:[#allocation2 + $0x378] sm:$0xff]
      %v3177 = vld [vmem:[#allocation2 + $0x380] sm:$0xff]
      %v3178 = vld [vmem:[#allocation2 + $0x388] sm:$0xff]
      %v3179 = vld [vmem:[#allocation2 + $0x390] sm:$0xff]
      %v3180 = vld [vmem:[#allocation2 + $0x398] sm:$0xff]
      %v3181 = vld [vmem:[#allocation2 + $0x3a0] sm:$0xff]
      %v3182 = vld [vmem:[#allocation2 + $0x3a8] sm:$0xff]
      %v3183 = vld [vmem:[#allocation2 + $0x3b0] sm:$0xff]
      %v3184 = vld [vmem:[#allocation2 + $0x3b8] sm:$0xff]
      %v3185 = vld [vmem:[#allocation2 + $0x3c0] sm:$0xff]
      %v3186 = vld [vmem:[#allocation2 + $0x3c8] sm:$0xff]
      %v3187 = vld [vmem:[#allocation2 + $0x3d0] sm:$0xff]
      %v3188 = vld [vmem:[#allocation2 + $0x3d8] sm:$0xff]
      %v3189 = vld [vmem:[#allocation2 + $0x3e0] sm:$0xff]
      %v3190 = vld [vmem:[#allocation2 + $0x3e8] sm:$0xff]
      %v3191 = vld [vmem:[#allocation2 + $0x3f0] sm:$0xff]
      %v3192 = vld [vmem:[#allocation2 + $0x3f8] sm:$0xff]
      %v3193 = vld [vmem:[#allocation2 + $0x400] sm:$0xff]
      %v3194 = vld [vmem:[#allocation2 + $0x408] sm:$0xff]
      %v3195 = vld [vmem:[#allocation2 + $0x410] sm:$0xff]
      %v3196 = vld [vmem:[#allocation2 + $0x418] sm:$0xff]
      %v3197 = vld [vmem:[#allocation2 + $0x420] sm:$0xff]
      %v3198 = vld [vmem:[#allocation2 + $0x428] sm:$0xff]
      %v3199 = vld [vmem:[#allocation2 + $0x430] sm:$0xff]
      %v3200 = vld [vmem:[#allocation2 + $0x438] sm:$0xff]
      %v3201 = vld [vmem:[#allocation2 + $0x440] sm:$0xff]
      %v3202 = vld [vmem:[#allocation2 + $0x448] sm:$0xff]
      %v3203 = vld [vmem:[#allocation2 + $0x450] sm:$0xff]
      %v3204 = vld [vmem:[#allocation2 + $0x458] sm:$0xff]
      %v3205 = vld [vmem:[#allocation2 + $0x460] sm:$0xff]
      %v3206 = vld [vmem:[#allocation2 + $0x468] sm:$0xff]
      %v3207 = vld [vmem:[#allocation2 + $0x470] sm:$0xff]
      %v3208 = vld [vmem:[#allocation2 + $0x478] sm:$0xff]
      %v3209 = vld [vmem:[#allocation2 + $0x480] sm:$0xff]
      %v3210 = vld [vmem:[#allocation2 + $0x488] sm:$0xff]
      %v3211 = vld [vmem:[#allocation2 + $0x490] sm:$0xff]
      %v3212 = vld [vmem:[#allocation2 + $0x498] sm:$0xff]
      %v3213 = vld [vmem:[#allocation2 + $0x4a0] sm:$0xff]
      %v3214 = vld [vmem:[#allocation2 + $0x4a8] sm:$0xff]
      %v3215 = vld [vmem:[#allocation2 + $0x4b0] sm:$0xff]
      %v3216 = vld [vmem:[#allocation2 + $0x4b8] sm:$0xff]
      %v3217 = vld [vmem:[#allocation2 + $0x4c0] sm:$0xff]
      %v3218 = vld [vmem:[#allocation2 + $0x4c8] sm:$0xff]
      %v3219 = vld [vmem:[#allocation2 + $0x4d0] sm:$0xff]
      %v3220 = vld [vmem:[#allocation2 + $0x4d8] sm:$0xff]
      %v3221 = vld [vmem:[#allocation2 + $0x4e0] sm:$0xff]
      %v3222 = vld [vmem:[#allocation2 + $0x4e8] sm:$0xff]
      %v3223 = vld [vmem:[#allocation2 + $0x4f0] sm:$0xff]
      %v3224 = vld [vmem:[#allocation2 + $0x4f8] sm:$0xff]
      %v3225 = vld [vmem:[#allocation2 + $0x500] sm:$0x1]
      %v3226 = vld [vmem:[#allocation2 + $0x508] sm:$0x1]
      %v3227 = vld [vmem:[#allocation2 + $0x510] sm:$0x1]
      %v3228 = vld [vmem:[#allocation2 + $0x518] sm:$0x1]
      %v3229 = vld [vmem:[#allocation2 + $0x520] sm:$0x1]
      %v3230 = vld [vmem:[#allocation2 + $0x528] sm:$0x1]
      %v3231 = vld [vmem:[#allocation2 + $0x530] sm:$0x1]
      %v3232 = vld [vmem:[#allocation2 + $0x538] sm:$0x1]
      %v3233 = vld [vmem:[#allocation2 + $0x540] sm:$0x1]
      %v3234 = vld [vmem:[#allocation2 + $0x548] sm:$0x1]
      %v3235 = vld [vmem:[#allocation2 + $0x550] sm:$0x1]
      %v3236 = vld [vmem:[#allocation2 + $0x558] sm:$0x1]
      %v3237 = vld [vmem:[#allocation2 + $0x560] sm:$0x1]
      %v3238 = vld [vmem:[#allocation2 + $0x568] sm:$0x1]
      %v3239 = vld [vmem:[#allocation2 + $0x570] sm:$0x1]
      %v3240 = vld [vmem:[#allocation2 + $0x578] sm:$0x1]
      %v3241 = vpack.c.bf16 %v3081, %v3065
      %v3242 = vpack.c.bf16 %v3082, %v3066
      %v3243 = vpack.c.bf16 %v3083, %v3067
      %v3244 = vpack.c.bf16 %v3084, %v3068
      %v3245 = vpack.c.bf16 %v3085, %v3069
      %v3246 = vpack.c.bf16 %v3086, %v3070
      %v3247 = vpack.c.bf16 %v3087, %v3071
      %v3248 = vpack.c.bf16 %v3088, %v3072
      %v3249 = vpack.c.bf16 %v3089, %v3073
      %v3250 = vpack.c.bf16 %v3090, %v3074
      %v3251 = vpack.c.bf16 %v3091, %v3075
      %v3252 = vpack.c.bf16 %v3092, %v3076
      %v3253 = vpack.c.bf16 %v3093, %v3077
      %v3254 = vpack.c.bf16 %v3094, %v3078
      %v3255 = vpack.c.bf16 %v3095, %v3079
      %v3256 = vpack.c.bf16 %v3096, %v3080
      %v3257 = vpack.c.bf16 %v3113, %v3097
      %v3258 = vpack.c.bf16 %v3114, %v3098
      %v3259 = vpack.c.bf16 %v3115, %v3099
      %v3260 = vpack.c.bf16 %v3116, %v3100
      %v3261 = vpack.c.bf16 %v3117, %v3101
      %v3262 = vpack.c.bf16 %v3118, %v3102
      %v3263 = vpack.c.bf16 %v3119, %v3103
      %v3264 = vpack.c.bf16 %v3120, %v3104
      %v3265 = vpack.c.bf16 %v3121, %v3105
      %v3266 = vpack.c.bf16 %v3122, %v3106
      %v3267 = vpack.c.bf16 %v3123, %v3107
      %v3268 = vpack.c.bf16 %v3124, %v3108
      %v3269 = vpack.c.bf16 %v3125, %v3109
      %v3270 = vpack.c.bf16 %v3126, %v3110
      %v3271 = vpack.c.bf16 %v3127, %v3111
      %v3272 = vpack.c.bf16 %v3128, %v3112
      %v3273 = vpack.c.bf16 %v3145, %v3129
      %v3274 = vpack.c.bf16 %v3146, %v3130
      %v3275 = vpack.c.bf16 %v3147, %v3131
      %v3276 = vpack.c.bf16 %v3148, %v3132
      %v3277 = vpack.c.bf16 %v3149, %v3133
      %v3278 = vpack.c.bf16 %v3150, %v3134
      %v3279 = vpack.c.bf16 %v3151, %v3135
      %v3280 = vpack.c.bf16 %v3152, %v3136
      %v3281 = vpack.c.bf16 %v3153, %v3137
      %v3282 = vpack.c.bf16 %v3154, %v3138
      %v3283 = vpack.c.bf16 %v3155, %v3139
      %v3284 = vpack.c.bf16 %v3156, %v3140
      %v3285 = vpack.c.bf16 %v3157, %v3141
      %v3286 = vpack.c.bf16 %v3158, %v3142
      %v3287 = vpack.c.bf16 %v3159, %v3143
      %v3288 = vpack.c.bf16 %v3160, %v3144
      %v3289 = vpack.c.bf16 %v3177, %v3161
      %v3290 = vpack.c.bf16 %v3178, %v3162
      %v3291 = vpack.c.bf16 %v3179, %v3163
      %v3292 = vpack.c.bf16 %v3180, %v3164
      %v3293 = vpack.c.bf16 %v3181, %v3165
      %v3294 = vpack.c.bf16 %v3182, %v3166
      %v3295 = vpack.c.bf16 %v3183, %v3167
      %v3296 = vpack.c.bf16 %v3184, %v3168
      %v3297 = vpack.c.bf16 %v3185, %v3169
      %v3298 = vpack.c.bf16 %v3186, %v3170
      %v3299 = vpack.c.bf16 %v3187, %v3171
      %v3300 = vpack.c.bf16 %v3188, %v3172
      %v3301 = vpack.c.bf16 %v3189, %v3173
      %v3302 = vpack.c.bf16 %v3190, %v3174
      %v3303 = vpack.c.bf16 %v3191, %v3175
      %v3304 = vpack.c.bf16 %v3192, %v3176
      %v3305 = vpack.c.bf16 %v3209, %v3193
      %v3306 = vpack.c.bf16 %v3210, %v3194
      %v3307 = vpack.c.bf16 %v3211, %v3195
      %v3308 = vpack.c.bf16 %v3212, %v3196
      %v3309 = vpack.c.bf16 %v3213, %v3197
      %v3310 = vpack.c.bf16 %v3214, %v3198
      %v3311 = vpack.c.bf16 %v3215, %v3199
      %v3312 = vpack.c.bf16 %v3216, %v3200
      %v3313 = vpack.c.bf16 %v3217, %v3201
      %v3314 = vpack.c.bf16 %v3218, %v3202
      %v3315 = vpack.c.bf16 %v3219, %v3203
      %v3316 = vpack.c.bf16 %v3220, %v3204
      %v3317 = vpack.c.bf16 %v3221, %v3205
      %v3318 = vpack.c.bf16 %v3222, %v3206
      %v3319 = vpack.c.bf16 %v3223, %v3207
      %v3320 = vpack.c.bf16 %v3224, %v3208
      %v3321 = vpack.c.bf16 %v3225, %v3225
      %v3322 = vpack.c.bf16 %v3226, %v3226
      %v3323 = vpack.c.bf16 %v3227, %v3227
      %v3324 = vpack.c.bf16 %v3228, %v3228
      %v3325 = vpack.c.bf16 %v3229, %v3229
      %v3326 = vpack.c.bf16 %v3230, %v3230
      %v3327 = vpack.c.bf16 %v3231, %v3231
      %v3328 = vpack.c.bf16 %v3232, %v3232
      %v3329 = vpack.c.bf16 %v3233, %v3233
      %v3330 = vpack.c.bf16 %v3234, %v3234
      %v3331 = vpack.c.bf16 %v3235, %v3235
      %v3332 = vpack.c.bf16 %v3236, %v3236
      %v3333 = vpack.c.bf16 %v3237, %v3237
      %v3334 = vpack.c.bf16 %v3238, %v3238
      %v3335 = vpack.c.bf16 %v3239, %v3239
      %v3336 = vpack.c.bf16 %v3240, %v3240
      %v3337 = vld [vmem:[%s3] sm:$0xff]
      %v3338 = vld [vmem:[%s3 + $0x8] sm:$0xff]
      %v3339 = vld [vmem:[%s3 + $0x10] sm:$0xff]
      %v3340 = vld [vmem:[%s3 + $0x18] sm:$0xff]
      %v3341 = vld [vmem:[%s3 + $0x20] sm:$0xff]
      %v3342 = vld [vmem:[%s3 + $0x28] sm:$0xff]
      %v3343 = vld [vmem:[%s3 + $0x30] sm:$0xff]
      %v3344 = vld [vmem:[%s3 + $0x38] sm:$0xff]
      %3346 = vset.pattern.permute.xlu0 0
      %3347 = vperm.xlu0 %3346, %v3337
      %v3348 = vpop.permute.xlu0 %3347
      %3351 = vset.pattern.permute.xlu0 0
      %3352 = vperm.xlu0 %3351, %v3338
      %v3353 = vpop.permute.xlu0 %3352
      %3356 = vset.pattern.permute.xlu0 0
      %3357 = vperm.xlu0 %3356, %v3339
      %v3358 = vpop.permute.xlu0 %3357
      %3361 = vset.pattern.permute.xlu0 0
      %3362 = vperm.xlu0 %3361, %v3340
      %v3363 = vpop.permute.xlu0 %3362
      %3366 = vset.pattern.permute.xlu0 0
      %3367 = vperm.xlu0 %3366, %v3341
      %v3368 = vpop.permute.xlu0 %3367
      %3371 = vset.pattern.permute.xlu0 0
      %3372 = vperm.xlu0 %3371, %v3342
      %v3373 = vpop.permute.xlu0 %3372
      %3376 = vset.pattern.permute.xlu0 0
      %3377 = vperm.xlu0 %3376, %v3343
      %v3378 = vpop.permute.xlu0 %3377
      %3381 = vset.pattern.permute.xlu0 0
      %3382 = vperm.xlu0 %3381, %v3344
      %v3383 = vpop.permute.xlu0 %3382
      %v3393 = vunpack.c.l.b16 %v3057
      %v3394 = vunpack.c.l.b16 %v3058
      %v3395 = vunpack.c.l.b16 %v3059
      %v3396 = vunpack.c.l.b16 %v3060
      %v3397 = vunpack.c.l.b16 %v3061
      %v3398 = vunpack.c.l.b16 %v3062
      %v3399 = vunpack.c.l.b16 %v3063
      %v3400 = vunpack.c.l.b16 %v3064
      %v3401 = vpack.c.b16 %v3394, %v3393
      %v3402 = vpack.c.b16 %v3396, %v3395
      %v3403 = vpack.c.b16 %v3398, %v3397
      %v3404 = vpack.c.b16 %v3400, %v3399
      %vm3405 = vcmask 662528
      %v3407 = vsel %vm3405, %v3401, 0
      %v3410 = vsel %vm3405, %v3402, 0
      %v3413 = vsel %vm3405, %v3403, 0
      %v3416 = vsel %vm3405, %v3404, 0
      %v3418 = vsel 0, 4294967295, 65535
      %v3419 = vsel %vm399, %v3418, 0
      %v3421 = vand.u32 %v3321, %v3419
      %v3424 = vand.u32 %v3322, %v3419
      %v3427 = vand.u32 %v3323, %v3419
      %v3430 = vand.u32 %v3324, %v3419
      %v3433 = vand.u32 %v3325, %v3419
      %v3436 = vand.u32 %v3326, %v3419
      %v3439 = vand.u32 %v3327, %v3419
      %v3442 = vand.u32 %v3328, %v3419
      %v3445 = vand.u32 %v3329, %v3419
      %v3448 = vand.u32 %v3330, %v3419
      %v3451 = vand.u32 %v3331, %v3419
      %v3454 = vand.u32 %v3332, %v3419
      %v3457 = vand.u32 %v3333, %v3419
      %v3460 = vand.u32 %v3334, %v3419
      %v3463 = vand.u32 %v3335, %v3419
      %v3466 = vand.u32 %v3336, %v3419
      %3468 = vmatprep.subr.bf16.mxu0 0
      %3469 = vmatpush1.bf16.msra.mxu0 0
      %3470 = vmatprep.subr.bf16.mxu0 0
      %3471 = vmatpush1.bf16.msra.mxu0 0
      %3472 = vmatprep.subr.bf16.mxu0 %v3424
      %3473 = vmatpush1.bf16.msra.mxu0 %v3421
      %3474 = vmatprep.subr.bf16.mxu0 %v3306
      %3475 = vmatpush1.bf16.msra.mxu0 %v3305
      %3476 = vmatprep.subr.bf16.mxu0 %v3290
      %3477 = vmatpush1.bf16.msra.mxu0 %v3289
      %3478 = vmatprep.subr.bf16.mxu0 %v3274
      %3479 = vmatpush1.bf16.msra.mxu0 %v3273
      %3480 = vmatprep.subr.bf16.mxu0 %v3258
      %3481 = vmatpush1.bf16.msra.mxu0 %v3257
      %3482 = vmatprep.subr.bf16.mxu0 %v3242
      %3483 = vmatpush1.bf16.msra.mxu0 %v3241
      %3484 = vmatprep.subr.bf16.mxu0 0
      %3485 = vmatpush2.bf16.msra.mxu0 0
      %3486 = vmatprep.subr.bf16.mxu0 0
      %3487 = vmatpush2.bf16.msra.mxu0 0
      %3488 = vmatprep.subr.bf16.mxu0 0
      %3489 = vmatpush2.bf16.msra.mxu0 0
      %3490 = vmatprep.subr.bf16.mxu0 0
      %3491 = vmatpush2.bf16.msra.mxu0 0
      %3492 = vmatprep.subr.bf16.mxu0 0
      %3493 = vmatpush2.bf16.msra.mxu0 0
      %3494 = vmatprep.subr.bf16.mxu0 0
      %3495 = vmatpush2.bf16.msra.mxu0 0
      %3496 = vmatprep.subr.bf16.mxu0 0
      %3497 = vmatpush2.bf16.msra.mxu0 0
      %3498 = vmatprep.subr.bf16.mxu0 0
      %3499 = vmatpush2.bf16.msra.mxu0 0
      %3500 = vmatprep.mubr.bf16.mxu0 0
      %3501 = vmatmul.mubr.bf16.gmra.mxu0 %v3407
      %v3502 = vpop.f32.mrf.mxu0
      %v3503 = vadd.f32 %v3348, %v3502
      %v3504 = vpop.f32.mrf.mxu0
      %v3505 = vadd.f32 %v3348, %v3504
      %v3506 = vpop.f32.mrf.mxu0
      %v3507 = vadd.f32 %v3353, %v3506
      %v3508 = vpop.f32.mrf.mxu0
      %v3509 = vadd.f32 %v3353, %v3508
      %3510 = vmatprep.mubr.bf16.mxu0 0
      %3511 = vmatmul.mubr.bf16.gmra.mxu0 %v3410
      %v3512 = vpop.f32.mrf.mxu0
      %v3513 = vadd.f32 %v3358, %v3512
      %v3514 = vpop.f32.mrf.mxu0
      %v3515 = vadd.f32 %v3358, %v3514
      %v3516 = vpop.f32.mrf.mxu0
      %v3517 = vadd.f32 %v3363, %v3516
      %v3518 = vpop.f32.mrf.mxu0
      %v3519 = vadd.f32 %v3363, %v3518
      %3520 = vmatprep.mubr.bf16.mxu0 0
      %3521 = vmatmul.mubr.bf16.gmra.mxu0 %v3413
      %v3522 = vpop.f32.mrf.mxu0
      %v3523 = vadd.f32 %v3368, %v3522
      %v3524 = vpop.f32.mrf.mxu0
      %v3525 = vadd.f32 %v3368, %v3524
      %v3526 = vpop.f32.mrf.mxu0
      %v3527 = vadd.f32 %v3373, %v3526
      %v3528 = vpop.f32.mrf.mxu0
      %v3529 = vadd.f32 %v3373, %v3528
      %3530 = vmatprep.mubr.bf16.mxu0 0
      %3531 = vmatmul.mubr.bf16.gmra.mxu0 %v3416
      %v3532 = vpop.f32.mrf.mxu0
      %v3533 = vadd.f32 %v3378, %v3532
      %v3534 = vpop.f32.mrf.mxu0
      %v3535 = vadd.f32 %v3378, %v3534
      %v3536 = vpop.f32.mrf.mxu0
      %v3537 = vadd.f32 %v3383, %v3536
      %v3538 = vpop.f32.mrf.mxu0
      %v3539 = vadd.f32 %v3383, %v3538
      %3540 = vdwg.mxu0
      %3541 = vmatprep.subr.bf16.mxu0 0
      %3542 = vmatpush1.bf16.msra.mxu0 0
      %3543 = vmatprep.subr.bf16.mxu0 0
      %3544 = vmatpush1.bf16.msra.mxu0 0
      %3545 = vmatprep.subr.bf16.mxu0 %v3430
      %3546 = vmatpush1.bf16.msra.mxu0 %v3427
      %3547 = vmatprep.subr.bf16.mxu0 %v3308
      %3548 = vmatpush1.bf16.msra.mxu0 %v3307
      %3549 = vmatprep.subr.bf16.mxu0 %v3292
      %3550 = vmatpush1.bf16.msra.mxu0 %v3291
      %3551 = vmatprep.subr.bf16.mxu0 %v3276
      %3552 = vmatpush1.bf16.msra.mxu0 %v3275
      %3553 = vmatprep.subr.bf16.mxu0 %v3260
      %3554 = vmatpush1.bf16.msra.mxu0 %v3259
      %3555 = vmatprep.subr.bf16.mxu0 %v3244
      %3556 = vmatpush1.bf16.msra.mxu0 %v3243
      %3557 = vmatprep.subr.bf16.mxu0 0
      %3558 = vmatpush2.bf16.msra.mxu0 0
      %3559 = vmatprep.subr.bf16.mxu0 0
      %3560 = vmatpush2.bf16.msra.mxu0 0
      %3561 = vmatprep.subr.bf16.mxu0 0
      %3562 = vmatpush2.bf16.msra.mxu0 0
      %3563 = vmatprep.subr.bf16.mxu0 0
      %3564 = vmatpush2.bf16.msra.mxu0 0
      %3565 = vmatprep.subr.bf16.mxu0 0
      %3566 = vmatpush2.bf16.msra.mxu0 0
      %3567 = vmatprep.subr.bf16.mxu0 0
      %3568 = vmatpush2.bf16.msra.mxu0 0
      %3569 = vmatprep.subr.bf16.mxu0 0
      %3570 = vmatpush2.bf16.msra.mxu0 0
      %3571 = vmatprep.subr.bf16.mxu0 0
      %3572 = vmatpush2.bf16.msra.mxu0 0
      %3573 = vmatprep.mubr.bf16.mxu0 0
      %3574 = vmatmul.mubr.bf16.gmra.mxu0 %v3407
      %v3575 = vpop.f32.mrf.mxu0
      %v3576 = vadd.f32 %v3348, %v3575
      %v3577 = vpop.f32.mrf.mxu0
      %v3578 = vadd.f32 %v3348, %v3577
      %v3579 = vpop.f32.mrf.mxu0
      %v3580 = vadd.f32 %v3353, %v3579
      %v3581 = vpop.f32.mrf.mxu0
      %v3582 = vadd.f32 %v3353, %v3581
      %3583 = vmatprep.mubr.bf16.mxu0 0
      %3584 = vmatmul.mubr.bf16.gmra.mxu0 %v3410
      %v3585 = vpop.f32.mrf.mxu0
      %v3586 = vadd.f32 %v3358, %v3585
      %v3587 = vpop.f32.mrf.mxu0
      %v3588 = vadd.f32 %v3358, %v3587
      %v3589 = vpop.f32.mrf.mxu0
      %v3590 = vadd.f32 %v3363, %v3589
      %v3591 = vpop.f32.mrf.mxu0
      %v3592 = vadd.f32 %v3363, %v3591
      %3593 = vmatprep.mubr.bf16.mxu0 0
      %3594 = vmatmul.mubr.bf16.gmra.mxu0 %v3413
      %v3595 = vpop.f32.mrf.mxu0
      %v3596 = vadd.f32 %v3368, %v3595
      %v3597 = vpop.f32.mrf.mxu0
      %v3598 = vadd.f32 %v3368, %v3597
      %v3599 = vpop.f32.mrf.mxu0
      %v3600 = vadd.f32 %v3373, %v3599
      %v3601 = vpop.f32.mrf.mxu0
      %v3602 = vadd.f32 %v3373, %v3601
      %3603 = vmatprep.mubr.bf16.mxu0 0
      %3604 = vmatmul.mubr.bf16.gmra.mxu0 %v3416
      %v3605 = vpop.f32.mrf.mxu0
      %v3606 = vadd.f32 %v3378, %v3605
      %v3607 = vpop.f32.mrf.mxu0
      %v3608 = vadd.f32 %v3378, %v3607
      %v3609 = vpop.f32.mrf.mxu0
      %v3610 = vadd.f32 %v3383, %v3609
      %v3611 = vpop.f32.mrf.mxu0
      %v3612 = vadd.f32 %v3383, %v3611
      %3613 = vdwg.mxu0
      %3614 = vmatprep.subr.bf16.mxu0 0
      %3615 = vmatpush1.bf16.msra.mxu0 0
      %3616 = vmatprep.subr.bf16.mxu0 0
      %3617 = vmatpush1.bf16.msra.mxu0 0
      %3618 = vmatprep.subr.bf16.mxu0 %v3436
      %3619 = vmatpush1.bf16.msra.mxu0 %v3433
      %3620 = vmatprep.subr.bf16.mxu0 %v3310
      %3621 = vmatpush1.bf16.msra.mxu0 %v3309
      %3622 = vmatprep.subr.bf16.mxu0 %v3294
      %3623 = vmatpush1.bf16.msra.mxu0 %v3293
      %3624 = vmatprep.subr.bf16.mxu0 %v3278
      %3625 = vmatpush1.bf16.msra.mxu0 %v3277
      %3626 = vmatprep.subr.bf16.mxu0 %v3262
      %3627 = vmatpush1.bf16.msra.mxu0 %v3261
      %3628 = vmatprep.subr.bf16.mxu0 %v3246
      %3629 = vmatpush1.bf16.msra.mxu0 %v3245
      %3630 = vmatprep.subr.bf16.mxu0 0
      %3631 = vmatpush2.bf16.msra.mxu0 0
      %3632 = vmatprep.subr.bf16.mxu0 0
      %3633 = vmatpush2.bf16.msra.mxu0 0
      %3634 = vmatprep.subr.bf16.mxu0 0
      %3635 = vmatpush2.bf16.msra.mxu0 0
      %3636 = vmatprep.subr.bf16.mxu0 0
      %3637 = vmatpush2.bf16.msra.mxu0 0
      %3638 = vmatprep.subr.bf16.mxu0 0
      %3639 = vmatpush2.bf16.msra.mxu0 0
      %3640 = vmatprep.subr.bf16.mxu0 0
      %3641 = vmatpush2.bf16.msra.mxu0 0
      %3642 = vmatprep.subr.bf16.mxu0 0
      %3643 = vmatpush2.bf16.msra.mxu0 0
      %3644 = vmatprep.subr.bf16.mxu0 0
      %3645 = vmatpush2.bf16.msra.mxu0 0
      %3646 = vmatprep.mubr.bf16.mxu0 0
      %3647 = vmatmul.mubr.bf16.gmra.mxu0 %v3407
      %v3648 = vpop.f32.mrf.mxu0
      %v3649 = vadd.f32 %v3348, %v3648
      %v3650 = vpop.f32.mrf.mxu0
      %v3651 = vadd.f32 %v3348, %v3650
      %v3652 = vpop.f32.mrf.mxu0
      %v3653 = vadd.f32 %v3353, %v3652
      %v3654 = vpop.f32.mrf.mxu0
      %v3655 = vadd.f32 %v3353, %v3654
      %3656 = vmatprep.mubr.bf16.mxu0 0
      %3657 = vmatmul.mubr.bf16.gmra.mxu0 %v3410
      %v3658 = vpop.f32.mrf.mxu0
      %v3659 = vadd.f32 %v3358, %v3658
      %v3660 = vpop.f32.mrf.mxu0
      %v3661 = vadd.f32 %v3358, %v3660
      %v3662 = vpop.f32.mrf.mxu0
      %v3663 = vadd.f32 %v3363, %v3662
      %v3664 = vpop.f32.mrf.mxu0
      %v3665 = vadd.f32 %v3363, %v3664
      %3666 = vmatprep.mubr.bf16.mxu0 0
      %3667 = vmatmul.mubr.bf16.gmra.mxu0 %v3413
      %v3668 = vpop.f32.mrf.mxu0
      %v3669 = vadd.f32 %v3368, %v3668
      %v3670 = vpop.f32.mrf.mxu0
      %v3671 = vadd.f32 %v3368, %v3670
      %v3672 = vpop.f32.mrf.mxu0
      %v3673 = vadd.f32 %v3373, %v3672
      %v3674 = vpop.f32.mrf.mxu0
      %v3675 = vadd.f32 %v3373, %v3674
      %3676 = vmatprep.mubr.bf16.mxu0 0
      %3677 = vmatmul.mubr.bf16.gmra.mxu0 %v3416
      %v3678 = vpop.f32.mrf.mxu0
      %v3679 = vadd.f32 %v3378, %v3678
      %v3680 = vpop.f32.mrf.mxu0
      %v3681 = vadd.f32 %v3378, %v3680
      %v3682 = vpop.f32.mrf.mxu0
      %v3683 = vadd.f32 %v3383, %v3682
      %v3684 = vpop.f32.mrf.mxu0
      %v3685 = vadd.f32 %v3383, %v3684
      %3686 = vdwg.mxu0
      %3687 = vmatprep.subr.bf16.mxu0 0
      %3688 = vmatpush1.bf16.msra.mxu0 0
      %3689 = vmatprep.subr.bf16.mxu0 0
      %3690 = vmatpush1.bf16.msra.mxu0 0
      %3691 = vmatprep.subr.bf16.mxu0 %v3442
      %3692 = vmatpush1.bf16.msra.mxu0 %v3439
      %3693 = vmatprep.subr.bf16.mxu0 %v3312
      %3694 = vmatpush1.bf16.msra.mxu0 %v3311
      %3695 = vmatprep.subr.bf16.mxu0 %v3296
      %3696 = vmatpush1.bf16.msra.mxu0 %v3295
      %3697 = vmatprep.subr.bf16.mxu0 %v3280
      %3698 = vmatpush1.bf16.msra.mxu0 %v3279
      %3699 = vmatprep.subr.bf16.mxu0 %v3264
      %3700 = vmatpush1.bf16.msra.mxu0 %v3263
      %3701 = vmatprep.subr.bf16.mxu0 %v3248
      %3702 = vmatpush1.bf16.msra.mxu0 %v3247
      %3703 = vmatprep.subr.bf16.mxu0 0
      %3704 = vmatpush2.bf16.msra.mxu0 0
      %3705 = vmatprep.subr.bf16.mxu0 0
      %3706 = vmatpush2.bf16.msra.mxu0 0
      %3707 = vmatprep.subr.bf16.mxu0 0
      %3708 = vmatpush2.bf16.msra.mxu0 0
      %3709 = vmatprep.subr.bf16.mxu0 0
      %3710 = vmatpush2.bf16.msra.mxu0 0
      %3711 = vmatprep.subr.bf16.mxu0 0
      %3712 = vmatpush2.bf16.msra.mxu0 0
      %3713 = vmatprep.subr.bf16.mxu0 0
      %3714 = vmatpush2.bf16.msra.mxu0 0
      %3715 = vmatprep.subr.bf16.mxu0 0
      %3716 = vmatpush2.bf16.msra.mxu0 0
      %3717 = vmatprep.subr.bf16.mxu0 0
      %3718 = vmatpush2.bf16.msra.mxu0 0
      %3719 = vmatprep.mubr.bf16.mxu0 0
      %3720 = vmatmul.mubr.bf16.gmra.mxu0 %v3407
      %v3721 = vpop.f32.mrf.mxu0
      %v3722 = vadd.f32 %v3348, %v3721
      %v3723 = vpop.f32.mrf.mxu0
      %v3724 = vadd.f32 %v3348, %v3723
      %v3725 = vpop.f32.mrf.mxu0
      %v3726 = vadd.f32 %v3353, %v3725
      %v3727 = vpop.f32.mrf.mxu0
      %v3728 = vadd.f32 %v3353, %v3727
      %3729 = vmatprep.mubr.bf16.mxu0 0
      %3730 = vmatmul.mubr.bf16.gmra.mxu0 %v3410
      %v3731 = vpop.f32.mrf.mxu0
      %v3732 = vadd.f32 %v3358, %v3731
      %v3733 = vpop.f32.mrf.mxu0
      %v3734 = vadd.f32 %v3358, %v3733
      %v3735 = vpop.f32.mrf.mxu0
      %v3736 = vadd.f32 %v3363, %v3735
      %v3737 = vpop.f32.mrf.mxu0
      %v3738 = vadd.f32 %v3363, %v3737
      %3739 = vmatprep.mubr.bf16.mxu0 0
      %3740 = vmatmul.mubr.bf16.gmra.mxu0 %v3413
      %v3741 = vpop.f32.mrf.mxu0
      %v3742 = vadd.f32 %v3368, %v3741
      %v3743 = vpop.f32.mrf.mxu0
      %v3744 = vadd.f32 %v3368, %v3743
      %v3745 = vpop.f32.mrf.mxu0
      %v3746 = vadd.f32 %v3373, %v3745
      %v3747 = vpop.f32.mrf.mxu0
      %v3748 = vadd.f32 %v3373, %v3747
      %3749 = vmatprep.mubr.bf16.mxu0 0
      %3750 = vmatmul.mubr.bf16.gmra.mxu0 %v3416
      %v3751 = vpop.f32.mrf.mxu0
      %v3752 = vadd.f32 %v3378, %v3751
      %v3753 = vpop.f32.mrf.mxu0
      %v3754 = vadd.f32 %v3378, %v3753
      %v3755 = vpop.f32.mrf.mxu0
      %v3756 = vadd.f32 %v3383, %v3755
      %v3757 = vpop.f32.mrf.mxu0
      %v3758 = vadd.f32 %v3383, %v3757
      %3759 = vdwg.mxu0
      %3760 = vmatprep.subr.bf16.mxu0 0
      %3761 = vmatpush1.bf16.msra.mxu0 0
      %3762 = vmatprep.subr.bf16.mxu0 0
      %3763 = vmatpush1.bf16.msra.mxu0 0
      %3764 = vmatprep.subr.bf16.mxu0 %v3448
      %3765 = vmatpush1.bf16.msra.mxu0 %v3445
      %3766 = vmatprep.subr.bf16.mxu0 %v3314
      %3767 = vmatpush1.bf16.msra.mxu0 %v3313
      %3768 = vmatprep.subr.bf16.mxu0 %v3298
      %3769 = vmatpush1.bf16.msra.mxu0 %v3297
      %3770 = vmatprep.subr.bf16.mxu0 %v3282
      %3771 = vmatpush1.bf16.msra.mxu0 %v3281
      %3772 = vmatprep.subr.bf16.mxu0 %v3266
      %3773 = vmatpush1.bf16.msra.mxu0 %v3265
      %3774 = vmatprep.subr.bf16.mxu0 %v3250
      %3775 = vmatpush1.bf16.msra.mxu0 %v3249
      %3776 = vmatprep.subr.bf16.mxu0 0
      %3777 = vmatpush2.bf16.msra.mxu0 0
      %3778 = vmatprep.subr.bf16.mxu0 0
      %3779 = vmatpush2.bf16.msra.mxu0 0
      %3780 = vmatprep.subr.bf16.mxu0 0
      %3781 = vmatpush2.bf16.msra.mxu0 0
      %3782 = vmatprep.subr.bf16.mxu0 0
      %3783 = vmatpush2.bf16.msra.mxu0 0
      %3784 = vmatprep.subr.bf16.mxu0 0
      %3785 = vmatpush2.bf16.msra.mxu0 0
      %3786 = vmatprep.subr.bf16.mxu0 0
      %3787 = vmatpush2.bf16.msra.mxu0 0
      %3788 = vmatprep.subr.bf16.mxu0 0
      %3789 = vmatpush2.bf16.msra.mxu0 0
      %3790 = vmatprep.subr.bf16.mxu0 0
      %3791 = vmatpush2.bf16.msra.mxu0 0
      %3792 = vmatprep.mubr.bf16.mxu0 0
      %3793 = vmatmul.mubr.bf16.gmra.mxu0 %v3407
      %v3794 = vpop.f32.mrf.mxu0
      %v3795 = vadd.f32 %v3348, %v3794
      %v3796 = vpop.f32.mrf.mxu0
      %v3797 = vadd.f32 %v3348, %v3796
      %v3798 = vpop.f32.mrf.mxu0
      %v3799 = vadd.f32 %v3353, %v3798
      %v3800 = vpop.f32.mrf.mxu0
      %v3801 = vadd.f32 %v3353, %v3800
      %3802 = vmatprep.mubr.bf16.mxu0 0
      %3803 = vmatmul.mubr.bf16.gmra.mxu0 %v3410
      %v3804 = vpop.f32.mrf.mxu0
      %v3805 = vadd.f32 %v3358, %v3804
      %v3806 = vpop.f32.mrf.mxu0
      %v3807 = vadd.f32 %v3358, %v3806
      %v3808 = vpop.f32.mrf.mxu0
      %v3809 = vadd.f32 %v3363, %v3808
      %v3810 = vpop.f32.mrf.mxu0
      %v3811 = vadd.f32 %v3363, %v3810
      %3812 = vmatprep.mubr.bf16.mxu0 0
      %3813 = vmatmul.mubr.bf16.gmra.mxu0 %v3413
      %v3814 = vpop.f32.mrf.mxu0
      %v3815 = vadd.f32 %v3368, %v3814
      %v3816 = vpop.f32.mrf.mxu0
      %v3817 = vadd.f32 %v3368, %v3816
      %v3818 = vpop.f32.mrf.mxu0
      %v3819 = vadd.f32 %v3373, %v3818
      %v3820 = vpop.f32.mrf.mxu0
      %v3821 = vadd.f32 %v3373, %v3820
      %3822 = vmatprep.mubr.bf16.mxu0 0
      %3823 = vmatmul.mubr.bf16.gmra.mxu0 %v3416
      %v3824 = vpop.f32.mrf.mxu0
      %v3825 = vadd.f32 %v3378, %v3824
      %v3826 = vpop.f32.mrf.mxu0
      %v3827 = vadd.f32 %v3378, %v3826
      %v3828 = vpop.f32.mrf.mxu0
      %v3829 = vadd.f32 %v3383, %v3828
      %v3830 = vpop.f32.mrf.mxu0
      %v3831 = vadd.f32 %v3383, %v3830
      %3832 = vdwg.mxu0
      %3833 = vmatprep.subr.bf16.mxu0 0
      %3834 = vmatpush1.bf16.msra.mxu0 0
      %3835 = vmatprep.subr.bf16.mxu0 0
      %3836 = vmatpush1.bf16.msra.mxu0 0
      %3837 = vmatprep.subr.bf16.mxu0 %v3454
      %3838 = vmatpush1.bf16.msra.mxu0 %v3451
      %3839 = vmatprep.subr.bf16.mxu0 %v3316
      %3840 = vmatpush1.bf16.msra.mxu0 %v3315
      %3841 = vmatprep.subr.bf16.mxu0 %v3300
      %3842 = vmatpush1.bf16.msra.mxu0 %v3299
      %3843 = vmatprep.subr.bf16.mxu0 %v3284
      %3844 = vmatpush1.bf16.msra.mxu0 %v3283
      %3845 = vmatprep.subr.bf16.mxu0 %v3268
      %3846 = vmatpush1.bf16.msra.mxu0 %v3267
      %3847 = vmatprep.subr.bf16.mxu0 %v3252
      %3848 = vmatpush1.bf16.msra.mxu0 %v3251
      %3849 = vmatprep.subr.bf16.mxu0 0
      %3850 = vmatpush2.bf16.msra.mxu0 0
      %3851 = vmatprep.subr.bf16.mxu0 0
      %3852 = vmatpush2.bf16.msra.mxu0 0
      %3853 = vmatprep.subr.bf16.mxu0 0
      %3854 = vmatpush2.bf16.msra.mxu0 0
      %3855 = vmatprep.subr.bf16.mxu0 0
      %3856 = vmatpush2.bf16.msra.mxu0 0
      %3857 = vmatprep.subr.bf16.mxu0 0
      %3858 = vmatpush2.bf16.msra.mxu0 0
      %3859 = vmatprep.subr.bf16.mxu0 0
      %3860 = vmatpush2.bf16.msra.mxu0 0
      %3861 = vmatprep.subr.bf16.mxu0 0
      %3862 = vmatpush2.bf16.msra.mxu0 0
      %3863 = vmatprep.subr.bf16.mxu0 0
      %3864 = vmatpush2.bf16.msra.mxu0 0
      %3865 = vmatprep.mubr.bf16.mxu0 0
      %3866 = vmatmul.mubr.bf16.gmra.mxu0 %v3407
      %v3867 = vpop.f32.mrf.mxu0
      %v3868 = vadd.f32 %v3348, %v3867
      %v3869 = vpop.f32.mrf.mxu0
      %v3870 = vadd.f32 %v3348, %v3869
      %v3871 = vpop.f32.mrf.mxu0
      %v3872 = vadd.f32 %v3353, %v3871
      %v3873 = vpop.f32.mrf.mxu0
      %v3874 = vadd.f32 %v3353, %v3873
      %3875 = vmatprep.mubr.bf16.mxu0 0
      %3876 = vmatmul.mubr.bf16.gmra.mxu0 %v3410
      %v3877 = vpop.f32.mrf.mxu0
      %v3878 = vadd.f32 %v3358, %v3877
      %v3879 = vpop.f32.mrf.mxu0
      %v3880 = vadd.f32 %v3358, %v3879
      %v3881 = vpop.f32.mrf.mxu0
      %v3882 = vadd.f32 %v3363, %v3881
      %v3883 = vpop.f32.mrf.mxu0
      %v3884 = vadd.f32 %v3363, %v3883
      %3885 = vmatprep.mubr.bf16.mxu0 0
      %3886 = vmatmul.mubr.bf16.gmra.mxu0 %v3413
      %v3887 = vpop.f32.mrf.mxu0
      %v3888 = vadd.f32 %v3368, %v3887
      %v3889 = vpop.f32.mrf.mxu0
      %v3890 = vadd.f32 %v3368, %v3889
      %v3891 = vpop.f32.mrf.mxu0
      %v3892 = vadd.f32 %v3373, %v3891
      %v3893 = vpop.f32.mrf.mxu0
      %v3894 = vadd.f32 %v3373, %v3893
      %3895 = vmatprep.mubr.bf16.mxu0 0
      %3896 = vmatmul.mubr.bf16.gmra.mxu0 %v3416
      %v3897 = vpop.f32.mrf.mxu0
      %v3898 = vadd.f32 %v3378, %v3897
      %v3899 = vpop.f32.mrf.mxu0
      %v3900 = vadd.f32 %v3378, %v3899
      %v3901 = vpop.f32.mrf.mxu0
      %v3902 = vadd.f32 %v3383, %v3901
      %v3903 = vpop.f32.mrf.mxu0
      %v3904 = vadd.f32 %v3383, %v3903
      %3905 = vdwg.mxu0
      %3906 = vmatprep.subr.bf16.mxu0 0
      %3907 = vmatpush1.bf16.msra.mxu0 0
      %3908 = vmatprep.subr.bf16.mxu0 0
      %3909 = vmatpush1.bf16.msra.mxu0 0
      %3910 = vmatprep.subr.bf16.mxu0 %v3460
      %3911 = vmatpush1.bf16.msra.mxu0 %v3457
      %3912 = vmatprep.subr.bf16.mxu0 %v3318
      %3913 = vmatpush1.bf16.msra.mxu0 %v3317
      %3914 = vmatprep.subr.bf16.mxu0 %v3302
      %3915 = vmatpush1.bf16.msra.mxu0 %v3301
      %3916 = vmatprep.subr.bf16.mxu0 %v3286
      %3917 = vmatpush1.bf16.msra.mxu0 %v3285
      %3918 = vmatprep.subr.bf16.mxu0 %v3270
      %3919 = vmatpush1.bf16.msra.mxu0 %v3269
      %3920 = vmatprep.subr.bf16.mxu0 %v3254
      %3921 = vmatpush1.bf16.msra.mxu0 %v3253
      %3922 = vmatprep.subr.bf16.mxu0 0
      %3923 = vmatpush2.bf16.msra.mxu0 0
      %3924 = vmatprep.subr.bf16.mxu0 0
      %3925 = vmatpush2.bf16.msra.mxu0 0
      %3926 = vmatprep.subr.bf16.mxu0 0
      %3927 = vmatpush2.bf16.msra.mxu0 0
      %3928 = vmatprep.subr.bf16.mxu0 0
      %3929 = vmatpush2.bf16.msra.mxu0 0
      %3930 = vmatprep.subr.bf16.mxu0 0
      %3931 = vmatpush2.bf16.msra.mxu0 0
      %3932 = vmatprep.subr.bf16.mxu0 0
      %3933 = vmatpush2.bf16.msra.mxu0 0
      %3934 = vmatprep.subr.bf16.mxu0 0
      %3935 = vmatpush2.bf16.msra.mxu0 0
      %3936 = vmatprep.subr.bf16.mxu0 0
      %3937 = vmatpush2.bf16.msra.mxu0 0
      %3938 = vmatprep.mubr.bf16.mxu0 0
      %3939 = vmatmul.mubr.bf16.gmra.mxu0 %v3407
      %v3940 = vpop.f32.mrf.mxu0
      %v3941 = vadd.f32 %v3348, %v3940
      %v3942 = vpop.f32.mrf.mxu0
      %v3943 = vadd.f32 %v3348, %v3942
      %v3944 = vpop.f32.mrf.mxu0
      %v3945 = vadd.f32 %v3353, %v3944
      %v3946 = vpop.f32.mrf.mxu0
      %v3947 = vadd.f32 %v3353, %v3946
      %3948 = vmatprep.mubr.bf16.mxu0 0
      %3949 = vmatmul.mubr.bf16.gmra.mxu0 %v3410
      %v3950 = vpop.f32.mrf.mxu0
      %v3951 = vadd.f32 %v3358, %v3950
      %v3952 = vpop.f32.mrf.mxu0
      %v3953 = vadd.f32 %v3358, %v3952
      %v3954 = vpop.f32.mrf.mxu0
      %v3955 = vadd.f32 %v3363, %v3954
      %v3956 = vpop.f32.mrf.mxu0
      %v3957 = vadd.f32 %v3363, %v3956
      %3958 = vmatprep.mubr.bf16.mxu0 0
      %3959 = vmatmul.mubr.bf16.gmra.mxu0 %v3413
      %v3960 = vpop.f32.mrf.mxu0
      %v3961 = vadd.f32 %v3368, %v3960
      %v3962 = vpop.f32.mrf.mxu0
      %v3963 = vadd.f32 %v3368, %v3962
      %v3964 = vpop.f32.mrf.mxu0
      %v3965 = vadd.f32 %v3373, %v3964
      %v3966 = vpop.f32.mrf.mxu0
      %v3967 = vadd.f32 %v3373, %v3966
      %3968 = vmatprep.mubr.bf16.mxu0 0
      %3969 = vmatmul.mubr.bf16.gmra.mxu0 %v3416
      %v3970 = vpop.f32.mrf.mxu0
      %v3971 = vadd.f32 %v3378, %v3970
      %v3972 = vpop.f32.mrf.mxu0
      %v3973 = vadd.f32 %v3378, %v3972
      %v3974 = vpop.f32.mrf.mxu0
      %v3975 = vadd.f32 %v3383, %v3974
      %v3976 = vpop.f32.mrf.mxu0
      %v3977 = vadd.f32 %v3383, %v3976
      %3978 = vdwg.mxu0
      %3979 = vmatprep.subr.bf16.mxu0 0
      %3980 = vmatpush1.bf16.msra.mxu0 0
      %3981 = vmatprep.subr.bf16.mxu0 0
      %3982 = vmatpush1.bf16.msra.mxu0 0
      %3983 = vmatprep.subr.bf16.mxu0 %v3466
      %3984 = vmatpush1.bf16.msra.mxu0 %v3463
      %3985 = vmatprep.subr.bf16.mxu0 %v3320
      %3986 = vmatpush1.bf16.msra.mxu0 %v3319
      %3987 = vmatprep.subr.bf16.mxu0 %v3304
      %3988 = vmatpush1.bf16.msra.mxu0 %v3303
      %3989 = vmatprep.subr.bf16.mxu0 %v3288
      %3990 = vmatpush1.bf16.msra.mxu0 %v3287
      %3991 = vmatprep.subr.bf16.mxu0 %v3272
      %3992 = vmatpush1.bf16.msra.mxu0 %v3271
      %3993 = vmatprep.subr.bf16.mxu0 %v3256
      %3994 = vmatpush1.bf16.msra.mxu0 %v3255
      %3995 = vmatprep.subr.bf16.mxu0 0
      %3996 = vmatpush2.bf16.msra.mxu0 0
      %3997 = vmatprep.subr.bf16.mxu0 0
      %3998 = vmatpush2.bf16.msra.mxu0 0
      %3999 = vmatprep.subr.bf16.mxu0 0
      %4000 = vmatpush2.bf16.msra.mxu0 0
      %4001 = vmatprep.subr.bf16.mxu0 0
      %4002 = vmatpush2.bf16.msra.mxu0 0
      %4003 = vmatprep.subr.bf16.mxu0 0
      %4004 = vmatpush2.bf16.msra.mxu0 0
      %4005 = vmatprep.subr.bf16.mxu0 0
      %4006 = vmatpush2.bf16.msra.mxu0 0
      %4007 = vmatprep.subr.bf16.mxu0 0
      %4008 = vmatpush2.bf16.msra.mxu0 0
      %4009 = vmatprep.subr.bf16.mxu0 0
      %4010 = vmatpush2.bf16.msra.mxu0 0
      %4011 = vmatprep.mubr.bf16.mxu0 0
      %4012 = vmatmul.mubr.bf16.gmra.mxu0 %v3407
      %v4013 = vpop.f32.mrf.mxu0
      %v4014 = vadd.f32 %v3348, %v4013
      %v4015 = vpop.f32.mrf.mxu0
      %v4016 = vadd.f32 %v3348, %v4015
      %v4017 = vpop.f32.mrf.mxu0
      %v4018 = vadd.f32 %v3353, %v4017
      %v4019 = vpop.f32.mrf.mxu0
      %v4020 = vadd.f32 %v3353, %v4019
      %4021 = vmatprep.mubr.bf16.mxu0 0
      %4022 = vmatmul.mubr.bf16.gmra.mxu0 %v3410
      %v4023 = vpop.f32.mrf.mxu0
      %v4024 = vadd.f32 %v3358, %v4023
      %v4025 = vpop.f32.mrf.mxu0
      %v4026 = vadd.f32 %v3358, %v4025
      %v4027 = vpop.f32.mrf.mxu0
      %v4028 = vadd.f32 %v3363, %v4027
      %v4029 = vpop.f32.mrf.mxu0
      %v4030 = vadd.f32 %v3363, %v4029
      %4031 = vmatprep.mubr.bf16.mxu0 0
      %4032 = vmatmul.mubr.bf16.gmra.mxu0 %v3413
      %v4033 = vpop.f32.mrf.mxu0
      %v4034 = vadd.f32 %v3368, %v4033
      %v4035 = vpop.f32.mrf.mxu0
      %v4036 = vadd.f32 %v3368, %v4035
      %v4037 = vpop.f32.mrf.mxu0
      %v4038 = vadd.f32 %v3373, %v4037
      %v4039 = vpop.f32.mrf.mxu0
      %v4040 = vadd.f32 %v3373, %v4039
      %4041 = vmatprep.mubr.bf16.mxu0 0
      %4042 = vmatmul.mubr.bf16.gmra.mxu0 %v3416
      %v4043 = vpop.f32.mrf.mxu0
      %v4044 = vadd.f32 %v3378, %v4043
      %v4045 = vpop.f32.mrf.mxu0
      %v4046 = vadd.f32 %v3378, %v4045
      %v4047 = vpop.f32.mrf.mxu0
      %v4048 = vadd.f32 %v3383, %v4047
      %v4049 = vpop.f32.mrf.mxu0
      %v4050 = vadd.f32 %v3383, %v4049
      %4051 = vdwg.mxu0
      %v4052 = vmax.f32 %v3503, 0.0
      %v4053 = vmax.f32 %v3505, 0.0
      %v4054 = vmax.f32 %v3576, 0.0
      %v4055 = vmax.f32 %v3578, 0.0
      %v4056 = vmax.f32 %v3649, 0.0
      %v4057 = vmax.f32 %v3651, 0.0
      %v4058 = vmax.f32 %v3722, 0.0
      %v4059 = vmax.f32 %v3724, 0.0
      %v4060 = vmax.f32 %v3795, 0.0
      %v4061 = vmax.f32 %v3797, 0.0
      %v4062 = vmax.f32 %v3868, 0.0
      %v4063 = vmax.f32 %v3870, 0.0
      %v4064 = vmax.f32 %v3941, 0.0
      %v4065 = vmax.f32 %v3943, 0.0
      %v4066 = vmax.f32 %v4014, 0.0
      %v4067 = vmax.f32 %v4016, 0.0
      %v4068 = vmax.f32 %v3507, 0.0
      %v4069 = vmax.f32 %v3509, 0.0
      %v4070 = vmax.f32 %v3580, 0.0
      %v4071 = vmax.f32 %v3582, 0.0
      %v4072 = vmax.f32 %v3653, 0.0
      %v4073 = vmax.f32 %v3655, 0.0
      %v4074 = vmax.f32 %v3726, 0.0
      %v4075 = vmax.f32 %v3728, 0.0
      %v4076 = vmax.f32 %v3799, 0.0
      %v4077 = vmax.f32 %v3801, 0.0
      %v4078 = vmax.f32 %v3872, 0.0
      %v4079 = vmax.f32 %v3874, 0.0
      %v4080 = vmax.f32 %v3945, 0.0
      %v4081 = vmax.f32 %v3947, 0.0
      %v4082 = vmax.f32 %v4018, 0.0
      %v4083 = vmax.f32 %v4020, 0.0
      %v4084 = vmax.f32 %v3513, 0.0
      %v4085 = vmax.f32 %v3515, 0.0
      %v4086 = vmax.f32 %v3586, 0.0
      %v4087 = vmax.f32 %v3588, 0.0
      %v4088 = vmax.f32 %v3659, 0.0
      %v4089 = vmax.f32 %v3661, 0.0
      %v4090 = vmax.f32 %v3732, 0.0
      %v4091 = vmax.f32 %v3734, 0.0
      %v4092 = vmax.f32 %v3805, 0.0
      %v4093 = vmax.f32 %v3807, 0.0
      %v4094 = vmax.f32 %v3878, 0.0
      %v4095 = vmax.f32 %v3880, 0.0
      %v4096 = vmax.f32 %v3951, 0.0
      %v4097 = vmax.f32 %v3953, 0.0
      %v4098 = vmax.f32 %v4024, 0.0
      %v4099 = vmax.f32 %v4026, 0.0
      %v4100 = vmax.f32 %v3517, 0.0
      %v4101 = vmax.f32 %v3519, 0.0
      %v4102 = vmax.f32 %v3590, 0.0
      %v4103 = vmax.f32 %v3592, 0.0
      %v4104 = vmax.f32 %v3663, 0.0
      %v4105 = vmax.f32 %v3665, 0.0
      %v4106 = vmax.f32 %v3736, 0.0
      %v4107 = vmax.f32 %v3738, 0.0
      %v4108 = vmax.f32 %v3809, 0.0
      %v4109 = vmax.f32 %v3811, 0.0
      %v4110 = vmax.f32 %v3882, 0.0
      %v4111 = vmax.f32 %v3884, 0.0
      %v4112 = vmax.f32 %v3955, 0.0
      %v4113 = vmax.f32 %v3957, 0.0
      %v4114 = vmax.f32 %v4028, 0.0
      %v4115 = vmax.f32 %v4030, 0.0
      %v4116 = vmax.f32 %v3523, 0.0
      %v4117 = vmax.f32 %v3525, 0.0
      %v4118 = vmax.f32 %v3596, 0.0
      %v4119 = vmax.f32 %v3598, 0.0
      %v4120 = vmax.f32 %v3669, 0.0
      %v4121 = vmax.f32 %v3671, 0.0
      %v4122 = vmax.f32 %v3742, 0.0
      %v4123 = vmax.f32 %v3744, 0.0
      %v4124 = vmax.f32 %v3815, 0.0
      %v4125 = vmax.f32 %v3817, 0.0
      %v4126 = vmax.f32 %v3888, 0.0
      %v4127 = vmax.f32 %v3890, 0.0
      %v4128 = vmax.f32 %v3961, 0.0
      %v4129 = vmax.f32 %v3963, 0.0
      %v4130 = vmax.f32 %v4034, 0.0
      %v4131 = vmax.f32 %v4036, 0.0
      %v4132 = vmax.f32 %v3527, 0.0
      %v4133 = vmax.f32 %v3529, 0.0
      %v4134 = vmax.f32 %v3600, 0.0
      %v4135 = vmax.f32 %v3602, 0.0
      %v4136 = vmax.f32 %v3673, 0.0
      %v4137 = vmax.f32 %v3675, 0.0
      %v4138 = vmax.f32 %v3746, 0.0
      %v4139 = vmax.f32 %v3748, 0.0
      %v4140 = vmax.f32 %v3819, 0.0
      %v4141 = vmax.f32 %v3821, 0.0
      %v4142 = vmax.f32 %v3892, 0.0
      %v4143 = vmax.f32 %v3894, 0.0
      %v4144 = vmax.f32 %v3965, 0.0
      %v4145 = vmax.f32 %v3967, 0.0
      %v4146 = vmax.f32 %v4038, 0.0
      %v4147 = vmax.f32 %v4040, 0.0
      %v4148 = vmax.f32 %v3533, 0.0
      %v4149 = vmax.f32 %v3535, 0.0
      %v4150 = vmax.f32 %v3606, 0.0
      %v4151 = vmax.f32 %v3608, 0.0
      %v4152 = vmax.f32 %v3679, 0.0
      %v4153 = vmax.f32 %v3681, 0.0
      %v4154 = vmax.f32 %v3752, 0.0
      %v4155 = vmax.f32 %v3754, 0.0
      %v4156 = vmax.f32 %v3825, 0.0
      %v4157 = vmax.f32 %v3827, 0.0
      %v4158 = vmax.f32 %v3898, 0.0
      %v4159 = vmax.f32 %v3900, 0.0
      %v4160 = vmax.f32 %v3971, 0.0
      %v4161 = vmax.f32 %v3973, 0.0
      %v4162 = vmax.f32 %v4044, 0.0
      %v4163 = vmax.f32 %v4046, 0.0
      %v4164 = vmax.f32 %v3537, 0.0
      %v4165 = vmax.f32 %v3539, 0.0
      %v4166 = vmax.f32 %v3610, 0.0
      %v4167 = vmax.f32 %v3612, 0.0
      %v4168 = vmax.f32 %v3683, 0.0
      %v4169 = vmax.f32 %v3685, 0.0
      %v4170 = vmax.f32 %v3756, 0.0
      %v4171 = vmax.f32 %v3758, 0.0
      %v4172 = vmax.f32 %v3829, 0.0
      %v4173 = vmax.f32 %v3831, 0.0
      %v4174 = vmax.f32 %v3902, 0.0
      %v4175 = vmax.f32 %v3904, 0.0
      %v4176 = vmax.f32 %v3975, 0.0
      %v4177 = vmax.f32 %v3977, 0.0
      %v4178 = vmax.f32 %v4048, 0.0
      %v4179 = vmax.f32 %v4050, 0.0
      %v4180 = vld [vmem:[%s4] sm:$0xf]
      %v4181 = vld [vmem:[%s4 + $0x4] sm:$0xf]
      %v4182 = vld [vmem:[%s4 + $0x8] sm:$0xf]
      %v4183 = vld [vmem:[%s4 + $0xc] sm:$0xf]
      %v4184 = vpack.c.bf16 %v4068, %v4052
      %v4185 = vpack.c.bf16 %v4069, %v4053
      %v4186 = vpack.c.bf16 %v4070, %v4054
      %v4187 = vpack.c.bf16 %v4071, %v4055
      %v4188 = vpack.c.bf16 %v4072, %v4056
      %v4189 = vpack.c.bf16 %v4073, %v4057
      %v4190 = vpack.c.bf16 %v4074, %v4058
      %v4191 = vpack.c.bf16 %v4075, %v4059
      %v4192 = vpack.c.bf16 %v4076, %v4060
      %v4193 = vpack.c.bf16 %v4077, %v4061
      %v4194 = vpack.c.bf16 %v4078, %v4062
      %v4195 = vpack.c.bf16 %v4079, %v4063
      %v4196 = vpack.c.bf16 %v4080, %v4064
      %v4197 = vpack.c.bf16 %v4081, %v4065
      %v4198 = vpack.c.bf16 %v4082, %v4066
      %v4199 = vpack.c.bf16 %v4083, %v4067
      %v4200 = vpack.c.bf16 %v4100, %v4084
      %v4201 = vpack.c.bf16 %v4101, %v4085
      %v4202 = vpack.c.bf16 %v4102, %v4086
      %v4203 = vpack.c.bf16 %v4103, %v4087
      %v4204 = vpack.c.bf16 %v4104, %v4088
      %v4205 = vpack.c.bf16 %v4105, %v4089
      %v4206 = vpack.c.bf16 %v4106, %v4090
      %v4207 = vpack.c.bf16 %v4107, %v4091
      %v4208 = vpack.c.bf16 %v4108, %v4092
      %v4209 = vpack.c.bf16 %v4109, %v4093
      %v4210 = vpack.c.bf16 %v4110, %v4094
      %v4211 = vpack.c.bf16 %v4111, %v4095
      %v4212 = vpack.c.bf16 %v4112, %v4096
      %v4213 = vpack.c.bf16 %v4113, %v4097
      %v4214 = vpack.c.bf16 %v4114, %v4098
      %v4215 = vpack.c.bf16 %v4115, %v4099
      %v4216 = vpack.c.bf16 %v4132, %v4116
      %v4217 = vpack.c.bf16 %v4133, %v4117
      %v4218 = vpack.c.bf16 %v4134, %v4118
      %v4219 = vpack.c.bf16 %v4135, %v4119
      %v4220 = vpack.c.bf16 %v4136, %v4120
      %v4221 = vpack.c.bf16 %v4137, %v4121
      %v4222 = vpack.c.bf16 %v4138, %v4122
      %v4223 = vpack.c.bf16 %v4139, %v4123
      %v4224 = vpack.c.bf16 %v4140, %v4124
      %v4225 = vpack.c.bf16 %v4141, %v4125
      %v4226 = vpack.c.bf16 %v4142, %v4126
      %v4227 = vpack.c.bf16 %v4143, %v4127
      %v4228 = vpack.c.bf16 %v4144, %v4128
      %v4229 = vpack.c.bf16 %v4145, %v4129
      %v4230 = vpack.c.bf16 %v4146, %v4130
      %v4231 = vpack.c.bf16 %v4147, %v4131
      %v4232 = vpack.c.bf16 %v4164, %v4148
      %v4233 = vpack.c.bf16 %v4165, %v4149
      %v4234 = vpack.c.bf16 %v4166, %v4150
      %v4235 = vpack.c.bf16 %v4167, %v4151
      %v4236 = vpack.c.bf16 %v4168, %v4152
      %v4237 = vpack.c.bf16 %v4169, %v4153
      %v4238 = vpack.c.bf16 %v4170, %v4154
      %v4239 = vpack.c.bf16 %v4171, %v4155
      %v4240 = vpack.c.bf16 %v4172, %v4156
      %v4241 = vpack.c.bf16 %v4173, %v4157
      %v4242 = vpack.c.bf16 %v4174, %v4158
      %v4243 = vpack.c.bf16 %v4175, %v4159
      %v4244 = vpack.c.bf16 %v4176, %v4160
      %v4245 = vpack.c.bf16 %v4177, %v4161
      %v4246 = vpack.c.bf16 %v4178, %v4162
      %v4247 = vpack.c.bf16 %v4179, %v4163
      %v4248 = vld [vmem:[%s5] sm:$0xff]
      %v4249 = vld [vmem:[%s5 + $0x8] sm:$0xff]
      %v4250 = vld [vmem:[%s5 + $0x10] sm:$0xff]
      %v4251 = vld [vmem:[%s5 + $0x18] sm:$0xff]
      %4253 = vset.pattern.permute.xlu0 0
      %4254 = vperm.xlu0 %4253, %v4248
      %v4255 = vpop.permute.xlu0 %4254
      %4258 = vset.pattern.permute.xlu0 0
      %4259 = vperm.xlu0 %4258, %v4249
      %v4260 = vpop.permute.xlu0 %4259
      %4263 = vset.pattern.permute.xlu0 0
      %4264 = vperm.xlu0 %4263, %v4250
      %v4265 = vpop.permute.xlu0 %4264
      %4268 = vset.pattern.permute.xlu0 0
      %4269 = vperm.xlu0 %4268, %v4251
      %v4270 = vpop.permute.xlu0 %4269
      %v4276 = vunpack.c.l.b16 %v4180
      %v4277 = vunpack.c.l.b16 %v4181
      %v4278 = vunpack.c.l.b16 %v4182
      %v4279 = vunpack.c.l.b16 %v4183
      %v4280 = vpack.c.b16 %v4277, %v4276
      %v4281 = vpack.c.b16 %v4279, %v4278
      %vm4282 = vcmask 523264
      %v4284 = vsel %vm4282, %v4280, 0
      %v4287 = vsel %vm4282, %v4281, 0
      %4289 = vmatprep.subr.bf16.mxu0 0
      %4290 = vmatpush1.bf16.msra.mxu0 0
      %4291 = vmatprep.subr.bf16.mxu0 0
      %4292 = vmatpush1.bf16.msra.mxu0 0
      %4293 = vmatprep.subr.bf16.mxu0 0
      %4294 = vmatpush1.bf16.msra.mxu0 0
      %4295 = vmatprep.subr.bf16.mxu0 0
      %4296 = vmatpush1.bf16.msra.mxu0 0
      %4297 = vmatprep.subr.bf16.mxu0 %v4233
      %4298 = vmatpush1.bf16.msra.mxu0 %v4232
      %4299 = vmatprep.subr.bf16.mxu0 %v4217
      %4300 = vmatpush1.bf16.msra.mxu0 %v4216
      %4301 = vmatprep.subr.bf16.mxu0 %v4201
      %4302 = vmatpush1.bf16.msra.mxu0 %v4200
      %4303 = vmatprep.subr.bf16.mxu0 %v4185
      %4304 = vmatpush1.bf16.msra.mxu0 %v4184
      %4305 = vmatprep.subr.bf16.mxu0 0
      %4306 = vmatpush2.bf16.msra.mxu0 0
      %4307 = vmatprep.subr.bf16.mxu0 0
      %4308 = vmatpush2.bf16.msra.mxu0 0
      %4309 = vmatprep.subr.bf16.mxu0 0
      %4310 = vmatpush2.bf16.msra.mxu0 0
      %4311 = vmatprep.subr.bf16.mxu0 0
      %4312 = vmatpush2.bf16.msra.mxu0 0
      %4313 = vmatprep.subr.bf16.mxu0 0
      %4314 = vmatpush2.bf16.msra.mxu0 0
      %4315 = vmatprep.subr.bf16.mxu0 0
      %4316 = vmatpush2.bf16.msra.mxu0 0
      %4317 = vmatprep.subr.bf16.mxu0 0
      %4318 = vmatpush2.bf16.msra.mxu0 0
      %4319 = vmatprep.subr.bf16.mxu0 0
      %4320 = vmatpush2.bf16.msra.mxu0 0
      %4321 = vmatprep.mubr.bf16.mxu0 0
      %4322 = vmatmul.mubr.bf16.gmra.mxu0 %v4284
      %v4323 = vpop.f32.mrf.mxu0
      %v4324 = vadd.f32 %v4255, %v4323
      %v4325 = vpop.f32.mrf.mxu0
      %v4326 = vadd.f32 %v4255, %v4325
      %v4327 = vpop.f32.mrf.mxu0
      %v4328 = vadd.f32 %v4260, %v4327
      %v4329 = vpop.f32.mrf.mxu0
      %v4330 = vadd.f32 %v4260, %v4329
      %4331 = vmatprep.mubr.bf16.mxu0 0
      %4332 = vmatmul.mubr.bf16.gmra.mxu0 %v4287
      %v4333 = vpop.f32.mrf.mxu0
      %v4334 = vadd.f32 %v4265, %v4333
      %v4335 = vpop.f32.mrf.mxu0
      %v4336 = vadd.f32 %v4265, %v4335
      %v4337 = vpop.f32.mrf.mxu0
      %v4338 = vadd.f32 %v4270, %v4337
      %v4339 = vpop.f32.mrf.mxu0
      %v4340 = vadd.f32 %v4270, %v4339
      %4341 = vdwg.mxu0
      %4342 = vmatprep.subr.bf16.mxu0 0
      %4343 = vmatpush1.bf16.msra.mxu0 0
      %4344 = vmatprep.subr.bf16.mxu0 0
      %4345 = vmatpush1.bf16.msra.mxu0 0
      %4346 = vmatprep.subr.bf16.mxu0 0
      %4347 = vmatpush1.bf16.msra.mxu0 0
      %4348 = vmatprep.subr.bf16.mxu0 0
      %4349 = vmatpush1.bf16.msra.mxu0 0
      %4350 = vmatprep.subr.bf16.mxu0 %v4235
      %4351 = vmatpush1.bf16.msra.mxu0 %v4234
      %4352 = vmatprep.subr.bf16.mxu0 %v4219
      %4353 = vmatpush1.bf16.msra.mxu0 %v4218
      %4354 = vmatprep.subr.bf16.mxu0 %v4203
      %4355 = vmatpush1.bf16.msra.mxu0 %v4202
      %4356 = vmatprep.subr.bf16.mxu0 %v4187
      %4357 = vmatpush1.bf16.msra.mxu0 %v4186
      %4358 = vmatprep.subr.bf16.mxu0 0
      %4359 = vmatpush2.bf16.msra.mxu0 0
      %4360 = vmatprep.subr.bf16.mxu0 0
      %4361 = vmatpush2.bf16.msra.mxu0 0
      %4362 = vmatprep.subr.bf16.mxu0 0
      %4363 = vmatpush2.bf16.msra.mxu0 0
      %4364 = vmatprep.subr.bf16.mxu0 0
      %4365 = vmatpush2.bf16.msra.mxu0 0
      %4366 = vmatprep.subr.bf16.mxu0 0
      %4367 = vmatpush2.bf16.msra.mxu0 0
      %4368 = vmatprep.subr.bf16.mxu0 0
      %4369 = vmatpush2.bf16.msra.mxu0 0
      %4370 = vmatprep.subr.bf16.mxu0 0
      %4371 = vmatpush2.bf16.msra.mxu0 0
      %4372 = vmatprep.subr.bf16.mxu0 0
      %4373 = vmatpush2.bf16.msra.mxu0 0
      %4374 = vmatprep.mubr.bf16.mxu0 0
      %4375 = vmatmul.mubr.bf16.gmra.mxu0 %v4284
      %v4376 = vpop.f32.mrf.mxu0
      %v4377 = vadd.f32 %v4255, %v4376
      %v4378 = vpop.f32.mrf.mxu0
      %v4379 = vadd.f32 %v4255, %v4378
      %v4380 = vpop.f32.mrf.mxu0
      %v4381 = vadd.f32 %v4260, %v4380
      %v4382 = vpop.f32.mrf.mxu0
      %v4383 = vadd.f32 %v4260, %v4382
      %4384 = vmatprep.mubr.bf16.mxu0 0
      %4385 = vmatmul.mubr.bf16.gmra.mxu0 %v4287
      %v4386 = vpop.f32.mrf.mxu0
      %v4387 = vadd.f32 %v4265, %v4386
      %v4388 = vpop.f32.mrf.mxu0
      %v4389 = vadd.f32 %v4265, %v4388
      %v4390 = vpop.f32.mrf.mxu0
      %v4391 = vadd.f32 %v4270, %v4390
      %v4392 = vpop.f32.mrf.mxu0
      %v4393 = vadd.f32 %v4270, %v4392
      %4394 = vdwg.mxu0
      %4395 = vmatprep.subr.bf16.mxu0 0
      %4396 = vmatpush1.bf16.msra.mxu0 0
      %4397 = vmatprep.subr.bf16.mxu0 0
      %4398 = vmatpush1.bf16.msra.mxu0 0
      %4399 = vmatprep.subr.bf16.mxu0 0
      %4400 = vmatpush1.bf16.msra.mxu0 0
      %4401 = vmatprep.subr.bf16.mxu0 0
      %4402 = vmatpush1.bf16.msra.mxu0 0
      %4403 = vmatprep.subr.bf16.mxu0 %v4237
      %4404 = vmatpush1.bf16.msra.mxu0 %v4236
      %4405 = vmatprep.subr.bf16.mxu0 %v4221
      %4406 = vmatpush1.bf16.msra.mxu0 %v4220
      %4407 = vmatprep.subr.bf16.mxu0 %v4205
      %4408 = vmatpush1.bf16.msra.mxu0 %v4204
      %4409 = vmatprep.subr.bf16.mxu0 %v4189
      %4410 = vmatpush1.bf16.msra.mxu0 %v4188
      %4411 = vmatprep.subr.bf16.mxu0 0
      %4412 = vmatpush2.bf16.msra.mxu0 0
      %4413 = vmatprep.subr.bf16.mxu0 0
      %4414 = vmatpush2.bf16.msra.mxu0 0
      %4415 = vmatprep.subr.bf16.mxu0 0
      %4416 = vmatpush2.bf16.msra.mxu0 0
      %4417 = vmatprep.subr.bf16.mxu0 0
      %4418 = vmatpush2.bf16.msra.mxu0 0
      %4419 = vmatprep.subr.bf16.mxu0 0
      %4420 = vmatpush2.bf16.msra.mxu0 0
      %4421 = vmatprep.subr.bf16.mxu0 0
      %4422 = vmatpush2.bf16.msra.mxu0 0
      %4423 = vmatprep.subr.bf16.mxu0 0
      %4424 = vmatpush2.bf16.msra.mxu0 0
      %4425 = vmatprep.subr.bf16.mxu0 0
      %4426 = vmatpush2.bf16.msra.mxu0 0
      %4427 = vmatprep.mubr.bf16.mxu0 0
      %4428 = vmatmul.mubr.bf16.gmra.mxu0 %v4284
      %v4429 = vpop.f32.mrf.mxu0
      %v4430 = vadd.f32 %v4255, %v4429
      %v4431 = vpop.f32.mrf.mxu0
      %v4432 = vadd.f32 %v4255, %v4431
      %v4433 = vpop.f32.mrf.mxu0
      %v4434 = vadd.f32 %v4260, %v4433
      %v4435 = vpop.f32.mrf.mxu0
      %v4436 = vadd.f32 %v4260, %v4435
      %4437 = vmatprep.mubr.bf16.mxu0 0
      %4438 = vmatmul.mubr.bf16.gmra.mxu0 %v4287
      %v4439 = vpop.f32.mrf.mxu0
      %v4440 = vadd.f32 %v4265, %v4439
      %v4441 = vpop.f32.mrf.mxu0
      %v4442 = vadd.f32 %v4265, %v4441
      %v4443 = vpop.f32.mrf.mxu0
      %v4444 = vadd.f32 %v4270, %v4443
      %v4445 = vpop.f32.mrf.mxu0
      %v4446 = vadd.f32 %v4270, %v4445
      %4447 = vdwg.mxu0
      %4448 = vmatprep.subr.bf16.mxu0 0
      %4449 = vmatpush1.bf16.msra.mxu0 0
      %4450 = vmatprep.subr.bf16.mxu0 0
      %4451 = vmatpush1.bf16.msra.mxu0 0
      %4452 = vmatprep.subr.bf16.mxu0 0
      %4453 = vmatpush1.bf16.msra.mxu0 0
      %4454 = vmatprep.subr.bf16.mxu0 0
      %4455 = vmatpush1.bf16.msra.mxu0 0
      %4456 = vmatprep.subr.bf16.mxu0 %v4239
      %4457 = vmatpush1.bf16.msra.mxu0 %v4238
      %4458 = vmatprep.subr.bf16.mxu0 %v4223
      %4459 = vmatpush1.bf16.msra.mxu0 %v4222
      %4460 = vmatprep.subr.bf16.mxu0 %v4207
      %4461 = vmatpush1.bf16.msra.mxu0 %v4206
      %4462 = vmatprep.subr.bf16.mxu0 %v4191
      %4463 = vmatpush1.bf16.msra.mxu0 %v4190
      %4464 = vmatprep.subr.bf16.mxu0 0
      %4465 = vmatpush2.bf16.msra.mxu0 0
      %4466 = vmatprep.subr.bf16.mxu0 0
      %4467 = vmatpush2.bf16.msra.mxu0 0
      %4468 = vmatprep.subr.bf16.mxu0 0
      %4469 = vmatpush2.bf16.msra.mxu0 0
      %4470 = vmatprep.subr.bf16.mxu0 0
      %4471 = vmatpush2.bf16.msra.mxu0 0
      %4472 = vmatprep.subr.bf16.mxu0 0
      %4473 = vmatpush2.bf16.msra.mxu0 0
      %4474 = vmatprep.subr.bf16.mxu0 0
      %4475 = vmatpush2.bf16.msra.mxu0 0
      %4476 = vmatprep.subr.bf16.mxu0 0
      %4477 = vmatpush2.bf16.msra.mxu0 0
      %4478 = vmatprep.subr.bf16.mxu0 0
      %4479 = vmatpush2.bf16.msra.mxu0 0
      %4480 = vmatprep.mubr.bf16.mxu0 0
      %4481 = vmatmul.mubr.bf16.gmra.mxu0 %v4284
      %v4482 = vpop.f32.mrf.mxu0
      %v4483 = vadd.f32 %v4255, %v4482
      %v4484 = vpop.f32.mrf.mxu0
      %v4485 = vadd.f32 %v4255, %v4484
      %v4486 = vpop.f32.mrf.mxu0
      %v4487 = vadd.f32 %v4260, %v4486
      %v4488 = vpop.f32.mrf.mxu0
      %v4489 = vadd.f32 %v4260, %v4488
      %4490 = vmatprep.mubr.bf16.mxu0 0
      %4491 = vmatmul.mubr.bf16.gmra.mxu0 %v4287
      %v4492 = vpop.f32.mrf.mxu0
      %v4493 = vadd.f32 %v4265, %v4492
      %v4494 = vpop.f32.mrf.mxu0
      %v4495 = vadd.f32 %v4265, %v4494
      %v4496 = vpop.f32.mrf.mxu0
      %v4497 = vadd.f32 %v4270, %v4496
      %v4498 = vpop.f32.mrf.mxu0
      %v4499 = vadd.f32 %v4270, %v4498
      %4500 = vdwg.mxu0
      %4501 = vmatprep.subr.bf16.mxu0 0
      %4502 = vmatpush1.bf16.msra.mxu0 0
      %4503 = vmatprep.subr.bf16.mxu0 0
      %4504 = vmatpush1.bf16.msra.mxu0 0
      %4505 = vmatprep.subr.bf16.mxu0 0
      %4506 = vmatpush1.bf16.msra.mxu0 0
      %4507 = vmatprep.subr.bf16.mxu0 0
      %4508 = vmatpush1.bf16.msra.mxu0 0
      %4509 = vmatprep.subr.bf16.mxu0 %v4241
      %4510 = vmatpush1.bf16.msra.mxu0 %v4240
      %4511 = vmatprep.subr.bf16.mxu0 %v4225
      %4512 = vmatpush1.bf16.msra.mxu0 %v4224
      %4513 = vmatprep.subr.bf16.mxu0 %v4209
      %4514 = vmatpush1.bf16.msra.mxu0 %v4208
      %4515 = vmatprep.subr.bf16.mxu0 %v4193
      %4516 = vmatpush1.bf16.msra.mxu0 %v4192
      %4517 = vmatprep.subr.bf16.mxu0 0
      %4518 = vmatpush2.bf16.msra.mxu0 0
      %4519 = vmatprep.subr.bf16.mxu0 0
      %4520 = vmatpush2.bf16.msra.mxu0 0
      %4521 = vmatprep.subr.bf16.mxu0 0
      %4522 = vmatpush2.bf16.msra.mxu0 0
      %4523 = vmatprep.subr.bf16.mxu0 0
      %4524 = vmatpush2.bf16.msra.mxu0 0
      %4525 = vmatprep.subr.bf16.mxu0 0
      %4526 = vmatpush2.bf16.msra.mxu0 0
      %4527 = vmatprep.subr.bf16.mxu0 0
      %4528 = vmatpush2.bf16.msra.mxu0 0
      %4529 = vmatprep.subr.bf16.mxu0 0
      %4530 = vmatpush2.bf16.msra.mxu0 0
      %4531 = vmatprep.subr.bf16.mxu0 0
      %4532 = vmatpush2.bf16.msra.mxu0 0
      %4533 = vmatprep.mubr.bf16.mxu0 0
      %4534 = vmatmul.mubr.bf16.gmra.mxu0 %v4284
      %v4535 = vpop.f32.mrf.mxu0
      %v4536 = vadd.f32 %v4255, %v4535
      %v4537 = vpop.f32.mrf.mxu0
      %v4538 = vadd.f32 %v4255, %v4537
      %v4539 = vpop.f32.mrf.mxu0
      %v4540 = vadd.f32 %v4260, %v4539
      %v4541 = vpop.f32.mrf.mxu0
      %v4542 = vadd.f32 %v4260, %v4541
      %4543 = vmatprep.mubr.bf16.mxu0 0
      %4544 = vmatmul.mubr.bf16.gmra.mxu0 %v4287
      %v4545 = vpop.f32.mrf.mxu0
      %v4546 = vadd.f32 %v4265, %v4545
      %v4547 = vpop.f32.mrf.mxu0
      %v4548 = vadd.f32 %v4265, %v4547
      %v4549 = vpop.f32.mrf.mxu0
      %v4550 = vadd.f32 %v4270, %v4549
      %v4551 = vpop.f32.mrf.mxu0
      %v4552 = vadd.f32 %v4270, %v4551
      %4553 = vdwg.mxu0
      %4554 = vmatprep.subr.bf16.mxu0 0
      %4555 = vmatpush1.bf16.msra.mxu0 0
      %4556 = vmatprep.subr.bf16.mxu0 0
      %4557 = vmatpush1.bf16.msra.mxu0 0
      %4558 = vmatprep.subr.bf16.mxu0 0
      %4559 = vmatpush1.bf16.msra.mxu0 0
      %4560 = vmatprep.subr.bf16.mxu0 0
      %4561 = vmatpush1.bf16.msra.mxu0 0
      %4562 = vmatprep.subr.bf16.mxu0 %v4243
      %4563 = vmatpush1.bf16.msra.mxu0 %v4242
      %4564 = vmatprep.subr.bf16.mxu0 %v4227
      %4565 = vmatpush1.bf16.msra.mxu0 %v4226
      %4566 = vmatprep.subr.bf16.mxu0 %v4211
      %4567 = vmatpush1.bf16.msra.mxu0 %v4210
      %4568 = vmatprep.subr.bf16.mxu0 %v4195
      %4569 = vmatpush1.bf16.msra.mxu0 %v4194
      %4570 = vmatprep.subr.bf16.mxu0 0
      %4571 = vmatpush2.bf16.msra.mxu0 0
      %4572 = vmatprep.subr.bf16.mxu0 0
      %4573 = vmatpush2.bf16.msra.mxu0 0
      %4574 = vmatprep.subr.bf16.mxu0 0
      %4575 = vmatpush2.bf16.msra.mxu0 0
      %4576 = vmatprep.subr.bf16.mxu0 0
      %4577 = vmatpush2.bf16.msra.mxu0 0
      %4578 = vmatprep.subr.bf16.mxu0 0
      %4579 = vmatpush2.bf16.msra.mxu0 0
      %4580 = vmatprep.subr.bf16.mxu0 0
      %4581 = vmatpush2.bf16.msra.mxu0 0
      %4582 = vmatprep.subr.bf16.mxu0 0
      %4583 = vmatpush2.bf16.msra.mxu0 0
      %4584 = vmatprep.subr.bf16.mxu0 0
      %4585 = vmatpush2.bf16.msra.mxu0 0
      %4586 = vmatprep.mubr.bf16.mxu0 0
      %4587 = vmatmul.mubr.bf16.gmra.mxu0 %v4284
      %v4588 = vpop.f32.mrf.mxu0
      %v4589 = vadd.f32 %v4255, %v4588
      %v4590 = vpop.f32.mrf.mxu0
      %v4591 = vadd.f32 %v4255, %v4590
      %v4592 = vpop.f32.mrf.mxu0
      %v4593 = vadd.f32 %v4260, %v4592
      %v4594 = vpop.f32.mrf.mxu0
      %v4595 = vadd.f32 %v4260, %v4594
      %4596 = vmatprep.mubr.bf16.mxu0 0
      %4597 = vmatmul.mubr.bf16.gmra.mxu0 %v4287
      %v4598 = vpop.f32.mrf.mxu0
      %v4599 = vadd.f32 %v4265, %v4598
      %v4600 = vpop.f32.mrf.mxu0
      %v4601 = vadd.f32 %v4265, %v4600
      %v4602 = vpop.f32.mrf.mxu0
      %v4603 = vadd.f32 %v4270, %v4602
      %v4604 = vpop.f32.mrf.mxu0
      %v4605 = vadd.f32 %v4270, %v4604
      %4606 = vdwg.mxu0
      %4607 = vmatprep.subr.bf16.mxu0 0
      %4608 = vmatpush1.bf16.msra.mxu0 0
      %4609 = vmatprep.subr.bf16.mxu0 0
      %4610 = vmatpush1.bf16.msra.mxu0 0
      %4611 = vmatprep.subr.bf16.mxu0 0
      %4612 = vmatpush1.bf16.msra.mxu0 0
      %4613 = vmatprep.subr.bf16.mxu0 0
      %4614 = vmatpush1.bf16.msra.mxu0 0
      %4615 = vmatprep.subr.bf16.mxu0 %v4245
      %4616 = vmatpush1.bf16.msra.mxu0 %v4244
      %4617 = vmatprep.subr.bf16.mxu0 %v4229
      %4618 = vmatpush1.bf16.msra.mxu0 %v4228
      %4619 = vmatprep.subr.bf16.mxu0 %v4213
      %4620 = vmatpush1.bf16.msra.mxu0 %v4212
      %4621 = vmatprep.subr.bf16.mxu0 %v4197
      %4622 = vmatpush1.bf16.msra.mxu0 %v4196
      %4623 = vmatprep.subr.bf16.mxu0 0
      %4624 = vmatpush2.bf16.msra.mxu0 0
      %4625 = vmatprep.subr.bf16.mxu0 0
      %4626 = vmatpush2.bf16.msra.mxu0 0
      %4627 = vmatprep.subr.bf16.mxu0 0
      %4628 = vmatpush2.bf16.msra.mxu0 0
      %4629 = vmatprep.subr.bf16.mxu0 0
      %4630 = vmatpush2.bf16.msra.mxu0 0
      %4631 = vmatprep.subr.bf16.mxu0 0
      %4632 = vmatpush2.bf16.msra.mxu0 0
      %4633 = vmatprep.subr.bf16.mxu0 0
      %4634 = vmatpush2.bf16.msra.mxu0 0
      %4635 = vmatprep.subr.bf16.mxu0 0
      %4636 = vmatpush2.bf16.msra.mxu0 0
      %4637 = vmatprep.subr.bf16.mxu0 0
      %4638 = vmatpush2.bf16.msra.mxu0 0
      %4639 = vmatprep.mubr.bf16.mxu0 0
      %4640 = vmatmul.mubr.bf16.gmra.mxu0 %v4284
      %v4641 = vpop.f32.mrf.mxu0
      %v4642 = vadd.f32 %v4255, %v4641
      %v4643 = vpop.f32.mrf.mxu0
      %v4644 = vadd.f32 %v4255, %v4643
      %v4645 = vpop.f32.mrf.mxu0
      %v4646 = vadd.f32 %v4260, %v4645
      %v4647 = vpop.f32.mrf.mxu0
      %v4648 = vadd.f32 %v4260, %v4647
      %4649 = vmatprep.mubr.bf16.mxu0 0
      %4650 = vmatmul.mubr.bf16.gmra.mxu0 %v4287
      %v4651 = vpop.f32.mrf.mxu0
      %v4652 = vadd.f32 %v4265, %v4651
      %v4653 = vpop.f32.mrf.mxu0
      %v4654 = vadd.f32 %v4265, %v4653
      %v4655 = vpop.f32.mrf.mxu0
      %v4656 = vadd.f32 %v4270, %v4655
      %v4657 = vpop.f32.mrf.mxu0
      %v4658 = vadd.f32 %v4270, %v4657
      %4659 = vdwg.mxu0
      %4660 = vmatprep.subr.bf16.mxu0 0
      %4661 = vmatpush1.bf16.msra.mxu0 0
      %4662 = vmatprep.subr.bf16.mxu0 0
      %4663 = vmatpush1.bf16.msra.mxu0 0
      %4664 = vmatprep.subr.bf16.mxu0 0
      %4665 = vmatpush1.bf16.msra.mxu0 0
      %4666 = vmatprep.subr.bf16.mxu0 0
      %4667 = vmatpush1.bf16.msra.mxu0 0
      %4668 = vmatprep.subr.bf16.mxu0 %v4247
      %4669 = vmatpush1.bf16.msra.mxu0 %v4246
      %4670 = vmatprep.subr.bf16.mxu0 %v4231
      %4671 = vmatpush1.bf16.msra.mxu0 %v4230
      %4672 = vmatprep.subr.bf16.mxu0 %v4215
      %4673 = vmatpush1.bf16.msra.mxu0 %v4214
      %4674 = vmatprep.subr.bf16.mxu0 %v4199
      %4675 = vmatpush1.bf16.msra.mxu0 %v4198
      %4676 = vmatprep.subr.bf16.mxu0 0
      %4677 = vmatpush2.bf16.msra.mxu0 0
      %4678 = vmatprep.subr.bf16.mxu0 0
      %4679 = vmatpush2.bf16.msra.mxu0 0
      %4680 = vmatprep.subr.bf16.mxu0 0
      %4681 = vmatpush2.bf16.msra.mxu0 0
      %4682 = vmatprep.subr.bf16.mxu0 0
      %4683 = vmatpush2.bf16.msra.mxu0 0
      %4684 = vmatprep.subr.bf16.mxu0 0
      %4685 = vmatpush2.bf16.msra.mxu0 0
      %4686 = vmatprep.subr.bf16.mxu0 0
      %4687 = vmatpush2.bf16.msra.mxu0 0
      %4688 = vmatprep.subr.bf16.mxu0 0
      %4689 = vmatpush2.bf16.msra.mxu0 0
      %4690 = vmatprep.subr.bf16.mxu0 0
      %4691 = vmatpush2.bf16.msra.mxu0 0
      %4692 = vmatprep.mubr.bf16.mxu0 0
      %4693 = vmatmul.mubr.bf16.gmra.mxu0 %v4284
      %v4694 = vpop.f32.mrf.mxu0
      %v4695 = vadd.f32 %v4255, %v4694
      %v4696 = vpop.f32.mrf.mxu0
      %v4697 = vadd.f32 %v4255, %v4696
      %v4698 = vpop.f32.mrf.mxu0
      %v4699 = vadd.f32 %v4260, %v4698
      %v4700 = vpop.f32.mrf.mxu0
      %v4701 = vadd.f32 %v4260, %v4700
      %4702 = vmatprep.mubr.bf16.mxu0 0
      %4703 = vmatmul.mubr.bf16.gmra.mxu0 %v4287
      %v4704 = vpop.f32.mrf.mxu0
      %v4705 = vadd.f32 %v4265, %v4704
      %v4706 = vpop.f32.mrf.mxu0
      %v4707 = vadd.f32 %v4265, %v4706
      %v4708 = vpop.f32.mrf.mxu0
      %v4709 = vadd.f32 %v4270, %v4708
      %v4710 = vpop.f32.mrf.mxu0
      %v4711 = vadd.f32 %v4270, %v4710
      %4712 = vdwg.mxu0
      %v4713 = vmax.f32 %v4324, 0.0
      %v4714 = vmax.f32 %v4326, 0.0
      %v4715 = vmax.f32 %v4377, 0.0
      %v4716 = vmax.f32 %v4379, 0.0
      %v4717 = vmax.f32 %v4430, 0.0
      %v4718 = vmax.f32 %v4432, 0.0
      %v4719 = vmax.f32 %v4483, 0.0
      %v4720 = vmax.f32 %v4485, 0.0
      %v4721 = vmax.f32 %v4536, 0.0
      %v4722 = vmax.f32 %v4538, 0.0
      %v4723 = vmax.f32 %v4589, 0.0
      %v4724 = vmax.f32 %v4591, 0.0
      %v4725 = vmax.f32 %v4642, 0.0
      %v4726 = vmax.f32 %v4644, 0.0
      %v4727 = vmax.f32 %v4695, 0.0
      %v4728 = vmax.f32 %v4697, 0.0
      %v4729 = vmax.f32 %v4328, 0.0
      %v4730 = vmax.f32 %v4330, 0.0
      %v4731 = vmax.f32 %v4381, 0.0
      %v4732 = vmax.f32 %v4383, 0.0
      %v4733 = vmax.f32 %v4434, 0.0
      %v4734 = vmax.f32 %v4436, 0.0
      %v4735 = vmax.f32 %v4487, 0.0
      %v4736 = vmax.f32 %v4489, 0.0
      %v4737 = vmax.f32 %v4540, 0.0
      %v4738 = vmax.f32 %v4542, 0.0
      %v4739 = vmax.f32 %v4593, 0.0
      %v4740 = vmax.f32 %v4595, 0.0
      %v4741 = vmax.f32 %v4646, 0.0
      %v4742 = vmax.f32 %v4648, 0.0
      %v4743 = vmax.f32 %v4699, 0.0
      %v4744 = vmax.f32 %v4701, 0.0
      %v4745 = vmax.f32 %v4334, 0.0
      %v4746 = vmax.f32 %v4336, 0.0
      %v4747 = vmax.f32 %v4387, 0.0
      %v4748 = vmax.f32 %v4389, 0.0
      %v4749 = vmax.f32 %v4440, 0.0
      %v4750 = vmax.f32 %v4442, 0.0
      %v4751 = vmax.f32 %v4493, 0.0
      %v4752 = vmax.f32 %v4495, 0.0
      %v4753 = vmax.f32 %v4546, 0.0
      %v4754 = vmax.f32 %v4548, 0.0
      %v4755 = vmax.f32 %v4599, 0.0
      %v4756 = vmax.f32 %v4601, 0.0
      %v4757 = vmax.f32 %v4652, 0.0
      %v4758 = vmax.f32 %v4654, 0.0
      %v4759 = vmax.f32 %v4705, 0.0
      %v4760 = vmax.f32 %v4707, 0.0
      %v4761 = vmax.f32 %v4338, 0.0
      %v4762 = vmax.f32 %v4340, 0.0
      %v4763 = vmax.f32 %v4391, 0.0
      %v4764 = vmax.f32 %v4393, 0.0
      %v4765 = vmax.f32 %v4444, 0.0
      %v4766 = vmax.f32 %v4446, 0.0
      %v4767 = vmax.f32 %v4497, 0.0
      %v4768 = vmax.f32 %v4499, 0.0
      %v4769 = vmax.f32 %v4550, 0.0
      %v4770 = vmax.f32 %v4552, 0.0
      %v4771 = vmax.f32 %v4603, 0.0
      %v4772 = vmax.f32 %v4605, 0.0
      %v4773 = vmax.f32 %v4656, 0.0
      %v4774 = vmax.f32 %v4658, 0.0
      %v4775 = vmax.f32 %v4709, 0.0
      %v4776 = vmax.f32 %v4711, 0.0
      %v4777 = vld [vmem:[%s1] sm:$0xff]
      %v4778 = vld [vmem:[%s1 + $0x8] sm:$0xff]
      %v4781 = vlaneseq
      %v4782 = vshrl.u32 %v4781, 7
      %v4783 = vsub.s32 0, %v4782
      %v4784 = vrot.slane %v4777, %v4783
      %v4785 = vlaneseq
      %v4786 = vshrl.u32 %v4785, 7
      %v4787 = vsub.s32 1, %v4786
      %v4788 = vrot.slane %v4777, %v4787
      %v4789 = vlaneseq
      %v4790 = vshrl.u32 %v4789, 7
      %v4791 = vsub.s32 2, %v4790
      %v4792 = vrot.slane %v4777, %v4791
      %v4793 = vlaneseq
      %v4794 = vshrl.u32 %v4793, 7
      %v4795 = vsub.s32 3, %v4794
      %v4796 = vrot.slane %v4777, %v4795
      %v4797 = vlaneseq
      %v4798 = vshrl.u32 %v4797, 7
      %v4799 = vsub.s32 4, %v4798
      %v4800 = vrot.slane %v4777, %v4799
      %v4801 = vlaneseq
      %v4802 = vshrl.u32 %v4801, 7
      %v4803 = vsub.s32 5, %v4802
      %v4804 = vrot.slane %v4777, %v4803
      %v4805 = vlaneseq
      %v4806 = vshrl.u32 %v4805, 7
      %v4807 = vsub.s32 6, %v4806
      %v4808 = vrot.slane %v4777, %v4807
      %v4809 = vlaneseq
      %v4810 = vshrl.u32 %v4809, 7
      %v4811 = vsub.s32 7, %v4810
      %v4812 = vrot.slane %v4777, %v4811
      %v4813 = vlaneseq
      %v4814 = vshrl.u32 %v4813, 7
      %v4815 = vsub.s32 0, %v4814
      %v4816 = vrot.slane %v4778, %v4815
      %v4817 = vlaneseq
      %v4818 = vshrl.u32 %v4817, 7
      %v4819 = vsub.s32 1, %v4818
      %v4820 = vrot.slane %v4778, %v4819
      %v4821 = vlaneseq
      %v4822 = vshrl.u32 %v4821, 7
      %v4823 = vsub.s32 2, %v4822
      %v4824 = vrot.slane %v4778, %v4823
      %v4825 = vlaneseq
      %v4826 = vshrl.u32 %v4825, 7
      %v4827 = vsub.s32 3, %v4826
      %v4828 = vrot.slane %v4778, %v4827
      %v4829 = vlaneseq
      %v4830 = vshrl.u32 %v4829, 7
      %v4831 = vsub.s32 4, %v4830
      %v4832 = vrot.slane %v4778, %v4831
      %v4833 = vlaneseq
      %v4834 = vshrl.u32 %v4833, 7
      %v4835 = vsub.s32 5, %v4834
      %v4836 = vrot.slane %v4778, %v4835
      %v4837 = vlaneseq
      %v4838 = vshrl.u32 %v4837, 7
      %v4839 = vsub.s32 6, %v4838
      %v4840 = vrot.slane %v4778, %v4839
      %v4841 = vlaneseq
      %v4842 = vshrl.u32 %v4841, 7
      %v4843 = vsub.s32 7, %v4842
      %v4844 = vrot.slane %v4778, %v4843
      %v4861 = vmul.f32 %v4713, %v4784
      %v4862 = vmul.f32 %v4714, %v4788
      %v4863 = vmul.f32 %v4715, %v4792
      %v4864 = vmul.f32 %v4716, %v4796
      %v4865 = vmul.f32 %v4717, %v4800
      %v4866 = vmul.f32 %v4718, %v4804
      %v4867 = vmul.f32 %v4719, %v4808
      %v4868 = vmul.f32 %v4720, %v4812
      %v4869 = vmul.f32 %v4721, %v4816
      %v4870 = vmul.f32 %v4722, %v4820
      %v4871 = vmul.f32 %v4723, %v4824
      %v4872 = vmul.f32 %v4724, %v4828
      %v4873 = vmul.f32 %v4725, %v4832
      %v4874 = vmul.f32 %v4726, %v4836
      %v4875 = vmul.f32 %v4727, %v4840
      %v4876 = vmul.f32 %v4728, %v4844
      %v4877 = vmul.f32 %v4729, %v4784
      %v4878 = vmul.f32 %v4730, %v4788
      %v4879 = vmul.f32 %v4731, %v4792
      %v4880 = vmul.f32 %v4732, %v4796
      %v4881 = vmul.f32 %v4733, %v4800
      %v4882 = vmul.f32 %v4734, %v4804
      %v4883 = vmul.f32 %v4735, %v4808
      %v4884 = vmul.f32 %v4736, %v4812
      %v4885 = vmul.f32 %v4737, %v4816
      %v4886 = vmul.f32 %v4738, %v4820
      %v4887 = vmul.f32 %v4739, %v4824
      %v4888 = vmul.f32 %v4740, %v4828
      %v4889 = vmul.f32 %v4741, %v4832
      %v4890 = vmul.f32 %v4742, %v4836
      %v4891 = vmul.f32 %v4743, %v4840
      %v4892 = vmul.f32 %v4744, %v4844
      %v4893 = vmul.f32 %v4745, %v4784
      %v4894 = vmul.f32 %v4746, %v4788
      %v4895 = vmul.f32 %v4747, %v4792
      %v4896 = vmul.f32 %v4748, %v4796
      %v4897 = vmul.f32 %v4749, %v4800
      %v4898 = vmul.f32 %v4750, %v4804
      %v4899 = vmul.f32 %v4751, %v4808
      %v4900 = vmul.f32 %v4752, %v4812
      %v4901 = vmul.f32 %v4753, %v4816
      %v4902 = vmul.f32 %v4754, %v4820
      %v4903 = vmul.f32 %v4755, %v4824
      %v4904 = vmul.f32 %v4756, %v4828
      %v4905 = vmul.f32 %v4757, %v4832
      %v4906 = vmul.f32 %v4758, %v4836
      %v4907 = vmul.f32 %v4759, %v4840
      %v4908 = vmul.f32 %v4760, %v4844
      %v4909 = vmul.f32 %v4761, %v4784
      %v4910 = vmul.f32 %v4762, %v4788
      %v4911 = vmul.f32 %v4763, %v4792
      %v4912 = vmul.f32 %v4764, %v4796
      %v4913 = vmul.f32 %v4765, %v4800
      %v4914 = vmul.f32 %v4766, %v4804
      %v4915 = vmul.f32 %v4767, %v4808
      %v4916 = vmul.f32 %v4768, %v4812
      %v4917 = vmul.f32 %v4769, %v4816
      %v4918 = vmul.f32 %v4770, %v4820
      %v4919 = vmul.f32 %v4771, %v4824
      %v4920 = vmul.f32 %v4772, %v4828
      %v4921 = vmul.f32 %v4773, %v4832
      %v4922 = vmul.f32 %v4774, %v4836
      %v4923 = vmul.f32 %v4775, %v4840
      %v4924 = vmul.f32 %v4776, %v4844
      %v4925 = vld [vmem:[%s6] sm:$0xf]
      %v4926 = vld [vmem:[%s6 + $0x4] sm:$0xf]
      %v4927 = vld [vmem:[%s6 + $0x8] sm:$0xf]
      %v4928 = vld [vmem:[%s6 + $0xc] sm:$0x1]
      %v4929 = vpack.c.bf16 %v4877, %v4861
      %v4930 = vpack.c.bf16 %v4878, %v4862
      %v4931 = vpack.c.bf16 %v4879, %v4863
      %v4932 = vpack.c.bf16 %v4880, %v4864
      %v4933 = vpack.c.bf16 %v4881, %v4865
      %v4934 = vpack.c.bf16 %v4882, %v4866
      %v4935 = vpack.c.bf16 %v4883, %v4867
      %v4936 = vpack.c.bf16 %v4884, %v4868
      %v4937 = vpack.c.bf16 %v4885, %v4869
      %v4938 = vpack.c.bf16 %v4886, %v4870
      %v4939 = vpack.c.bf16 %v4887, %v4871
      %v4940 = vpack.c.bf16 %v4888, %v4872
      %v4941 = vpack.c.bf16 %v4889, %v4873
      %v4942 = vpack.c.bf16 %v4890, %v4874
      %v4943 = vpack.c.bf16 %v4891, %v4875
      %v4944 = vpack.c.bf16 %v4892, %v4876
      %v4945 = vpack.c.bf16 %v4909, %v4893
      %v4946 = vpack.c.bf16 %v4910, %v4894
      %v4947 = vpack.c.bf16 %v4911, %v4895
      %v4948 = vpack.c.bf16 %v4912, %v4896
      %v4949 = vpack.c.bf16 %v4913, %v4897
      %v4950 = vpack.c.bf16 %v4914, %v4898
      %v4951 = vpack.c.bf16 %v4915, %v4899
      %v4952 = vpack.c.bf16 %v4916, %v4900
      %v4953 = vpack.c.bf16 %v4917, %v4901
      %v4954 = vpack.c.bf16 %v4918, %v4902
      %v4955 = vpack.c.bf16 %v4919, %v4903
      %v4956 = vpack.c.bf16 %v4920, %v4904
      %v4957 = vpack.c.bf16 %v4921, %v4905
      %v4958 = vpack.c.bf16 %v4922, %v4906
      %v4959 = vpack.c.bf16 %v4923, %v4907
      %v4960 = vpack.c.bf16 %v4924, %v4908
      %v4965 = vunpack.c.l.b16 %v4925
      %v4966 = vunpack.c.l.b16 %v4926
      %v4967 = vunpack.c.l.b16 %v4927
      %v4968 = vunpack.c.l.b16 %v4928
      %v4969 = vpack.c.b16 %v4966, %v4965
      %v4970 = vpack.c.b16 %v4968, %v4967
      %vm4971 = vcmask 261120
      %v4973 = vsel %vm4971, %v4969, 0
      %v4976 = vsel %vm4971, %v4970, 0
      %4978 = vmatprep.subr.bf16.mxu0 0
      %4979 = vmatpush1.bf16.msra.mxu0 0
      %4980 = vmatprep.subr.bf16.mxu0 0
      %4981 = vmatpush1.bf16.msra.mxu0 0
      %4982 = vmatprep.subr.bf16.mxu0 0
      %4983 = vmatpush1.bf16.msra.mxu0 0
      %4984 = vmatprep.subr.bf16.mxu0 0
      %4985 = vmatpush1.bf16.msra.mxu0 0
      %4986 = vmatprep.subr.bf16.mxu0 0
      %4987 = vmatpush1.bf16.msra.mxu0 0
      %4988 = vmatprep.subr.bf16.mxu0 0
      %4989 = vmatpush1.bf16.msra.mxu0 0
      %4990 = vmatprep.subr.bf16.mxu0 %v4946
      %4991 = vmatpush1.bf16.msra.mxu0 %v4945
      %4992 = vmatprep.subr.bf16.mxu0 %v4930
      %4993 = vmatpush1.bf16.msra.mxu0 %v4929
      %4994 = vmatprep.subr.bf16.mxu0 0
      %4995 = vmatpush2.bf16.msra.mxu0 0
      %4996 = vmatprep.subr.bf16.mxu0 0
      %4997 = vmatpush2.bf16.msra.mxu0 0
      %4998 = vmatprep.subr.bf16.mxu0 0
      %4999 = vmatpush2.bf16.msra.mxu0 0
      %5000 = vmatprep.subr.bf16.mxu0 0
      %5001 = vmatpush2.bf16.msra.mxu0 0
      %5002 = vmatprep.subr.bf16.mxu0 0
      %5003 = vmatpush2.bf16.msra.mxu0 0
      %5004 = vmatprep.subr.bf16.mxu0 0
      %5005 = vmatpush2.bf16.msra.mxu0 0
      %5006 = vmatprep.subr.bf16.mxu0 0
      %5007 = vmatpush2.bf16.msra.mxu0 0
      %5008 = vmatprep.subr.bf16.mxu0 0
      %5009 = vmatpush2.bf16.msra.mxu0 0
      %5010 = vmatprep.mubr.bf16.mxu0 0
      %5011 = vmatmul.mubr.bf16.gmra.mxu0 %v4973
      %v5012 = vpop.f32.mrf.mxu0
      %v5013 = vadd.f32 0.0, %v5012
      %v5014 = vpop.f32.mrf.mxu0
      %v5015 = vadd.f32 0.0, %v5014
      %v5016 = vpop.f32.mrf.mxu0
      %v5017 = vadd.f32 0.0, %v5016
      %v5018 = vpop.f32.mrf.mxu0
      %v5019 = vadd.f32 0.0, %v5018
      %5020 = vmatprep.mubr.bf16.mxu0 0
      %5021 = vmatmul.mubr.bf16.gmra.mxu0 %v4976
      %v5022 = vpop.f32.mrf.mxu0
      %v5023 = vadd.f32 0.0, %v5022
      %v5024 = vpop.f32.mrf.mxu0
      %v5025 = vadd.f32 0.0, %v5024
      %v5026 = vpop.f32.mrf.mxu0
      %v5027 = vadd.f32 0.0, %v5026
      %v5028 = vpop.f32.mrf.mxu0
      %v5029 = vadd.f32 0.0, %v5028
      %5030 = vdwg.mxu0
      %5031 = vmatprep.subr.bf16.mxu0 0
      %5032 = vmatpush1.bf16.msra.mxu0 0
      %5033 = vmatprep.subr.bf16.mxu0 0
      %5034 = vmatpush1.bf16.msra.mxu0 0
      %5035 = vmatprep.subr.bf16.mxu0 0
      %5036 = vmatpush1.bf16.msra.mxu0 0
      %5037 = vmatprep.subr.bf16.mxu0 0
      %5038 = vmatpush1.bf16.msra.mxu0 0
      %5039 = vmatprep.subr.bf16.mxu0 0
      %5040 = vmatpush1.bf16.msra.mxu0 0
      %5041 = vmatprep.subr.bf16.mxu0 0
      %5042 = vmatpush1.bf16.msra.mxu0 0
      %5043 = vmatprep.subr.bf16.mxu0 %v4948
      %5044 = vmatpush1.bf16.msra.mxu0 %v4947
      %5045 = vmatprep.subr.bf16.mxu0 %v4932
      %5046 = vmatpush1.bf16.msra.mxu0 %v4931
      %5047 = vmatprep.subr.bf16.mxu0 0
      %5048 = vmatpush2.bf16.msra.mxu0 0
      %5049 = vmatprep.subr.bf16.mxu0 0
      %5050 = vmatpush2.bf16.msra.mxu0 0
      %5051 = vmatprep.subr.bf16.mxu0 0
      %5052 = vmatpush2.bf16.msra.mxu0 0
      %5053 = vmatprep.subr.bf16.mxu0 0
      %5054 = vmatpush2.bf16.msra.mxu0 0
      %5055 = vmatprep.subr.bf16.mxu0 0
      %5056 = vmatpush2.bf16.msra.mxu0 0
      %5057 = vmatprep.subr.bf16.mxu0 0
      %5058 = vmatpush2.bf16.msra.mxu0 0
      %5059 = vmatprep.subr.bf16.mxu0 0
      %5060 = vmatpush2.bf16.msra.mxu0 0
      %5061 = vmatprep.subr.bf16.mxu0 0
      %5062 = vmatpush2.bf16.msra.mxu0 0
      %5063 = vmatprep.mubr.bf16.mxu0 0
      %5064 = vmatmul.mubr.bf16.gmra.mxu0 %v4973
      %v5065 = vpop.f32.mrf.mxu0
      %v5066 = vadd.f32 0.0, %v5065
      %v5067 = vpop.f32.mrf.mxu0
      %v5068 = vadd.f32 0.0, %v5067
      %v5069 = vpop.f32.mrf.mxu0
      %v5070 = vadd.f32 0.0, %v5069
      %v5071 = vpop.f32.mrf.mxu0
      %v5072 = vadd.f32 0.0, %v5071
      %5073 = vmatprep.mubr.bf16.mxu0 0
      %5074 = vmatmul.mubr.bf16.gmra.mxu0 %v4976
      %v5075 = vpop.f32.mrf.mxu0
      %v5076 = vadd.f32 0.0, %v5075
      %v5077 = vpop.f32.mrf.mxu0
      %v5078 = vadd.f32 0.0, %v5077
      %v5079 = vpop.f32.mrf.mxu0
      %v5080 = vadd.f32 0.0, %v5079
      %v5081 = vpop.f32.mrf.mxu0
      %v5082 = vadd.f32 0.0, %v5081
      %5083 = vdwg.mxu0
      %5084 = vmatprep.subr.bf16.mxu0 0
      %5085 = vmatpush1.bf16.msra.mxu0 0
      %5086 = vmatprep.subr.bf16.mxu0 0
      %5087 = vmatpush1.bf16.msra.mxu0 0
      %5088 = vmatprep.subr.bf16.mxu0 0
      %5089 = vmatpush1.bf16.msra.mxu0 0
      %5090 = vmatprep.subr.bf16.mxu0 0
      %5091 = vmatpush1.bf16.msra.mxu0 0
      %5092 = vmatprep.subr.bf16.mxu0 0
      %5093 = vmatpush1.bf16.msra.mxu0 0
      %5094 = vmatprep.subr.bf16.mxu0 0
      %5095 = vmatpush1.bf16.msra.mxu0 0
      %5096 = vmatprep.subr.bf16.mxu0 %v4950
      %5097 = vmatpush1.bf16.msra.mxu0 %v4949
      %5098 = vmatprep.subr.bf16.mxu0 %v4934
      %5099 = vmatpush1.bf16.msra.mxu0 %v4933
      %5100 = vmatprep.subr.bf16.mxu0 0
      %5101 = vmatpush2.bf16.msra.mxu0 0
      %5102 = vmatprep.subr.bf16.mxu0 0
      %5103 = vmatpush2.bf16.msra.mxu0 0
      %5104 = vmatprep.subr.bf16.mxu0 0
      %5105 = vmatpush2.bf16.msra.mxu0 0
      %5106 = vmatprep.subr.bf16.mxu0 0
      %5107 = vmatpush2.bf16.msra.mxu0 0
      %5108 = vmatprep.subr.bf16.mxu0 0
      %5109 = vmatpush2.bf16.msra.mxu0 0
      %5110 = vmatprep.subr.bf16.mxu0 0
      %5111 = vmatpush2.bf16.msra.mxu0 0
      %5112 = vmatprep.subr.bf16.mxu0 0
      %5113 = vmatpush2.bf16.msra.mxu0 0
      %5114 = vmatprep.subr.bf16.mxu0 0
      %5115 = vmatpush2.bf16.msra.mxu0 0
      %5116 = vmatprep.mubr.bf16.mxu0 0
      %5117 = vmatmul.mubr.bf16.gmra.mxu0 %v4973
      %v5118 = vpop.f32.mrf.mxu0
      %v5119 = vadd.f32 0.0, %v5118
      %v5120 = vpop.f32.mrf.mxu0
      %v5121 = vadd.f32 0.0, %v5120
      %v5122 = vpop.f32.mrf.mxu0
      %v5123 = vadd.f32 0.0, %v5122
      %v5124 = vpop.f32.mrf.mxu0
      %v5125 = vadd.f32 0.0, %v5124
      %5126 = vmatprep.mubr.bf16.mxu0 0
      %5127 = vmatmul.mubr.bf16.gmra.mxu0 %v4976
      %v5128 = vpop.f32.mrf.mxu0
      %v5129 = vadd.f32 0.0, %v5128
      %v5130 = vpop.f32.mrf.mxu0
      %v5131 = vadd.f32 0.0, %v5130
      %v5132 = vpop.f32.mrf.mxu0
      %v5133 = vadd.f32 0.0, %v5132
      %v5134 = vpop.f32.mrf.mxu0
      %v5135 = vadd.f32 0.0, %v5134
      %5136 = vdwg.mxu0
      %5137 = vmatprep.subr.bf16.mxu0 0
      %5138 = vmatpush1.bf16.msra.mxu0 0
      %5139 = vmatprep.subr.bf16.mxu0 0
      %5140 = vmatpush1.bf16.msra.mxu0 0
      %5141 = vmatprep.subr.bf16.mxu0 0
      %5142 = vmatpush1.bf16.msra.mxu0 0
      %5143 = vmatprep.subr.bf16.mxu0 0
      %5144 = vmatpush1.bf16.msra.mxu0 0
      %5145 = vmatprep.subr.bf16.mxu0 0
      %5146 = vmatpush1.bf16.msra.mxu0 0
      %5147 = vmatprep.subr.bf16.mxu0 0
      %5148 = vmatpush1.bf16.msra.mxu0 0
      %5149 = vmatprep.subr.bf16.mxu0 %v4952
      %5150 = vmatpush1.bf16.msra.mxu0 %v4951
      %5151 = vmatprep.subr.bf16.mxu0 %v4936
      %5152 = vmatpush1.bf16.msra.mxu0 %v4935
      %5153 = vmatprep.subr.bf16.mxu0 0
      %5154 = vmatpush2.bf16.msra.mxu0 0
      %5155 = vmatprep.subr.bf16.mxu0 0
      %5156 = vmatpush2.bf16.msra.mxu0 0
      %5157 = vmatprep.subr.bf16.mxu0 0
      %5158 = vmatpush2.bf16.msra.mxu0 0
      %5159 = vmatprep.subr.bf16.mxu0 0
      %5160 = vmatpush2.bf16.msra.mxu0 0
      %5161 = vmatprep.subr.bf16.mxu0 0
      %5162 = vmatpush2.bf16.msra.mxu0 0
      %5163 = vmatprep.subr.bf16.mxu0 0
      %5164 = vmatpush2.bf16.msra.mxu0 0
      %5165 = vmatprep.subr.bf16.mxu0 0
      %5166 = vmatpush2.bf16.msra.mxu0 0
      %5167 = vmatprep.subr.bf16.mxu0 0
      %5168 = vmatpush2.bf16.msra.mxu0 0
      %5169 = vmatprep.mubr.bf16.mxu0 0
      %5170 = vmatmul.mubr.bf16.gmra.mxu0 %v4973
      %v5171 = vpop.f32.mrf.mxu0
      %v5172 = vadd.f32 0.0, %v5171
      %v5173 = vpop.f32.mrf.mxu0
      %v5174 = vadd.f32 0.0, %v5173
      %v5175 = vpop.f32.mrf.mxu0
      %v5176 = vadd.f32 0.0, %v5175
      %v5177 = vpop.f32.mrf.mxu0
      %v5178 = vadd.f32 0.0, %v5177
      %5179 = vmatprep.mubr.bf16.mxu0 0
      %5180 = vmatmul.mubr.bf16.gmra.mxu0 %v4976
      %v5181 = vpop.f32.mrf.mxu0
      %v5182 = vadd.f32 0.0, %v5181
      %v5183 = vpop.f32.mrf.mxu0
      %v5184 = vadd.f32 0.0, %v5183
      %v5185 = vpop.f32.mrf.mxu0
      %v5186 = vadd.f32 0.0, %v5185
      %v5187 = vpop.f32.mrf.mxu0
      %v5188 = vadd.f32 0.0, %v5187
      %5189 = vdwg.mxu0
      %5190 = vmatprep.subr.bf16.mxu0 0
      %5191 = vmatpush1.bf16.msra.mxu0 0
      %5192 = vmatprep.subr.bf16.mxu0 0
      %5193 = vmatpush1.bf16.msra.mxu0 0
      %5194 = vmatprep.subr.bf16.mxu0 0
      %5195 = vmatpush1.bf16.msra.mxu0 0
      %5196 = vmatprep.subr.bf16.mxu0 0
      %5197 = vmatpush1.bf16.msra.mxu0 0
      %5198 = vmatprep.subr.bf16.mxu0 0
      %5199 = vmatpush1.bf16.msra.mxu0 0
      %5200 = vmatprep.subr.bf16.mxu0 0
      %5201 = vmatpush1.bf16.msra.mxu0 0
      %5202 = vmatprep.subr.bf16.mxu0 %v4954
      %5203 = vmatpush1.bf16.msra.mxu0 %v4953
      %5204 = vmatprep.subr.bf16.mxu0 %v4938
      %5205 = vmatpush1.bf16.msra.mxu0 %v4937
      %5206 = vmatprep.subr.bf16.mxu0 0
      %5207 = vmatpush2.bf16.msra.mxu0 0
      %5208 = vmatprep.subr.bf16.mxu0 0
      %5209 = vmatpush2.bf16.msra.mxu0 0
      %5210 = vmatprep.subr.bf16.mxu0 0
      %5211 = vmatpush2.bf16.msra.mxu0 0
      %5212 = vmatprep.subr.bf16.mxu0 0
      %5213 = vmatpush2.bf16.msra.mxu0 0
      %5214 = vmatprep.subr.bf16.mxu0 0
      %5215 = vmatpush2.bf16.msra.mxu0 0
      %5216 = vmatprep.subr.bf16.mxu0 0
      %5217 = vmatpush2.bf16.msra.mxu0 0
      %5218 = vmatprep.subr.bf16.mxu0 0
      %5219 = vmatpush2.bf16.msra.mxu0 0
      %5220 = vmatprep.subr.bf16.mxu0 0
      %5221 = vmatpush2.bf16.msra.mxu0 0
      %5222 = vmatprep.mubr.bf16.mxu0 0
      %5223 = vmatmul.mubr.bf16.gmra.mxu0 %v4973
      %v5224 = vpop.f32.mrf.mxu0
      %v5225 = vadd.f32 0.0, %v5224
      %v5226 = vpop.f32.mrf.mxu0
      %v5227 = vadd.f32 0.0, %v5226
      %v5228 = vpop.f32.mrf.mxu0
      %v5229 = vadd.f32 0.0, %v5228
      %v5230 = vpop.f32.mrf.mxu0
      %v5231 = vadd.f32 0.0, %v5230
      %5232 = vmatprep.mubr.bf16.mxu0 0
      %5233 = vmatmul.mubr.bf16.gmra.mxu0 %v4976
      %v5234 = vpop.f32.mrf.mxu0
      %v5235 = vadd.f32 0.0, %v5234
      %v5236 = vpop.f32.mrf.mxu0
      %v5237 = vadd.f32 0.0, %v5236
      %v5238 = vpop.f32.mrf.mxu0
      %v5239 = vadd.f32 0.0, %v5238
      %v5240 = vpop.f32.mrf.mxu0
      %v5241 = vadd.f32 0.0, %v5240
      %5242 = vdwg.mxu0
      %5243 = vmatprep.subr.bf16.mxu0 0
      %5244 = vmatpush1.bf16.msra.mxu0 0
      %5245 = vmatprep.subr.bf16.mxu0 0
      %5246 = vmatpush1.bf16.msra.mxu0 0
      %5247 = vmatprep.subr.bf16.mxu0 0
      %5248 = vmatpush1.bf16.msra.mxu0 0
      %5249 = vmatprep.subr.bf16.mxu0 0
      %5250 = vmatpush1.bf16.msra.mxu0 0
      %5251 = vmatprep.subr.bf16.mxu0 0
      %5252 = vmatpush1.bf16.msra.mxu0 0
      %5253 = vmatprep.subr.bf16.mxu0 0
      %5254 = vmatpush1.bf16.msra.mxu0 0
      %5255 = vmatprep.subr.bf16.mxu0 %v4956
      %5256 = vmatpush1.bf16.msra.mxu0 %v4955
      %5257 = vmatprep.subr.bf16.mxu0 %v4940
      %5258 = vmatpush1.bf16.msra.mxu0 %v4939
      %5259 = vmatprep.subr.bf16.mxu0 0
      %5260 = vmatpush2.bf16.msra.mxu0 0
      %5261 = vmatprep.subr.bf16.mxu0 0
      %5262 = vmatpush2.bf16.msra.mxu0 0
      %5263 = vmatprep.subr.bf16.mxu0 0
      %5264 = vmatpush2.bf16.msra.mxu0 0
      %5265 = vmatprep.subr.bf16.mxu0 0
      %5266 = vmatpush2.bf16.msra.mxu0 0
      %5267 = vmatprep.subr.bf16.mxu0 0
      %5268 = vmatpush2.bf16.msra.mxu0 0
      %5269 = vmatprep.subr.bf16.mxu0 0
      %5270 = vmatpush2.bf16.msra.mxu0 0
      %5271 = vmatprep.subr.bf16.mxu0 0
      %5272 = vmatpush2.bf16.msra.mxu0 0
      %5273 = vmatprep.subr.bf16.mxu0 0
      %5274 = vmatpush2.bf16.msra.mxu0 0
      %5275 = vmatprep.mubr.bf16.mxu0 0
      %5276 = vmatmul.mubr.bf16.gmra.mxu0 %v4973
      %v5277 = vpop.f32.mrf.mxu0
      %v5278 = vadd.f32 0.0, %v5277
      %v5279 = vpop.f32.mrf.mxu0
      %v5280 = vadd.f32 0.0, %v5279
      %v5281 = vpop.f32.mrf.mxu0
      %v5282 = vadd.f32 0.0, %v5281
      %v5283 = vpop.f32.mrf.mxu0
      %v5284 = vadd.f32 0.0, %v5283
      %5285 = vmatprep.mubr.bf16.mxu0 0
      %5286 = vmatmul.mubr.bf16.gmra.mxu0 %v4976
      %v5287 = vpop.f32.mrf.mxu0
      %v5288 = vadd.f32 0.0, %v5287
      %v5289 = vpop.f32.mrf.mxu0
      %v5290 = vadd.f32 0.0, %v5289
      %v5291 = vpop.f32.mrf.mxu0
      %v5292 = vadd.f32 0.0, %v5291
      %v5293 = vpop.f32.mrf.mxu0
      %v5294 = vadd.f32 0.0, %v5293
      %5295 = vdwg.mxu0
      %5296 = vmatprep.subr.bf16.mxu0 0
      %5297 = vmatpush1.bf16.msra.mxu0 0
      %5298 = vmatprep.subr.bf16.mxu0 0
      %5299 = vmatpush1.bf16.msra.mxu0 0
      %5300 = vmatprep.subr.bf16.mxu0 0
      %5301 = vmatpush1.bf16.msra.mxu0 0
      %5302 = vmatprep.subr.bf16.mxu0 0
      %5303 = vmatpush1.bf16.msra.mxu0 0
      %5304 = vmatprep.subr.bf16.mxu0 0
      %5305 = vmatpush1.bf16.msra.mxu0 0
      %5306 = vmatprep.subr.bf16.mxu0 0
      %5307 = vmatpush1.bf16.msra.mxu0 0
      %5308 = vmatprep.subr.bf16.mxu0 %v4958
      %5309 = vmatpush1.bf16.msra.mxu0 %v4957
      %5310 = vmatprep.subr.bf16.mxu0 %v4942
      %5311 = vmatpush1.bf16.msra.mxu0 %v4941
      %5312 = vmatprep.subr.bf16.mxu0 0
      %5313 = vmatpush2.bf16.msra.mxu0 0
      %5314 = vmatprep.subr.bf16.mxu0 0
      %5315 = vmatpush2.bf16.msra.mxu0 0
      %5316 = vmatprep.subr.bf16.mxu0 0
      %5317 = vmatpush2.bf16.msra.mxu0 0
      %5318 = vmatprep.subr.bf16.mxu0 0
      %5319 = vmatpush2.bf16.msra.mxu0 0
      %5320 = vmatprep.subr.bf16.mxu0 0
      %5321 = vmatpush2.bf16.msra.mxu0 0
      %5322 = vmatprep.subr.bf16.mxu0 0
      %5323 = vmatpush2.bf16.msra.mxu0 0
      %5324 = vmatprep.subr.bf16.mxu0 0
      %5325 = vmatpush2.bf16.msra.mxu0 0
      %5326 = vmatprep.subr.bf16.mxu0 0
      %5327 = vmatpush2.bf16.msra.mxu0 0
      %5328 = vmatprep.mubr.bf16.mxu0 0
      %5329 = vmatmul.mubr.bf16.gmra.mxu0 %v4973
      %v5330 = vpop.f32.mrf.mxu0
      %v5331 = vadd.f32 0.0, %v5330
      %v5332 = vpop.f32.mrf.mxu0
      %v5333 = vadd.f32 0.0, %v5332
      %v5334 = vpop.f32.mrf.mxu0
      %v5335 = vadd.f32 0.0, %v5334
      %v5336 = vpop.f32.mrf.mxu0
      %v5337 = vadd.f32 0.0, %v5336
      %5338 = vmatprep.mubr.bf16.mxu0 0
      %5339 = vmatmul.mubr.bf16.gmra.mxu0 %v4976
      %v5340 = vpop.f32.mrf.mxu0
      %v5341 = vadd.f32 0.0, %v5340
      %v5342 = vpop.f32.mrf.mxu0
      %v5343 = vadd.f32 0.0, %v5342
      %v5344 = vpop.f32.mrf.mxu0
      %v5345 = vadd.f32 0.0, %v5344
      %v5346 = vpop.f32.mrf.mxu0
      %v5347 = vadd.f32 0.0, %v5346
      %5348 = vdwg.mxu0
      %5349 = vmatprep.subr.bf16.mxu0 0
      %5350 = vmatpush1.bf16.msra.mxu0 0
      %5351 = vmatprep.subr.bf16.mxu0 0
      %5352 = vmatpush1.bf16.msra.mxu0 0
      %5353 = vmatprep.subr.bf16.mxu0 0
      %5354 = vmatpush1.bf16.msra.mxu0 0
      %5355 = vmatprep.subr.bf16.mxu0 0
      %5356 = vmatpush1.bf16.msra.mxu0 0
      %5357 = vmatprep.subr.bf16.mxu0 0
      %5358 = vmatpush1.bf16.msra.mxu0 0
      %5359 = vmatprep.subr.bf16.mxu0 0
      %5360 = vmatpush1.bf16.msra.mxu0 0
      %5361 = vmatprep.subr.bf16.mxu0 %v4960
      %5362 = vmatpush1.bf16.msra.mxu0 %v4959
      %5363 = vmatprep.subr.bf16.mxu0 %v4944
      %5364 = vmatpush1.bf16.msra.mxu0 %v4943
      %5365 = vmatprep.subr.bf16.mxu0 0
      %5366 = vmatpush2.bf16.msra.mxu0 0
      %5367 = vmatprep.subr.bf16.mxu0 0
      %5368 = vmatpush2.bf16.msra.mxu0 0
      %5369 = vmatprep.subr.bf16.mxu0 0
      %5370 = vmatpush2.bf16.msra.mxu0 0
      %5371 = vmatprep.subr.bf16.mxu0 0
      %5372 = vmatpush2.bf16.msra.mxu0 0
      %5373 = vmatprep.subr.bf16.mxu0 0
      %5374 = vmatpush2.bf16.msra.mxu0 0
      %5375 = vmatprep.subr.bf16.mxu0 0
      %5376 = vmatpush2.bf16.msra.mxu0 0
      %5377 = vmatprep.subr.bf16.mxu0 0
      %5378 = vmatpush2.bf16.msra.mxu0 0
      %5379 = vmatprep.subr.bf16.mxu0 0
      %5380 = vmatpush2.bf16.msra.mxu0 0
      %5381 = vmatprep.mubr.bf16.mxu0 0
      %5382 = vmatmul.mubr.bf16.gmra.mxu0 %v4973
      %v5383 = vpop.f32.mrf.mxu0
      %v5384 = vadd.f32 0.0, %v5383
      %v5385 = vpop.f32.mrf.mxu0
      %v5386 = vadd.f32 0.0, %v5385
      %v5387 = vpop.f32.mrf.mxu0
      %v5388 = vadd.f32 0.0, %v5387
      %v5389 = vpop.f32.mrf.mxu0
      %v5390 = vadd.f32 0.0, %v5389
      %5391 = vmatprep.mubr.bf16.mxu0 0
      %5392 = vmatmul.mubr.bf16.gmra.mxu0 %v4976
      %v5393 = vpop.f32.mrf.mxu0
      %v5394 = vadd.f32 0.0, %v5393
      %v5395 = vpop.f32.mrf.mxu0
      %v5396 = vadd.f32 0.0, %v5395
      %v5397 = vpop.f32.mrf.mxu0
      %v5398 = vadd.f32 0.0, %v5397
      %v5399 = vpop.f32.mrf.mxu0
      %v5400 = vadd.f32 0.0, %v5399
      %5401 = vdwg.mxu0
      %5402 = vst [vmem:[#allocation3] sm:$0xff] %v5013
      %5403 = vst [vmem:[#allocation3 + $0x8] sm:$0xff] %v5015
      %5404 = vst [vmem:[#allocation3 + $0x10] sm:$0xff] %v5066
      %5405 = vst [vmem:[#allocation3 + $0x18] sm:$0xff] %v5068
      %5406 = vst [vmem:[#allocation3 + $0x20] sm:$0xff] %v5119
      %5407 = vst [vmem:[#allocation3 + $0x28] sm:$0xff] %v5121
      %5408 = vst [vmem:[#allocation3 + $0x30] sm:$0xff] %v5172
      %5409 = vst [vmem:[#allocation3 + $0x38] sm:$0xff] %v5174
      %5410 = vst [vmem:[#allocation3 + $0x40] sm:$0xff] %v5225
      %5411 = vst [vmem:[#allocation3 + $0x48] sm:$0xff] %v5227
      %5412 = vst [vmem:[#allocation3 + $0x50] sm:$0xff] %v5278
      %5413 = vst [vmem:[#allocation3 + $0x58] sm:$0xff] %v5280
      %5414 = vst [vmem:[#allocation3 + $0x60] sm:$0xff] %v5331
      %5415 = vst [vmem:[#allocation3 + $0x68] sm:$0xff] %v5333
      %5416 = vst [vmem:[#allocation3 + $0x70] sm:$0xff] %v5384
      %5417 = vst [vmem:[#allocation3 + $0x78] sm:$0xff] %v5386
      %5418 = vst [vmem:[#allocation3 + $0x80] sm:$0xff] %v5017
      %5419 = vst [vmem:[#allocation3 + $0x88] sm:$0xff] %v5019
      %5420 = vst [vmem:[#allocation3 + $0x90] sm:$0xff] %v5070
      %5421 = vst [vmem:[#allocation3 + $0x98] sm:$0xff] %v5072
      %5422 = vst [vmem:[#allocation3 + $0xa0] sm:$0xff] %v5123
      %5423 = vst [vmem:[#allocation3 + $0xa8] sm:$0xff] %v5125
      %5424 = vst [vmem:[#allocation3 + $0xb0] sm:$0xff] %v5176
      %5425 = vst [vmem:[#allocation3 + $0xb8] sm:$0xff] %v5178
      %5426 = vst [vmem:[#allocation3 + $0xc0] sm:$0xff] %v5229
      %5427 = vst [vmem:[#allocation3 + $0xc8] sm:$0xff] %v5231
      %5428 = vst [vmem:[#allocation3 + $0xd0] sm:$0xff] %v5282
      %5429 = vst [vmem:[#allocation3 + $0xd8] sm:$0xff] %v5284
      %5430 = vst [vmem:[#allocation3 + $0xe0] sm:$0xff] %v5335
      %5431 = vst [vmem:[#allocation3 + $0xe8] sm:$0xff] %v5337
      %5432 = vst [vmem:[#allocation3 + $0xf0] sm:$0xff] %v5388
      %5433 = vst [vmem:[#allocation3 + $0xf8] sm:$0xff] %v5390
      %5434 = vst [vmem:[#allocation3 + $0x100] sm:$0xff] %v5023
      %5435 = vst [vmem:[#allocation3 + $0x108] sm:$0xff] %v5025
      %5436 = vst [vmem:[#allocation3 + $0x110] sm:$0xff] %v5076
      %5437 = vst [vmem:[#allocation3 + $0x118] sm:$0xff] %v5078
      %5438 = vst [vmem:[#allocation3 + $0x120] sm:$0xff] %v5129
      %5439 = vst [vmem:[#allocation3 + $0x128] sm:$0xff] %v5131
      %5440 = vst [vmem:[#allocation3 + $0x130] sm:$0xff] %v5182
      %5441 = vst [vmem:[#allocation3 + $0x138] sm:$0xff] %v5184
      %5442 = vst [vmem:[#allocation3 + $0x140] sm:$0xff] %v5235
      %5443 = vst [vmem:[#allocation3 + $0x148] sm:$0xff] %v5237
      %5444 = vst [vmem:[#allocation3 + $0x150] sm:$0xff] %v5288
      %5445 = vst [vmem:[#allocation3 + $0x158] sm:$0xff] %v5290
      %5446 = vst [vmem:[#allocation3 + $0x160] sm:$0xff] %v5341
      %5447 = vst [vmem:[#allocation3 + $0x168] sm:$0xff] %v5343
      %5448 = vst [vmem:[#allocation3 + $0x170] sm:$0xff] %v5394
      %5449 = vst [vmem:[#allocation3 + $0x178] sm:$0xff] %v5396
      %5450 = vst [vmem:[#allocation3 + $0x180] sm:$0x1] %v5027
      %5451 = vst [vmem:[#allocation3 + $0x188] sm:$0x1] %v5029
      %5452 = vst [vmem:[#allocation3 + $0x190] sm:$0x1] %v5080
      %5453 = vst [vmem:[#allocation3 + $0x198] sm:$0x1] %v5082
      %5454 = vst [vmem:[#allocation3 + $0x1a0] sm:$0x1] %v5133
      %5455 = vst [vmem:[#allocation3 + $0x1a8] sm:$0x1] %v5135
      %5456 = vst [vmem:[#allocation3 + $0x1b0] sm:$0x1] %v5186
      %5457 = vst [vmem:[#allocation3 + $0x1b8] sm:$0x1] %v5188
      %5458 = vst [vmem:[#allocation3 + $0x1c0] sm:$0x1] %v5239
      %5459 = vst [vmem:[#allocation3 + $0x1c8] sm:$0x1] %v5241
      %5460 = vst [vmem:[#allocation3 + $0x1d0] sm:$0x1] %v5292
      %5461 = vst [vmem:[#allocation3 + $0x1d8] sm:$0x1] %v5294
      %5462 = vst [vmem:[#allocation3 + $0x1e0] sm:$0x1] %v5345
      %5463 = vst [vmem:[#allocation3 + $0x1e8] sm:$0x1] %v5347
      %5464 = vst [vmem:[#allocation3 + $0x1f0] sm:$0x1] %v5398
      %5465 = vst [vmem:[#allocation3 + $0x1f8] sm:$0x1] %v5400
      %s5466 = sld [smem:[#allocation4]]
      %s5467 = scalar_lea.vmem %s305, 16
      %v5468 = vld [vmem:[%s5467] ss:$8 sm:$0x7]
      %v5469 = vstv %s5466
      %v5470 = vadd.f32 %v5468, %v5469
      %v5471 = vld [vmem:[#allocation3] ss:$8 sm:$0x7]
      %s5472 = scalar_lea.vmem [#allocation3], 1
      %v5473 = vld [vmem:[%s5472] ss:$8 sm:$0xf]
      %s5474 = scalar_lea.vmem [#allocation3], 2
      %v5475 = vld [vmem:[%s5474] ss:$8 sm:$0xf]
      %s5476 = scalar_lea.vmem [#allocation3], 3
      %v5477 = vld [vmem:[%s5476] ss:$8 sm:$0xf]
      %s5478 = scalar_lea.vmem [#allocation3], 4
      %v5479 = vld [vmem:[%s5478] ss:$8 sm:$0xf]
      %s5480 = scalar_lea.vmem [#allocation3], 5
      %v5481 = vld [vmem:[%s5480] ss:$8 sm:$0xf]
      %s5482 = scalar_lea.vmem [#allocation3], 6
      %v5483 = vld [vmem:[%s5482] ss:$8 sm:$0xf]
      %s5484 = scalar_lea.vmem [#allocation3], 7
      %v5485 = vld [vmem:[%s5484] ss:$8 sm:$0xf]
      %s5486 = scalar_lea.vmem [#allocation3], 128
      %v5487 = vld [vmem:[%s5486] ss:$8 sm:$0xf]
      %s5488 = scalar_lea.vmem [#allocation3], 129
      %v5489 = vld [vmem:[%s5488] ss:$8 sm:$0xf]
      %s5490 = scalar_lea.vmem [#allocation3], 130
      %v5491 = vld [vmem:[%s5490] ss:$8 sm:$0xf]
      %s5492 = scalar_lea.vmem [#allocation3], 131
      %v5493 = vld [vmem:[%s5492] ss:$8 sm:$0xf]
      %s5494 = scalar_lea.vmem [#allocation3], 132
      %v5495 = vld [vmem:[%s5494] ss:$8 sm:$0xf]
      %s5496 = scalar_lea.vmem [#allocation3], 133
      %v5497 = vld [vmem:[%s5496] ss:$8 sm:$0xf]
      %s5498 = scalar_lea.vmem [#allocation3], 134
      %v5499 = vld [vmem:[%s5498] ss:$8 sm:$0xf]
      %s5500 = scalar_lea.vmem [#allocation3], 135
      %v5501 = vld [vmem:[%s5500] ss:$8 sm:$0xf]
      %s5502 = scalar_lea.vmem [#allocation3], 256
      %v5503 = vld [vmem:[%s5502] ss:$8 sm:$0xf]
      %s5504 = scalar_lea.vmem [#allocation3], 257
      %v5505 = vld [vmem:[%s5504] ss:$8 sm:$0xf]
      %s5506 = scalar_lea.vmem [#allocation3], 258
      %v5507 = vld [vmem:[%s5506] ss:$8 sm:$0xf]
      %s5508 = scalar_lea.vmem [#allocation3], 259
      %v5509 = vld [vmem:[%s5508] ss:$8 sm:$0xf]
      %s5510 = scalar_lea.vmem [#allocation3], 260
      %v5511 = vld [vmem:[%s5510] ss:$8 sm:$0xf]
      %s5512 = scalar_lea.vmem [#allocation3], 261
      %v5513 = vld [vmem:[%s5512] ss:$8 sm:$0xf]
      %s5514 = scalar_lea.vmem [#allocation3], 262
      %v5515 = vld [vmem:[%s5514] ss:$8 sm:$0xf]
      %s5516 = scalar_lea.vmem [#allocation3], 263
      %v5517 = vld [vmem:[%s5516] ss:$8 sm:$0xf]
      %s5518 = scalar_lea.vmem [#allocation3], 384
      %v5519 = vld [vmem:[%s5518] ss:$8 sm:$0xf]
      %v5520 = vadd.f32 %v5470, %v5471
      %5522 = vrot.lane.b32.xlu0 %v5475, 127
      %v5523 = vpop.permute.xlu0 %5522
      %v5524 = vrot.slane %v5523, 1
      %vm5525 = vcmask 1039360
      %v5526 = vsel %vm5525, %v5523, %v5524
      %v5528 = vadd.f32 %v5473, %v5526
      %5530 = vrot.lane.b32.xlu0 %v5479, 127
      %v5531 = vpop.permute.xlu0 %5530
      %v5532 = vrot.slane %v5531, 1
      %v5533 = vsel %vm5525, %v5531, %v5532
      %v5535 = vadd.f32 %v5477, %v5533
      %5537 = vrot.lane.b32.xlu0 %v5483, 127
      %v5538 = vpop.permute.xlu0 %5537
      %v5539 = vrot.slane %v5538, 1
      %v5540 = vsel %vm5525, %v5538, %v5539
      %v5542 = vadd.f32 %v5481, %v5540
      %5544 = vrot.lane.b32.xlu0 %v5487, 127
      %v5545 = vpop.permute.xlu0 %5544
      %v5546 = vrot.slane %v5545, 1
      %v5547 = vsel %vm5525, %v5545, %v5546
      %v5549 = vadd.f32 %v5485, %v5547
      %5551 = vrot.lane.b32.xlu0 %v5491, 108
      %v5552 = vpop.permute.xlu0 %5551
      %v5553 = vrot.slane %v5552, 1
      %vm5554 = vcmask 883712
      %v5555 = vsel %vm5554, %v5552, %v5553
      %v5557 = vadd.f32 %v5489, %v5555
      %5559 = vrot.lane.b32.xlu0 %v5495, 127
      %v5560 = vpop.permute.xlu0 %5559
      %v5561 = vrot.slane %v5560, 1
      %v5562 = vsel %vm5525, %v5560, %v5561
      %v5564 = vadd.f32 %v5493, %v5562
      %5566 = vrot.lane.b32.xlu0 %v5499, 127
      %v5567 = vpop.permute.xlu0 %5566
      %v5568 = vrot.slane %v5567, 1
      %v5569 = vsel %vm5525, %v5567, %v5568
      %v5571 = vadd.f32 %v5497, %v5569
      %5573 = vrot.lane.b32.xlu0 %v5503, 127
      %v5574 = vpop.permute.xlu0 %5573
      %v5575 = vrot.slane %v5574, 1
      %v5576 = vsel %vm5525, %v5574, %v5575
      %v5578 = vadd.f32 %v5501, %v5576
      %5580 = vrot.lane.b32.xlu0 %v5507, 127
      %v5581 = vpop.permute.xlu0 %5580
      %v5582 = vrot.slane %v5581, 1
      %v5583 = vsel %vm5525, %v5581, %v5582
      %v5585 = vadd.f32 %v5505, %v5583
      %5587 = vrot.lane.b32.xlu0 %v5511, 108
      %v5588 = vpop.permute.xlu0 %5587
      %v5589 = vrot.slane %v5588, 1
      %v5590 = vsel %vm5554, %v5588, %v5589
      %v5592 = vadd.f32 %v5509, %v5590
      %5594 = vrot.lane.b32.xlu0 %v5515, 127
      %v5595 = vpop.permute.xlu0 %5594
      %v5596 = vrot.slane %v5595, 1
      %v5597 = vsel %vm5525, %v5595, %v5596
      %v5599 = vadd.f32 %v5513, %v5597
      %5601 = vrot.lane.b32.xlu0 %v5519, 127
      %v5602 = vpop.permute.xlu0 %5601
      %v5603 = vrot.slane %v5602, 1
      %v5604 = vsel %vm5525, %v5602, %v5603
      %v5606 = vadd.f32 %v5517, %v5604
      %5608 = vrot.lane.b32.xlu0 %v5528, 127
      %v5609 = vpop.permute.xlu0 %5608
      %v5610 = vrot.slane %v5609, 1
      %v5611 = vsel %vm5525, %v5609, %v5610
      %v5613 = vadd.f32 %v5520, %v5611
      %5615 = vrot.lane.b32.xlu0 %v5542, 107
      %v5616 = vpop.permute.xlu0 %5615
      %v5617 = vrot.slane %v5616, 1
      %vm5618 = vcmask 875520
      %v5619 = vsel %vm5618, %v5616, %v5617
      %v5621 = vadd.f32 %v5535, %v5619
      %5623 = vrot.lane.b32.xlu0 %v5557, 126
      %v5624 = vpop.permute.xlu0 %5623
      %v5625 = vrot.slane %v5624, 1
      %vm5626 = vcmask 1031168
      %v5627 = vsel %vm5626, %v5624, %v5625
      %v5629 = vadd.f32 %v5549, %v5627
      %5631 = vrot.lane.b32.xlu0 %v5571, 126
      %v5632 = vpop.permute.xlu0 %5631
      %v5633 = vrot.slane %v5632, 1
      %v5634 = vsel %vm5626, %v5632, %v5633
      %v5636 = vadd.f32 %v5564, %v5634
      %5638 = vrot.lane.b32.xlu0 %v5585, 126
      %v5639 = vpop.permute.xlu0 %5638
      %v5640 = vrot.slane %v5639, 1
      %v5641 = vsel %vm5626, %v5639, %v5640
      %v5643 = vadd.f32 %v5578, %v5641
      %5645 = vrot.lane.b32.xlu0 %v5599, 107
      %v5646 = vpop.permute.xlu0 %5645
      %v5647 = vrot.slane %v5646, 1
      %v5648 = vsel %vm5618, %v5646, %v5647
      %v5650 = vadd.f32 %v5592, %v5648
      %5652 = vrot.lane.b32.xlu0 %v5621, 125
      %v5653 = vpop.permute.xlu0 %5652
      %v5654 = vrot.slane %v5653, 1
      %vm5655 = vcmask 1022976
      %v5656 = vsel %vm5655, %v5653, %v5654
      %v5658 = vadd.f32 %v5613, %v5656
      %5660 = vrot.lane.b32.xlu0 %v5636, 105
      %v5661 = vpop.permute.xlu0 %5660
      %v5662 = vrot.slane %v5661, 1
      %vm5663 = vcmask 859136
      %v5664 = vsel %vm5663, %v5661, %v5662
      %v5666 = vadd.f32 %v5629, %v5664
      %5668 = vrot.lane.b32.xlu0 %v5650, 124
      %v5669 = vpop.permute.xlu0 %5668
      %v5670 = vrot.slane %v5669, 1
      %vm5671 = vcmask 1014784
      %v5672 = vsel %vm5671, %v5669, %v5670
      %v5674 = vadd.f32 %v5643, %v5672
      %5676 = vrot.lane.b32.xlu0 %v5666, 102
      %v5677 = vpop.permute.xlu0 %5676
      %v5678 = vrot.slane %v5677, 1
      %vm5679 = vcmask 834560
      %v5680 = vsel %vm5679, %v5677, %v5678
      %v5682 = vadd.f32 %v5658, %v5680
      %5684 = vrot.lane.b32.xlu0 %v5606, 101
      %v5685 = vpop.permute.xlu0 %5684
      %v5686 = vrot.slane %v5685, 1
      %vm5687 = vcmask 826368
      %v5688 = vsel %vm5687, %v5685, %v5686
      %v5690 = vadd.f32 %v5674, %v5688
      %5692 = vrot.lane.b32.xlu0 %v5690, 56
      %v5693 = vpop.permute.xlu0 %5692
      %v5694 = vrot.slane %v5693, 1
      %vm5695 = vcmask 457728
      %v5696 = vsel %vm5695, %v5693, %v5694
      %v5698 = vadd.f32 %v5682, %v5696
      %v5699 = vlaneseq
      %vm5700 = vcmp.ge.s32.totalorder %v5699, 0
      %vm5701 = vcmp.lt.s32.totalorder %v5699, 384
      %vm5702 = vmand %vm5700, %vm5701
      %5703 = vst.msk [vmem:[%s311] sm:$0x7] %vm5702, %v5698
      %s5704 = scalar_lea.vmem %s1011, 16
      %v5705 = vld [vmem:[%s5704] ss:$8 sm:$0x7]
      %v5706 = vadd.f32 %v5705, %v5469
      %s5707 = scalar_lea.vmem [#allocation3], 32
      %v5708 = vld [vmem:[%s5707] ss:$8 sm:$0x7]
      %s5709 = scalar_lea.vmem [#allocation3], 33
      %v5710 = vld [vmem:[%s5709] ss:$8 sm:$0xf]
      %s5711 = scalar_lea.vmem [#allocation3], 34
      %v5712 = vld [vmem:[%s5711] ss:$8 sm:$0xf]
      %s5713 = scalar_lea.vmem [#allocation3], 35
      %v5714 = vld [vmem:[%s5713] ss:$8 sm:$0xf]
      %s5715 = scalar_lea.vmem [#allocation3], 36
      %v5716 = vld [vmem:[%s5715] ss:$8 sm:$0xf]
      %s5717 = scalar_lea.vmem [#allocation3], 37
      %v5718 = vld [vmem:[%s5717] ss:$8 sm:$0xf]
      %s5719 = scalar_lea.vmem [#allocation3], 38
      %v5720 = vld [vmem:[%s5719] ss:$8 sm:$0xf]
      %s5721 = scalar_lea.vmem [#allocation3], 39
      %v5722 = vld [vmem:[%s5721] ss:$8 sm:$0xf]
      %s5723 = scalar_lea.vmem [#allocation3], 160
      %v5724 = vld [vmem:[%s5723] ss:$8 sm:$0xf]
      %s5725 = scalar_lea.vmem [#allocation3], 161
      %v5726 = vld [vmem:[%s5725] ss:$8 sm:$0xf]
      %s5727 = scalar_lea.vmem [#allocation3], 162
      %v5728 = vld [vmem:[%s5727] ss:$8 sm:$0xf]
      %s5729 = scalar_lea.vmem [#allocation3], 163
      %v5730 = vld [vmem:[%s5729] ss:$8 sm:$0xf]
      %s5731 = scalar_lea.vmem [#allocation3], 164
      %v5732 = vld [vmem:[%s5731] ss:$8 sm:$0xf]
      %s5733 = scalar_lea.vmem [#allocation3], 165
      %v5734 = vld [vmem:[%s5733] ss:$8 sm:$0xf]
      %s5735 = scalar_lea.vmem [#allocation3], 166
      %v5736 = vld [vmem:[%s5735] ss:$8 sm:$0xf]
      %s5737 = scalar_lea.vmem [#allocation3], 167
      %v5738 = vld [vmem:[%s5737] ss:$8 sm:$0xf]
      %s5739 = scalar_lea.vmem [#allocation3], 288
      %v5740 = vld [vmem:[%s5739] ss:$8 sm:$0xf]
      %s5741 = scalar_lea.vmem [#allocation3], 289
      %v5742 = vld [vmem:[%s5741] ss:$8 sm:$0xf]
      %s5743 = scalar_lea.vmem [#allocation3], 290
      %v5744 = vld [vmem:[%s5743] ss:$8 sm:$0xf]
      %s5745 = scalar_lea.vmem [#allocation3], 291
      %v5746 = vld [vmem:[%s5745] ss:$8 sm:$0xf]
      %s5747 = scalar_lea.vmem [#allocation3], 292
      %v5748 = vld [vmem:[%s5747] ss:$8 sm:$0xf]
      %s5749 = scalar_lea.vmem [#allocation3], 293
      %v5750 = vld [vmem:[%s5749] ss:$8 sm:$0xf]
      %s5751 = scalar_lea.vmem [#allocation3], 294
      %v5752 = vld [vmem:[%s5751] ss:$8 sm:$0xf]
      %s5753 = scalar_lea.vmem [#allocation3], 295
      %v5754 = vld [vmem:[%s5753] ss:$8 sm:$0xf]
      %s5755 = scalar_lea.vmem [#allocation3], 416
      %v5756 = vld [vmem:[%s5755] ss:$8 sm:$0xf]
      %v5757 = vadd.f32 %v5706, %v5708
      %5759 = vrot.lane.b32.xlu0 %v5712, 127
      %v5760 = vpop.permute.xlu0 %5759
      %v5761 = vrot.slane %v5760, 1
      %v5762 = vsel %vm5525, %v5760, %v5761
      %v5764 = vadd.f32 %v5710, %v5762
      %5766 = vrot.lane.b32.xlu0 %v5716, 127
      %v5767 = vpop.permute.xlu0 %5766
      %v5768 = vrot.slane %v5767, 1
      %v5769 = vsel %vm5525, %v5767, %v5768
      %v5771 = vadd.f32 %v5714, %v5769
      %5773 = vrot.lane.b32.xlu0 %v5720, 127
      %v5774 = vpop.permute.xlu0 %5773
      %v5775 = vrot.slane %v5774, 1
      %v5776 = vsel %vm5525, %v5774, %v5775
      %v5778 = vadd.f32 %v5718, %v5776
      %5780 = vrot.lane.b32.xlu0 %v5724, 127
      %v5781 = vpop.permute.xlu0 %5780
      %v5782 = vrot.slane %v5781, 1
      %v5783 = vsel %vm5525, %v5781, %v5782
      %v5785 = vadd.f32 %v5722, %v5783
      %5787 = vrot.lane.b32.xlu0 %v5728, 108
      %v5788 = vpop.permute.xlu0 %5787
      %v5789 = vrot.slane %v5788, 1
      %v5790 = vsel %vm5554, %v5788, %v5789
      %v5792 = vadd.f32 %v5726, %v5790
      %5794 = vrot.lane.b32.xlu0 %v5732, 127
      %v5795 = vpop.permute.xlu0 %5794
      %v5796 = vrot.slane %v5795, 1
      %v5797 = vsel %vm5525, %v5795, %v5796
      %v5799 = vadd.f32 %v5730, %v5797
      %5801 = vrot.lane.b32.xlu0 %v5736, 127
      %v5802 = vpop.permute.xlu0 %5801
      %v5803 = vrot.slane %v5802, 1
      %v5804 = vsel %vm5525, %v5802, %v5803
      %v5806 = vadd.f32 %v5734, %v5804
      %5808 = vrot.lane.b32.xlu0 %v5740, 127
      %v5809 = vpop.permute.xlu0 %5808
      %v5810 = vrot.slane %v5809, 1
      %v5811 = vsel %vm5525, %v5809, %v5810
      %v5813 = vadd.f32 %v5738, %v5811
      %5815 = vrot.lane.b32.xlu0 %v5744, 127
      %v5816 = vpop.permute.xlu0 %5815
      %v5817 = vrot.slane %v5816, 1
      %v5818 = vsel %vm5525, %v5816, %v5817
      %v5820 = vadd.f32 %v5742, %v5818
      %5822 = vrot.lane.b32.xlu0 %v5748, 108
      %v5823 = vpop.permute.xlu0 %5822
      %v5824 = vrot.slane %v5823, 1
      %v5825 = vsel %vm5554, %v5823, %v5824
      %v5827 = vadd.f32 %v5746, %v5825
      %5829 = vrot.lane.b32.xlu0 %v5752, 127
      %v5830 = vpop.permute.xlu0 %5829
      %v5831 = vrot.slane %v5830, 1
      %v5832 = vsel %vm5525, %v5830, %v5831
      %v5834 = vadd.f32 %v5750, %v5832
      %5836 = vrot.lane.b32.xlu0 %v5756, 127
      %v5837 = vpop.permute.xlu0 %5836
      %v5838 = vrot.slane %v5837, 1
      %v5839 = vsel %vm5525, %v5837, %v5838
      %v5841 = vadd.f32 %v5754, %v5839
      %5843 = vrot.lane.b32.xlu0 %v5764, 127
      %v5844 = vpop.permute.xlu0 %5843
      %v5845 = vrot.slane %v5844, 1
      %v5846 = vsel %vm5525, %v5844, %v5845
      %v5848 = vadd.f32 %v5757, %v5846
      %5850 = vrot.lane.b32.xlu0 %v5778, 107
      %v5851 = vpop.permute.xlu0 %5850
      %v5852 = vrot.slane %v5851, 1
      %v5853 = vsel %vm5618, %v5851, %v5852
      %v5855 = vadd.f32 %v5771, %v5853
      %5857 = vrot.lane.b32.xlu0 %v5792, 126
      %v5858 = vpop.permute.xlu0 %5857
      %v5859 = vrot.slane %v5858, 1
      %v5860 = vsel %vm5626, %v5858, %v5859
      %v5862 = vadd.f32 %v5785, %v5860
      %5864 = vrot.lane.b32.xlu0 %v5806, 126
      %v5865 = vpop.permute.xlu0 %5864
      %v5866 = vrot.slane %v5865, 1
      %v5867 = vsel %vm5626, %v5865, %v5866
      %v5869 = vadd.f32 %v5799, %v5867
      %5871 = vrot.lane.b32.xlu0 %v5820, 126
      %v5872 = vpop.permute.xlu0 %5871
      %v5873 = vrot.slane %v5872, 1
      %v5874 = vsel %vm5626, %v5872, %v5873
      %v5876 = vadd.f32 %v5813, %v5874
      %5878 = vrot.lane.b32.xlu0 %v5834, 107
      %v5879 = vpop.permute.xlu0 %5878
      %v5880 = vrot.slane %v5879, 1
      %v5881 = vsel %vm5618, %v5879, %v5880
      %v5883 = vadd.f32 %v5827, %v5881
      %5885 = vrot.lane.b32.xlu0 %v5855, 125
      %v5886 = vpop.permute.xlu0 %5885
      %v5887 = vrot.slane %v5886, 1
      %v5888 = vsel %vm5655, %v5886, %v5887
      %v5890 = vadd.f32 %v5848, %v5888
      %5892 = vrot.lane.b32.xlu0 %v5869, 105
      %v5893 = vpop.permute.xlu0 %5892
      %v5894 = vrot.slane %v5893, 1
      %v5895 = vsel %vm5663, %v5893, %v5894
      %v5897 = vadd.f32 %v5862, %v5895
      %5899 = vrot.lane.b32.xlu0 %v5883, 124
      %v5900 = vpop.permute.xlu0 %5899
      %v5901 = vrot.slane %v5900, 1
      %v5902 = vsel %vm5671, %v5900, %v5901
      %v5904 = vadd.f32 %v5876, %v5902
      %5906 = vrot.lane.b32.xlu0 %v5897, 102
      %v5907 = vpop.permute.xlu0 %5906
      %v5908 = vrot.slane %v5907, 1
      %v5909 = vsel %vm5679, %v5907, %v5908
      %v5911 = vadd.f32 %v5890, %v5909
      %5913 = vrot.lane.b32.xlu0 %v5841, 101
      %v5914 = vpop.permute.xlu0 %5913
      %v5915 = vrot.slane %v5914, 1
      %v5916 = vsel %vm5687, %v5914, %v5915
      %v5918 = vadd.f32 %v5904, %v5916
      %5920 = vrot.lane.b32.xlu0 %v5918, 56
      %v5921 = vpop.permute.xlu0 %5920
      %v5922 = vrot.slane %v5921, 1
      %v5923 = vsel %vm5695, %v5921, %v5922
      %v5925 = vadd.f32 %v5911, %v5923
      %s5926 = scalar_lea.vmem %s311, 3
      %5927 = vst.msk [vmem:[%s5926] sm:$0x7] %vm5702, %v5925
      %s5928 = scalar_lea.vmem %s1693, 16
      %v5929 = vld [vmem:[%s5928] ss:$8 sm:$0x7]
      %v5930 = vadd.f32 %v5929, %v5469
      %s5931 = scalar_lea.vmem [#allocation3], 64
      %v5932 = vld [vmem:[%s5931] ss:$8 sm:$0x7]
      %s5933 = scalar_lea.vmem [#allocation3], 65
      %v5934 = vld [vmem:[%s5933] ss:$8 sm:$0xf]
      %s5935 = scalar_lea.vmem [#allocation3], 66
      %v5936 = vld [vmem:[%s5935] ss:$8 sm:$0xf]
      %s5937 = scalar_lea.vmem [#allocation3], 67
      %v5938 = vld [vmem:[%s5937] ss:$8 sm:$0xf]
      %s5939 = scalar_lea.vmem [#allocation3], 68
      %v5940 = vld [vmem:[%s5939] ss:$8 sm:$0xf]
      %s5941 = scalar_lea.vmem [#allocation3], 69
      %v5942 = vld [vmem:[%s5941] ss:$8 sm:$0xf]
      %s5943 = scalar_lea.vmem [#allocation3], 70
      %v5944 = vld [vmem:[%s5943] ss:$8 sm:$0xf]
      %s5945 = scalar_lea.vmem [#allocation3], 71
      %v5946 = vld [vmem:[%s5945] ss:$8 sm:$0xf]
      %s5947 = scalar_lea.vmem [#allocation3], 192
      %v5948 = vld [vmem:[%s5947] ss:$8 sm:$0xf]
      %s5949 = scalar_lea.vmem [#allocation3], 193
      %v5950 = vld [vmem:[%s5949] ss:$8 sm:$0xf]
      %s5951 = scalar_lea.vmem [#allocation3], 194
      %v5952 = vld [vmem:[%s5951] ss:$8 sm:$0xf]
      %s5953 = scalar_lea.vmem [#allocation3], 195
      %v5954 = vld [vmem:[%s5953] ss:$8 sm:$0xf]
      %s5955 = scalar_lea.vmem [#allocation3], 196
      %v5956 = vld [vmem:[%s5955] ss:$8 sm:$0xf]
      %s5957 = scalar_lea.vmem [#allocation3], 197
      %v5958 = vld [vmem:[%s5957] ss:$8 sm:$0xf]
      %s5959 = scalar_lea.vmem [#allocation3], 198
      %v5960 = vld [vmem:[%s5959] ss:$8 sm:$0xf]
      %s5961 = scalar_lea.vmem [#allocation3], 199
      %v5962 = vld [vmem:[%s5961] ss:$8 sm:$0xf]
      %s5963 = scalar_lea.vmem [#allocation3], 320
      %v5964 = vld [vmem:[%s5963] ss:$8 sm:$0xf]
      %s5965 = scalar_lea.vmem [#allocation3], 321
      %v5966 = vld [vmem:[%s5965] ss:$8 sm:$0xf]
      %s5967 = scalar_lea.vmem [#allocation3], 322
      %v5968 = vld [vmem:[%s5967] ss:$8 sm:$0xf]
      %s5969 = scalar_lea.vmem [#allocation3], 323
      %v5970 = vld [vmem:[%s5969] ss:$8 sm:$0xf]
      %s5971 = scalar_lea.vmem [#allocation3], 324
      %v5972 = vld [vmem:[%s5971] ss:$8 sm:$0xf]
      %s5973 = scalar_lea.vmem [#allocation3], 325
      %v5974 = vld [vmem:[%s5973] ss:$8 sm:$0xf]
      %s5975 = scalar_lea.vmem [#allocation3], 326
      %v5976 = vld [vmem:[%s5975] ss:$8 sm:$0xf]
      %s5977 = scalar_lea.vmem [#allocation3], 327
      %v5978 = vld [vmem:[%s5977] ss:$8 sm:$0xf]
      %s5979 = scalar_lea.vmem [#allocation3], 448
      %v5980 = vld [vmem:[%s5979] ss:$8 sm:$0xf]
      %v5981 = vadd.f32 %v5930, %v5932
      %5983 = vrot.lane.b32.xlu0 %v5936, 127
      %v5984 = vpop.permute.xlu0 %5983
      %v5985 = vrot.slane %v5984, 1
      %v5986 = vsel %vm5525, %v5984, %v5985
      %v5988 = vadd.f32 %v5934, %v5986
      %5990 = vrot.lane.b32.xlu0 %v5940, 127
      %v5991 = vpop.permute.xlu0 %5990
      %v5992 = vrot.slane %v5991, 1
      %v5993 = vsel %vm5525, %v5991, %v5992
      %v5995 = vadd.f32 %v5938, %v5993
      %5997 = vrot.lane.b32.xlu0 %v5944, 127
      %v5998 = vpop.permute.xlu0 %5997
      %v5999 = vrot.slane %v5998, 1
      %v6000 = vsel %vm5525, %v5998, %v5999
      %v6002 = vadd.f32 %v5942, %v6000
      %6004 = vrot.lane.b32.xlu0 %v5948, 127
      %v6005 = vpop.permute.xlu0 %6004
      %v6006 = vrot.slane %v6005, 1
      %v6007 = vsel %vm5525, %v6005, %v6006
      %v6009 = vadd.f32 %v5946, %v6007
      %6011 = vrot.lane.b32.xlu0 %v5952, 108
      %v6012 = vpop.permute.xlu0 %6011
      %v6013 = vrot.slane %v6012, 1
      %v6014 = vsel %vm5554, %v6012, %v6013
      %v6016 = vadd.f32 %v5950, %v6014
      %6018 = vrot.lane.b32.xlu0 %v5956, 127
      %v6019 = vpop.permute.xlu0 %6018
      %v6020 = vrot.slane %v6019, 1
      %v6021 = vsel %vm5525, %v6019, %v6020
      %v6023 = vadd.f32 %v5954, %v6021
      %6025 = vrot.lane.b32.xlu0 %v5960, 127
      %v6026 = vpop.permute.xlu0 %6025
      %v6027 = vrot.slane %v6026, 1
      %v6028 = vsel %vm5525, %v6026, %v6027
      %v6030 = vadd.f32 %v5958, %v6028
      %6032 = vrot.lane.b32.xlu0 %v5964, 127
      %v6033 = vpop.permute.xlu0 %6032
      %v6034 = vrot.slane %v6033, 1
      %v6035 = vsel %vm5525, %v6033, %v6034
      %v6037 = vadd.f32 %v5962, %v6035
      %6039 = vrot.lane.b32.xlu0 %v5968, 127
      %v6040 = vpop.permute.xlu0 %6039
      %v6041 = vrot.slane %v6040, 1
      %v6042 = vsel %vm5525, %v6040, %v6041
      %v6044 = vadd.f32 %v5966, %v6042
      %6046 = vrot.lane.b32.xlu0 %v5972, 108
      %v6047 = vpop.permute.xlu0 %6046
      %v6048 = vrot.slane %v6047, 1
      %v6049 = vsel %vm5554, %v6047, %v6048
      %v6051 = vadd.f32 %v5970, %v6049
      %6053 = vrot.lane.b32.xlu0 %v5976, 127
      %v6054 = vpop.permute.xlu0 %6053
      %v6055 = vrot.slane %v6054, 1
      %v6056 = vsel %vm5525, %v6054, %v6055
      %v6058 = vadd.f32 %v5974, %v6056
      %6060 = vrot.lane.b32.xlu0 %v5980, 127
      %v6061 = vpop.permute.xlu0 %6060
      %v6062 = vrot.slane %v6061, 1
      %v6063 = vsel %vm5525, %v6061, %v6062
      %v6065 = vadd.f32 %v5978, %v6063
      %6067 = vrot.lane.b32.xlu0 %v5988, 127
      %v6068 = vpop.permute.xlu0 %6067
      %v6069 = vrot.slane %v6068, 1
      %v6070 = vsel %vm5525, %v6068, %v6069
      %v6072 = vadd.f32 %v5981, %v6070
      %6074 = vrot.lane.b32.xlu0 %v6002, 107
      %v6075 = vpop.permute.xlu0 %6074
      %v6076 = vrot.slane %v6075, 1
      %v6077 = vsel %vm5618, %v6075, %v6076
      %v6079 = vadd.f32 %v5995, %v6077
      %6081 = vrot.lane.b32.xlu0 %v6016, 126
      %v6082 = vpop.permute.xlu0 %6081
      %v6083 = vrot.slane %v6082, 1
      %v6084 = vsel %vm5626, %v6082, %v6083
      %v6086 = vadd.f32 %v6009, %v6084
      %6088 = vrot.lane.b32.xlu0 %v6030, 126
      %v6089 = vpop.permute.xlu0 %6088
      %v6090 = vrot.slane %v6089, 1
      %v6091 = vsel %vm5626, %v6089, %v6090
      %v6093 = vadd.f32 %v6023, %v6091
      %6095 = vrot.lane.b32.xlu0 %v6044, 126
      %v6096 = vpop.permute.xlu0 %6095
      %v6097 = vrot.slane %v6096, 1
      %v6098 = vsel %vm5626, %v6096, %v6097
      %v6100 = vadd.f32 %v6037, %v6098
      %6102 = vrot.lane.b32.xlu0 %v6058, 107
      %v6103 = vpop.permute.xlu0 %6102
      %v6104 = vrot.slane %v6103, 1
      %v6105 = vsel %vm5618, %v6103, %v6104
      %v6107 = vadd.f32 %v6051, %v6105
      %6109 = vrot.lane.b32.xlu0 %v6079, 125
      %v6110 = vpop.permute.xlu0 %6109
      %v6111 = vrot.slane %v6110, 1
      %v6112 = vsel %vm5655, %v6110, %v6111
      %v6114 = vadd.f32 %v6072, %v6112
      %6116 = vrot.lane.b32.xlu0 %v6093, 105
      %v6117 = vpop.permute.xlu0 %6116
      %v6118 = vrot.slane %v6117, 1
      %v6119 = vsel %vm5663, %v6117, %v6118
      %v6121 = vadd.f32 %v6086, %v6119
      %6123 = vrot.lane.b32.xlu0 %v6107, 124
      %v6124 = vpop.permute.xlu0 %6123
      %v6125 = vrot.slane %v6124, 1
      %v6126 = vsel %vm5671, %v6124, %v6125
      %v6128 = vadd.f32 %v6100, %v6126
      %6130 = vrot.lane.b32.xlu0 %v6121, 102
      %v6131 = vpop.permute.xlu0 %6130
      %v6132 = vrot.slane %v6131, 1
      %v6133 = vsel %vm5679, %v6131, %v6132
      %v6135 = vadd.f32 %v6114, %v6133
      %6137 = vrot.lane.b32.xlu0 %v6065, 101
      %v6138 = vpop.permute.xlu0 %6137
      %v6139 = vrot.slane %v6138, 1
      %v6140 = vsel %vm5687, %v6138, %v6139
      %v6142 = vadd.f32 %v6128, %v6140
      %6144 = vrot.lane.b32.xlu0 %v6142, 56
      %v6145 = vpop.permute.xlu0 %6144
      %v6146 = vrot.slane %v6145, 1
      %v6147 = vsel %vm5695, %v6145, %v6146
      %v6149 = vadd.f32 %v6135, %v6147
      %s6150 = scalar_lea.vmem %s311, 6
      %6151 = vst.msk [vmem:[%s6150] sm:$0x7] %vm5702, %v6149
      %s6152 = scalar_lea.vmem %s2375, 16
      %v6153 = vld [vmem:[%s6152] ss:$8 sm:$0x7]
      %v6154 = vadd.f32 %v6153, %v5469
      %s6155 = scalar_lea.vmem [#allocation3], 96
      %v6156 = vld [vmem:[%s6155] ss:$8 sm:$0x7]
      %s6157 = scalar_lea.vmem [#allocation3], 97
      %v6158 = vld [vmem:[%s6157] ss:$8 sm:$0xf]
      %s6159 = scalar_lea.vmem [#allocation3], 98
      %v6160 = vld [vmem:[%s6159] ss:$8 sm:$0xf]
      %s6161 = scalar_lea.vmem [#allocation3], 99
      %v6162 = vld [vmem:[%s6161] ss:$8 sm:$0xf]
      %s6163 = scalar_lea.vmem [#allocation3], 100
      %v6164 = vld [vmem:[%s6163] ss:$8 sm:$0xf]
      %s6165 = scalar_lea.vmem [#allocation3], 101
      %v6166 = vld [vmem:[%s6165] ss:$8 sm:$0xf]
      %s6167 = scalar_lea.vmem [#allocation3], 102
      %v6168 = vld [vmem:[%s6167] ss:$8 sm:$0xf]
      %s6169 = scalar_lea.vmem [#allocation3], 103
      %v6170 = vld [vmem:[%s6169] ss:$8 sm:$0xf]
      %s6171 = scalar_lea.vmem [#allocation3], 224
      %v6172 = vld [vmem:[%s6171] ss:$8 sm:$0xf]
      %s6173 = scalar_lea.vmem [#allocation3], 225
      %v6174 = vld [vmem:[%s6173] ss:$8 sm:$0xf]
      %s6175 = scalar_lea.vmem [#allocation3], 226
      %v6176 = vld [vmem:[%s6175] ss:$8 sm:$0xf]
      %s6177 = scalar_lea.vmem [#allocation3], 227
      %v6178 = vld [vmem:[%s6177] ss:$8 sm:$0xf]
      %s6179 = scalar_lea.vmem [#allocation3], 228
      %v6180 = vld [vmem:[%s6179] ss:$8 sm:$0xf]
      %s6181 = scalar_lea.vmem [#allocation3], 229
      %v6182 = vld [vmem:[%s6181] ss:$8 sm:$0xf]
      %s6183 = scalar_lea.vmem [#allocation3], 230
      %v6184 = vld [vmem:[%s6183] ss:$8 sm:$0xf]
      %s6185 = scalar_lea.vmem [#allocation3], 231
      %v6186 = vld [vmem:[%s6185] ss:$8 sm:$0xf]
      %s6187 = scalar_lea.vmem [#allocation3], 352
      %v6188 = vld [vmem:[%s6187] ss:$8 sm:$0xf]
      %s6189 = scalar_lea.vmem [#allocation3], 353
      %v6190 = vld [vmem:[%s6189] ss:$8 sm:$0xf]
      %s6191 = scalar_lea.vmem [#allocation3], 354
      %v6192 = vld [vmem:[%s6191] ss:$8 sm:$0xf]
      %s6193 = scalar_lea.vmem [#allocation3], 355
      %v6194 = vld [vmem:[%s6193] ss:$8 sm:$0xf]
      %s6195 = scalar_lea.vmem [#allocation3], 356
      %v6196 = vld [vmem:[%s6195] ss:$8 sm:$0xf]
      %s6197 = scalar_lea.vmem [#allocation3], 357
      %v6198 = vld [vmem:[%s6197] ss:$8 sm:$0xf]
      %s6199 = scalar_lea.vmem [#allocation3], 358
      %v6200 = vld [vmem:[%s6199] ss:$8 sm:$0xf]
      %s6201 = scalar_lea.vmem [#allocation3], 359
      %v6202 = vld [vmem:[%s6201] ss:$8 sm:$0xf]
      %s6203 = scalar_lea.vmem [#allocation3], 480
      %v6204 = vld [vmem:[%s6203] ss:$8 sm:$0xf]
      %v6205 = vadd.f32 %v6154, %v6156
      %6207 = vrot.lane.b32.xlu0 %v6160, 127
      %v6208 = vpop.permute.xlu0 %6207
      %v6209 = vrot.slane %v6208, 1
      %v6210 = vsel %vm5525, %v6208, %v6209
      %v6212 = vadd.f32 %v6158, %v6210
      %6214 = vrot.lane.b32.xlu0 %v6164, 127
      %v6215 = vpop.permute.xlu0 %6214
      %v6216 = vrot.slane %v6215, 1
      %v6217 = vsel %vm5525, %v6215, %v6216
      %v6219 = vadd.f32 %v6162, %v6217
      %6221 = vrot.lane.b32.xlu0 %v6168, 127
      %v6222 = vpop.permute.xlu0 %6221
      %v6223 = vrot.slane %v6222, 1
      %v6224 = vsel %vm5525, %v6222, %v6223
      %v6226 = vadd.f32 %v6166, %v6224
      %6228 = vrot.lane.b32.xlu0 %v6172, 127
      %v6229 = vpop.permute.xlu0 %6228
      %v6230 = vrot.slane %v6229, 1
      %v6231 = vsel %vm5525, %v6229, %v6230
      %v6233 = vadd.f32 %v6170, %v6231
      %6235 = vrot.lane.b32.xlu0 %v6176, 108
      %v6236 = vpop.permute.xlu0 %6235
      %v6237 = vrot.slane %v6236, 1
      %v6238 = vsel %vm5554, %v6236, %v6237
      %v6240 = vadd.f32 %v6174, %v6238
      %6242 = vrot.lane.b32.xlu0 %v6180, 127
      %v6243 = vpop.permute.xlu0 %6242
      %v6244 = vrot.slane %v6243, 1
      %v6245 = vsel %vm5525, %v6243, %v6244
      %v6247 = vadd.f32 %v6178, %v6245
      %6249 = vrot.lane.b32.xlu0 %v6184, 127
      %v6250 = vpop.permute.xlu0 %6249
      %v6251 = vrot.slane %v6250, 1
      %v6252 = vsel %vm5525, %v6250, %v6251
      %v6254 = vadd.f32 %v6182, %v6252
      %6256 = vrot.lane.b32.xlu0 %v6188, 127
      %v6257 = vpop.permute.xlu0 %6256
      %v6258 = vrot.slane %v6257, 1
      %v6259 = vsel %vm5525, %v6257, %v6258
      %v6261 = vadd.f32 %v6186, %v6259
      %6263 = vrot.lane.b32.xlu0 %v6192, 127
      %v6264 = vpop.permute.xlu0 %6263
      %v6265 = vrot.slane %v6264, 1
      %v6266 = vsel %vm5525, %v6264, %v6265
      %v6268 = vadd.f32 %v6190, %v6266
      %6270 = vrot.lane.b32.xlu0 %v6196, 108
      %v6271 = vpop.permute.xlu0 %6270
      %v6272 = vrot.slane %v6271, 1
      %v6273 = vsel %vm5554, %v6271, %v6272
      %v6275 = vadd.f32 %v6194, %v6273
      %6277 = vrot.lane.b32.xlu0 %v6200, 127
      %v6278 = vpop.permute.xlu0 %6277
      %v6279 = vrot.slane %v6278, 1
      %v6280 = vsel %vm5525, %v6278, %v6279
      %v6282 = vadd.f32 %v6198, %v6280
      %6284 = vrot.lane.b32.xlu0 %v6204, 127
      %v6285 = vpop.permute.xlu0 %6284
      %v6286 = vrot.slane %v6285, 1
      %v6287 = vsel %vm5525, %v6285, %v6286
      %v6289 = vadd.f32 %v6202, %v6287
      %6291 = vrot.lane.b32.xlu0 %v6212, 127
      %v6292 = vpop.permute.xlu0 %6291
      %v6293 = vrot.slane %v6292, 1
      %v6294 = vsel %vm5525, %v6292, %v6293
      %v6296 = vadd.f32 %v6205, %v6294
      %6298 = vrot.lane.b32.xlu0 %v6226, 107
      %v6299 = vpop.permute.xlu0 %6298
      %v6300 = vrot.slane %v6299, 1
      %v6301 = vsel %vm5618, %v6299, %v6300
      %v6303 = vadd.f32 %v6219, %v6301
      %6305 = vrot.lane.b32.xlu0 %v6240, 126
      %v6306 = vpop.permute.xlu0 %6305
      %v6307 = vrot.slane %v6306, 1
      %v6308 = vsel %vm5626, %v6306, %v6307
      %v6310 = vadd.f32 %v6233, %v6308
      %6312 = vrot.lane.b32.xlu0 %v6254, 126
      %v6313 = vpop.permute.xlu0 %6312
      %v6314 = vrot.slane %v6313, 1
      %v6315 = vsel %vm5626, %v6313, %v6314
      %v6317 = vadd.f32 %v6247, %v6315
      %6319 = vrot.lane.b32.xlu0 %v6268, 126
      %v6320 = vpop.permute.xlu0 %6319
      %v6321 = vrot.slane %v6320, 1
      %v6322 = vsel %vm5626, %v6320, %v6321
      %v6324 = vadd.f32 %v6261, %v6322
      %6326 = vrot.lane.b32.xlu0 %v6282, 107
      %v6327 = vpop.permute.xlu0 %6326
      %v6328 = vrot.slane %v6327, 1
      %v6329 = vsel %vm5618, %v6327, %v6328
      %v6331 = vadd.f32 %v6275, %v6329
      %6333 = vrot.lane.b32.xlu0 %v6303, 125
      %v6334 = vpop.permute.xlu0 %6333
      %v6335 = vrot.slane %v6334, 1
      %v6336 = vsel %vm5655, %v6334, %v6335
      %v6338 = vadd.f32 %v6296, %v6336
      %6340 = vrot.lane.b32.xlu0 %v6317, 105
      %v6341 = vpop.permute.xlu0 %6340
      %v6342 = vrot.slane %v6341, 1
      %v6343 = vsel %vm5663, %v6341, %v6342
      %v6345 = vadd.f32 %v6310, %v6343
      %6347 = vrot.lane.b32.xlu0 %v6331, 124
      %v6348 = vpop.permute.xlu0 %6347
      %v6349 = vrot.slane %v6348, 1
      %v6350 = vsel %vm5671, %v6348, %v6349
      %v6352 = vadd.f32 %v6324, %v6350
      %6354 = vrot.lane.b32.xlu0 %v6345, 102
      %v6355 = vpop.permute.xlu0 %6354
      %v6356 = vrot.slane %v6355, 1
      %v6357 = vsel %vm5679, %v6355, %v6356
      %v6359 = vadd.f32 %v6338, %v6357
      %6361 = vrot.lane.b32.xlu0 %v6289, 101
      %v6362 = vpop.permute.xlu0 %6361
      %v6363 = vrot.slane %v6362, 1
      %v6364 = vsel %vm5687, %v6362, %v6363
      %v6366 = vadd.f32 %v6352, %v6364
      %6368 = vrot.lane.b32.xlu0 %v6366, 56
      %v6369 = vpop.permute.xlu0 %6368
      %v6370 = vrot.slane %v6369, 1
      %v6371 = vsel %vm5695, %v6369, %v6370
      %v6373 = vadd.f32 %v6359, %v6371
      %s6374 = scalar_lea.vmem %s311, 9
      %6375 = vst.msk [vmem:[%s6374] sm:$0x7] %vm5702, %v6373
      %s6376 = smul.u32 4, %s20
      %p6377 = scmp.lt.s32.totalorder %s6376, 7
      %s6378 = scalar_select %p6377, %s6376, 7
      %s6379 = smul.addr %s6378, 3
      %s6380 = scalar_lea.vmem %s8, %s6379
      // Predicated region
      $region53: #{srcnn_forward.1} parent=51 // pred_check
        %p6381 = pneg %p211
      $region54: #{srcnn_forward.1} parent=51 // pred_check_branch
        %6383 = sbr.rel (%p6381) target = $region56
      $region55: #{srcnn_forward.1} parent=51 // pred_region
        %s6384 = smul.u32 4, %s20
      $region56: #{srcnn_forward.1} parent=51 // pred_fallthru
        _
    $region52: #{srcnn_forward.1} parent=5 // pred_fallthru
      _
    %p6385 = scmp.le.s32.totalorder 2, %s15
    // Predicated region
    $region57: #{srcnn_forward.1} parent=5 // pred_check
      %p6386 = pneg %p6385
    $region58: #{srcnn_forward.1} parent=5 // pred_check_branch
      %6388 = sbr.rel (%p6386) target = $region60
    $region59: #{srcnn_forward.1} parent=5 // pred_region
      %s6389 = ssub.s32 %s15, 2
      // Predicated region
      $region61: #{srcnn_forward.1} parent=59 // pred_check
        %p6390 = pneg %p217
      $region62: #{srcnn_forward.1} parent=59 // pred_check_branch
        %6392 = sbr.rel (%p6390) target = $region64
      $region63: #{srcnn_forward.1} parent=59 // pred_region
        %s6393 = smul.u32 4, %s21
        %p6394 = scmp.lt.s32.totalorder %s6393, 7
        %s6395 = scalar_select %p6394, %s6393, 7
        %s6396 = smul.addr %s6395, 3
        %s6397 = scalar_lea.vmem %s8, %s6396
      $region64: #{srcnn_forward.1} parent=59 // pred_fallthru
        _
    $region60: #{srcnn_forward.1} parent=5 // pred_fallthru
      _
  $region6: #{srcnn_forward.1} parent=0 // loop_footer
    %s19 = sadd.s32 1, %s15
  $region7: #{srcnn_forward.1} parent=0 // loop_footer_branch
    %14 = sbr.rel target = $region3
  $region8: #{srcnn_forward.1} parent=0 // loop_exit
    _

</llo_original>
